<compile_context>
chip_gen: v6e
topology: v6e:2x2x1
jax: 0.10.0
libtpu: 0.0.40
codegen_flags: <defaults>
</compile_context>

<pallas_src>
import math
import jax
import jax.numpy as jnp
from jax import lax
from jax.experimental import pallas as pl
from jax.experimental.pallas import tpu as pltpu

LANE = 128


def _round_up(x, m):
    return ((x + m - 1) // m) * m


def _is_v5e():
    """True on TPU v5e / v5 lite (no native bf16 VPU -> keep pooling scratch f32)."""
    try:
        kind = jax.devices()[0].device_kind.lower()
        return ("v5 lite" in kind) or ("v5e" in kind) or ("v5lite" in kind)
    except Exception:
        return False


def _vmem_capacity_bytes():
    try:
        return int(pltpu.get_tpu_info().vmem_capacity_bytes)
    except Exception:
        return 64 << 20              # conservative default (v7x per-TensorCore VMEM)


# ---------------------------------------------------------------------------
# Fused SPPF kernel: cv1 (1x1 conv + BN + SiLU) -> 3x maxpool(5, s=1, p=2)
#                    -> cv2 (1x1 conv over the implicit concat + BN + SiLU)
# One grid step processes one NHWC image (channels mapped to TPU lanes).
# ---------------------------------------------------------------------------
def _make_sppf_kernel(H, W, C1, Cp, C2p, k_pool, mxu_dtype, pool_dtype):
    P = k_pool // 2
    Hp, Wp = H + 2 * P, W + 2 * P
    M = H * W

    def silu(y):
        # y * sigmoid(y) == y * 0.5 * (1 + tanh(y/2)): one EUP tanh, no VPU divide.
        return y * (0.5 * jnp.tanh(0.5 * y) + 0.5)

    def running_max(v, axis):
        # k-tap max along `axis` via the doubling trick: covered window 1 -> 2 -> 4
        # -> ... -> k  (ceil(log2(k)) shifted reads + maxima instead of k-1).
        covered = 1
        while covered < k_pool:
            step = min(covered, k_pool - covered)
            L = v.shape[axis]
            v = jnp.maximum(lax.slice_in_dim(v, 0, L - step, axis=axis),
                            lax.slice_in_dim(v, step, L, axis=axis))
            covered += step
        return v

    def pool(src_ref):
        # Separable k x k max pool over a -inf bordered scratch.  H pass first:
        # its shifted slices are aligned (Wp, Cp) planes; the sublane-misaligned
        # W pass then only touches H (not Hp) rows.
        v = src_ref[...]
        v = running_max(v, axis=1)              # (1, H, Wp, Cp)
        v = running_max(v, axis=2)              # (1, H, W,  Cp)
        return v

    def kernel(x_ref, w1_ref, b1_ref, w2_ref, b2_ref, o_ref, pad_a, pad_b):
        # -inf borders for the pooling scratch (interiors are fully overwritten
        # below).  Re-written every step: scratch is not guaranteed initialized and
        # under megacore "parallel" sharding there is no reliable "first step on
        # this core" predicate, so a one-time SMEM-flag init would be unsafe.  The
        # cost is a few partial stores per image (column borders only span the
        # interior rows; the corner cells are covered by the full-width row writes).
        ninf_rows = jnp.full((1, P, Wp, Cp), -jnp.inf, dtype=pool_dtype)
        ninf_cols = jnp.full((1, H, P, Cp), -jnp.inf, dtype=pool_dtype)
        for pref in (pad_a, pad_b):
            pref[:, 0:P, :, :] = ninf_rows
            pref[:, H + P:Hp, :, :] = ninf_rows
            pref[:, P:H + P, 0:P, :] = ninf_cols
            pref[:, P:H + P, W + P:Wp, :] = ninf_cols

        # ---- cv1: 1x1 conv (BN scale folded into w1) + shift + SiLU -------------
        # MXU operands in mxu_dtype (bf16 by default); f32 accumulation/epilogue.
        x2d = x_ref[...].reshape(M, C1).astype(mxu_dtype)
        y = jnp.dot(x2d, w1_ref[...], preferred_element_type=jnp.float32)
        x1 = silu(y + b1_ref[...])                                   # (M, Cp) f32

        # ---- cv2 term 0: x1 @ w2[0:Cp]  (the concat is never materialized) ------
        acc = jnp.dot(x1.astype(mxu_dtype), w2_ref[0:Cp, :],
                      preferred_element_type=jnp.float32)

        # ---- y1 = pool(x1) ; cv2 term 1 ------------------------------------------
        pad_a[:, P:P + H, P:P + W, :] = x1.reshape(1, H, W, Cp).astype(pool_dtype)
        y1 = pool(pad_a)
        acc += jnp.dot(y1.reshape(M, Cp).astype(mxu_dtype), w2_ref[Cp:2 * Cp, :],
                       preferred_element_type=jnp.float32)

        # ---- y2 = pool(y1) ; cv2 term 2 ------------------------------------------
        pad_b[:, P:P + H, P:P + W, :] = y1
        y2 = pool(pad_b)
        acc += jnp.dot(y2.reshape(M, Cp).astype(mxu_dtype), w2_ref[2 * Cp:3 * Cp, :],
                       preferred_element_type=jnp.float32)

        # ---- y3 = pool(y2) ; cv2 term 3  (x1 dead -> reuse pad_a) -----------------
        pad_a[:, P:P + H, P:P + W, :] = y2
        y3 = pool(pad_a)
        acc += jnp.dot(y3.reshape(M, Cp).astype(mxu_dtype), w2_ref[3 * Cp:4 * Cp, :],
                       preferred_element_type=jnp.float32)

        # ---- cv2 epilogue: BN shift + SiLU, lane-dense store ---------------------
        out = silu(acc + b2_ref[...])
        o_ref[...] = out.reshape(1, H, W, C2p).astype(o_ref.dtype)

    return kernel


# ---------------------------------------------------------------------------
# NHWC fast path: no wrapper-side layout ops on x (no transpose / pad / cast).
# ---------------------------------------------------------------------------
def sppf_all_lora_forward_nhwc(x_nhwc, params, k_pool=5, eps=1e-5,
                               mxu_dtype=jnp.bfloat16, pool_dtype=None,
                               out_dtype=None):
    """SPPF_all_lora forward.  x_nhwc: (N, H, W, C1) -> (N, H, W, C2).

    mxu_dtype : dtype of the matmul operands (weights stored in it, activations
                cast right before each dot); accumulation / BN / SiLU stay f32.
    pool_dtype: pooling-scratch dtype; defaults to bf16 when mxu_dtype is bf16
                (except on v5e, which lacks a bf16 VPU), else f32.
    out_dtype : output storage dtype; defaults to the input dtype.
    """
    N, H, W, C1 = x_nhwc.shape
    w1 = params["cv1_w"]                          # (C_, C1)   1x1 conv [out, in]
    w2 = params["cv2_w"]                          # (C2, 4*C_)
    C_ = w1.shape[0]
    C2 = w2.shape[0]
    g1, b1, m1, v1 = params["cv1_bn"]
    g2, b2, m2, v2 = params["cv2_bn"]

    mxu_dtype = jnp.dtype(mxu_dtype)
    if pool_dtype is None:
        pool_dtype = (jnp.dtype(jnp.float32)
                      if (mxu_dtype == jnp.dtype(jnp.float32) or _is_v5e())
                      else jnp.dtype(jnp.bfloat16))
    pool_dtype = jnp.dtype(pool_dtype)
    out_dtype = jnp.dtype(out_dtype) if out_dtype is not None else x_nhwc.dtype

    # Fold the BatchNorm scale into the conv weights (exact); keep the shift in f32.
    s1 = g1 / jnp.sqrt(v1 + eps)
    sh1 = b1 - m1 * s1
    s2 = g2 / jnp.sqrt(v2 + eps)
    sh2 = b2 - m2 * s2
    w1f = jnp.transpose(w1).astype(jnp.float32) * s1[None, :]   # (C1, C_)
    w2f = jnp.transpose(w2).astype(jnp.float32) * s2[None, :]   # (4*C_, C2)

    # Pad hidden / output channel dims to lane multiples (dense MXU inputs and
    # unmasked output stores); x stays unpadded -- the MXU zero-pads the K dim.
    Cp, C2p = _round_up(C_, LANE), _round_up(C2, LANE)
    w1p = jnp.zeros((C1, Cp), jnp.float32).at[:, :C_].set(w1f).astype(mxu_dtype)
    sh1p = jnp.zeros((1, Cp), jnp.float32).at[0, :C_].set(sh1)
    w2p = jnp.zeros((4 * Cp, C2p), jnp.float32)
    for i in range(4):                            # per-branch row blocks, Cp apart
        w2p = w2p.at[i * Cp:i * Cp + C_, :C2].set(w2f[i * C_:(i + 1) * C_, :])
    w2p = w2p.astype(mxu_dtype)
    sh2p = jnp.zeros((1, C2p), jnp.float32).at[0, :C2].set(sh2)

    P = k_pool // 2
    Hp, Wp = H + 2 * P, W + 2 * P

    # Generation-aware VMEM budget + fit guard.
    isz = lambda dt: jnp.dtype(dt).itemsize
    vmem_need = (
        2 * H * W * C1 * isz(x_nhwc.dtype)          # input block (double buffered)
        + 2 * H * W * C2p * isz(out_dtype)          # output block (double buffered)
        + 2 * ((C1 * Cp + 4 * Cp * C2p) * isz(mxu_dtype) + (Cp + C2p) * 4)  # weights
        + 2 * Hp * Wp * Cp * isz(pool_dtype)        # the two -inf bordered pads
        + (H * W * Cp + H * W * C2p) * 4            # x1 + cv2 accumulator (f32)
        + 2 * Hp * Wp * Cp * isz(pool_dtype))       # pooling temporaries
    vmem_cap = _vmem_capacity_bytes()
    if vmem_need > int(0.85 * vmem_cap):
        # TODO(synk): add an H row-slab grid axis (6-row halo across the 3 chained
        # pools) so huge feature maps fit VMEM and N=1 shards across both v7x cores.
        raise ValueError(
            f"SPPF feature map needs ~{vmem_need >> 20} MiB VMEM (capacity "
            f"{vmem_cap >> 20} MiB); reduce H*W or add the row-slab path.")
    vmem_limit = min(int(0.9 * vmem_cap), max(2 * vmem_need, 32 << 20))

    kernel = _make_sppf_kernel(H, W, C1, Cp, C2p, k_pool, mxu_dtype, pool_dtype)

    def run(single_buffer_weights):
        # Weights/biases keep a constant block index across the grid; a single
        # buffer avoids pointlessly double-buffering them (VMEM savings, esp. w2).
        wkw = {"pipeline_mode": pl.Buffered(1)} if single_buffer_weights else {}
        return pl.pallas_call(
            kernel,
            out_shape=jax.ShapeDtypeStruct((N, H, W, C2p), out_dtype),
            grid=(N,),
            in_specs=[
                pl.BlockSpec((1, H, W, C1), lambda n: (n, 0, 0, 0)),
                pl.BlockSpec((C1, Cp), lambda n: (0, 0), **wkw),
                pl.BlockSpec((1, Cp), lambda n: (0, 0), **wkw),
                pl.BlockSpec((4 * Cp, C2p), lambda n: (0, 0), **wkw),
                pl.BlockSpec((1, C2p), lambda n: (0, 0), **wkw),
            ],
            out_specs=pl.BlockSpec((1, H, W, C2p), lambda n: (n, 0, 0, 0)),
            scratch_shapes=[
                pltpu.VMEM((1, Hp, Wp, Cp), pool_dtype),
                pltpu.VMEM((1, Hp, Wp, Cp), pool_dtype),
            ],
            compiler_params=pltpu.CompilerParams(
                dimension_semantics=("parallel",),   # batch shards across cores
                vmem_limit_bytes=vmem_limit,
            ),
        )(x_nhwc, w1p, sh1p, w2p, sh2p)

    try:
        out = run(True)
    except Exception:
        # Some Pallas versions reject single-buffered inputs; fall back to default.
        out = run(False)

    return out if C2p == C2 else out[..., :C2]


def sppf_all_lora_forward(x_nchw, params, **kwargs):
    """NCHW convenience wrapper (PyTorch layout parity): (N,C1,H,W) -> (N,C2,H,W).

    The NCHW<->NHWC transposes here are extra HBM round trips; prefer
    sppf_all_lora_forward_nhwc when the surrounding graph is already NHWC.
    """
    x = jnp.transpose(x_nchw, (0, 2, 3, 1))
    out = sppf_all_lora_forward_nhwc(x, params, **kwargs)
    return jnp.transpose(out, (0, 3, 1, 2))


# ---------------------------------------------------------------------------
# Parameter construction (deterministic, mirrors module __init__ shapes)
# ---------------------------------------------------------------------------
def init_sppf_params(key, c1, c2, r=1.0, lora_alpha=1.0):
    c_ = c1 // 2

    def conv_lora_weight(key, cin, cout, k=1):
        inter_r = math.floor(min(k * k, cout * cin) * r)
        inter_r = inter_r if inter_r >= 1 else 1
        ka, kb = jax.random.split(key)
        lora_A = jax.random.uniform(ka, (inter_r, k * k), jnp.float32, -0.5, 0.5)
        lora_B = jax.random.uniform(kb, (cout * cin, inter_r), jnp.float32, -0.5, 0.5)
        scaling = lora_alpha / r
        w = (lora_B @ lora_A).reshape(cout, cin, k, k) * scaling
        return w[:, :, 0, 0]                     # (cout, cin) for a 1x1 conv

    def bn_params(key, c):
        k1, k2, k3, k4 = jax.random.split(key, 4)
        gamma = jax.random.uniform(k1, (c,), jnp.float32, 0.5, 1.5)
        beta = jax.random.uniform(k2, (c,), jnp.float32, -0.5, 0.5)
        mean = jax.random.uniform(k3, (c,), jnp.float32, -0.5, 0.5)
        var = jax.random.uniform(k4, (c,), jnp.float32, 0.5, 1.5)
        return gamma, beta, mean, var

    k1, k2, k3, k4 = jax.random.split(key, 4)
    return {
        "cv1_w": conv_lora_weight(k1, c1, c_),
        "cv1_bn": bn_params(k2, c_),
        "cv2_w": conv_lora_weight(k3, c_ * 4, c2),
        "cv2_bn": bn_params(k4, c2),
    }


# ---------------------------------------------------------------------------
# Pure-JAX reference (for correctness check)
# ---------------------------------------------------------------------------
def reference_forward(x_nchw, params, k_pool=5, eps=1e-5):
    def conv_bn_silu(x, w, bn):
        g, b, m, v = bn
        y = jnp.einsum("nchw,oc->nohw", x, w)
        y = (y - m[None, :, None, None]) / jnp.sqrt(v[None, :, None, None] + eps)
        y = y * g[None, :, None, None] + b[None, :, None, None]
        return y * jax.nn.sigmoid(y)

    def mp(x):
        p = k_pool // 2
        return jax.lax.reduce_window(
            x, -jnp.inf, jax.lax.max,
            (1, 1, k_pool, k_pool), (1, 1, 1, 1),
            [(0, 0), (0, 0), (p, p), (p, p)])

    x1 = conv_bn_silu(x_nchw, params["cv1_w"], params["cv1_bn"])
    y1 = mp(x1); y2 = mp(y1); y3 = mp(y2)
    return conv_bn_silu(jnp.concatenate([x1, y1, y2, y3], axis=1),
                        params["cv2_w"], params["cv2_bn"])


if __name__ == "__main__":
    key = jax.random.PRNGKey(0)
    kx, kp = jax.random.split(key)

    N, C1, H, W = 2, 8, 16, 16      # SPPF: c_ = C1 // 2 = 4, cv2 input = 4*c_ = 16
    C2 = 8
    x = jax.random.normal(kx, (N, C1, H, W), jnp.float32)
    params = init_sppf_params(kp, C1, C2, r=1.0, lora_alpha=1.0)

    ref = reference_forward(x, params)

    # Exact path (f32 MXU operands) -- tight correctness check of the kernel math.
    out_f32 = jax.block_until_ready(
        sppf_all_lora_forward(x, params, mxu_dtype=jnp.float32))
    # Default fast path (bf16 MXU operands; bf16 pooling scratch off-v5e).
    out_fast = jax.block_until_ready(sppf_all_lora_forward(x, params))
    # NHWC fast path (no wrapper-side layout round trips).
    out_nhwc = jax.block_until_ready(
        sppf_all_lora_forward_nhwc(jnp.transpose(x, (0, 2, 3, 1)), params))

    err_f32 = float(jnp.max(jnp.abs(out_f32 - ref)))
    err_fast = float(jnp.max(jnp.abs(out_fast - ref)))
    err_nhwc = float(jnp.max(jnp.abs(jnp.transpose(out_nhwc, (0, 3, 1, 2)) - ref)))

    ok = (out_f32.shape == (N, C2, H, W)
          and err_f32 < 1e-4 and err_fast < 1e-1 and err_nhwc < 1e-1)
    if ok:
        print("KERNEL_OK")
    else:
        print(f"MISMATCH f32_err={err_f32} fast_err={err_fast} nhwc_err={err_nhwc}")
</pallas_src>

<mosaic_0001>
module attributes {stable_mosaic.version = 11 : i64} {
  func.func @kernel(%arg0: i32, %arg1: memref<1x16x16x8xf32, #tpu.memory_space<vmem>>, %arg2: memref<8x128xf32, #tpu.memory_space<vmem>>, %arg3: memref<1x128xf32, #tpu.memory_space<vmem>>, %arg4: memref<512x128xf32, #tpu.memory_space<vmem>>, %arg5: memref<1x128xf32, #tpu.memory_space<vmem>>, %arg6: memref<1x16x16x128xf32, #tpu.memory_space<vmem>>, %arg7: memref<1x20x20x128xf32, #tpu.memory_space<vmem>>, %arg8: memref<1x20x20x128xf32, #tpu.memory_space<vmem>>) attributes {dimension_semantics = [#tpu.dimension_semantics<parallel>], iteration_bounds = array<i64: 2>, scalar_prefetch = 0 : i64, scratch_operands = 2 : i64, tpu.core_type = #tpu.core_type<tc>, window_params = [{transform_indices = @transform_0, window_bounds = array<i64: 1, 16, 16, 8>}, {pipeline_mode = #tpu.pipeline_mode<synchronous>, transform_indices = @transform_1, window_bounds = array<i64: 8, 128>}, {pipeline_mode = #tpu.pipeline_mode<synchronous>, transform_indices = @transform_2, window_bounds = array<i64: 1, 128>}, {pipeline_mode = #tpu.pipeline_mode<synchronous>, transform_indices = @transform_3, window_bounds = array<i64: 512, 128>}, {pipeline_mode = #tpu.pipeline_mode<synchronous>, transform_indices = @transform_4, window_bounds = array<i64: 1, 128>}, {transform_indices = @transform_5, window_bounds = array<i64: 1, 16, 16, 128>}]} {
    %cst = arith.constant 0xFF800000 : f32
    %0 = vector.broadcast %cst : f32 to vector<1x2x20x128xf32>
    %cst_0 = arith.constant 0xFF800000 : f32
    %1 = vector.broadcast %cst_0 : f32 to vector<1x16x2x128xf32>
    %c0 = arith.constant 0 : index
    %c0_1 = arith.constant 0 : index
    %c0_2 = arith.constant 0 : index
    %c0_3 = arith.constant 0 : index
    %2 = vector.load %arg7[%c0, %c0_1, %c0_2, %c0_3] : memref<1x20x20x128xf32, #tpu.memory_space<vmem>>, vector<1x2x20x128xf32>
    tpu.vector_store %arg7[%c0, %c0_1, %c0_2, %c0_3], %0 {strides = array<i32>} : memref<1x20x20x128xf32, #tpu.memory_space<vmem>>, vector<1x2x20x128xf32>,
    %c0_4 = arith.constant 0 : index
    %c18 = arith.constant 18 : index
    %c0_5 = arith.constant 0 : index
    %c0_6 = arith.constant 0 : index
    %3 = vector.load %arg7[%c0_4, %c18, %c0_5, %c0_6] : memref<1x20x20x128xf32, #tpu.memory_space<vmem>>, vector<1x2x20x128xf32>
    tpu.vector_store %arg7[%c0_4, %c18, %c0_5, %c0_6], %0 {strides = array<i32>} : memref<1x20x20x128xf32, #tpu.memory_space<vmem>>, vector<1x2x20x128xf32>,
    %c0_7 = arith.constant 0 : index
    %c2 = arith.constant 2 : index
    %c0_8 = arith.constant 0 : index
    %c0_9 = arith.constant 0 : index
    %4 = vector.load %arg7[%c0_7, %c2, %c0_8, %c0_9] : memref<1x20x20x128xf32, #tpu.memory_space<vmem>>, vector<1x16x2x128xf32>
    tpu.vector_store %arg7[%c0_7, %c2, %c0_8, %c0_9], %1 {strides = array<i32>} : memref<1x20x20x128xf32, #tpu.memory_space<vmem>>, vector<1x16x2x128xf32>,
    %c0_10 = arith.constant 0 : index
    %c2_11 = arith.constant 2 : index
    %c18_12 = arith.constant 18 : index
    %c0_13 = arith.constant 0 : index
    %5 = vector.load %arg7[%c0_10, %c2_11, %c18_12, %c0_13] : memref<1x20x20x128xf32, #tpu.memory_space<vmem>>, vector<1x16x2x128xf32>
    tpu.vector_store %arg7[%c0_10, %c2_11, %c18_12, %c0_13], %1 {strides = array<i32>} : memref<1x20x20x128xf32, #tpu.memory_space<vmem>>, vector<1x16x2x128xf32>,
    %c0_14 = arith.constant 0 : index
    %c0_15 = arith.constant 0 : index
    %c0_16 = arith.constant 0 : index
    %c0_17 = arith.constant 0 : index
    %6 = vector.load %arg8[%c0_14, %c0_15, %c0_16, %c0_17] : memref<1x20x20x128xf32, #tpu.memory_space<vmem>>, vector<1x2x20x128xf32>
    tpu.vector_store %arg8[%c0_14, %c0_15, %c0_16, %c0_17], %0 {strides = array<i32>} : memref<1x20x20x128xf32, #tpu.memory_space<vmem>>, vector<1x2x20x128xf32>,
    %c0_18 = arith.constant 0 : index
    %c18_19 = arith.constant 18 : index
    %c0_20 = arith.constant 0 : index
    %c0_21 = arith.constant 0 : index
    %7 = vector.load %arg8[%c0_18, %c18_19, %c0_20, %c0_21] : memref<1x20x20x128xf32, #tpu.memory_space<vmem>>, vector<1x2x20x128xf32>
    tpu.vector_store %arg8[%c0_18, %c18_19, %c0_20, %c0_21], %0 {strides = array<i32>} : memref<1x20x20x128xf32, #tpu.memory_space<vmem>>, vector<1x2x20x128xf32>,
    %c0_22 = arith.constant 0 : index
    %c2_23 = arith.constant 2 : index
    %c0_24 = arith.constant 0 : index
    %c0_25 = arith.constant 0 : index
    %8 = vector.load %arg8[%c0_22, %c2_23, %c0_24, %c0_25] : memref<1x20x20x128xf32, #tpu.memory_space<vmem>>, vector<1x16x2x128xf32>
    tpu.vector_store %arg8[%c0_22, %c2_23, %c0_24, %c0_25], %1 {strides = array<i32>} : memref<1x20x20x128xf32, #tpu.memory_space<vmem>>, vector<1x16x2x128xf32>,
    %c0_26 = arith.constant 0 : index
    %c2_27 = arith.constant 2 : index
    %c18_28 = arith.constant 18 : index
    %c0_29 = arith.constant 0 : index
    %9 = vector.load %arg8[%c0_26, %c2_27, %c18_28, %c0_29] : memref<1x20x20x128xf32, #tpu.memory_space<vmem>>, vector<1x16x2x128xf32>
    tpu.vector_store %arg8[%c0_26, %c2_27, %c18_28, %c0_29], %1 {strides = array<i32>} : memref<1x20x20x128xf32, #tpu.memory_space<vmem>>, vector<1x16x2x128xf32>,
    %c0_30 = arith.constant 0 : index
    %c0_31 = arith.constant 0 : index
    %c0_32 = arith.constant 0 : index
    %c0_33 = arith.constant 0 : index
    %10 = vector.load %arg1[%c0_30, %c0_31, %c0_32, %c0_33] : memref<1x16x16x8xf32, #tpu.memory_space<vmem>>, vector<1x16x16x8xf32>
    %11 = vector.shape_cast %10 : vector<1x16x16x8xf32> to vector<256x8xf32>
    %c0_34 = arith.constant 0 : index
    %c0_35 = arith.constant 0 : index
    %12 = vector.load %arg2[%c0_34, %c0_35] : memref<8x128xf32, #tpu.memory_space<vmem>>, vector<8x128xf32>
    %cst_36 = arith.constant dense<0.000000e+00> : vector<256x128xf32>
    %13 = tpu.matmul %11, %12, %cst_36 {dimension_numbers = #tpu.dot_dimension_numbers<[1], [0], [0], [1], [0, 0, 1, 1], [], []>} : vector<256x8xf32>, vector<8x128xf32>, vector<256x128xf32> -> vector<256x128xf32>
    %c0_37 = arith.constant 0 : index
    %c0_38 = arith.constant 0 : index
    %14 = vector.load %arg3[%c0_37, %c0_38] : memref<1x128xf32, #tpu.memory_space<vmem>>, vector<1x128xf32>
    %15 = vector.broadcast %14 : vector<1x128xf32> to vector<256x128xf32>
    %16 = arith.addf %13, %15 : vector<256x128xf32>
    %cst_39 = arith.constant 5.000000e-01 : f32
    %17 = vector.broadcast %cst_39 : f32 to vector<256x128xf32>
    %18 = arith.mulf %17, %16 : vector<256x128xf32>
    %19 = math.tanh %18 : vector<256x128xf32>
    %cst_40 = arith.constant 5.000000e-01 : f32
    %20 = vector.broadcast %cst_40 : f32 to vector<256x128xf32>
    %21 = arith.mulf %20, %19 : vector<256x128xf32>
    %cst_41 = arith.constant 5.000000e-01 : f32
    %22 = vector.broadcast %cst_41 : f32 to vector<256x128xf32>
    %23 = arith.addf %21, %22 : vector<256x128xf32>
    %24 = arith.mulf %16, %23 : vector<256x128xf32>
    %c0_42 = arith.constant 0 : index
    %c0_43 = arith.constant 0 : index
    %25 = vector.load %arg4[%c0_42, %c0_43] : memref<512x128xf32, #tpu.memory_space<vmem>>, vector<128x128xf32>
    %cst_44 = arith.constant dense<0.000000e+00> : vector<256x128xf32>
    %26 = tpu.matmul %24, %25, %cst_44 {dimension_numbers = #tpu.dot_dimension_numbers<[1], [0], [0], [1], [0, 0, 1, 1], [], []>} : vector<256x128xf32>, vector<128x128xf32>, vector<256x128xf32> -> vector<256x128xf32>
    %27 = vector.shape_cast %24 : vector<256x128xf32> to vector<1x16x16x128xf32>
    %c0_45 = arith.constant 0 : index
    %c2_46 = arith.constant 2 : index
    %c2_47 = arith.constant 2 : index
    %c0_48 = arith.constant 0 : index
    %28 = vector.load %arg7[%c0_45, %c2_46, %c2_47, %c0_48] : memref<1x20x20x128xf32, #tpu.memory_space<vmem>>, vector<1x16x16x128xf32>
    tpu.vector_store %arg7[%c0_45, %c2_46, %c2_47, %c0_48], %27 {strides = array<i32>} : memref<1x20x20x128xf32, #tpu.memory_space<vmem>>, vector<1x16x16x128xf32>,
    %c0_49 = arith.constant 0 : index
    %c0_50 = arith.constant 0 : index
    %c0_51 = arith.constant 0 : index
    %c0_52 = arith.constant 0 : index
    %29 = vector.load %arg7[%c0_49, %c0_50, %c0_51, %c0_52] : memref<1x20x20x128xf32, #tpu.memory_space<vmem>>, vector<1x20x20x128xf32>
    %30 = vector.extract_strided_slice %29 {offsets = [0, 0, 0, 0], sizes = [1, 19, 20, 128], strides = [1, 1, 1, 1]} : vector<1x20x20x128xf32> to vector<1x19x20x128xf32>
    %31 = vector.extract_strided_slice %29 {offsets = [0, 1, 0, 0], sizes = [1, 19, 20, 128], strides = [1, 1, 1, 1]} : vector<1x20x20x128xf32> to vector<1x19x20x128xf32>
    %32 = arith.maximumf %30, %31 : vector<1x19x20x128xf32>
    %33 = vector.extract_strided_slice %32 {offsets = [0, 0, 0, 0], sizes = [1, 17, 20, 128], strides = [1, 1, 1, 1]} : vector<1x19x20x128xf32> to vector<1x17x20x128xf32>
    %34 = vector.extract_strided_slice %32 {offsets = [0, 2, 0, 0], sizes = [1, 17, 20, 128], strides = [1, 1, 1, 1]} : vector<1x19x20x128xf32> to vector<1x17x20x128xf32>
    %35 = arith.maximumf %33, %34 : vector<1x17x20x128xf32>
    %36 = vector.extract_strided_slice %35 {offsets = [0, 0, 0, 0], sizes = [1, 16, 20, 128], strides = [1, 1, 1, 1]} : vector<1x17x20x128xf32> to vector<1x16x20x128xf32>
    %37 = vector.extract_strided_slice %35 {offsets = [0, 1, 0, 0], sizes = [1, 16, 20, 128], strides = [1, 1, 1, 1]} : vector<1x17x20x128xf32> to vector<1x16x20x128xf32>
    %38 = arith.maximumf %36, %37 : vector<1x16x20x128xf32>
    %39 = vector.extract_strided_slice %38 {offsets = [0, 0, 0, 0], sizes = [1, 16, 19, 128], strides = [1, 1, 1, 1]} : vector<1x16x20x128xf32> to vector<1x16x19x128xf32>
    %40 = vector.extract_strided_slice %38 {offsets = [0, 0, 1, 0], sizes = [1, 16, 19, 128], strides = [1, 1, 1, 1]} : vector<1x16x20x128xf32> to vector<1x16x19x128xf32>
    %41 = arith.maximumf %39, %40 : vector<1x16x19x128xf32>
    %42 = vector.extract_strided_slice %41 {offsets = [0, 0, 0, 0], sizes = [1, 16, 17, 128], strides = [1, 1, 1, 1]} : vector<1x16x19x128xf32> to vector<1x16x17x128xf32>
    %43 = vector.extract_strided_slice %41 {offsets = [0, 0, 2, 0], sizes = [1, 16, 17, 128], strides = [1, 1, 1, 1]} : vector<1x16x19x128xf32> to vector<1x16x17x128xf32>
    %44 = arith.maximumf %42, %43 : vector<1x16x17x128xf32>
    %45 = vector.extract_strided_slice %44 {offsets = [0, 0, 0, 0], sizes = [1, 16, 16, 128], strides = [1, 1, 1, 1]} : vector<1x16x17x128xf32> to vector<1x16x16x128xf32>
    %46 = vector.extract_strided_slice %44 {offsets = [0, 0, 1, 0], sizes = [1, 16, 16, 128], strides = [1, 1, 1, 1]} : vector<1x16x17x128xf32> to vector<1x16x16x128xf32>
    %47 = arith.maximumf %45, %46 : vector<1x16x16x128xf32>
    %48 = vector.shape_cast %47 : vector<1x16x16x128xf32> to vector<256x128xf32>
    %c128 = arith.constant 128 : index
    %c0_53 = arith.constant 0 : index
    %49 = vector.load %arg4[%c128, %c0_53] : memref<512x128xf32, #tpu.memory_space<vmem>>, vector<128x128xf32>
    %cst_54 = arith.constant dense<0.000000e+00> : vector<256x128xf32>
    %50 = tpu.matmul %48, %49, %cst_54 {dimension_numbers = #tpu.dot_dimension_numbers<[1], [0], [0], [1], [0, 0, 1, 1], [], []>} : vector<256x128xf32>, vector<128x128xf32>, vector<256x128xf32> -> vector<256x128xf32>
    %51 = arith.addf %26, %50 : vector<256x128xf32>
    %c0_55 = arith.constant 0 : index
    %c2_56 = arith.constant 2 : index
    %c2_57 = arith.constant 2 : index
    %c0_58 = arith.constant 0 : index
    %52 = vector.load %arg8[%c0_55, %c2_56, %c2_57, %c0_58] : memref<1x20x20x128xf32, #tpu.memory_space<vmem>>, vector<1x16x16x128xf32>
    tpu.vector_store %arg8[%c0_55, %c2_56, %c2_57, %c0_58], %47 {strides = array<i32>} : memref<1x20x20x128xf32, #tpu.memory_space<vmem>>, vector<1x16x16x128xf32>,
    %c0_59 = arith.constant 0 : index
    %c0_60 = arith.constant 0 : index
    %c0_61 = arith.constant 0 : index
    %c0_62 = arith.constant 0 : index
    %53 = vector.load %arg8[%c0_59, %c0_60, %c0_61, %c0_62] : memref<1x20x20x128xf32, #tpu.memory_space<vmem>>, vector<1x20x20x128xf32>
    %54 = vector.extract_strided_slice %53 {offsets = [0, 0, 0, 0], sizes = [1, 19, 20, 128], strides = [1, 1, 1, 1]} : vector<1x20x20x128xf32> to vector<1x19x20x128xf32>
    %55 = vector.extract_strided_slice %53 {offsets = [0, 1, 0, 0], sizes = [1, 19, 20, 128], strides = [1, 1, 1, 1]} : vector<1x20x20x128xf32> to vector<1x19x20x128xf32>
    %56 = arith.maximumf %54, %55 : vector<1x19x20x128xf32>
    %57 = vector.extract_strided_slice %56 {offsets = [0, 0, 0, 0], sizes = [1, 17, 20, 128], strides = [1, 1, 1, 1]} : vector<1x19x20x128xf32> to vector<1x17x20x128xf32>
    %58 = vector.extract_strided_slice %56 {offsets = [0, 2, 0, 0], sizes = [1, 17, 20, 128], strides = [1, 1, 1, 1]} : vector<1x19x20x128xf32> to vector<1x17x20x128xf32>
    %59 = arith.maximumf %57, %58 : vector<1x17x20x128xf32>
    %60 = vector.extract_strided_slice %59 {offsets = [0, 0, 0, 0], sizes = [1, 16, 20, 128], strides = [1, 1, 1, 1]} : vector<1x17x20x128xf32> to vector<1x16x20x128xf32>
    %61 = vector.extract_strided_slice %59 {offsets = [0, 1, 0, 0], sizes = [1, 16, 20, 128], strides = [1, 1, 1, 1]} : vector<1x17x20x128xf32> to vector<1x16x20x128xf32>
    %62 = arith.maximumf %60, %61 : vector<1x16x20x128xf32>
    %63 = vector.extract_strided_slice %62 {offsets = [0, 0, 0, 0], sizes = [1, 16, 19, 128], strides = [1, 1, 1, 1]} : vector<1x16x20x128xf32> to vector<1x16x19x128xf32>
    %64 = vector.extract_strided_slice %62 {offsets = [0, 0, 1, 0], sizes = [1, 16, 19, 128], strides = [1, 1, 1, 1]} : vector<1x16x20x128xf32> to vector<1x16x19x128xf32>
    %65 = arith.maximumf %63, %64 : vector<1x16x19x128xf32>
    %66 = vector.extract_strided_slice %65 {offsets = [0, 0, 0, 0], sizes = [1, 16, 17, 128], strides = [1, 1, 1, 1]} : vector<1x16x19x128xf32> to vector<1x16x17x128xf32>
    %67 = vector.extract_strided_slice %65 {offsets = [0, 0, 2, 0], sizes = [1, 16, 17, 128], strides = [1, 1, 1, 1]} : vector<1x16x19x128xf32> to vector<1x16x17x128xf32>
    %68 = arith.maximumf %66, %67 : vector<1x16x17x128xf32>
    %69 = vector.extract_strided_slice %68 {offsets = [0, 0, 0, 0], sizes = [1, 16, 16, 128], strides = [1, 1, 1, 1]} : vector<1x16x17x128xf32> to vector<1x16x16x128xf32>
    %70 = vector.extract_strided_slice %68 {offsets = [0, 0, 1, 0], sizes = [1, 16, 16, 128], strides = [1, 1, 1, 1]} : vector<1x16x17x128xf32> to vector<1x16x16x128xf32>
    %71 = arith.maximumf %69, %70 : vector<1x16x16x128xf32>
    %72 = vector.shape_cast %71 : vector<1x16x16x128xf32> to vector<256x128xf32>
    %c256 = arith.constant 256 : index
    %c0_63 = arith.constant 0 : index
    %73 = vector.load %arg4[%c256, %c0_63] : memref<512x128xf32, #tpu.memory_space<vmem>>, vector<128x128xf32>
    %cst_64 = arith.constant dense<0.000000e+00> : vector<256x128xf32>
    %74 = tpu.matmul %72, %73, %cst_64 {dimension_numbers = #tpu.dot_dimension_numbers<[1], [0], [0], [1], [0, 0, 1, 1], [], []>} : vector<256x128xf32>, vector<128x128xf32>, vector<256x128xf32> -> vector<256x128xf32>
    %75 = arith.addf %51, %74 : vector<256x128xf32>
    %c0_65 = arith.constant 0 : index
    %c2_66 = arith.constant 2 : index
    %c2_67 = arith.constant 2 : index
    %c0_68 = arith.constant 0 : index
    %76 = vector.load %arg7[%c0_65, %c2_66, %c2_67, %c0_68] : memref<1x20x20x128xf32, #tpu.memory_space<vmem>>, vector<1x16x16x128xf32>
    tpu.vector_store %arg7[%c0_65, %c2_66, %c2_67, %c0_68], %71 {strides = array<i32>} : memref<1x20x20x128xf32, #tpu.memory_space<vmem>>, vector<1x16x16x128xf32>,
    %c0_69 = arith.constant 0 : index
    %c0_70 = arith.constant 0 : index
    %c0_71 = arith.constant 0 : index
    %c0_72 = arith.constant 0 : index
    %77 = vector.load %arg7[%c0_69, %c0_70, %c0_71, %c0_72] : memref<1x20x20x128xf32, #tpu.memory_space<vmem>>, vector<1x20x20x128xf32>
    %78 = vector.extract_strided_slice %77 {offsets = [0, 0, 0, 0], sizes = [1, 19, 20, 128], strides = [1, 1, 1, 1]} : vector<1x20x20x128xf32> to vector<1x19x20x128xf32>
    %79 = vector.extract_strided_slice %77 {offsets = [0, 1, 0, 0], sizes = [1, 19, 20, 128], strides = [1, 1, 1, 1]} : vector<1x20x20x128xf32> to vector<1x19x20x128xf32>
    %80 = arith.maximumf %78, %79 : vector<1x19x20x128xf32>
    %81 = vector.extract_strided_slice %80 {offsets = [0, 0, 0, 0], sizes = [1, 17, 20, 128], strides = [1, 1, 1, 1]} : vector<1x19x20x128xf32> to vector<1x17x20x128xf32>
    %82 = vector.extract_strided_slice %80 {offsets = [0, 2, 0, 0], sizes = [1, 17, 20, 128], strides = [1, 1, 1, 1]} : vector<1x19x20x128xf32> to vector<1x17x20x128xf32>
    %83 = arith.maximumf %81, %82 : vector<1x17x20x128xf32>
    %84 = vector.extract_strided_slice %83 {offsets = [0, 0, 0, 0], sizes = [1, 16, 20, 128], strides = [1, 1, 1, 1]} : vector<1x17x20x128xf32> to vector<1x16x20x128xf32>
    %85 = vector.extract_strided_slice %83 {offsets = [0, 1, 0, 0], sizes = [1, 16, 20, 128], strides = [1, 1, 1, 1]} : vector<1x17x20x128xf32> to vector<1x16x20x128xf32>
    %86 = arith.maximumf %84, %85 : vector<1x16x20x128xf32>
    %87 = vector.extract_strided_slice %86 {offsets = [0, 0, 0, 0], sizes = [1, 16, 19, 128], strides = [1, 1, 1, 1]} : vector<1x16x20x128xf32> to vector<1x16x19x128xf32>
    %88 = vector.extract_strided_slice %86 {offsets = [0, 0, 1, 0], sizes = [1, 16, 19, 128], strides = [1, 1, 1, 1]} : vector<1x16x20x128xf32> to vector<1x16x19x128xf32>
    %89 = arith.maximumf %87, %88 : vector<1x16x19x128xf32>
    %90 = vector.extract_strided_slice %89 {offsets = [0, 0, 0, 0], sizes = [1, 16, 17, 128], strides = [1, 1, 1, 1]} : vector<1x16x19x128xf32> to vector<1x16x17x128xf32>
    %91 = vector.extract_strided_slice %89 {offsets = [0, 0, 2, 0], sizes = [1, 16, 17, 128], strides = [1, 1, 1, 1]} : vector<1x16x19x128xf32> to vector<1x16x17x128xf32>
    %92 = arith.maximumf %90, %91 : vector<1x16x17x128xf32>
    %93 = vector.extract_strided_slice %92 {offsets = [0, 0, 0, 0], sizes = [1, 16, 16, 128], strides = [1, 1, 1, 1]} : vector<1x16x17x128xf32> to vector<1x16x16x128xf32>
    %94 = vector.extract_strided_slice %92 {offsets = [0, 0, 1, 0], sizes = [1, 16, 16, 128], strides = [1, 1, 1, 1]} : vector<1x16x17x128xf32> to vector<1x16x16x128xf32>
    %95 = arith.maximumf %93, %94 : vector<1x16x16x128xf32>
    %96 = vector.shape_cast %95 : vector<1x16x16x128xf32> to vector<256x128xf32>
    %c384 = arith.constant 384 : index
    %c0_73 = arith.constant 0 : index
    %97 = vector.load %arg4[%c384, %c0_73] : memref<512x128xf32, #tpu.memory_space<vmem>>, vector<128x128xf32>
    %cst_74 = arith.constant dense<0.000000e+00> : vector<256x128xf32>
    %98 = tpu.matmul %96, %97, %cst_74 {dimension_numbers = #tpu.dot_dimension_numbers<[1], [0], [0], [1], [0, 0, 1, 1], [], []>} : vector<256x128xf32>, vector<128x128xf32>, vector<256x128xf32> -> vector<256x128xf32>
    %99 = arith.addf %75, %98 : vector<256x128xf32>
    %c0_75 = arith.constant 0 : index
    %c0_76 = arith.constant 0 : index
    %100 = vector.load %arg5[%c0_75, %c0_76] : memref<1x128xf32, #tpu.memory_space<vmem>>, vector<1x128xf32>
    %101 = vector.broadcast %100 : vector<1x128xf32> to vector<256x128xf32>
    %102 = arith.addf %99, %101 : vector<256x128xf32>
    %cst_77 = arith.constant 5.000000e-01 : f32
    %103 = vector.broadcast %cst_77 : f32 to vector<256x128xf32>
    %104 = arith.mulf %103, %102 : vector<256x128xf32>
    %105 = math.tanh %104 : vector<256x128xf32>
    %cst_78 = arith.constant 5.000000e-01 : f32
    %106 = vector.broadcast %cst_78 : f32 to vector<256x128xf32>
    %107 = arith.mulf %106, %105 : vector<256x128xf32>
    %cst_79 = arith.constant 5.000000e-01 : f32
    %108 = vector.broadcast %cst_79 : f32 to vector<256x128xf32>
    %109 = arith.addf %107, %108 : vector<256x128xf32>
    %110 = arith.mulf %102, %109 : vector<256x128xf32>
    %111 = vector.shape_cast %110 : vector<256x128xf32> to vector<1x16x16x128xf32>
    %c0_80 = arith.constant 0 : index
    %c0_81 = arith.constant 0 : index
    %c0_82 = arith.constant 0 : index
    %c0_83 = arith.constant 0 : index
    %112 = vector.load %arg6[%c0_80, %c0_81, %c0_82, %c0_83] : memref<1x16x16x128xf32, #tpu.memory_space<vmem>>, vector<1x16x16x128xf32>
    tpu.vector_store %arg6[%c0_80, %c0_81, %c0_82, %c0_83], %111 {strides = array<i32>} : memref<1x16x16x128xf32, #tpu.memory_space<vmem>>, vector<1x16x16x128xf32>,
    return
  }
  func.func @transform_0(%arg0: i32) -> (i32, i32, i32, i32) {
    %c0_i32 = arith.constant 0 : i32
    %c0_i32_0 = arith.constant 0 : i32
    %c0_i32_1 = arith.constant 0 : i32
    %c0_i32_2 = arith.constant 0 : i32
    return %arg0, %c0_i32, %c0_i32_0, %c0_i32_1 : i32, i32, i32, i32
  }
  func.func @transform_1(%arg0: i32) -> (i32, i32) {
    %c0_i32 = arith.constant 0 : i32
    %c0_i32_0 = arith.constant 0 : i32
    %c0_i32_1 = arith.constant 0 : i32
    return %c0_i32, %c0_i32_0 : i32, i32
  }
  func.func @transform_2(%arg0: i32) -> (i32, i32) {
    %c0_i32 = arith.constant 0 : i32
    %c0_i32_0 = arith.constant 0 : i32
    %c0_i32_1 = arith.constant 0 : i32
    return %c0_i32, %c0_i32_0 : i32, i32
  }
  func.func @transform_3(%arg0: i32) -> (i32, i32) {
    %c0_i32 = arith.constant 0 : i32
    %c0_i32_0 = arith.constant 0 : i32
    %c0_i32_1 = arith.constant 0 : i32
    return %c0_i32, %c0_i32_0 : i32, i32
  }
  func.func @transform_4(%arg0: i32) -> (i32, i32) {
    %c0_i32 = arith.constant 0 : i32
    %c0_i32_0 = arith.constant 0 : i32
    %c0_i32_1 = arith.constant 0 : i32
    return %c0_i32, %c0_i32_0 : i32, i32
  }
  func.func @transform_5(%arg0: i32) -> (i32, i32, i32, i32) {
    %c0_i32 = arith.constant 0 : i32
    %c0_i32_0 = arith.constant 0 : i32
    %c0_i32_1 = arith.constant 0 : i32
    %c0_i32_2 = arith.constant 0 : i32
    return %arg0, %c0_i32, %c0_i32_0, %c0_i32_1 : i32, i32, i32, i32
  }
}

module attributes {stable_mosaic.version = 11 : i64} {
  func.func @kernel(%arg0: i32, %arg1: memref<1x16x16x8xf32, #tpu.memory_space<vmem>>, %arg2: memref<8x128xf32, #tpu.memory_space<vmem>>, %arg3: memref<1x128xf32, #tpu.memory_space<vmem>>, %arg4: memref<512x128xf32, #tpu.memory_space<vmem>>, %arg5: memref<1x128xf32, #tpu.memory_space<vmem>>, %arg6: memref<1x16x16x128xf32, #tpu.memory_space<vmem>>, %arg7: memref<1x20x20x128xf32, #tpu.memory_space<vmem>>, %arg8: memref<1x20x20x128xf32, #tpu.memory_space<vmem>>) attributes {dimension_semantics = [#tpu.dimension_semantics<parallel>], iteration_bounds = array<i64: 2>, scalar_prefetch = 0 : i64, scratch_operands = 2 : i64, tpu.core_type = #tpu.core_type<tc>, window_params = [{transform_indices = @transform_0, window_bounds = array<i64: 1, 16, 16, 8>}, {pipeline_mode = #tpu.pipeline_mode<synchronous>, transform_indices = @transform_1, window_bounds = array<i64: 8, 128>}, {pipeline_mode = #tpu.pipeline_mode<synchronous>, transform_indices = @transform_2, window_bounds = array<i64: 1, 128>}, {pipeline_mode = #tpu.pipeline_mode<synchronous>, transform_indices = @transform_3, window_bounds = array<i64: 512, 128>}, {pipeline_mode = #tpu.pipeline_mode<synchronous>, transform_indices = @transform_4, window_bounds = array<i64: 1, 128>}, {transform_indices = @transform_5, window_bounds = array<i64: 1, 16, 16, 128>}]} {
    %cst = arith.constant 0xFF800000 : f32
    %0 = vector.broadcast %cst : f32 to vector<1x2x20x128xf32>
    %cst_0 = arith.constant 0xFF800000 : f32
    %1 = vector.broadcast %cst_0 : f32 to vector<1x16x2x128xf32>
    %c0 = arith.constant 0 : index
    %c0_1 = arith.constant 0 : index
    %c0_2 = arith.constant 0 : index
    %c0_3 = arith.constant 0 : index
    %2 = vector.load %arg7[%c0, %c0_1, %c0_2, %c0_3] : memref<1x20x20x128xf32, #tpu.memory_space<vmem>>, vector<1x2x20x128xf32>
    tpu.vector_store %arg7[%c0, %c0_1, %c0_2, %c0_3], %0 {strides = array<i32>} : memref<1x20x20x128xf32, #tpu.memory_space<vmem>>, vector<1x2x20x128xf32>,
    %c0_4 = arith.constant 0 : index
    %c18 = arith.constant 18 : index
    %c0_5 = arith.constant 0 : index
    %c0_6 = arith.constant 0 : index
    %3 = vector.load %arg7[%c0_4, %c18, %c0_5, %c0_6] : memref<1x20x20x128xf32, #tpu.memory_space<vmem>>, vector<1x2x20x128xf32>
    tpu.vector_store %arg7[%c0_4, %c18, %c0_5, %c0_6], %0 {strides = array<i32>} : memref<1x20x20x128xf32, #tpu.memory_space<vmem>>, vector<1x2x20x128xf32>,
    %c0_7 = arith.constant 0 : index
    %c2 = arith.constant 2 : index
    %c0_8 = arith.constant 0 : index
    %c0_9 = arith.constant 0 : index
    %4 = vector.load %arg7[%c0_7, %c2, %c0_8, %c0_9] : memref<1x20x20x128xf32, #tpu.memory_space<vmem>>, vector<1x16x2x128xf32>
    tpu.vector_store %arg7[%c0_7, %c2, %c0_8, %c0_9], %1 {strides = array<i32>} : memref<1x20x20x128xf32, #tpu.memory_space<vmem>>, vector<1x16x2x128xf32>,
    %c0_10 = arith.constant 0 : index
    %c2_11 = arith.constant 2 : index
    %c18_12 = arith.constant 18 : index
    %c0_13 = arith.constant 0 : index
    %5 = vector.load %arg7[%c0_10, %c2_11, %c18_12, %c0_13] : memref<1x20x20x128xf32, #tpu.memory_space<vmem>>, vector<1x16x2x128xf32>
    tpu.vector_store %arg7[%c0_10, %c2_11, %c18_12, %c0_13], %1 {strides = array<i32>} : memref<1x20x20x128xf32, #tpu.memory_space<vmem>>, vector<1x16x2x128xf32>,
    %c0_14 = arith.constant 0 : index
    %c0_15 = arith.constant 0 : index
    %c0_16 = arith.constant 0 : index
    %c0_17 = arith.constant 0 : index
    %6 = vector.load %arg8[%c0_14, %c0_15, %c0_16, %c0_17] : memref<1x20x20x128xf32, #tpu.memory_space<vmem>>, vector<1x2x20x128xf32>
    tpu.vector_store %arg8[%c0_14, %c0_15, %c0_16, %c0_17], %0 {strides = array<i32>} : memref<1x20x20x128xf32, #tpu.memory_space<vmem>>, vector<1x2x20x128xf32>,
    %c0_18 = arith.constant 0 : index
    %c18_19 = arith.constant 18 : index
    %c0_20 = arith.constant 0 : index
    %c0_21 = arith.constant 0 : index
    %7 = vector.load %arg8[%c0_18, %c18_19, %c0_20, %c0_21] : memref<1x20x20x128xf32, #tpu.memory_space<vmem>>, vector<1x2x20x128xf32>
    tpu.vector_store %arg8[%c0_18, %c18_19, %c0_20, %c0_21], %0 {strides = array<i32>} : memref<1x20x20x128xf32, #tpu.memory_space<vmem>>, vector<1x2x20x128xf32>,
    %c0_22 = arith.constant 0 : index
    %c2_23 = arith.constant 2 : index
    %c0_24 = arith.constant 0 : index
    %c0_25 = arith.constant 0 : index
    %8 = vector.load %arg8[%c0_22, %c2_23, %c0_24, %c0_25] : memref<1x20x20x128xf32, #tpu.memory_space<vmem>>, vector<1x16x2x128xf32>
    tpu.vector_store %arg8[%c0_22, %c2_23, %c0_24, %c0_25], %1 {strides = array<i32>} : memref<1x20x20x128xf32, #tpu.memory_space<vmem>>, vector<1x16x2x128xf32>,
    %c0_26 = arith.constant 0 : index
    %c2_27 = arith.constant 2 : index
    %c18_28 = arith.constant 18 : index
    %c0_29 = arith.constant 0 : index
    %9 = vector.load %arg8[%c0_26, %c2_27, %c18_28, %c0_29] : memref<1x20x20x128xf32, #tpu.memory_space<vmem>>, vector<1x16x2x128xf32>
    tpu.vector_store %arg8[%c0_26, %c2_27, %c18_28, %c0_29], %1 {strides = array<i32>} : memref<1x20x20x128xf32, #tpu.memory_space<vmem>>, vector<1x16x2x128xf32>,
    %c0_30 = arith.constant 0 : index
    %c0_31 = arith.constant 0 : index
    %c0_32 = arith.constant 0 : index
    %c0_33 = arith.constant 0 : index
    %10 = vector.load %arg1[%c0_30, %c0_31, %c0_32, %c0_33] : memref<1x16x16x8xf32, #tpu.memory_space<vmem>>, vector<1x16x16x8xf32>
    %11 = vector.shape_cast %10 : vector<1x16x16x8xf32> to vector<256x8xf32>
    %c0_34 = arith.constant 0 : index
    %c0_35 = arith.constant 0 : index
    %12 = vector.load %arg2[%c0_34, %c0_35] : memref<8x128xf32, #tpu.memory_space<vmem>>, vector<8x128xf32>
    %cst_36 = arith.constant dense<0.000000e+00> : vector<256x128xf32>
    %13 = tpu.matmul %11, %12, %cst_36 {dimension_numbers = #tpu.dot_dimension_numbers<[1], [0], [0], [1], [0, 0, 1, 1], [], []>} : vector<256x8xf32>, vector<8x128xf32>, vector<256x128xf32> -> vector<256x128xf32>
    %c0_37 = arith.constant 0 : index
    %c0_38 = arith.constant 0 : index
    %14 = vector.load %arg3[%c0_37, %c0_38] : memref<1x128xf32, #tpu.memory_space<vmem>>, vector<1x128xf32>
    %15 = vector.broadcast %14 : vector<1x128xf32> to vector<256x128xf32>
    %16 = arith.addf %13, %15 : vector<256x128xf32>
    %cst_39 = arith.constant 5.000000e-01 : f32
    %17 = vector.broadcast %cst_39 : f32 to vector<256x128xf32>
    %18 = arith.mulf %17, %16 : vector<256x128xf32>
    %19 = math.tanh %18 : vector<256x128xf32>
    %cst_40 = arith.constant 5.000000e-01 : f32
    %20 = vector.broadcast %cst_40 : f32 to vector<256x128xf32>
    %21 = arith.mulf %20, %19 : vector<256x128xf32>
    %cst_41 = arith.constant 5.000000e-01 : f32
    %22 = vector.broadcast %cst_41 : f32 to vector<256x128xf32>
    %23 = arith.addf %21, %22 : vector<256x128xf32>
    %24 = arith.mulf %16, %23 : vector<256x128xf32>
    %c0_42 = arith.constant 0 : index
    %c0_43 = arith.constant 0 : index
    %25 = vector.load %arg4[%c0_42, %c0_43] : memref<512x128xf32, #tpu.memory_space<vmem>>, vector<128x128xf32>
    %cst_44 = arith.constant dense<0.000000e+00> : vector<256x128xf32>
    %26 = tpu.matmul %24, %25, %cst_44 {dimension_numbers = #tpu.dot_dimension_numbers<[1], [0], [0], [1], [0, 0, 1, 1], [], []>} : vector<256x128xf32>, vector<128x128xf32>, vector<256x128xf32> -> vector<256x128xf32>
    %27 = vector.shape_cast %24 : vector<256x128xf32> to vector<1x16x16x128xf32>
    %c0_45 = arith.constant 0 : index
    %c2_46 = arith.constant 2 : index
    %c2_47 = arith.constant 2 : index
    %c0_48 = arith.constant 0 : index
    %28 = vector.load %arg7[%c0_45, %c2_46, %c2_47, %c0_48] : memref<1x20x20x128xf32, #tpu.memory_space<vmem>>, vector<1x16x16x128xf32>
    tpu.vector_store %arg7[%c0_45, %c2_46, %c2_47, %c0_48], %27 {strides = array<i32>} : memref<1x20x20x128xf32, #tpu.memory_space<vmem>>, vector<1x16x16x128xf32>,
    %c0_49 = arith.constant 0 : index
    %c0_50 = arith.constant 0 : index
    %c0_51 = arith.constant 0 : index
    %c0_52 = arith.constant 0 : index
    %29 = vector.load %arg7[%c0_49, %c0_50, %c0_51, %c0_52] : memref<1x20x20x128xf32, #tpu.memory_space<vmem>>, vector<1x20x20x128xf32>
    %30 = vector.extract_strided_slice %29 {offsets = [0, 0, 0, 0], sizes = [1, 19, 20, 128], strides = [1, 1, 1, 1]} : vector<1x20x20x128xf32> to vector<1x19x20x128xf32>
    %31 = vector.extract_strided_slice %29 {offsets = [0, 1, 0, 0], sizes = [1, 19, 20, 128], strides = [1, 1, 1, 1]} : vector<1x20x20x128xf32> to vector<1x19x20x128xf32>
    %32 = arith.maximumf %30, %31 : vector<1x19x20x128xf32>
    %33 = vector.extract_strided_slice %32 {offsets = [0, 0, 0, 0], sizes = [1, 17, 20, 128], strides = [1, 1, 1, 1]} : vector<1x19x20x128xf32> to vector<1x17x20x128xf32>
    %34 = vector.extract_strided_slice %32 {offsets = [0, 2, 0, 0], sizes = [1, 17, 20, 128], strides = [1, 1, 1, 1]} : vector<1x19x20x128xf32> to vector<1x17x20x128xf32>
    %35 = arith.maximumf %33, %34 : vector<1x17x20x128xf32>
    %36 = vector.extract_strided_slice %35 {offsets = [0, 0, 0, 0], sizes = [1, 16, 20, 128], strides = [1, 1, 1, 1]} : vector<1x17x20x128xf32> to vector<1x16x20x128xf32>
    %37 = vector.extract_strided_slice %35 {offsets = [0, 1, 0, 0], sizes = [1, 16, 20, 128], strides = [1, 1, 1, 1]} : vector<1x17x20x128xf32> to vector<1x16x20x128xf32>
    %38 = arith.maximumf %36, %37 : vector<1x16x20x128xf32>
    %39 = vector.extract_strided_slice %38 {offsets = [0, 0, 0, 0], sizes = [1, 16, 19, 128], strides = [1, 1, 1, 1]} : vector<1x16x20x128xf32> to vector<1x16x19x128xf32>
    %40 = vector.extract_strided_slice %38 {offsets = [0, 0, 1, 0], sizes = [1, 16, 19, 128], strides = [1, 1, 1, 1]} : vector<1x16x20x128xf32> to vector<1x16x19x128xf32>
    %41 = arith.maximumf %39, %40 : vector<1x16x19x128xf32>
    %42 = vector.extract_strided_slice %41 {offsets = [0, 0, 0, 0], sizes = [1, 16, 17, 128], strides = [1, 1, 1, 1]} : vector<1x16x19x128xf32> to vector<1x16x17x128xf32>
    %43 = vector.extract_strided_slice %41 {offsets = [0, 0, 2, 0], sizes = [1, 16, 17, 128], strides = [1, 1, 1, 1]} : vector<1x16x19x128xf32> to vector<1x16x17x128xf32>
    %44 = arith.maximumf %42, %43 : vector<1x16x17x128xf32>
    %45 = vector.extract_strided_slice %44 {offsets = [0, 0, 0, 0], sizes = [1, 16, 16, 128], strides = [1, 1, 1, 1]} : vector<1x16x17x128xf32> to vector<1x16x16x128xf32>
    %46 = vector.extract_strided_slice %44 {offsets = [0, 0, 1, 0], sizes = [1, 16, 16, 128], strides = [1, 1, 1, 1]} : vector<1x16x17x128xf32> to vector<1x16x16x128xf32>
    %47 = arith.maximumf %45, %46 : vector<1x16x16x128xf32>
    %48 = vector.shape_cast %47 : vector<1x16x16x128xf32> to vector<256x128xf32>
    %c128 = arith.constant 128 : index
    %c0_53 = arith.constant 0 : index
    %49 = vector.load %arg4[%c128, %c0_53] : memref<512x128xf32, #tpu.memory_space<vmem>>, vector<128x128xf32>
    %cst_54 = arith.constant dense<0.000000e+00> : vector<256x128xf32>
    %50 = tpu.matmul %48, %49, %cst_54 {dimension_numbers = #tpu.dot_dimension_numbers<[1], [0], [0], [1], [0, 0, 1, 1], [], []>} : vector<256x128xf32>, vector<128x128xf32>, vector<256x128xf32> -> vector<256x128xf32>
    %51 = arith.addf %26, %50 : vector<256x128xf32>
    %c0_55 = arith.constant 0 : index
    %c2_56 = arith.constant 2 : index
    %c2_57 = arith.constant 2 : index
    %c0_58 = arith.constant 0 : index
    %52 = vector.load %arg8[%c0_55, %c2_56, %c2_57, %c0_58] : memref<1x20x20x128xf32, #tpu.memory_space<vmem>>, vector<1x16x16x128xf32>
    tpu.vector_store %arg8[%c0_55, %c2_56, %c2_57, %c0_58], %47 {strides = array<i32>} : memref<1x20x20x128xf32, #tpu.memory_space<vmem>>, vector<1x16x16x128xf32>,
    %c0_59 = arith.constant 0 : index
    %c0_60 = arith.constant 0 : index
    %c0_61 = arith.constant 0 : index
    %c0_62 = arith.constant 0 : index
    %53 = vector.load %arg8[%c0_59, %c0_60, %c0_61, %c0_62] : memref<1x20x20x128xf32, #tpu.memory_space<vmem>>, vector<1x20x20x128xf32>
    %54 = vector.extract_strided_slice %53 {offsets = [0, 0, 0, 0], sizes = [1, 19, 20, 128], strides = [1, 1, 1, 1]} : vector<1x20x20x128xf32> to vector<1x19x20x128xf32>
    %55 = vector.extract_strided_slice %53 {offsets = [0, 1, 0, 0], sizes = [1, 19, 20, 128], strides = [1, 1, 1, 1]} : vector<1x20x20x128xf32> to vector<1x19x20x128xf32>
    %56 = arith.maximumf %54, %55 : vector<1x19x20x128xf32>
    %57 = vector.extract_strided_slice %56 {offsets = [0, 0, 0, 0], sizes = [1, 17, 20, 128], strides = [1, 1, 1, 1]} : vector<1x19x20x128xf32> to vector<1x17x20x128xf32>
    %58 = vector.extract_strided_slice %56 {offsets = [0, 2, 0, 0], sizes = [1, 17, 20, 128], strides = [1, 1, 1, 1]} : vector<1x19x20x128xf32> to vector<1x17x20x128xf32>
    %59 = arith.maximumf %57, %58 : vector<1x17x20x128xf32>
    %60 = vector.extract_strided_slice %59 {offsets = [0, 0, 0, 0], sizes = [1, 16, 20, 128], strides = [1, 1, 1, 1]} : vector<1x17x20x128xf32> to vector<1x16x20x128xf32>
    %61 = vector.extract_strided_slice %59 {offsets = [0, 1, 0, 0], sizes = [1, 16, 20, 128], strides = [1, 1, 1, 1]} : vector<1x17x20x128xf32> to vector<1x16x20x128xf32>
    %62 = arith.maximumf %60, %61 : vector<1x16x20x128xf32>
    %63 = vector.extract_strided_slice %62 {offsets = [0, 0, 0, 0], sizes = [1, 16, 19, 128], strides = [1, 1, 1, 1]} : vector<1x16x20x128xf32> to vector<1x16x19x128xf32>
    %64 = vector.extract_strided_slice %62 {offsets = [0, 0, 1, 0], sizes = [1, 16, 19, 128], strides = [1, 1, 1, 1]} : vector<1x16x20x128xf32> to vector<1x16x19x128xf32>
    %65 = arith.maximumf %63, %64 : vector<1x16x19x128xf32>
    %66 = vector.extract_strided_slice %65 {offsets = [0, 0, 0, 0], sizes = [1, 16, 17, 128], strides = [1, 1, 1, 1]} : vector<1x16x19x128xf32> to vector<1x16x17x128xf32>
    %67 = vector.extract_strided_slice %65 {offsets = [0, 0, 2, 0], sizes = [1, 16, 17, 128], strides = [1, 1, 1, 1]} : vector<1x16x19x128xf32> to vector<1x16x17x128xf32>
    %68 = arith.maximumf %66, %67 : vector<1x16x17x128xf32>
    %69 = vector.extract_strided_slice %68 {offsets = [0, 0, 0, 0], sizes = [1, 16, 16, 128], strides = [1, 1, 1, 1]} : vector<1x16x17x128xf32> to vector<1x16x16x128xf32>
    %70 = vector.extract_strided_slice %68 {offsets = [0, 0, 1, 0], sizes = [1, 16, 16, 128], strides = [1, 1, 1, 1]} : vector<1x16x17x128xf32> to vector<1x16x16x128xf32>
    %71 = arith.maximumf %69, %70 : vector<1x16x16x128xf32>
    %72 = vector.shape_cast %71 : vector<1x16x16x128xf32> to vector<256x128xf32>
    %c256 = arith.constant 256 : index
    %c0_63 = arith.constant 0 : index
    %73 = vector.load %arg4[%c256, %c0_63] : memref<512x128xf32, #tpu.memory_space<vmem>>, vector<128x128xf32>
    %cst_64 = arith.constant dense<0.000000e+00> : vector<256x128xf32>
    %74 = tpu.matmul %72, %73, %cst_64 {dimension_numbers = #tpu.dot_dimension_numbers<[1], [0], [0], [1], [0, 0, 1, 1], [], []>} : vector<256x128xf32>, vector<128x128xf32>, vector<256x128xf32> -> vector<256x128xf32>
    %75 = arith.addf %51, %74 : vector<256x128xf32>
    %c0_65 = arith.constant 0 : index
    %c2_66 = arith.constant 2 : index
    %c2_67 = arith.constant 2 : index
    %c0_68 = arith.constant 0 : index
    %76 = vector.load %arg7[%c0_65, %c2_66, %c2_67, %c0_68] : memref<1x20x20x128xf32, #tpu.memory_space<vmem>>, vector<1x16x16x128xf32>
    tpu.vector_store %arg7[%c0_65, %c2_66, %c2_67, %c0_68], %71 {strides = array<i32>} : memref<1x20x20x128xf32, #tpu.memory_space<vmem>>, vector<1x16x16x128xf32>,
    %c0_69 = arith.constant 0 : index
    %c0_70 = arith.constant 0 : index
    %c0_71 = arith.constant 0 : index
    %c0_72 = arith.constant 0 : index
    %77 = vector.load %arg7[%c0_69, %c0_70, %c0_71, %c0_72] : memref<1x20x20x128xf32, #tpu.memory_space<vmem>>, vector<1x20x20x128xf32>
    %78 = vector.extract_strided_slice %77 {offsets = [0, 0, 0, 0], sizes = [1, 19, 20, 128], strides = [1, 1, 1, 1]} : vector<1x20x20x128xf32> to vector<1x19x20x128xf32>
    %79 = vector.extract_strided_slice %77 {offsets = [0, 1, 0, 0], sizes = [1, 19, 20, 128], strides = [1, 1, 1, 1]} : vector<1x20x20x128xf32> to vector<1x19x20x128xf32>
    %80 = arith.maximumf %78, %79 : vector<1x19x20x128xf32>
    %81 = vector.extract_strided_slice %80 {offsets = [0, 0, 0, 0], sizes = [1, 17, 20, 128], strides = [1, 1, 1, 1]} : vector<1x19x20x128xf32> to vector<1x17x20x128xf32>
    %82 = vector.extract_strided_slice %80 {offsets = [0, 2, 0, 0], sizes = [1, 17, 20, 128], strides = [1, 1, 1, 1]} : vector<1x19x20x128xf32> to vector<1x17x20x128xf32>
    %83 = arith.maximumf %81, %82 : vector<1x17x20x128xf32>
    %84 = vector.extract_strided_slice %83 {offsets = [0, 0, 0, 0], sizes = [1, 16, 20, 128], strides = [1, 1, 1, 1]} : vector<1x17x20x128xf32> to vector<1x16x20x128xf32>
    %85 = vector.extract_strided_slice %83 {offsets = [0, 1, 0, 0], sizes = [1, 16, 20, 128], strides = [1, 1, 1, 1]} : vector<1x17x20x128xf32> to vector<1x16x20x128xf32>
    %86 = arith.maximumf %84, %85 : vector<1x16x20x128xf32>
    %87 = vector.extract_strided_slice %86 {offsets = [0, 0, 0, 0], sizes = [1, 16, 19, 128], strides = [1, 1, 1, 1]} : vector<1x16x20x128xf32> to vector<1x16x19x128xf32>
    %88 = vector.extract_strided_slice %86 {offsets = [0, 0, 1, 0], sizes = [1, 16, 19, 128], strides = [1, 1, 1, 1]} : vector<1x16x20x128xf32> to vector<1x16x19x128xf32>
    %89 = arith.maximumf %87, %88 : vector<1x16x19x128xf32>
    %90 = vector.extract_strided_slice %89 {offsets = [0, 0, 0, 0], sizes = [1, 16, 17, 128], strides = [1, 1, 1, 1]} : vector<1x16x19x128xf32> to vector<1x16x17x128xf32>
    %91 = vector.extract_strided_slice %89 {offsets = [0, 0, 2, 0], sizes = [1, 16, 17, 128], strides = [1, 1, 1, 1]} : vector<1x16x19x128xf32> to vector<1x16x17x128xf32>
    %92 = arith.maximumf %90, %91 : vector<1x16x17x128xf32>
    %93 = vector.extract_strided_slice %92 {offsets = [0, 0, 0, 0], sizes = [1, 16, 16, 128], strides = [1, 1, 1, 1]} : vector<1x16x17x128xf32> to vector<1x16x16x128xf32>
    %94 = vector.extract_strided_slice %92 {offsets = [0, 0, 1, 0], sizes = [1, 16, 16, 128], strides = [1, 1, 1, 1]} : vector<1x16x17x128xf32> to vector<1x16x16x128xf32>
    %95 = arith.maximumf %93, %94 : vector<1x16x16x128xf32>
    %96 = vector.shape_cast %95 : vector<1x16x16x128xf32> to vector<256x128xf32>
    %c384 = arith.constant 384 : index
    %c0_73 = arith.constant 0 : index
    %97 = vector.load %arg4[%c384, %c0_73] : memref<512x128xf32, #tpu.memory_space<vmem>>, vector<128x128xf32>
    %cst_74 = arith.constant dense<0.000000e+00> : vector<256x128xf32>
    %98 = tpu.matmul %96, %97, %cst_74 {dimension_numbers = #tpu.dot_dimension_numbers<[1], [0], [0], [1], [0, 0, 1, 1], [], []>} : vector<256x128xf32>, vector<128x128xf32>, vector<256x128xf32> -> vector<256x128xf32>
    %99 = arith.addf %75, %98 : vector<256x128xf32>
    %c0_75 = arith.constant 0 : index
    %c0_76 = arith.constant 0 : index
    %100 = vector.load %arg5[%c0_75, %c0_76] : memref<1x128xf32, #tpu.memory_space<vmem>>, vector<1x128xf32>
    %101 = vector.broadcast %100 : vector<1x128xf32> to vector<256x128xf32>
    %102 = arith.addf %99, %101 : vector<256x128xf32>
    %cst_77 = arith.constant 5.000000e-01 : f32
    %103 = vector.broadcast %cst_77 : f32 to vector<256x128xf32>
    %104 = arith.mulf %103, %102 : vector<256x128xf32>
    %105 = math.tanh %104 : vector<256x128xf32>
    %cst_78 = arith.constant 5.000000e-01 : f32
    %106 = vector.broadcast %cst_78 : f32 to vector<256x128xf32>
    %107 = arith.mulf %106, %105 : vector<256x128xf32>
    %cst_79 = arith.constant 5.000000e-01 : f32
    %108 = vector.broadcast %cst_79 : f32 to vector<256x128xf32>
    %109 = arith.addf %107, %108 : vector<256x128xf32>
    %110 = arith.mulf %102, %109 : vector<256x128xf32>
    %111 = vector.shape_cast %110 : vector<256x128xf32> to vector<1x16x16x128xf32>
    %c0_80 = arith.constant 0 : index
    %c0_81 = arith.constant 0 : index
    %c0_82 = arith.constant 0 : index
    %c0_83 = arith.constant 0 : index
    %112 = vector.load %arg6[%c0_80, %c0_81, %c0_82, %c0_83] : memref<1x16x16x128xf32, #tpu.memory_space<vmem>>, vector<1x16x16x128xf32>
    tpu.vector_store %arg6[%c0_80, %c0_81, %c0_82, %c0_83], %111 {strides = array<i32>} : memref<1x16x16x128xf32, #tpu.memory_space<vmem>>, vector<1x16x16x128xf32>,
    return
  }
  func.func @transform_0(%arg0: i32) -> (i32, i32, i32, i32) {
    %c0_i32 = arith.constant 0 : i32
    %c0_i32_0 = arith.constant 0 : i32
    %c0_i32_1 = arith.constant 0 : i32
    %c0_i32_2 = arith.constant 0 : i32
    return %arg0, %c0_i32, %c0_i32_0, %c0_i32_1 : i32, i32, i32, i32
  }
  func.func @transform_1(%arg0: i32) -> (i32, i32) {
    %c0_i32 = arith.constant 0 : i32
    %c0_i32_0 = arith.constant 0 : i32
    %c0_i32_1 = arith.constant 0 : i32
    return %c0_i32, %c0_i32_0 : i32, i32
  }
  func.func @transform_2(%arg0: i32) -> (i32, i32) {
    %c0_i32 = arith.constant 0 : i32
    %c0_i32_0 = arith.constant 0 : i32
    %c0_i32_1 = arith.constant 0 : i32
    return %c0_i32, %c0_i32_0 : i32, i32
  }
  func.func @transform_3(%arg0: i32) -> (i32, i32) {
    %c0_i32 = arith.constant 0 : i32
    %c0_i32_0 = arith.constant 0 : i32
    %c0_i32_1 = arith.constant 0 : i32
    return %c0_i32, %c0_i32_0 : i32, i32
  }
  func.func @transform_4(%arg0: i32) -> (i32, i32) {
    %c0_i32 = arith.constant 0 : i32
    %c0_i32_0 = arith.constant 0 : i32
    %c0_i32_1 = arith.constant 0 : i32
    return %c0_i32, %c0_i32_0 : i32, i32
  }
  func.func @transform_5(%arg0: i32) -> (i32, i32, i32, i32) {
    %c0_i32 = arith.constant 0 : i32
    %c0_i32_0 = arith.constant 0 : i32
    %c0_i32_1 = arith.constant 0 : i32
    %c0_i32_2 = arith.constant 0 : i32
    return %arg0, %c0_i32, %c0_i32_0, %c0_i32_1 : i32, i32, i32, i32
  }
}

</mosaic_0001>

<llo_original>
// kernel: tpu_custom_call.1
$region0: #{tpu_custom_call.1}
  #allocation0 [shape = 'u32[]', space=smem, size = 0x4, offset = 0x4, fixed_abs, tag = 'smem constant byte address 0x4 - core index']
  #allocation1 [shape = 'u32[144,128]{1,0:T(1,128)}', space=vmem, size = 0x12000, scoped, tag = 'internal scratch']
  #allocation2 [shape = 'f32[1,20,20,128]{3,2,1,0:T(8,128)}', space=vmem, size = 0x3c000, scoped, tag = 'scratch operand']
  #allocation3 [shape = 'f32[1,20,20,128]{3,2,1,0:T(8,128)}', space=vmem, size = 0x3c000, scoped, tag = 'scratch operand']
  %s0 = inlined_call_operand.vmem [shape: f32[2,16,16,8], index: 0, kind: input, shape index: {}]
  %s1 = inlined_call_operand.vmem [shape: f32[8,128], index: 1, kind: input, shape index: {}]
  %s2 = inlined_call_operand.vmem [shape: f32[1,128], index: 2, kind: input, shape index: {}]
  %s3 = inlined_call_operand.vmem [shape: f32[512,128], index: 3, kind: input, shape index: {}]
  %s4 = inlined_call_operand.vmem [shape: f32[1,128], index: 4, kind: input, shape index: {}]
  %s5 = inlined_call_operand.hbm [shape: f32[2,16,16,128], index: 5, kind: output, shape index: {}]
  %s6 = sld [smem:[#allocation0]]
  $region53: #{tpu_custom_call.1} parent=0
    _
  %s8 = ssub.s32 1, %s6
  %s9 = scalar_select 0, %s8, %s6
  $region1: #{tpu_custom_call.1} parent=0
    #allocation4 [shape = 'u8[262144]{0}', space=vmem, size = 0x40000, scoped, tag = 'output window, operand 0']
    #allocation5 [shape = 's32[2]{0}', space=sflag, size = 0x8, scoped, tag = 'scoped memory for tpu_custom_call.1']
    %10 = vsyncpa [#allocation5], 0
    %s11 = scalar_lea.sflag [#allocation5], 1
    %12 = vsyncpa %s11, 0
    loop: start=0, step=1, limit=4
    $region2: #{tpu_custom_call.1} parent=1 // loop_pre_header
      _
    $region3: #{tpu_custom_call.1} parent=1 // loop_header
      %s14 = sphi 0, %s18
      %p15 = scmp.ge.s32.totalorder %s14, 4
      %s24 = sphi 0, %s26
      %s27 = sphi 0, %s24
      %s28 = sphi 0, %s27
      %s44 = sphi 0, %s28
      %s48 = sphi 0, %s48
      %s50 = sphi 0, %s48
      %s51 = sphi 0, %s50
      %s65 = sphi 0, %s51
      %s69 = sphi 0, %s69
      %s71 = sphi 0, %s69
      %s72 = sphi 0, %s71
      %s86 = sphi 0, %s72
      %s90 = sphi 0, %s90
      %s92 = sphi 0, %s90
      %s93 = sphi 0, %s92
      %s107 = sphi 0, %s93
      %s111 = sphi 0, %s111
      %s113 = sphi 0, %s111
      %s114 = sphi 0, %s113
      %s128 = sphi 0, %s114
      %s134 = sphi 0, %s136
      %s137 = sphi 0, %s134
      %s138 = sphi 0, %s137
      %s154 = sphi 0, %s138
    $region4: #{tpu_custom_call.1} parent=1 // loop_header_branch
      %17 = sbr.rel (%p15) target = $region8
    $region5: #{tpu_custom_call.1} parent=1 // loop_body
      %s19 = ssub.s32 %s14, 1
      %s20 = ssub.s32 %s14, 2
      %s21 = sadd.s32 %s14, 1
      %s22 = ssub.s32 %s14, %s21
      %p23 = scmp.eq.s32.totalorder %s22, 0
      %s25 = sadd.s32 %s24, 1
      %s26 = scalar_select %p23, %s24, %s25
      %p29 = pneg %p23
      %p30 = scmp.eq.s32.totalorder %s14, 1
      %p31 = por %p29, %p30
      %p32 = scmp.ne.s32.totalorder %s24, %s27
      %p33 = scmp.eq.s32.totalorder %s14, 0
      %p34 = por %p32, %p33
      %p35 = scmp.ne.s32.totalorder %s24, %s27
      %p36 = scmp.eq.s32.totalorder %s19, 1
      %p37 = por %p35, %p36
      %p38 = scmp.ne.s32.totalorder %s27, %s28
      %p39 = scmp.eq.s32.totalorder %s19, 0
      %p40 = por %p38, %p39
      %p41 = scmp.ne.s32.totalorder %s27, %s28
      %p42 = scmp.eq.s32.totalorder %s20, 1
      %p43 = por %p41, %p42
      %p45 = scmp.ne.s32.totalorder %s28, %s44
      %p46 = scmp.eq.s32.totalorder %s20, 0
      %p47 = por %p45, %p46
      %s49 = sadd.s32 %s48, 1
      %p52 = scmp.eq.s32.totalorder %s14, 1
      %p53 = scmp.ne.s32.totalorder %s48, %s50
      %p54 = scmp.eq.s32.totalorder %s14, 0
      %p55 = por %p53, %p54
      %p56 = scmp.ne.s32.totalorder %s48, %s50
      %p57 = scmp.eq.s32.totalorder %s19, 1
      %p58 = por %p56, %p57
      %p59 = scmp.ne.s32.totalorder %s50, %s51
      %p60 = scmp.eq.s32.totalorder %s19, 0
      %p61 = por %p59, %p60
      %p62 = scmp.ne.s32.totalorder %s50, %s51
      %p63 = scmp.eq.s32.totalorder %s20, 1
      %p64 = por %p62, %p63
      %p66 = scmp.ne.s32.totalorder %s51, %s65
      %p67 = scmp.eq.s32.totalorder %s20, 0
      %p68 = por %p66, %p67
      %s70 = sadd.s32 %s69, 1
      %p73 = scmp.eq.s32.totalorder %s14, 1
      %p74 = scmp.ne.s32.totalorder %s69, %s71
      %p75 = scmp.eq.s32.totalorder %s14, 0
      %p76 = por %p74, %p75
      %p77 = scmp.ne.s32.totalorder %s69, %s71
      %p78 = scmp.eq.s32.totalorder %s19, 1
      %p79 = por %p77, %p78
      %p80 = scmp.ne.s32.totalorder %s71, %s72
      %p81 = scmp.eq.s32.totalorder %s19, 0
      %p82 = por %p80, %p81
      %p83 = scmp.ne.s32.totalorder %s71, %s72
      %p84 = scmp.eq.s32.totalorder %s20, 1
      %p85 = por %p83, %p84
      %p87 = scmp.ne.s32.totalorder %s72, %s86
      %p88 = scmp.eq.s32.totalorder %s20, 0
      %p89 = por %p87, %p88
      %s91 = sadd.s32 %s90, 1
      %p94 = scmp.eq.s32.totalorder %s14, 1
      %p95 = scmp.ne.s32.totalorder %s90, %s92
      %p96 = scmp.eq.s32.totalorder %s14, 0
      %p97 = por %p95, %p96
      %p98 = scmp.ne.s32.totalorder %s90, %s92
      %p99 = scmp.eq.s32.totalorder %s19, 1
      %p100 = por %p98, %p99
      %p101 = scmp.ne.s32.totalorder %s92, %s93
      %p102 = scmp.eq.s32.totalorder %s19, 0
      %p103 = por %p101, %p102
      %p104 = scmp.ne.s32.totalorder %s92, %s93
      %p105 = scmp.eq.s32.totalorder %s20, 1
      %p106 = por %p104, %p105
      %p108 = scmp.ne.s32.totalorder %s93, %s107
      %p109 = scmp.eq.s32.totalorder %s20, 0
      %p110 = por %p108, %p109
      %s112 = sadd.s32 %s111, 1
      %p115 = scmp.eq.s32.totalorder %s14, 1
      %p116 = scmp.ne.s32.totalorder %s111, %s113
      %p117 = scmp.eq.s32.totalorder %s14, 0
      %p118 = por %p116, %p117
      %p119 = scmp.ne.s32.totalorder %s111, %s113
      %p120 = scmp.eq.s32.totalorder %s19, 1
      %p121 = por %p119, %p120
      %p122 = scmp.ne.s32.totalorder %s113, %s114
      %p123 = scmp.eq.s32.totalorder %s19, 0
      %p124 = por %p122, %p123
      %p125 = scmp.ne.s32.totalorder %s113, %s114
      %p126 = scmp.eq.s32.totalorder %s20, 1
      %p127 = por %p125, %p126
      %p129 = scmp.ne.s32.totalorder %s114, %s128
      %p130 = scmp.eq.s32.totalorder %s20, 0
      %p131 = por %p129, %p130
      %s132 = ssub.s32 %s14, %s21
      %p133 = scmp.eq.s32.totalorder %s132, 0
      %s135 = sadd.s32 %s134, 1
      %s136 = scalar_select %p133, %s134, %s135
      %p139 = pneg %p133
      %p140 = scmp.eq.s32.totalorder %s14, 1
      %p141 = por %p139, %p140
      %p142 = scmp.ne.s32.totalorder %s134, %s137
      %p143 = scmp.eq.s32.totalorder %s14, 0
      %p144 = por %p142, %p143
      %p145 = scmp.ne.s32.totalorder %s134, %s137
      %p146 = scmp.eq.s32.totalorder %s19, 1
      %p147 = por %p145, %p146
      %p148 = scmp.ne.s32.totalorder %s137, %s138
      %p149 = scmp.eq.s32.totalorder %s19, 0
      %p150 = por %p148, %p149
      %p151 = scmp.ne.s32.totalorder %s137, %s138
      %p152 = scmp.eq.s32.totalorder %s20, 1
      %p153 = por %p151, %p152
      %p155 = scmp.ne.s32.totalorder %s138, %s154
      %p156 = scmp.eq.s32.totalorder %s20, 0
      %p157 = por %p155, %p156
      %p158 = scmp.le.s32.totalorder 1, %s14
      %p159 = scmp.lt.s32.totalorder %s14, 3
      %p160 = pnand %p158, %p159
      %p161 = pneg %p160
      // Predicated region
      $region9: #{tpu_custom_call.1} parent=5 // pred_check
        _
      $region10: #{tpu_custom_call.1} parent=5 // pred_check_branch
        %163 = sbr.rel (%p160) target = $region12
      $region11: #{tpu_custom_call.1} parent=5 // pred_region
        %s164 = ssub.s32 %s14, 1
        // Predicated region
        $region13: #{tpu_custom_call.1} parent=11 // pred_check
          %p165 = pneg %p61
        $region14: #{tpu_custom_call.1} parent=11 // pred_check_branch
          %167 = sbr.rel (%p165) target = $region16
        $region15: #{tpu_custom_call.1} parent=11 // pred_region
          _
        $region16: #{tpu_custom_call.1} parent=11 // pred_fallthru
          _
        // Predicated region
        $region17: #{tpu_custom_call.1} parent=11 // pred_check
          %p168 = pneg %p82
        $region18: #{tpu_custom_call.1} parent=11 // pred_check_branch
          %170 = sbr.rel (%p168) target = $region20
        $region19: #{tpu_custom_call.1} parent=11 // pred_region
          _
        $region20: #{tpu_custom_call.1} parent=11 // pred_fallthru
          _
        // Predicated region
        $region21: #{tpu_custom_call.1} parent=11 // pred_check
          %p171 = pneg %p103
        $region22: #{tpu_custom_call.1} parent=11 // pred_check_branch
          %173 = sbr.rel (%p171) target = $region24
        $region23: #{tpu_custom_call.1} parent=11 // pred_region
          _
        $region24: #{tpu_custom_call.1} parent=11 // pred_fallthru
          _
        // Predicated region
        $region25: #{tpu_custom_call.1} parent=11 // pred_check
          %p174 = pneg %p124
        $region26: #{tpu_custom_call.1} parent=11 // pred_check_branch
          %176 = sbr.rel (%p174) target = $region28
        $region27: #{tpu_custom_call.1} parent=11 // pred_region
          _
        $region28: #{tpu_custom_call.1} parent=11 // pred_fallthru
          _
      $region12: #{tpu_custom_call.1} parent=5 // pred_fallthru
        _
      %p177 = scmp.lt.s32.totalorder %s14, 2
      // Predicated region
      $region29: #{tpu_custom_call.1} parent=5 // pred_check
        %p178 = pneg %p177
      $region30: #{tpu_custom_call.1} parent=5 // pred_check_branch
        %180 = sbr.rel (%p178) target = $region32
      $region31: #{tpu_custom_call.1} parent=5 // pred_region
        // Predicated region
        $region33: #{tpu_custom_call.1} parent=31 // pred_check
          %p181 = pneg %p34
        $region34: #{tpu_custom_call.1} parent=31 // pred_check_branch
          %183 = sbr.rel (%p181) target = $region36
        $region35: #{tpu_custom_call.1} parent=31 // pred_region
          %p184 = scmp.lt.s32.totalorder %s14, 1
          %s185 = scalar_select %p184, %s14, 1
          %s186 = smul.addr %s185, 32
          %s187 = smul.addr %s186, 8
          %s188 = scalar_lea.vmem %s0, %s187
        $region36: #{tpu_custom_call.1} parent=31 // pred_fallthru
          _
      $region32: #{tpu_custom_call.1} parent=5 // pred_fallthru
        _
      %p189 = scmp.le.s32.totalorder 1, %s14
      %p190 = scmp.lt.s32.totalorder %s14, 3
      %p191 = pnand %p189, %p190
      %p192 = pneg %p191
      // Predicated region
      $region37: #{tpu_custom_call.1} parent=5 // pred_check
        _
      $region38: #{tpu_custom_call.1} parent=5 // pred_check_branch
        %194 = sbr.rel (%p191) target = $region40
      $region39: #{tpu_custom_call.1} parent=5 // pred_region
        %s195 = ssub.s32 %s14, 1
        %p196 = scmp.lt.s32.totalorder %s19, 1
        %s197 = scalar_select %p196, %s19, 1
        %s198 = smul.addr %s197, 32
        %s199 = smul.addr %s198, 8
        %s200 = scalar_lea.vmem %s0, %s199
        %p201 = pneg %p40
        %p202 = pneg %p37
        %p203 = pneg %p61
        %p204 = pneg %p58
        %p205 = pneg %p82
        %p206 = pneg %p79
        %p207 = pneg %p103
        %p208 = pneg %p100
        %p209 = pneg %p124
        %p210 = pneg %p121
        %p211 = pneg %p150
        %p212 = pneg %p147
        %s213 = sand.u32 %s137, 1
        %s214 = scalar_lea.sflag [#allocation5], %s213
        %s215 = sand.u32 %s137, 1
        %s216 = smul.addr %s215, 256
        %s217 = scalar_lea.vmem [#allocation4], %s216
        %p218 = scmp.lt.s32.totalorder %s19, 1
        %s219 = scalar_select %p218, %s19, 1
        %s220 = smul.addr %s219, 32
        %s221 = smul.addr %s220, 8
        %s222 = scalar_lea.vmem %s0, %s221
        %223 = vst [vmem:[#allocation2] sm:$0xff] -inf
        %224 = vst [vmem:[#allocation2 + $0x8] sm:$0xff] -inf
        %225 = vst [vmem:[#allocation2 + $0x10] sm:$0xf] -inf
        %226 = vst [vmem:[#allocation2 + $0x18] sm:$0xff] -inf
        %227 = vst [vmem:[#allocation2 + $0x20] sm:$0xff] -inf
        %228 = vst [vmem:[#allocation2 + $0x28] sm:$0xf] -inf
        %s229 = scalar_lea.vmem [#allocation2], 432
        %230 = vst [vmem:[%s229] sm:$0xff] -inf
        %231 = vst [vmem:[%s229 + $0x8] sm:$0xff] -inf
        %232 = vst [vmem:[%s229 + $0x10] sm:$0xf] -inf
        %233 = vst [vmem:[%s229 + $0x18] sm:$0xff] -inf
        %234 = vst [vmem:[%s229 + $0x20] sm:$0xff] -inf
        %235 = vst [vmem:[%s229 + $0x28] sm:$0xf] -inf
        %s236 = scalar_lea.vmem [#allocation2], 48
        %237 = vst [vmem:[%s236] sm:$0x3] -inf
        %238 = vst [vmem:[%s236 + $0x18] sm:$0x3] -inf
        %239 = vst [vmem:[%s236 + $0x30] sm:$0x3] -inf
        %240 = vst [vmem:[%s236 + $0x48] sm:$0x3] -inf
        %241 = vst [vmem:[%s236 + $0x60] sm:$0x3] -inf
        %242 = vst [vmem:[%s236 + $0x78] sm:$0x3] -inf
        %243 = vst [vmem:[%s236 + $0x90] sm:$0x3] -inf
        %244 = vst [vmem:[%s236 + $0xa8] sm:$0x3] -inf
        %245 = vst [vmem:[%s236 + $0xc0] sm:$0x3] -inf
        %246 = vst [vmem:[%s236 + $0xd8] sm:$0x3] -inf
        %247 = vst [vmem:[%s236 + $0xf0] sm:$0x3] -inf
        %248 = vst [vmem:[%s236 + $0x108] sm:$0x3] -inf
        %249 = vst [vmem:[%s236 + $0x120] sm:$0x3] -inf
        %250 = vst [vmem:[%s236 + $0x138] sm:$0x3] -inf
        %251 = vst [vmem:[%s236 + $0x150] sm:$0x3] -inf
        %252 = vst [vmem:[%s236 + $0x168] sm:$0x3] -inf
        %253 = vst [vmem:[%s236 + $0x12] sm:$0x3] -inf
        %254 = vst [vmem:[%s236 + $0x2a] sm:$0x3] -inf
        %255 = vst [vmem:[%s236 + $0x42] sm:$0x3] -inf
        %256 = vst [vmem:[%s236 + $0x5a] sm:$0x3] -inf
        %257 = vst [vmem:[%s236 + $0x72] sm:$0x3] -inf
        %258 = vst [vmem:[%s236 + $0x8a] sm:$0x3] -inf
        %259 = vst [vmem:[%s236 + $0xa2] sm:$0x3] -inf
        %260 = vst [vmem:[%s236 + $0xba] sm:$0x3] -inf
        %261 = vst [vmem:[%s236 + $0xd2] sm:$0x3] -inf
        %262 = vst [vmem:[%s236 + $0xea] sm:$0x3] -inf
        %263 = vst [vmem:[%s236 + $0x102] sm:$0x3] -inf
        %264 = vst [vmem:[%s236 + $0x11a] sm:$0x3] -inf
        %265 = vst [vmem:[%s236 + $0x132] sm:$0x3] -inf
        %266 = vst [vmem:[%s236 + $0x14a] sm:$0x3] -inf
        %267 = vst [vmem:[%s236 + $0x162] sm:$0x3] -inf
        %268 = vst [vmem:[%s236 + $0x17a] sm:$0x3] -inf
        %269 = vst [vmem:[#allocation3] sm:$0xff] -inf
        %270 = vst [vmem:[#allocation3 + $0x8] sm:$0xff] -inf
        %271 = vst [vmem:[#allocation3 + $0x10] sm:$0xf] -inf
        %272 = vst [vmem:[#allocation3 + $0x18] sm:$0xff] -inf
        %273 = vst [vmem:[#allocation3 + $0x20] sm:$0xff] -inf
        %274 = vst [vmem:[#allocation3 + $0x28] sm:$0xf] -inf
        %s275 = scalar_lea.vmem [#allocation3], 432
        %276 = vst [vmem:[%s275] sm:$0xff] -inf
        %277 = vst [vmem:[%s275 + $0x8] sm:$0xff] -inf
        %278 = vst [vmem:[%s275 + $0x10] sm:$0xf] -inf
        %279 = vst [vmem:[%s275 + $0x18] sm:$0xff] -inf
        %280 = vst [vmem:[%s275 + $0x20] sm:$0xff] -inf
        %281 = vst [vmem:[%s275 + $0x28] sm:$0xf] -inf
        %s282 = scalar_lea.vmem [#allocation3], 48
        %283 = vst [vmem:[%s282] sm:$0x3] -inf
        %284 = vst [vmem:[%s282 + $0x18] sm:$0x3] -inf
        %285 = vst [vmem:[%s282 + $0x30] sm:$0x3] -inf
        %286 = vst [vmem:[%s282 + $0x48] sm:$0x3] -inf
        %287 = vst [vmem:[%s282 + $0x60] sm:$0x3] -inf
        %288 = vst [vmem:[%s282 + $0x78] sm:$0x3] -inf
        %289 = vst [vmem:[%s282 + $0x90] sm:$0x3] -inf
        %290 = vst [vmem:[%s282 + $0xa8] sm:$0x3] -inf
        %291 = vst [vmem:[%s282 + $0xc0] sm:$0x3] -inf
        %292 = vst [vmem:[%s282 + $0xd8] sm:$0x3] -inf
        %293 = vst [vmem:[%s282 + $0xf0] sm:$0x3] -inf
        %294 = vst [vmem:[%s282 + $0x108] sm:$0x3] -inf
        %295 = vst [vmem:[%s282 + $0x120] sm:$0x3] -inf
        %296 = vst [vmem:[%s282 + $0x138] sm:$0x3] -inf
        %297 = vst [vmem:[%s282 + $0x150] sm:$0x3] -inf
        %298 = vst [vmem:[%s282 + $0x168] sm:$0x3] -inf
        %299 = vst [vmem:[%s282 + $0x12] sm:$0x3] -inf
        %300 = vst [vmem:[%s282 + $0x2a] sm:$0x3] -inf
        %301 = vst [vmem:[%s282 + $0x42] sm:$0x3] -inf
        %302 = vst [vmem:[%s282 + $0x5a] sm:$0x3] -inf
        %303 = vst [vmem:[%s282 + $0x72] sm:$0x3] -inf
        %304 = vst [vmem:[%s282 + $0x8a] sm:$0x3] -inf
        %305 = vst [vmem:[%s282 + $0xa2] sm:$0x3] -inf
        %306 = vst [vmem:[%s282 + $0xba] sm:$0x3] -inf
        %307 = vst [vmem:[%s282 + $0xd2] sm:$0x3] -inf
        %308 = vst [vmem:[%s282 + $0xea] sm:$0x3] -inf
        %309 = vst [vmem:[%s282 + $0x102] sm:$0x3] -inf
        %310 = vst [vmem:[%s282 + $0x11a] sm:$0x3] -inf
        %311 = vst [vmem:[%s282 + $0x132] sm:$0x3] -inf
        %312 = vst [vmem:[%s282 + $0x14a] sm:$0x3] -inf
        %313 = vst [vmem:[%s282 + $0x162] sm:$0x3] -inf
        %314 = vst [vmem:[%s282 + $0x17a] sm:$0x3] -inf
        %v315 = vld [vmem:[%s222] sm:$0xff]
        %v316 = vld [vmem:[%s222 + $0x8] sm:$0xff]
        %v317 = vld [vmem:[%s222 + $0x10] sm:$0xff]
        %v318 = vld [vmem:[%s222 + $0x18] sm:$0xff]
        %v319 = vld [vmem:[%s222 + $0x20] sm:$0xff]
        %v320 = vld [vmem:[%s222 + $0x28] sm:$0xff]
        %v321 = vld [vmem:[%s222 + $0x30] sm:$0xff]
        %v322 = vld [vmem:[%s222 + $0x38] sm:$0xff]
        %v323 = vld [vmem:[%s222 + $0x40] sm:$0xff]
        %v324 = vld [vmem:[%s222 + $0x48] sm:$0xff]
        %v325 = vld [vmem:[%s222 + $0x50] sm:$0xff]
        %v326 = vld [vmem:[%s222 + $0x58] sm:$0xff]
        %v327 = vld [vmem:[%s222 + $0x60] sm:$0xff]
        %v328 = vld [vmem:[%s222 + $0x68] sm:$0xff]
        %v329 = vld [vmem:[%s222 + $0x70] sm:$0xff]
        %v330 = vld [vmem:[%s222 + $0x78] sm:$0xff]
        %v331 = vld [vmem:[%s222 + $0x80] sm:$0xff]
        %v332 = vld [vmem:[%s222 + $0x88] sm:$0xff]
        %v333 = vld [vmem:[%s222 + $0x90] sm:$0xff]
        %v334 = vld [vmem:[%s222 + $0x98] sm:$0xff]
        %v335 = vld [vmem:[%s222 + $0xa0] sm:$0xff]
        %v336 = vld [vmem:[%s222 + $0xa8] sm:$0xff]
        %v337 = vld [vmem:[%s222 + $0xb0] sm:$0xff]
        %v338 = vld [vmem:[%s222 + $0xb8] sm:$0xff]
        %v339 = vld [vmem:[%s222 + $0xc0] sm:$0xff]
        %v340 = vld [vmem:[%s222 + $0xc8] sm:$0xff]
        %v341 = vld [vmem:[%s222 + $0xd0] sm:$0xff]
        %v342 = vld [vmem:[%s222 + $0xd8] sm:$0xff]
        %v343 = vld [vmem:[%s222 + $0xe0] sm:$0xff]
        %v344 = vld [vmem:[%s222 + $0xe8] sm:$0xff]
        %v345 = vld [vmem:[%s222 + $0xf0] sm:$0xff]
        %v346 = vld [vmem:[%s222 + $0xf8] sm:$0xff]
        %v347 = vld [vmem:[%s1] sm:$0xff]
        %v348 = vld [vmem:[%s2] sm:$0x1]
        %v350 = vlaneseq
        %v351 = vshrl.u32 %v350, 7
        %v352 = vsub.s32 0, %v351
        %v353 = vrot.slane %v348, %v352
        %vm355 = vcmask 64512
        %v357 = vsel %vm355, %v315, 0
        %v360 = vsel %vm355, %v316, 0
        %v363 = vsel %vm355, %v317, 0
        %v366 = vsel %vm355, %v318, 0
        %v369 = vsel %vm355, %v319, 0
        %v372 = vsel %vm355, %v320, 0
        %v375 = vsel %vm355, %v321, 0
        %v378 = vsel %vm355, %v322, 0
        %v381 = vsel %vm355, %v323, 0
        %v384 = vsel %vm355, %v324, 0
        %v387 = vsel %vm355, %v325, 0
        %v390 = vsel %vm355, %v326, 0
        %v393 = vsel %vm355, %v327, 0
        %v396 = vsel %vm355, %v328, 0
        %v399 = vsel %vm355, %v329, 0
        %v402 = vsel %vm355, %v330, 0
        %v405 = vsel %vm355, %v331, 0
        %v408 = vsel %vm355, %v332, 0
        %v411 = vsel %vm355, %v333, 0
        %v414 = vsel %vm355, %v334, 0
        %v417 = vsel %vm355, %v335, 0
        %v420 = vsel %vm355, %v336, 0
        %v423 = vsel %vm355, %v337, 0
        %v426 = vsel %vm355, %v338, 0
        %v429 = vsel %vm355, %v339, 0
        %v432 = vsel %vm355, %v340, 0
        %v435 = vsel %vm355, %v341, 0
        %v438 = vsel %vm355, %v342, 0
        %v441 = vsel %vm355, %v343, 0
        %v444 = vsel %vm355, %v344, 0
        %v447 = vsel %vm355, %v345, 0
        %v450 = vsel %vm355, %v346, 0
        %452 = vmatprep.subr.mxu0 0.0
        %453 = vmatpush1.msra.mxu0 0.0
        %454 = vmatprep.subr.mxu0 0.0
        %455 = vmatpush1.msra.mxu0 0.0
        %456 = vmatprep.subr.mxu0 0.0
        %457 = vmatpush1.msra.mxu0 0.0
        %458 = vmatprep.subr.mxu0 0.0
        %459 = vmatpush1.msra.mxu0 0.0
        %460 = vmatprep.subr.mxu0 0.0
        %461 = vmatpush1.msra.mxu0 0.0
        %462 = vmatprep.subr.mxu0 0.0
        %463 = vmatpush1.msra.mxu0 0.0
        %464 = vmatprep.subr.mxu0 0.0
        %465 = vmatpush1.msra.mxu0 0.0
        %466 = vmatprep.subr.mxu0 0.0
        %467 = vmatpush1.msra.mxu0 0.0
        %468 = vmatprep.subr.mxu0 0.0
        %469 = vmatpush1.msra.mxu0 0.0
        %470 = vmatprep.subr.mxu0 0.0
        %471 = vmatpush1.msra.mxu0 0.0
        %472 = vmatprep.subr.mxu0 0.0
        %473 = vmatpush1.msra.mxu0 0.0
        %474 = vmatprep.subr.mxu0 0.0
        %475 = vmatpush1.msra.mxu0 0.0
        %476 = vmatprep.subr.mxu0 0.0
        %477 = vmatpush1.msra.mxu0 0.0
        %478 = vmatprep.subr.mxu0 0.0
        %479 = vmatpush1.msra.mxu0 0.0
        %480 = vmatprep.subr.mxu0 0.0
        %481 = vmatpush1.msra.mxu0 0.0
        %482 = vmatprep.subr.mxu0 0.0
        %483 = vmatpush1.msra.mxu0 %v347
        %484 = vmatprep.subr.mxu0 0.0
        %485 = vmatpush2.msra.mxu0 0.0
        %486 = vmatprep.subr.mxu0 0.0
        %487 = vmatpush2.msra.mxu0 0.0
        %488 = vmatprep.subr.mxu0 0.0
        %489 = vmatpush2.msra.mxu0 0.0
        %490 = vmatprep.subr.mxu0 0.0
        %491 = vmatpush2.msra.mxu0 0.0
        %492 = vmatprep.subr.mxu0 0.0
        %493 = vmatpush2.msra.mxu0 0.0
        %494 = vmatprep.subr.mxu0 0.0
        %495 = vmatpush2.msra.mxu0 0.0
        %496 = vmatprep.subr.mxu0 0.0
        %497 = vmatpush2.msra.mxu0 0.0
        %498 = vmatprep.subr.mxu0 0.0
        %499 = vmatpush2.msra.mxu0 0.0
        %500 = vmatprep.subr.mxu0 0.0
        %501 = vmatpush2.msra.mxu0 0.0
        %502 = vmatprep.subr.mxu0 0.0
        %503 = vmatpush2.msra.mxu0 0.0
        %504 = vmatprep.subr.mxu0 0.0
        %505 = vmatpush2.msra.mxu0 0.0
        %506 = vmatprep.subr.mxu0 0.0
        %507 = vmatpush2.msra.mxu0 0.0
        %508 = vmatprep.subr.mxu0 0.0
        %509 = vmatpush2.msra.mxu0 0.0
        %510 = vmatprep.subr.mxu0 0.0
        %511 = vmatpush2.msra.mxu0 0.0
        %512 = vmatprep.subr.mxu0 0.0
        %513 = vmatpush2.msra.mxu0 0.0
        %514 = vmatprep.subr.mxu0 0.0
        %515 = vmatpush2.msra.mxu0 0.0
        %516 = vmatprep.mubr.f32.mxu0 0.0
        %517 = vmatmul.mubr.f32.gmra.mxu0 %v357
        %v518 = vpop.f32.mrf.mxu0
        %v519 = vadd.f32 %v353, %v518
        %v520 = vpop.f32.mrf.mxu0
        %521 = vmatprep.mubr.f32.mxu0 0.0
        %522 = vmatmul.mubr.f32.gmra.mxu0 %v360
        %v523 = vpop.f32.mrf.mxu0
        %v524 = vadd.f32 %v353, %v523
        %v525 = vpop.f32.mrf.mxu0
        %526 = vmatprep.mubr.f32.mxu0 0.0
        %527 = vmatmul.mubr.f32.gmra.mxu0 %v363
        %v528 = vpop.f32.mrf.mxu0
        %v529 = vadd.f32 %v353, %v528
        %v530 = vpop.f32.mrf.mxu0
        %531 = vmatprep.mubr.f32.mxu0 0.0
        %532 = vmatmul.mubr.f32.gmra.mxu0 %v366
        %v533 = vpop.f32.mrf.mxu0
        %v534 = vadd.f32 %v353, %v533
        %v535 = vpop.f32.mrf.mxu0
        %536 = vmatprep.mubr.f32.mxu0 0.0
        %537 = vmatmul.mubr.f32.gmra.mxu0 %v369
        %v538 = vpop.f32.mrf.mxu0
        %v539 = vadd.f32 %v353, %v538
        %v540 = vpop.f32.mrf.mxu0
        %541 = vmatprep.mubr.f32.mxu0 0.0
        %542 = vmatmul.mubr.f32.gmra.mxu0 %v372
        %v543 = vpop.f32.mrf.mxu0
        %v544 = vadd.f32 %v353, %v543
        %v545 = vpop.f32.mrf.mxu0
        %546 = vmatprep.mubr.f32.mxu0 0.0
        %547 = vmatmul.mubr.f32.gmra.mxu0 %v375
        %v548 = vpop.f32.mrf.mxu0
        %v549 = vadd.f32 %v353, %v548
        %v550 = vpop.f32.mrf.mxu0
        %551 = vmatprep.mubr.f32.mxu0 0.0
        %552 = vmatmul.mubr.f32.gmra.mxu0 %v378
        %v553 = vpop.f32.mrf.mxu0
        %v554 = vadd.f32 %v353, %v553
        %v555 = vpop.f32.mrf.mxu0
        %556 = vmatprep.mubr.f32.mxu0 0.0
        %557 = vmatmul.mubr.f32.gmra.mxu0 %v381
        %v558 = vpop.f32.mrf.mxu0
        %v559 = vadd.f32 %v353, %v558
        %v560 = vpop.f32.mrf.mxu0
        %561 = vmatprep.mubr.f32.mxu0 0.0
        %562 = vmatmul.mubr.f32.gmra.mxu0 %v384
        %v563 = vpop.f32.mrf.mxu0
        %v564 = vadd.f32 %v353, %v563
        %v565 = vpop.f32.mrf.mxu0
        %566 = vmatprep.mubr.f32.mxu0 0.0
        %567 = vmatmul.mubr.f32.gmra.mxu0 %v387
        %v568 = vpop.f32.mrf.mxu0
        %v569 = vadd.f32 %v353, %v568
        %v570 = vpop.f32.mrf.mxu0
        %571 = vmatprep.mubr.f32.mxu0 0.0
        %572 = vmatmul.mubr.f32.gmra.mxu0 %v390
        %v573 = vpop.f32.mrf.mxu0
        %v574 = vadd.f32 %v353, %v573
        %v575 = vpop.f32.mrf.mxu0
        %576 = vmatprep.mubr.f32.mxu0 0.0
        %577 = vmatmul.mubr.f32.gmra.mxu0 %v393
        %v578 = vpop.f32.mrf.mxu0
        %v579 = vadd.f32 %v353, %v578
        %v580 = vpop.f32.mrf.mxu0
        %581 = vmatprep.mubr.f32.mxu0 0.0
        %582 = vmatmul.mubr.f32.gmra.mxu0 %v396
        %v583 = vpop.f32.mrf.mxu0
        %v584 = vadd.f32 %v353, %v583
        %v585 = vpop.f32.mrf.mxu0
        %586 = vmatprep.mubr.f32.mxu0 0.0
        %587 = vmatmul.mubr.f32.gmra.mxu0 %v399
        %v588 = vpop.f32.mrf.mxu0
        %v589 = vadd.f32 %v353, %v588
        %v590 = vpop.f32.mrf.mxu0
        %591 = vmatprep.mubr.f32.mxu0 0.0
        %592 = vmatmul.mubr.f32.gmra.mxu0 %v402
        %v593 = vpop.f32.mrf.mxu0
        %v594 = vadd.f32 %v353, %v593
        %v595 = vpop.f32.mrf.mxu0
        %596 = vmatprep.mubr.f32.mxu0 0.0
        %597 = vmatmul.mubr.f32.gmra.mxu0 %v405
        %v598 = vpop.f32.mrf.mxu0
        %v599 = vadd.f32 %v353, %v598
        %v600 = vpop.f32.mrf.mxu0
        %601 = vmatprep.mubr.f32.mxu0 0.0
        %602 = vmatmul.mubr.f32.gmra.mxu0 %v408
        %v603 = vpop.f32.mrf.mxu0
        %v604 = vadd.f32 %v353, %v603
        %v605 = vpop.f32.mrf.mxu0
        %606 = vmatprep.mubr.f32.mxu0 0.0
        %607 = vmatmul.mubr.f32.gmra.mxu0 %v411
        %v608 = vpop.f32.mrf.mxu0
        %v609 = vadd.f32 %v353, %v608
        %v610 = vpop.f32.mrf.mxu0
        %611 = vmatprep.mubr.f32.mxu0 0.0
        %612 = vmatmul.mubr.f32.gmra.mxu0 %v414
        %v613 = vpop.f32.mrf.mxu0
        %v614 = vadd.f32 %v353, %v613
        %v615 = vpop.f32.mrf.mxu0
        %616 = vmatprep.mubr.f32.mxu0 0.0
        %617 = vmatmul.mubr.f32.gmra.mxu0 %v417
        %v618 = vpop.f32.mrf.mxu0
        %v619 = vadd.f32 %v353, %v618
        %v620 = vpop.f32.mrf.mxu0
        %621 = vmatprep.mubr.f32.mxu0 0.0
        %622 = vmatmul.mubr.f32.gmra.mxu0 %v420
        %v623 = vpop.f32.mrf.mxu0
        %v624 = vadd.f32 %v353, %v623
        %v625 = vpop.f32.mrf.mxu0
        %626 = vmatprep.mubr.f32.mxu0 0.0
        %627 = vmatmul.mubr.f32.gmra.mxu0 %v423
        %v628 = vpop.f32.mrf.mxu0
        %v629 = vadd.f32 %v353, %v628
        %v630 = vpop.f32.mrf.mxu0
        %631 = vmatprep.mubr.f32.mxu0 0.0
        %632 = vmatmul.mubr.f32.gmra.mxu0 %v426
        %v633 = vpop.f32.mrf.mxu0
        %v634 = vadd.f32 %v353, %v633
        %v635 = vpop.f32.mrf.mxu0
        %636 = vmatprep.mubr.f32.mxu0 0.0
        %637 = vmatmul.mubr.f32.gmra.mxu0 %v429
        %v638 = vpop.f32.mrf.mxu0
        %v639 = vadd.f32 %v353, %v638
        %v640 = vpop.f32.mrf.mxu0
        %641 = vmatprep.mubr.f32.mxu0 0.0
        %642 = vmatmul.mubr.f32.gmra.mxu0 %v432
        %v643 = vpop.f32.mrf.mxu0
        %v644 = vadd.f32 %v353, %v643
        %v645 = vpop.f32.mrf.mxu0
        %646 = vmatprep.mubr.f32.mxu0 0.0
        %647 = vmatmul.mubr.f32.gmra.mxu0 %v435
        %v648 = vpop.f32.mrf.mxu0
        %v649 = vadd.f32 %v353, %v648
        %v650 = vpop.f32.mrf.mxu0
        %651 = vmatprep.mubr.f32.mxu0 0.0
        %652 = vmatmul.mubr.f32.gmra.mxu0 %v438
        %v653 = vpop.f32.mrf.mxu0
        %v654 = vadd.f32 %v353, %v653
        %v655 = vpop.f32.mrf.mxu0
        %656 = vmatprep.mubr.f32.mxu0 0.0
        %657 = vmatmul.mubr.f32.gmra.mxu0 %v441
        %v658 = vpop.f32.mrf.mxu0
        %v659 = vadd.f32 %v353, %v658
        %v660 = vpop.f32.mrf.mxu0
        %661 = vmatprep.mubr.f32.mxu0 0.0
        %662 = vmatmul.mubr.f32.gmra.mxu0 %v444
        %v663 = vpop.f32.mrf.mxu0
        %v664 = vadd.f32 %v353, %v663
        %v665 = vpop.f32.mrf.mxu0
        %666 = vmatprep.mubr.f32.mxu0 0.0
        %667 = vmatmul.mubr.f32.gmra.mxu0 %v447
        %v668 = vpop.f32.mrf.mxu0
        %v669 = vadd.f32 %v353, %v668
        %v670 = vpop.f32.mrf.mxu0
        %671 = vmatprep.mubr.f32.mxu0 0.0
        %672 = vmatmul.mubr.f32.gmra.mxu0 %v450
        %v673 = vpop.f32.mrf.mxu0
        %v674 = vadd.f32 %v353, %v673
        %v675 = vpop.f32.mrf.mxu0
        %676 = vdwg.mxu0
        %v677 = vmul.f32 %v519, 0.5
        %v678 = vmul.f32 %v524, 0.5
        %v679 = vmul.f32 %v529, 0.5
        %v680 = vmul.f32 %v534, 0.5
        %v681 = vmul.f32 %v539, 0.5
        %v682 = vmul.f32 %v544, 0.5
        %v683 = vmul.f32 %v549, 0.5
        %v684 = vmul.f32 %v554, 0.5
        %v685 = vmul.f32 %v559, 0.5
        %v686 = vmul.f32 %v564, 0.5
        %v687 = vmul.f32 %v569, 0.5
        %v688 = vmul.f32 %v574, 0.5
        %v689 = vmul.f32 %v579, 0.5
        %v690 = vmul.f32 %v584, 0.5
        %v691 = vmul.f32 %v589, 0.5
        %v692 = vmul.f32 %v594, 0.5
        %v693 = vmul.f32 %v599, 0.5
        %v694 = vmul.f32 %v604, 0.5
        %v695 = vmul.f32 %v609, 0.5
        %v696 = vmul.f32 %v614, 0.5
        %v697 = vmul.f32 %v619, 0.5
        %v698 = vmul.f32 %v624, 0.5
        %v699 = vmul.f32 %v629, 0.5
        %v700 = vmul.f32 %v634, 0.5
        %v701 = vmul.f32 %v639, 0.5
        %v702 = vmul.f32 %v644, 0.5
        %v703 = vmul.f32 %v649, 0.5
        %v704 = vmul.f32 %v654, 0.5
        %v705 = vmul.f32 %v659, 0.5
        %v706 = vmul.f32 %v664, 0.5
        %v707 = vmul.f32 %v669, 0.5
        %v708 = vmul.f32 %v674, 0.5
        %v709 = vtanh.pop %v677
        %v710 = vtanh.pop %v678
        %v711 = vtanh.pop %v679
        %v712 = vtanh.pop %v680
        %v713 = vtanh.pop %v681
        %v714 = vtanh.pop %v682
        %v715 = vtanh.pop %v683
        %v716 = vtanh.pop %v684
        %v717 = vtanh.pop %v685
        %v718 = vtanh.pop %v686
        %v719 = vtanh.pop %v687
        %v720 = vtanh.pop %v688
        %v721 = vtanh.pop %v689
        %v722 = vtanh.pop %v690
        %v723 = vtanh.pop %v691
        %v724 = vtanh.pop %v692
        %v725 = vtanh.pop %v693
        %v726 = vtanh.pop %v694
        %v727 = vtanh.pop %v695
        %v728 = vtanh.pop %v696
        %v729 = vtanh.pop %v697
        %v730 = vtanh.pop %v698
        %v731 = vtanh.pop %v699
        %v732 = vtanh.pop %v700
        %v733 = vtanh.pop %v701
        %v734 = vtanh.pop %v702
        %v735 = vtanh.pop %v703
        %v736 = vtanh.pop %v704
        %v737 = vtanh.pop %v705
        %v738 = vtanh.pop %v706
        %v739 = vtanh.pop %v707
        %v740 = vtanh.pop %v708
        %v741 = vmul.f32 %v709, 0.5
        %v742 = vmul.f32 %v710, 0.5
        %v743 = vmul.f32 %v711, 0.5
        %v744 = vmul.f32 %v712, 0.5
        %v745 = vmul.f32 %v713, 0.5
        %v746 = vmul.f32 %v714, 0.5
        %v747 = vmul.f32 %v715, 0.5
        %v748 = vmul.f32 %v716, 0.5
        %v749 = vmul.f32 %v717, 0.5
        %v750 = vmul.f32 %v718, 0.5
        %v751 = vmul.f32 %v719, 0.5
        %v752 = vmul.f32 %v720, 0.5
        %v753 = vmul.f32 %v721, 0.5
        %v754 = vmul.f32 %v722, 0.5
        %v755 = vmul.f32 %v723, 0.5
        %v756 = vmul.f32 %v724, 0.5
        %v757 = vmul.f32 %v725, 0.5
        %v758 = vmul.f32 %v726, 0.5
        %v759 = vmul.f32 %v727, 0.5
        %v760 = vmul.f32 %v728, 0.5
        %v761 = vmul.f32 %v729, 0.5
        %v762 = vmul.f32 %v730, 0.5
        %v763 = vmul.f32 %v731, 0.5
        %v764 = vmul.f32 %v732, 0.5
        %v765 = vmul.f32 %v733, 0.5
        %v766 = vmul.f32 %v734, 0.5
        %v767 = vmul.f32 %v735, 0.5
        %v768 = vmul.f32 %v736, 0.5
        %v769 = vmul.f32 %v737, 0.5
        %v770 = vmul.f32 %v738, 0.5
        %v771 = vmul.f32 %v739, 0.5
        %v772 = vmul.f32 %v740, 0.5
        %v773 = vadd.f32 %v741, 0.5
        %v774 = vadd.f32 %v742, 0.5
        %v775 = vadd.f32 %v743, 0.5
        %v776 = vadd.f32 %v744, 0.5
        %v777 = vadd.f32 %v745, 0.5
        %v778 = vadd.f32 %v746, 0.5
        %v779 = vadd.f32 %v747, 0.5
        %v780 = vadd.f32 %v748, 0.5
        %v781 = vadd.f32 %v749, 0.5
        %v782 = vadd.f32 %v750, 0.5
        %v783 = vadd.f32 %v751, 0.5
        %v784 = vadd.f32 %v752, 0.5
        %v785 = vadd.f32 %v753, 0.5
        %v786 = vadd.f32 %v754, 0.5
        %v787 = vadd.f32 %v755, 0.5
        %v788 = vadd.f32 %v756, 0.5
        %v789 = vadd.f32 %v757, 0.5
        %v790 = vadd.f32 %v758, 0.5
        %v791 = vadd.f32 %v759, 0.5
        %v792 = vadd.f32 %v760, 0.5
        %v793 = vadd.f32 %v761, 0.5
        %v794 = vadd.f32 %v762, 0.5
        %v795 = vadd.f32 %v763, 0.5
        %v796 = vadd.f32 %v764, 0.5
        %v797 = vadd.f32 %v765, 0.5
        %v798 = vadd.f32 %v766, 0.5
        %v799 = vadd.f32 %v767, 0.5
        %v800 = vadd.f32 %v768, 0.5
        %v801 = vadd.f32 %v769, 0.5
        %v802 = vadd.f32 %v770, 0.5
        %v803 = vadd.f32 %v771, 0.5
        %v804 = vadd.f32 %v772, 0.5
        %v805 = vmul.f32 %v519, %v773
        %v806 = vmul.f32 %v524, %v774
        %v807 = vmul.f32 %v529, %v775
        %v808 = vmul.f32 %v534, %v776
        %v809 = vmul.f32 %v539, %v777
        %v810 = vmul.f32 %v544, %v778
        %v811 = vmul.f32 %v549, %v779
        %v812 = vmul.f32 %v554, %v780
        %v813 = vmul.f32 %v559, %v781
        %v814 = vmul.f32 %v564, %v782
        %v815 = vmul.f32 %v569, %v783
        %v816 = vmul.f32 %v574, %v784
        %v817 = vmul.f32 %v579, %v785
        %v818 = vmul.f32 %v584, %v786
        %v819 = vmul.f32 %v589, %v787
        %v820 = vmul.f32 %v594, %v788
        %v821 = vmul.f32 %v599, %v789
        %v822 = vmul.f32 %v604, %v790
        %v823 = vmul.f32 %v609, %v791
        %v824 = vmul.f32 %v614, %v792
        %v825 = vmul.f32 %v619, %v793
        %v826 = vmul.f32 %v624, %v794
        %v827 = vmul.f32 %v629, %v795
        %v828 = vmul.f32 %v634, %v796
        %v829 = vmul.f32 %v639, %v797
        %v830 = vmul.f32 %v644, %v798
        %v831 = vmul.f32 %v649, %v799
        %v832 = vmul.f32 %v654, %v800
        %v833 = vmul.f32 %v659, %v801
        %v834 = vmul.f32 %v664, %v802
        %v835 = vmul.f32 %v669, %v803
        %v836 = vmul.f32 %v674, %v804
        %v837 = vld [vmem:[%s3] sm:$0xff]
        %v838 = vld [vmem:[%s3 + $0x8] sm:$0xff]
        %v839 = vld [vmem:[%s3 + $0x10] sm:$0xff]
        %v840 = vld [vmem:[%s3 + $0x18] sm:$0xff]
        %v841 = vld [vmem:[%s3 + $0x20] sm:$0xff]
        %v842 = vld [vmem:[%s3 + $0x28] sm:$0xff]
        %v843 = vld [vmem:[%s3 + $0x30] sm:$0xff]
        %v844 = vld [vmem:[%s3 + $0x38] sm:$0xff]
        %v845 = vld [vmem:[%s3 + $0x40] sm:$0xff]
        %v846 = vld [vmem:[%s3 + $0x48] sm:$0xff]
        %v847 = vld [vmem:[%s3 + $0x50] sm:$0xff]
        %v848 = vld [vmem:[%s3 + $0x58] sm:$0xff]
        %v849 = vld [vmem:[%s3 + $0x60] sm:$0xff]
        %v850 = vld [vmem:[%s3 + $0x68] sm:$0xff]
        %v851 = vld [vmem:[%s3 + $0x70] sm:$0xff]
        %v852 = vld [vmem:[%s3 + $0x78] sm:$0xff]
        %853 = vst [vmem:[%s236 + $0x2] sm:$0xff] %v805
        %854 = vst [vmem:[%s236 + $0xa] sm:$0xff] %v806
        %855 = vst [vmem:[%s236 + $0x1a] sm:$0xff] %v807
        %856 = vst [vmem:[%s236 + $0x22] sm:$0xff] %v808
        %857 = vst [vmem:[%s236 + $0x32] sm:$0xff] %v809
        %858 = vst [vmem:[%s236 + $0x3a] sm:$0xff] %v810
        %859 = vst [vmem:[%s236 + $0x4a] sm:$0xff] %v811
        %860 = vst [vmem:[%s236 + $0x52] sm:$0xff] %v812
        %861 = vst [vmem:[%s236 + $0x62] sm:$0xff] %v813
        %862 = vst [vmem:[%s236 + $0x6a] sm:$0xff] %v814
        %863 = vst [vmem:[%s236 + $0x7a] sm:$0xff] %v815
        %864 = vst [vmem:[%s236 + $0x82] sm:$0xff] %v816
        %865 = vst [vmem:[%s236 + $0x92] sm:$0xff] %v817
        %866 = vst [vmem:[%s236 + $0x9a] sm:$0xff] %v818
        %867 = vst [vmem:[%s236 + $0xaa] sm:$0xff] %v819
        %868 = vst [vmem:[%s236 + $0xb2] sm:$0xff] %v820
        %869 = vst [vmem:[%s236 + $0xc2] sm:$0xff] %v821
        %870 = vst [vmem:[%s236 + $0xca] sm:$0xff] %v822
        %871 = vst [vmem:[%s236 + $0xda] sm:$0xff] %v823
        %872 = vst [vmem:[%s236 + $0xe2] sm:$0xff] %v824
        %873 = vst [vmem:[%s236 + $0xf2] sm:$0xff] %v825
        %874 = vst [vmem:[%s236 + $0xfa] sm:$0xff] %v826
        %875 = vst [vmem:[%s236 + $0x10a] sm:$0xff] %v827
        %876 = vst [vmem:[%s236 + $0x112] sm:$0xff] %v828
        %877 = vst [vmem:[%s236 + $0x122] sm:$0xff] %v829
        %878 = vst [vmem:[%s236 + $0x12a] sm:$0xff] %v830
        %879 = vst [vmem:[%s236 + $0x13a] sm:$0xff] %v831
        %880 = vst [vmem:[%s236 + $0x142] sm:$0xff] %v832
        %881 = vst [vmem:[%s236 + $0x152] sm:$0xff] %v833
        %882 = vst [vmem:[%s236 + $0x15a] sm:$0xff] %v834
        %883 = vst [vmem:[%s236 + $0x16a] sm:$0xff] %v835
        %884 = vst [vmem:[%s236 + $0x172] sm:$0xff] %v836
        %v885 = vld [vmem:[#allocation2] sm:$0xff]
        %v886 = vld [vmem:[#allocation2 + $0x8] sm:$0xff]
        %v887 = vld [vmem:[#allocation2 + $0x10] sm:$0xf]
        %v888 = vld [vmem:[#allocation2 + $0x18] sm:$0xff]
        %v889 = vld [vmem:[#allocation2 + $0x20] sm:$0xff]
        %v890 = vld [vmem:[#allocation2 + $0x28] sm:$0xf]
        %v891 = vld [vmem:[#allocation2 + $0x30] sm:$0xff]
        %v892 = vld [vmem:[#allocation2 + $0x38] sm:$0xff]
        %v893 = vld [vmem:[#allocation2 + $0x40] sm:$0xf]
        %v894 = vld [vmem:[#allocation2 + $0x48] sm:$0xff]
        %v895 = vld [vmem:[#allocation2 + $0x50] sm:$0xff]
        %v896 = vld [vmem:[#allocation2 + $0x58] sm:$0xf]
        %v897 = vld [vmem:[#allocation2 + $0x60] sm:$0xff]
        %v898 = vld [vmem:[#allocation2 + $0x68] sm:$0xff]
        %v899 = vld [vmem:[#allocation2 + $0x70] sm:$0xf]
        %v900 = vld [vmem:[#allocation2 + $0x78] sm:$0xff]
        %v901 = vld [vmem:[#allocation2 + $0x80] sm:$0xff]
        %v902 = vld [vmem:[#allocation2 + $0x88] sm:$0xf]
        %v903 = vld [vmem:[#allocation2 + $0x90] sm:$0xff]
        %v904 = vld [vmem:[#allocation2 + $0x98] sm:$0xff]
        %v905 = vld [vmem:[#allocation2 + $0xa0] sm:$0xf]
        %v906 = vld [vmem:[#allocation2 + $0xa8] sm:$0xff]
        %v907 = vld [vmem:[#allocation2 + $0xb0] sm:$0xff]
        %v908 = vld [vmem:[#allocation2 + $0xb8] sm:$0xf]
        %v909 = vld [vmem:[#allocation2 + $0xc0] sm:$0xff]
        %v910 = vld [vmem:[#allocation2 + $0xc8] sm:$0xff]
        %v911 = vld [vmem:[#allocation2 + $0xd0] sm:$0xf]
        %v912 = vld [vmem:[#allocation2 + $0xd8] sm:$0xff]
        %v913 = vld [vmem:[#allocation2 + $0xe0] sm:$0xff]
        %v914 = vld [vmem:[#allocation2 + $0xe8] sm:$0xf]
        %v915 = vld [vmem:[#allocation2 + $0xf0] sm:$0xff]
        %v916 = vld [vmem:[#allocation2 + $0xf8] sm:$0xff]
        %v917 = vld [vmem:[#allocation2 + $0x100] sm:$0xf]
        %v918 = vld [vmem:[#allocation2 + $0x108] sm:$0xff]
        %v919 = vld [vmem:[#allocation2 + $0x110] sm:$0xff]
        %v920 = vld [vmem:[#allocation2 + $0x118] sm:$0xf]
        %v921 = vld [vmem:[#allocation2 + $0x120] sm:$0xff]
        %v922 = vld [vmem:[#allocation2 + $0x128] sm:$0xff]
        %v923 = vld [vmem:[#allocation2 + $0x130] sm:$0xf]
        %v924 = vld [vmem:[#allocation2 + $0x138] sm:$0xff]
        %v925 = vld [vmem:[#allocation2 + $0x140] sm:$0xff]
        %v926 = vld [vmem:[#allocation2 + $0x148] sm:$0xf]
        %v927 = vld [vmem:[#allocation2 + $0x150] sm:$0xff]
        %v928 = vld [vmem:[#allocation2 + $0x158] sm:$0xff]
        %v929 = vld [vmem:[#allocation2 + $0x160] sm:$0xf]
        %v930 = vld [vmem:[#allocation2 + $0x168] sm:$0xff]
        %v931 = vld [vmem:[#allocation2 + $0x170] sm:$0xff]
        %v932 = vld [vmem:[#allocation2 + $0x178] sm:$0xf]
        %v933 = vld [vmem:[#allocation2 + $0x180] sm:$0xff]
        %v934 = vld [vmem:[#allocation2 + $0x188] sm:$0xff]
        %v935 = vld [vmem:[#allocation2 + $0x190] sm:$0xf]
        %v936 = vld [vmem:[#allocation2 + $0x198] sm:$0xff]
        %v937 = vld [vmem:[#allocation2 + $0x1a0] sm:$0xff]
        %v938 = vld [vmem:[#allocation2 + $0x1a8] sm:$0xf]
        %v939 = vld [vmem:[#allocation2 + $0x1b0] sm:$0xff]
        %v940 = vld [vmem:[#allocation2 + $0x1b8] sm:$0xff]
        %v941 = vld [vmem:[#allocation2 + $0x1c0] sm:$0xf]
        %v942 = vld [vmem:[#allocation2 + $0x1c8] sm:$0xff]
        %v943 = vld [vmem:[#allocation2 + $0x1d0] sm:$0xff]
        %v944 = vld [vmem:[#allocation2 + $0x1d8] sm:$0xf]
        %v945 = vmax.f32 %v885, %v888
        %v946 = vmax.f32 %v886, %v889
        %v947 = vmax.f32 %v887, %v890
        %v948 = vmax.f32 %v888, %v891
        %v949 = vmax.f32 %v889, %v892
        %v950 = vmax.f32 %v890, %v893
        %v951 = vmax.f32 %v891, %v894
        %v952 = vmax.f32 %v892, %v895
        %v953 = vmax.f32 %v893, %v896
        %v954 = vmax.f32 %v894, %v897
        %v955 = vmax.f32 %v895, %v898
        %v956 = vmax.f32 %v896, %v899
        %v957 = vmax.f32 %v897, %v900
        %v958 = vmax.f32 %v898, %v901
        %v959 = vmax.f32 %v899, %v902
        %v960 = vmax.f32 %v900, %v903
        %v961 = vmax.f32 %v901, %v904
        %v962 = vmax.f32 %v902, %v905
        %v963 = vmax.f32 %v903, %v906
        %v964 = vmax.f32 %v904, %v907
        %v965 = vmax.f32 %v905, %v908
        %v966 = vmax.f32 %v906, %v909
        %v967 = vmax.f32 %v907, %v910
        %v968 = vmax.f32 %v908, %v911
        %v969 = vmax.f32 %v909, %v912
        %v970 = vmax.f32 %v910, %v913
        %v971 = vmax.f32 %v911, %v914
        %v972 = vmax.f32 %v912, %v915
        %v973 = vmax.f32 %v913, %v916
        %v974 = vmax.f32 %v914, %v917
        %v975 = vmax.f32 %v915, %v918
        %v976 = vmax.f32 %v916, %v919
        %v977 = vmax.f32 %v917, %v920
        %v978 = vmax.f32 %v918, %v921
        %v979 = vmax.f32 %v919, %v922
        %v980 = vmax.f32 %v920, %v923
        %v981 = vmax.f32 %v921, %v924
        %v982 = vmax.f32 %v922, %v925
        %v983 = vmax.f32 %v923, %v926
        %v984 = vmax.f32 %v924, %v927
        %v985 = vmax.f32 %v925, %v928
        %v986 = vmax.f32 %v926, %v929
        %v987 = vmax.f32 %v927, %v930
        %v988 = vmax.f32 %v928, %v931
        %v989 = vmax.f32 %v929, %v932
        %v990 = vmax.f32 %v930, %v933
        %v991 = vmax.f32 %v931, %v934
        %v992 = vmax.f32 %v932, %v935
        %v993 = vmax.f32 %v933, %v936
        %v994 = vmax.f32 %v934, %v937
        %v995 = vmax.f32 %v935, %v938
        %v996 = vmax.f32 %v936, %v939
        %v997 = vmax.f32 %v937, %v940
        %v998 = vmax.f32 %v938, %v941
        %v999 = vmax.f32 %v939, %v942
        %v1000 = vmax.f32 %v940, %v943
        %v1001 = vmax.f32 %v941, %v944
        %v1002 = vmax.f32 %v945, %v951
        %v1003 = vmax.f32 %v946, %v952
        %v1004 = vmax.f32 %v947, %v953
        %v1005 = vmax.f32 %v948, %v954
        %v1006 = vmax.f32 %v949, %v955
        %v1007 = vmax.f32 %v950, %v956
        %v1008 = vmax.f32 %v951, %v957
        %v1009 = vmax.f32 %v952, %v958
        %v1010 = vmax.f32 %v953, %v959
        %v1011 = vmax.f32 %v954, %v960
        %v1012 = vmax.f32 %v955, %v961
        %v1013 = vmax.f32 %v956, %v962
        %v1014 = vmax.f32 %v957, %v963
        %v1015 = vmax.f32 %v958, %v964
        %v1016 = vmax.f32 %v959, %v965
        %v1017 = vmax.f32 %v960, %v966
        %v1018 = vmax.f32 %v961, %v967
        %v1019 = vmax.f32 %v962, %v968
        %v1020 = vmax.f32 %v963, %v969
        %v1021 = vmax.f32 %v964, %v970
        %v1022 = vmax.f32 %v965, %v971
        %v1023 = vmax.f32 %v966, %v972
        %v1024 = vmax.f32 %v967, %v973
        %v1025 = vmax.f32 %v968, %v974
        %v1026 = vmax.f32 %v969, %v975
        %v1027 = vmax.f32 %v970, %v976
        %v1028 = vmax.f32 %v971, %v977
        %v1029 = vmax.f32 %v972, %v978
        %v1030 = vmax.f32 %v973, %v979
        %v1031 = vmax.f32 %v974, %v980
        %v1032 = vmax.f32 %v975, %v981
        %v1033 = vmax.f32 %v976, %v982
        %v1034 = vmax.f32 %v977, %v983
        %v1035 = vmax.f32 %v978, %v984
        %v1036 = vmax.f32 %v979, %v985
        %v1037 = vmax.f32 %v980, %v986
        %v1038 = vmax.f32 %v981, %v987
        %v1039 = vmax.f32 %v982, %v988
        %v1040 = vmax.f32 %v983, %v989
        %v1041 = vmax.f32 %v984, %v990
        %v1042 = vmax.f32 %v985, %v991
        %v1043 = vmax.f32 %v986, %v992
        %v1044 = vmax.f32 %v987, %v993
        %v1045 = vmax.f32 %v988, %v994
        %v1046 = vmax.f32 %v989, %v995
        %v1047 = vmax.f32 %v990, %v996
        %v1048 = vmax.f32 %v991, %v997
        %v1049 = vmax.f32 %v992, %v998
        %v1050 = vmax.f32 %v993, %v999
        %v1051 = vmax.f32 %v994, %v1000
        %v1052 = vmax.f32 %v995, %v1001
        %v1053 = vmax.f32 %v1002, %v1005
        %v1054 = vmax.f32 %v1003, %v1006
        %v1055 = vmax.f32 %v1004, %v1007
        %v1056 = vmax.f32 %v1005, %v1008
        %v1057 = vmax.f32 %v1006, %v1009
        %v1058 = vmax.f32 %v1007, %v1010
        %v1059 = vmax.f32 %v1008, %v1011
        %v1060 = vmax.f32 %v1009, %v1012
        %v1061 = vmax.f32 %v1010, %v1013
        %v1062 = vmax.f32 %v1011, %v1014
        %v1063 = vmax.f32 %v1012, %v1015
        %v1064 = vmax.f32 %v1013, %v1016
        %v1065 = vmax.f32 %v1014, %v1017
        %v1066 = vmax.f32 %v1015, %v1018
        %v1067 = vmax.f32 %v1016, %v1019
        %v1068 = vmax.f32 %v1017, %v1020
        %v1069 = vmax.f32 %v1018, %v1021
        %v1070 = vmax.f32 %v1019, %v1022
        %v1071 = vmax.f32 %v1020, %v1023
        %v1072 = vmax.f32 %v1021, %v1024
        %v1073 = vmax.f32 %v1022, %v1025
        %v1074 = vmax.f32 %v1023, %v1026
        %v1075 = vmax.f32 %v1024, %v1027
        %v1076 = vmax.f32 %v1025, %v1028
        %v1077 = vmax.f32 %v1026, %v1029
        %v1078 = vmax.f32 %v1027, %v1030
        %v1079 = vmax.f32 %v1028, %v1031
        %v1080 = vmax.f32 %v1029, %v1032
        %v1081 = vmax.f32 %v1030, %v1033
        %v1082 = vmax.f32 %v1031, %v1034
        %v1083 = vmax.f32 %v1032, %v1035
        %v1084 = vmax.f32 %v1033, %v1036
        %v1085 = vmax.f32 %v1034, %v1037
        %v1086 = vmax.f32 %v1035, %v1038
        %v1087 = vmax.f32 %v1036, %v1039
        %v1088 = vmax.f32 %v1037, %v1040
        %v1089 = vmax.f32 %v1038, %v1041
        %v1090 = vmax.f32 %v1039, %v1042
        %v1091 = vmax.f32 %v1040, %v1043
        %v1092 = vmax.f32 %v1041, %v1044
        %v1093 = vmax.f32 %v1042, %v1045
        %v1094 = vmax.f32 %v1043, %v1046
        %v1095 = vmax.f32 %v1044, %v1047
        %v1096 = vmax.f32 %v1045, %v1048
        %v1097 = vmax.f32 %v1046, %v1049
        %v1098 = vmax.f32 %v1047, %v1050
        %v1099 = vmax.f32 %v1048, %v1051
        %v1100 = vmax.f32 %v1049, %v1052
        %vm1149 = vcmask 1046528
        %v1150 = vrot.slane %v1053, 1
        %v1151 = vrot.slane %v1054, 1
        %v1152 = vsel %vm1149, %v1150, %v1151
        %v1153 = vrot.slane %v1055, 1
        %v1154 = vsel %vm1149, %v1151, %v1153
        %v1155 = vrot.slane %v1056, 1
        %v1156 = vrot.slane %v1057, 1
        %v1157 = vsel %vm1149, %v1155, %v1156
        %v1158 = vrot.slane %v1058, 1
        %v1159 = vsel %vm1149, %v1156, %v1158
        %v1160 = vrot.slane %v1059, 1
        %v1161 = vrot.slane %v1060, 1
        %v1162 = vsel %vm1149, %v1160, %v1161
        %v1163 = vrot.slane %v1061, 1
        %v1164 = vsel %vm1149, %v1161, %v1163
        %v1165 = vrot.slane %v1062, 1
        %v1166 = vrot.slane %v1063, 1
        %v1167 = vsel %vm1149, %v1165, %v1166
        %v1168 = vrot.slane %v1064, 1
        %v1169 = vsel %vm1149, %v1166, %v1168
        %v1170 = vrot.slane %v1065, 1
        %v1171 = vrot.slane %v1066, 1
        %v1172 = vsel %vm1149, %v1170, %v1171
        %v1173 = vrot.slane %v1067, 1
        %v1174 = vsel %vm1149, %v1171, %v1173
        %v1175 = vrot.slane %v1068, 1
        %v1176 = vrot.slane %v1069, 1
        %v1177 = vsel %vm1149, %v1175, %v1176
        %v1178 = vrot.slane %v1070, 1
        %v1179 = vsel %vm1149, %v1176, %v1178
        %v1180 = vrot.slane %v1071, 1
        %v1181 = vrot.slane %v1072, 1
        %v1182 = vsel %vm1149, %v1180, %v1181
        %v1183 = vrot.slane %v1073, 1
        %v1184 = vsel %vm1149, %v1181, %v1183
        %v1185 = vrot.slane %v1074, 1
        %v1186 = vrot.slane %v1075, 1
        %v1187 = vsel %vm1149, %v1185, %v1186
        %v1188 = vrot.slane %v1076, 1
        %v1189 = vsel %vm1149, %v1186, %v1188
        %v1190 = vrot.slane %v1077, 1
        %v1191 = vrot.slane %v1078, 1
        %v1192 = vsel %vm1149, %v1190, %v1191
        %v1193 = vrot.slane %v1079, 1
        %v1194 = vsel %vm1149, %v1191, %v1193
        %v1195 = vrot.slane %v1080, 1
        %v1196 = vrot.slane %v1081, 1
        %v1197 = vsel %vm1149, %v1195, %v1196
        %v1198 = vrot.slane %v1082, 1
        %v1199 = vsel %vm1149, %v1196, %v1198
        %v1200 = vrot.slane %v1083, 1
        %v1201 = vrot.slane %v1084, 1
        %v1202 = vsel %vm1149, %v1200, %v1201
        %v1203 = vrot.slane %v1085, 1
        %v1204 = vsel %vm1149, %v1201, %v1203
        %v1205 = vrot.slane %v1086, 1
        %v1206 = vrot.slane %v1087, 1
        %v1207 = vsel %vm1149, %v1205, %v1206
        %v1208 = vrot.slane %v1088, 1
        %v1209 = vsel %vm1149, %v1206, %v1208
        %v1210 = vrot.slane %v1089, 1
        %v1211 = vrot.slane %v1090, 1
        %v1212 = vsel %vm1149, %v1210, %v1211
        %v1213 = vrot.slane %v1091, 1
        %v1214 = vsel %vm1149, %v1211, %v1213
        %v1215 = vrot.slane %v1092, 1
        %v1216 = vrot.slane %v1093, 1
        %v1217 = vsel %vm1149, %v1215, %v1216
        %v1218 = vrot.slane %v1094, 1
        %v1219 = vsel %vm1149, %v1216, %v1218
        %v1220 = vrot.slane %v1095, 1
        %v1221 = vrot.slane %v1096, 1
        %v1222 = vsel %vm1149, %v1220, %v1221
        %v1223 = vrot.slane %v1097, 1
        %v1224 = vsel %vm1149, %v1221, %v1223
        %v1225 = vrot.slane %v1098, 1
        %v1226 = vrot.slane %v1099, 1
        %v1227 = vsel %vm1149, %v1225, %v1226
        %v1228 = vrot.slane %v1100, 1
        %v1229 = vsel %vm1149, %v1226, %v1228
        %v1278 = vmax.f32 %v1053, %v1152
        %v1279 = vmax.f32 %v1054, %v1154
        %v1280 = vmax.f32 %v1055, %v1153
        %v1281 = vmax.f32 %v1056, %v1157
        %v1282 = vmax.f32 %v1057, %v1159
        %v1283 = vmax.f32 %v1058, %v1158
        %v1284 = vmax.f32 %v1059, %v1162
        %v1285 = vmax.f32 %v1060, %v1164
        %v1286 = vmax.f32 %v1061, %v1163
        %v1287 = vmax.f32 %v1062, %v1167
        %v1288 = vmax.f32 %v1063, %v1169
        %v1289 = vmax.f32 %v1064, %v1168
        %v1290 = vmax.f32 %v1065, %v1172
        %v1291 = vmax.f32 %v1066, %v1174
        %v1292 = vmax.f32 %v1067, %v1173
        %v1293 = vmax.f32 %v1068, %v1177
        %v1294 = vmax.f32 %v1069, %v1179
        %v1295 = vmax.f32 %v1070, %v1178
        %v1296 = vmax.f32 %v1071, %v1182
        %v1297 = vmax.f32 %v1072, %v1184
        %v1298 = vmax.f32 %v1073, %v1183
        %v1299 = vmax.f32 %v1074, %v1187
        %v1300 = vmax.f32 %v1075, %v1189
        %v1301 = vmax.f32 %v1076, %v1188
        %v1302 = vmax.f32 %v1077, %v1192
        %v1303 = vmax.f32 %v1078, %v1194
        %v1304 = vmax.f32 %v1079, %v1193
        %v1305 = vmax.f32 %v1080, %v1197
        %v1306 = vmax.f32 %v1081, %v1199
        %v1307 = vmax.f32 %v1082, %v1198
        %v1308 = vmax.f32 %v1083, %v1202
        %v1309 = vmax.f32 %v1084, %v1204
        %v1310 = vmax.f32 %v1085, %v1203
        %v1311 = vmax.f32 %v1086, %v1207
        %v1312 = vmax.f32 %v1087, %v1209
        %v1313 = vmax.f32 %v1088, %v1208
        %v1314 = vmax.f32 %v1089, %v1212
        %v1315 = vmax.f32 %v1090, %v1214
        %v1316 = vmax.f32 %v1091, %v1213
        %v1317 = vmax.f32 %v1092, %v1217
        %v1318 = vmax.f32 %v1093, %v1219
        %v1319 = vmax.f32 %v1094, %v1218
        %v1320 = vmax.f32 %v1095, %v1222
        %v1321 = vmax.f32 %v1096, %v1224
        %v1322 = vmax.f32 %v1097, %v1223
        %v1323 = vmax.f32 %v1098, %v1227
        %v1324 = vmax.f32 %v1099, %v1229
        %v1325 = vmax.f32 %v1100, %v1228
        %vm1374 = vcmask 1045504
        %v1375 = vrot.slane %v1278, 2
        %v1376 = vrot.slane %v1279, 2
        %v1377 = vsel %vm1374, %v1375, %v1376
        %v1378 = vrot.slane %v1280, 2
        %v1379 = vsel %vm1374, %v1376, %v1378
        %v1380 = vrot.slane %v1281, 2
        %v1381 = vrot.slane %v1282, 2
        %v1382 = vsel %vm1374, %v1380, %v1381
        %v1383 = vrot.slane %v1283, 2
        %v1384 = vsel %vm1374, %v1381, %v1383
        %v1385 = vrot.slane %v1284, 2
        %v1386 = vrot.slane %v1285, 2
        %v1387 = vsel %vm1374, %v1385, %v1386
        %v1388 = vrot.slane %v1286, 2
        %v1389 = vsel %vm1374, %v1386, %v1388
        %v1390 = vrot.slane %v1287, 2
        %v1391 = vrot.slane %v1288, 2
        %v1392 = vsel %vm1374, %v1390, %v1391
        %v1393 = vrot.slane %v1289, 2
        %v1394 = vsel %vm1374, %v1391, %v1393
        %v1395 = vrot.slane %v1290, 2
        %v1396 = vrot.slane %v1291, 2
        %v1397 = vsel %vm1374, %v1395, %v1396
        %v1398 = vrot.slane %v1292, 2
        %v1399 = vsel %vm1374, %v1396, %v1398
        %v1400 = vrot.slane %v1293, 2
        %v1401 = vrot.slane %v1294, 2
        %v1402 = vsel %vm1374, %v1400, %v1401
        %v1403 = vrot.slane %v1295, 2
        %v1404 = vsel %vm1374, %v1401, %v1403
        %v1405 = vrot.slane %v1296, 2
        %v1406 = vrot.slane %v1297, 2
        %v1407 = vsel %vm1374, %v1405, %v1406
        %v1408 = vrot.slane %v1298, 2
        %v1409 = vsel %vm1374, %v1406, %v1408
        %v1410 = vrot.slane %v1299, 2
        %v1411 = vrot.slane %v1300, 2
        %v1412 = vsel %vm1374, %v1410, %v1411
        %v1413 = vrot.slane %v1301, 2
        %v1414 = vsel %vm1374, %v1411, %v1413
        %v1415 = vrot.slane %v1302, 2
        %v1416 = vrot.slane %v1303, 2
        %v1417 = vsel %vm1374, %v1415, %v1416
        %v1418 = vrot.slane %v1304, 2
        %v1419 = vsel %vm1374, %v1416, %v1418
        %v1420 = vrot.slane %v1305, 2
        %v1421 = vrot.slane %v1306, 2
        %v1422 = vsel %vm1374, %v1420, %v1421
        %v1423 = vrot.slane %v1307, 2
        %v1424 = vsel %vm1374, %v1421, %v1423
        %v1425 = vrot.slane %v1308, 2
        %v1426 = vrot.slane %v1309, 2
        %v1427 = vsel %vm1374, %v1425, %v1426
        %v1428 = vrot.slane %v1310, 2
        %v1429 = vsel %vm1374, %v1426, %v1428
        %v1430 = vrot.slane %v1311, 2
        %v1431 = vrot.slane %v1312, 2
        %v1432 = vsel %vm1374, %v1430, %v1431
        %v1433 = vrot.slane %v1313, 2
        %v1434 = vsel %vm1374, %v1431, %v1433
        %v1435 = vrot.slane %v1314, 2
        %v1436 = vrot.slane %v1315, 2
        %v1437 = vsel %vm1374, %v1435, %v1436
        %v1438 = vrot.slane %v1316, 2
        %v1439 = vsel %vm1374, %v1436, %v1438
        %v1440 = vrot.slane %v1317, 2
        %v1441 = vrot.slane %v1318, 2
        %v1442 = vsel %vm1374, %v1440, %v1441
        %v1443 = vrot.slane %v1319, 2
        %v1444 = vsel %vm1374, %v1441, %v1443
        %v1445 = vrot.slane %v1320, 2
        %v1446 = vrot.slane %v1321, 2
        %v1447 = vsel %vm1374, %v1445, %v1446
        %v1448 = vrot.slane %v1322, 2
        %v1449 = vsel %vm1374, %v1446, %v1448
        %v1450 = vrot.slane %v1323, 2
        %v1451 = vrot.slane %v1324, 2
        %v1452 = vsel %vm1374, %v1450, %v1451
        %v1453 = vrot.slane %v1325, 2
        %v1454 = vsel %vm1374, %v1451, %v1453
        %v1503 = vmax.f32 %v1278, %v1377
        %v1504 = vmax.f32 %v1279, %v1379
        %v1505 = vmax.f32 %v1280, %v1378
        %v1506 = vmax.f32 %v1281, %v1382
        %v1507 = vmax.f32 %v1282, %v1384
        %v1508 = vmax.f32 %v1283, %v1383
        %v1509 = vmax.f32 %v1284, %v1387
        %v1510 = vmax.f32 %v1285, %v1389
        %v1511 = vmax.f32 %v1286, %v1388
        %v1512 = vmax.f32 %v1287, %v1392
        %v1513 = vmax.f32 %v1288, %v1394
        %v1514 = vmax.f32 %v1289, %v1393
        %v1515 = vmax.f32 %v1290, %v1397
        %v1516 = vmax.f32 %v1291, %v1399
        %v1517 = vmax.f32 %v1292, %v1398
        %v1518 = vmax.f32 %v1293, %v1402
        %v1519 = vmax.f32 %v1294, %v1404
        %v1520 = vmax.f32 %v1295, %v1403
        %v1521 = vmax.f32 %v1296, %v1407
        %v1522 = vmax.f32 %v1297, %v1409
        %v1523 = vmax.f32 %v1298, %v1408
        %v1524 = vmax.f32 %v1299, %v1412
        %v1525 = vmax.f32 %v1300, %v1414
        %v1526 = vmax.f32 %v1301, %v1413
        %v1527 = vmax.f32 %v1302, %v1417
        %v1528 = vmax.f32 %v1303, %v1419
        %v1529 = vmax.f32 %v1304, %v1418
        %v1530 = vmax.f32 %v1305, %v1422
        %v1531 = vmax.f32 %v1306, %v1424
        %v1532 = vmax.f32 %v1307, %v1423
        %v1533 = vmax.f32 %v1308, %v1427
        %v1534 = vmax.f32 %v1309, %v1429
        %v1535 = vmax.f32 %v1310, %v1428
        %v1536 = vmax.f32 %v1311, %v1432
        %v1537 = vmax.f32 %v1312, %v1434
        %v1538 = vmax.f32 %v1313, %v1433
        %v1539 = vmax.f32 %v1314, %v1437
        %v1540 = vmax.f32 %v1315, %v1439
        %v1541 = vmax.f32 %v1316, %v1438
        %v1542 = vmax.f32 %v1317, %v1442
        %v1543 = vmax.f32 %v1318, %v1444
        %v1544 = vmax.f32 %v1319, %v1443
        %v1545 = vmax.f32 %v1320, %v1447
        %v1546 = vmax.f32 %v1321, %v1449
        %v1547 = vmax.f32 %v1322, %v1448
        %v1548 = vmax.f32 %v1323, %v1452
        %v1549 = vmax.f32 %v1324, %v1454
        %v1550 = vmax.f32 %v1325, %v1453
        %v1599 = vrot.slane %v1503, 1
        %v1600 = vrot.slane %v1504, 1
        %v1601 = vsel %vm1149, %v1599, %v1600
        %v1602 = vrot.slane %v1505, 1
        %v1603 = vsel %vm1149, %v1600, %v1602
        %v1604 = vrot.slane %v1506, 1
        %v1605 = vrot.slane %v1507, 1
        %v1606 = vsel %vm1149, %v1604, %v1605
        %v1607 = vrot.slane %v1508, 1
        %v1608 = vsel %vm1149, %v1605, %v1607
        %v1609 = vrot.slane %v1509, 1
        %v1610 = vrot.slane %v1510, 1
        %v1611 = vsel %vm1149, %v1609, %v1610
        %v1612 = vrot.slane %v1511, 1
        %v1613 = vsel %vm1149, %v1610, %v1612
        %v1614 = vrot.slane %v1512, 1
        %v1615 = vrot.slane %v1513, 1
        %v1616 = vsel %vm1149, %v1614, %v1615
        %v1617 = vrot.slane %v1514, 1
        %v1618 = vsel %vm1149, %v1615, %v1617
        %v1619 = vrot.slane %v1515, 1
        %v1620 = vrot.slane %v1516, 1
        %v1621 = vsel %vm1149, %v1619, %v1620
        %v1622 = vrot.slane %v1517, 1
        %v1623 = vsel %vm1149, %v1620, %v1622
        %v1624 = vrot.slane %v1518, 1
        %v1625 = vrot.slane %v1519, 1
        %v1626 = vsel %vm1149, %v1624, %v1625
        %v1627 = vrot.slane %v1520, 1
        %v1628 = vsel %vm1149, %v1625, %v1627
        %v1629 = vrot.slane %v1521, 1
        %v1630 = vrot.slane %v1522, 1
        %v1631 = vsel %vm1149, %v1629, %v1630
        %v1632 = vrot.slane %v1523, 1
        %v1633 = vsel %vm1149, %v1630, %v1632
        %v1634 = vrot.slane %v1524, 1
        %v1635 = vrot.slane %v1525, 1
        %v1636 = vsel %vm1149, %v1634, %v1635
        %v1637 = vrot.slane %v1526, 1
        %v1638 = vsel %vm1149, %v1635, %v1637
        %v1639 = vrot.slane %v1527, 1
        %v1640 = vrot.slane %v1528, 1
        %v1641 = vsel %vm1149, %v1639, %v1640
        %v1642 = vrot.slane %v1529, 1
        %v1643 = vsel %vm1149, %v1640, %v1642
        %v1644 = vrot.slane %v1530, 1
        %v1645 = vrot.slane %v1531, 1
        %v1646 = vsel %vm1149, %v1644, %v1645
        %v1647 = vrot.slane %v1532, 1
        %v1648 = vsel %vm1149, %v1645, %v1647
        %v1649 = vrot.slane %v1533, 1
        %v1650 = vrot.slane %v1534, 1
        %v1651 = vsel %vm1149, %v1649, %v1650
        %v1652 = vrot.slane %v1535, 1
        %v1653 = vsel %vm1149, %v1650, %v1652
        %v1654 = vrot.slane %v1536, 1
        %v1655 = vrot.slane %v1537, 1
        %v1656 = vsel %vm1149, %v1654, %v1655
        %v1657 = vrot.slane %v1538, 1
        %v1658 = vsel %vm1149, %v1655, %v1657
        %v1659 = vrot.slane %v1539, 1
        %v1660 = vrot.slane %v1540, 1
        %v1661 = vsel %vm1149, %v1659, %v1660
        %v1662 = vrot.slane %v1541, 1
        %v1663 = vsel %vm1149, %v1660, %v1662
        %v1664 = vrot.slane %v1542, 1
        %v1665 = vrot.slane %v1543, 1
        %v1666 = vsel %vm1149, %v1664, %v1665
        %v1667 = vrot.slane %v1544, 1
        %v1668 = vsel %vm1149, %v1665, %v1667
        %v1669 = vrot.slane %v1545, 1
        %v1670 = vrot.slane %v1546, 1
        %v1671 = vsel %vm1149, %v1669, %v1670
        %v1672 = vrot.slane %v1547, 1
        %v1673 = vsel %vm1149, %v1670, %v1672
        %v1674 = vrot.slane %v1548, 1
        %v1675 = vrot.slane %v1549, 1
        %v1676 = vsel %vm1149, %v1674, %v1675
        %v1677 = vrot.slane %v1550, 1
        %v1678 = vsel %vm1149, %v1675, %v1677
        %v1711 = vmax.f32 %v1503, %v1601
        %v1712 = vmax.f32 %v1504, %v1603
        %v1713 = vmax.f32 %v1506, %v1606
        %v1714 = vmax.f32 %v1507, %v1608
        %v1715 = vmax.f32 %v1509, %v1611
        %v1716 = vmax.f32 %v1510, %v1613
        %v1717 = vmax.f32 %v1512, %v1616
        %v1718 = vmax.f32 %v1513, %v1618
        %v1719 = vmax.f32 %v1515, %v1621
        %v1720 = vmax.f32 %v1516, %v1623
        %v1721 = vmax.f32 %v1518, %v1626
        %v1722 = vmax.f32 %v1519, %v1628
        %v1723 = vmax.f32 %v1521, %v1631
        %v1724 = vmax.f32 %v1522, %v1633
        %v1725 = vmax.f32 %v1524, %v1636
        %v1726 = vmax.f32 %v1525, %v1638
        %v1727 = vmax.f32 %v1527, %v1641
        %v1728 = vmax.f32 %v1528, %v1643
        %v1729 = vmax.f32 %v1530, %v1646
        %v1730 = vmax.f32 %v1531, %v1648
        %v1731 = vmax.f32 %v1533, %v1651
        %v1732 = vmax.f32 %v1534, %v1653
        %v1733 = vmax.f32 %v1536, %v1656
        %v1734 = vmax.f32 %v1537, %v1658
        %v1735 = vmax.f32 %v1539, %v1661
        %v1736 = vmax.f32 %v1540, %v1663
        %v1737 = vmax.f32 %v1542, %v1666
        %v1738 = vmax.f32 %v1543, %v1668
        %v1739 = vmax.f32 %v1545, %v1671
        %v1740 = vmax.f32 %v1546, %v1673
        %v1741 = vmax.f32 %v1548, %v1676
        %v1742 = vmax.f32 %v1549, %v1678
        %v1743 = vld [vmem:[%s3 + $0x80] sm:$0xff]
        %v1744 = vld [vmem:[%s3 + $0x88] sm:$0xff]
        %v1745 = vld [vmem:[%s3 + $0x90] sm:$0xff]
        %v1746 = vld [vmem:[%s3 + $0x98] sm:$0xff]
        %v1747 = vld [vmem:[%s3 + $0xa0] sm:$0xff]
        %v1748 = vld [vmem:[%s3 + $0xa8] sm:$0xff]
        %v1749 = vld [vmem:[%s3 + $0xb0] sm:$0xff]
        %v1750 = vld [vmem:[%s3 + $0xb8] sm:$0xff]
        %v1751 = vld [vmem:[%s3 + $0xc0] sm:$0xff]
        %v1752 = vld [vmem:[%s3 + $0xc8] sm:$0xff]
        %v1753 = vld [vmem:[%s3 + $0xd0] sm:$0xff]
        %v1754 = vld [vmem:[%s3 + $0xd8] sm:$0xff]
        %v1755 = vld [vmem:[%s3 + $0xe0] sm:$0xff]
        %v1756 = vld [vmem:[%s3 + $0xe8] sm:$0xff]
        %v1757 = vld [vmem:[%s3 + $0xf0] sm:$0xff]
        %v1758 = vld [vmem:[%s3 + $0xf8] sm:$0xff]
        %1759 = vmatprep.subr.mxu0 0.0
        %1760 = vmatpush1.msra.mxu0 %v1758
        %1761 = vmatprep.subr.mxu0 0.0
        %1762 = vmatpush1.msra.mxu0 %v1757
        %1763 = vmatprep.subr.mxu0 0.0
        %1764 = vmatpush1.msra.mxu0 %v1756
        %1765 = vmatprep.subr.mxu0 0.0
        %1766 = vmatpush1.msra.mxu0 %v1755
        %1767 = vmatprep.subr.mxu0 0.0
        %1768 = vmatpush1.msra.mxu0 %v1754
        %1769 = vmatprep.subr.mxu0 0.0
        %1770 = vmatpush1.msra.mxu0 %v1753
        %1771 = vmatprep.subr.mxu0 0.0
        %1772 = vmatpush1.msra.mxu0 %v1752
        %1773 = vmatprep.subr.mxu0 0.0
        %1774 = vmatpush1.msra.mxu0 %v1751
        %1775 = vmatprep.subr.mxu0 0.0
        %1776 = vmatpush1.msra.mxu0 %v1750
        %1777 = vmatprep.subr.mxu0 0.0
        %1778 = vmatpush1.msra.mxu0 %v1749
        %1779 = vmatprep.subr.mxu0 0.0
        %1780 = vmatpush1.msra.mxu0 %v1748
        %1781 = vmatprep.subr.mxu0 0.0
        %1782 = vmatpush1.msra.mxu0 %v1747
        %1783 = vmatprep.subr.mxu0 0.0
        %1784 = vmatpush1.msra.mxu0 %v1746
        %1785 = vmatprep.subr.mxu0 0.0
        %1786 = vmatpush1.msra.mxu0 %v1745
        %1787 = vmatprep.subr.mxu0 0.0
        %1788 = vmatpush1.msra.mxu0 %v1744
        %1789 = vmatprep.subr.mxu0 0.0
        %1790 = vmatpush1.msra.mxu0 %v1743
        %1791 = vmatprep.subr.mxu0 0.0
        %1792 = vmatpush2.msra.mxu0 0.0
        %1793 = vmatprep.subr.mxu0 0.0
        %1794 = vmatpush2.msra.mxu0 0.0
        %1795 = vmatprep.subr.mxu0 0.0
        %1796 = vmatpush2.msra.mxu0 0.0
        %1797 = vmatprep.subr.mxu0 0.0
        %1798 = vmatpush2.msra.mxu0 0.0
        %1799 = vmatprep.subr.mxu0 0.0
        %1800 = vmatpush2.msra.mxu0 0.0
        %1801 = vmatprep.subr.mxu0 0.0
        %1802 = vmatpush2.msra.mxu0 0.0
        %1803 = vmatprep.subr.mxu0 0.0
        %1804 = vmatpush2.msra.mxu0 0.0
        %1805 = vmatprep.subr.mxu0 0.0
        %1806 = vmatpush2.msra.mxu0 0.0
        %1807 = vmatprep.subr.mxu0 0.0
        %1808 = vmatpush2.msra.mxu0 0.0
        %1809 = vmatprep.subr.mxu0 0.0
        %1810 = vmatpush2.msra.mxu0 0.0
        %1811 = vmatprep.subr.mxu0 0.0
        %1812 = vmatpush2.msra.mxu0 0.0
        %1813 = vmatprep.subr.mxu0 0.0
        %1814 = vmatpush2.msra.mxu0 0.0
        %1815 = vmatprep.subr.mxu0 0.0
        %1816 = vmatpush2.msra.mxu0 0.0
        %1817 = vmatprep.subr.mxu0 0.0
        %1818 = vmatpush2.msra.mxu0 0.0
        %1819 = vmatprep.subr.mxu0 0.0
        %1820 = vmatpush2.msra.mxu0 0.0
        %1821 = vmatprep.subr.mxu0 0.0
        %1822 = vmatpush2.msra.mxu0 0.0
        %1823 = vmatprep.mubr.f32.mxu0 0.0
        %1824 = vmatmul.mubr.f32.gmra.mxu0 %v1711
        %v1825 = vpop.f32.mrf.mxu0
        %v1826 = vadd.f32 0.0, %v1825
        %v1827 = vpop.f32.mrf.mxu0
        %1828 = vmatprep.mubr.f32.mxu0 0.0
        %1829 = vmatmul.mubr.f32.gmra.mxu0 %v1712
        %v1830 = vpop.f32.mrf.mxu0
        %v1831 = vadd.f32 0.0, %v1830
        %v1832 = vpop.f32.mrf.mxu0
        %1833 = vmatprep.mubr.f32.mxu0 0.0
        %1834 = vmatmul.mubr.f32.gmra.mxu0 %v1713
        %v1835 = vpop.f32.mrf.mxu0
        %v1836 = vadd.f32 0.0, %v1835
        %v1837 = vpop.f32.mrf.mxu0
        %1838 = vmatprep.mubr.f32.mxu0 0.0
        %1839 = vmatmul.mubr.f32.gmra.mxu0 %v1714
        %v1840 = vpop.f32.mrf.mxu0
        %v1841 = vadd.f32 0.0, %v1840
        %v1842 = vpop.f32.mrf.mxu0
        %1843 = vmatprep.mubr.f32.mxu0 0.0
        %1844 = vmatmul.mubr.f32.gmra.mxu0 %v1715
        %v1845 = vpop.f32.mrf.mxu0
        %v1846 = vadd.f32 0.0, %v1845
        %v1847 = vpop.f32.mrf.mxu0
        %1848 = vmatprep.mubr.f32.mxu0 0.0
        %1849 = vmatmul.mubr.f32.gmra.mxu0 %v1716
        %v1850 = vpop.f32.mrf.mxu0
        %v1851 = vadd.f32 0.0, %v1850
        %v1852 = vpop.f32.mrf.mxu0
        %1853 = vmatprep.mubr.f32.mxu0 0.0
        %1854 = vmatmul.mubr.f32.gmra.mxu0 %v1717
        %v1855 = vpop.f32.mrf.mxu0
        %v1856 = vadd.f32 0.0, %v1855
        %v1857 = vpop.f32.mrf.mxu0
        %1858 = vmatprep.mubr.f32.mxu0 0.0
        %1859 = vmatmul.mubr.f32.gmra.mxu0 %v1718
        %v1860 = vpop.f32.mrf.mxu0
        %v1861 = vadd.f32 0.0, %v1860
        %v1862 = vpop.f32.mrf.mxu0
        %1863 = vmatprep.mubr.f32.mxu0 0.0
        %1864 = vmatmul.mubr.f32.gmra.mxu0 %v1719
        %v1865 = vpop.f32.mrf.mxu0
        %v1866 = vadd.f32 0.0, %v1865
        %v1867 = vpop.f32.mrf.mxu0
        %1868 = vmatprep.mubr.f32.mxu0 0.0
        %1869 = vmatmul.mubr.f32.gmra.mxu0 %v1720
        %v1870 = vpop.f32.mrf.mxu0
        %v1871 = vadd.f32 0.0, %v1870
        %v1872 = vpop.f32.mrf.mxu0
        %1873 = vmatprep.mubr.f32.mxu0 0.0
        %1874 = vmatmul.mubr.f32.gmra.mxu0 %v1721
        %v1875 = vpop.f32.mrf.mxu0
        %v1876 = vadd.f32 0.0, %v1875
        %v1877 = vpop.f32.mrf.mxu0
        %1878 = vmatprep.mubr.f32.mxu0 0.0
        %1879 = vmatmul.mubr.f32.gmra.mxu0 %v1722
        %v1880 = vpop.f32.mrf.mxu0
        %v1881 = vadd.f32 0.0, %v1880
        %v1882 = vpop.f32.mrf.mxu0
        %1883 = vmatprep.mubr.f32.mxu0 0.0
        %1884 = vmatmul.mubr.f32.gmra.mxu0 %v1723
        %v1885 = vpop.f32.mrf.mxu0
        %v1886 = vadd.f32 0.0, %v1885
        %v1887 = vpop.f32.mrf.mxu0
        %1888 = vmatprep.mubr.f32.mxu0 0.0
        %1889 = vmatmul.mubr.f32.gmra.mxu0 %v1724
        %v1890 = vpop.f32.mrf.mxu0
        %v1891 = vadd.f32 0.0, %v1890
        %v1892 = vpop.f32.mrf.mxu0
        %1893 = vmatprep.mubr.f32.mxu0 0.0
        %1894 = vmatmul.mubr.f32.gmra.mxu0 %v1725
        %v1895 = vpop.f32.mrf.mxu0
        %v1896 = vadd.f32 0.0, %v1895
        %v1897 = vpop.f32.mrf.mxu0
        %1898 = vmatprep.mubr.f32.mxu0 0.0
        %1899 = vmatmul.mubr.f32.gmra.mxu0 %v1726
        %v1900 = vpop.f32.mrf.mxu0
        %v1901 = vadd.f32 0.0, %v1900
        %v1902 = vpop.f32.mrf.mxu0
        %1903 = vmatprep.mubr.f32.mxu0 0.0
        %1904 = vmatmul.mubr.f32.gmra.mxu0 %v1727
        %v1905 = vpop.f32.mrf.mxu0
        %v1906 = vadd.f32 0.0, %v1905
        %v1907 = vpop.f32.mrf.mxu0
        %1908 = vmatprep.mubr.f32.mxu0 0.0
        %1909 = vmatmul.mubr.f32.gmra.mxu0 %v1728
        %v1910 = vpop.f32.mrf.mxu0
        %v1911 = vadd.f32 0.0, %v1910
        %v1912 = vpop.f32.mrf.mxu0
        %1913 = vmatprep.mubr.f32.mxu0 0.0
        %1914 = vmatmul.mubr.f32.gmra.mxu0 %v1729
        %v1915 = vpop.f32.mrf.mxu0
        %v1916 = vadd.f32 0.0, %v1915
        %v1917 = vpop.f32.mrf.mxu0
        %1918 = vmatprep.mubr.f32.mxu0 0.0
        %1919 = vmatmul.mubr.f32.gmra.mxu0 %v1730
        %v1920 = vpop.f32.mrf.mxu0
        %v1921 = vadd.f32 0.0, %v1920
        %v1922 = vpop.f32.mrf.mxu0
        %1923 = vmatprep.mubr.f32.mxu0 0.0
        %1924 = vmatmul.mubr.f32.gmra.mxu0 %v1731
        %v1925 = vpop.f32.mrf.mxu0
        %v1926 = vadd.f32 0.0, %v1925
        %v1927 = vpop.f32.mrf.mxu0
        %1928 = vmatprep.mubr.f32.mxu0 0.0
        %1929 = vmatmul.mubr.f32.gmra.mxu0 %v1732
        %v1930 = vpop.f32.mrf.mxu0
        %v1931 = vadd.f32 0.0, %v1930
        %v1932 = vpop.f32.mrf.mxu0
        %1933 = vmatprep.mubr.f32.mxu0 0.0
        %1934 = vmatmul.mubr.f32.gmra.mxu0 %v1733
        %v1935 = vpop.f32.mrf.mxu0
        %v1936 = vadd.f32 0.0, %v1935
        %v1937 = vpop.f32.mrf.mxu0
        %1938 = vmatprep.mubr.f32.mxu0 0.0
        %1939 = vmatmul.mubr.f32.gmra.mxu0 %v1734
        %v1940 = vpop.f32.mrf.mxu0
        %v1941 = vadd.f32 0.0, %v1940
        %v1942 = vpop.f32.mrf.mxu0
        %1943 = vmatprep.mubr.f32.mxu0 0.0
        %1944 = vmatmul.mubr.f32.gmra.mxu0 %v1735
        %v1945 = vpop.f32.mrf.mxu0
        %v1946 = vadd.f32 0.0, %v1945
        %v1947 = vpop.f32.mrf.mxu0
        %1948 = vmatprep.mubr.f32.mxu0 0.0
        %1949 = vmatmul.mubr.f32.gmra.mxu0 %v1736
        %v1950 = vpop.f32.mrf.mxu0
        %v1951 = vadd.f32 0.0, %v1950
        %v1952 = vpop.f32.mrf.mxu0
        %1953 = vmatprep.mubr.f32.mxu0 0.0
        %1954 = vmatmul.mubr.f32.gmra.mxu0 %v1737
        %v1955 = vpop.f32.mrf.mxu0
        %v1956 = vadd.f32 0.0, %v1955
        %v1957 = vpop.f32.mrf.mxu0
        %1958 = vmatprep.mubr.f32.mxu0 0.0
        %1959 = vmatmul.mubr.f32.gmra.mxu0 %v1738
        %v1960 = vpop.f32.mrf.mxu0
        %v1961 = vadd.f32 0.0, %v1960
        %v1962 = vpop.f32.mrf.mxu0
        %1963 = vmatprep.mubr.f32.mxu0 0.0
        %1964 = vmatmul.mubr.f32.gmra.mxu0 %v1739
        %v1965 = vpop.f32.mrf.mxu0
        %v1966 = vadd.f32 0.0, %v1965
        %v1967 = vpop.f32.mrf.mxu0
        %1968 = vmatprep.mubr.f32.mxu0 0.0
        %1969 = vmatmul.mubr.f32.gmra.mxu0 %v1740
        %v1970 = vpop.f32.mrf.mxu0
        %v1971 = vadd.f32 0.0, %v1970
        %v1972 = vpop.f32.mrf.mxu0
        %1973 = vmatprep.mubr.f32.mxu0 0.0
        %1974 = vmatmul.mubr.f32.gmra.mxu0 %v1741
        %v1975 = vpop.f32.mrf.mxu0
        %v1976 = vadd.f32 0.0, %v1975
        %v1977 = vpop.f32.mrf.mxu0
        %1978 = vmatprep.mubr.f32.mxu0 0.0
        %1979 = vmatmul.mubr.f32.gmra.mxu0 %v1742
        %v1980 = vpop.f32.mrf.mxu0
        %v1981 = vadd.f32 0.0, %v1980
        %v1982 = vpop.f32.mrf.mxu0
        %1983 = vdwg.mxu0
        %1984 = vmatprep.subr.mxu0 0.0
        %1985 = vmatpush1.msra.mxu0 %v852
        %1986 = vmatprep.subr.mxu0 0.0
        %1987 = vmatpush1.msra.mxu0 %v851
        %1988 = vmatprep.subr.mxu0 0.0
        %1989 = vmatpush1.msra.mxu0 %v850
        %1990 = vmatprep.subr.mxu0 0.0
        %1991 = vmatpush1.msra.mxu0 %v849
        %1992 = vmatprep.subr.mxu0 0.0
        %1993 = vmatpush1.msra.mxu0 %v848
        %1994 = vmatprep.subr.mxu0 0.0
        %1995 = vmatpush1.msra.mxu0 %v847
        %1996 = vmatprep.subr.mxu0 0.0
        %1997 = vmatpush1.msra.mxu0 %v846
        %1998 = vmatprep.subr.mxu0 0.0
        %1999 = vmatpush1.msra.mxu0 %v845
        %2000 = vmatprep.subr.mxu0 0.0
        %2001 = vmatpush1.msra.mxu0 %v844
        %2002 = vmatprep.subr.mxu0 0.0
        %2003 = vmatpush1.msra.mxu0 %v843
        %2004 = vmatprep.subr.mxu0 0.0
        %2005 = vmatpush1.msra.mxu0 %v842
        %2006 = vmatprep.subr.mxu0 0.0
        %2007 = vmatpush1.msra.mxu0 %v841
        %2008 = vmatprep.subr.mxu0 0.0
        %2009 = vmatpush1.msra.mxu0 %v840
        %2010 = vmatprep.subr.mxu0 0.0
        %2011 = vmatpush1.msra.mxu0 %v839
        %2012 = vmatprep.subr.mxu0 0.0
        %2013 = vmatpush1.msra.mxu0 %v838
        %2014 = vmatprep.subr.mxu0 0.0
        %2015 = vmatpush1.msra.mxu0 %v837
        %2016 = vmatprep.subr.mxu0 0.0
        %2017 = vmatpush2.msra.mxu0 0.0
        %2018 = vmatprep.subr.mxu0 0.0
        %2019 = vmatpush2.msra.mxu0 0.0
        %2020 = vmatprep.subr.mxu0 0.0
        %2021 = vmatpush2.msra.mxu0 0.0
        %2022 = vmatprep.subr.mxu0 0.0
        %2023 = vmatpush2.msra.mxu0 0.0
        %2024 = vmatprep.subr.mxu0 0.0
        %2025 = vmatpush2.msra.mxu0 0.0
        %2026 = vmatprep.subr.mxu0 0.0
        %2027 = vmatpush2.msra.mxu0 0.0
        %2028 = vmatprep.subr.mxu0 0.0
        %2029 = vmatpush2.msra.mxu0 0.0
        %2030 = vmatprep.subr.mxu0 0.0
        %2031 = vmatpush2.msra.mxu0 0.0
        %2032 = vmatprep.subr.mxu0 0.0
        %2033 = vmatpush2.msra.mxu0 0.0
        %2034 = vmatprep.subr.mxu0 0.0
        %2035 = vmatpush2.msra.mxu0 0.0
        %2036 = vmatprep.subr.mxu0 0.0
        %2037 = vmatpush2.msra.mxu0 0.0
        %2038 = vmatprep.subr.mxu0 0.0
        %2039 = vmatpush2.msra.mxu0 0.0
        %2040 = vmatprep.subr.mxu0 0.0
        %2041 = vmatpush2.msra.mxu0 0.0
        %2042 = vmatprep.subr.mxu0 0.0
        %2043 = vmatpush2.msra.mxu0 0.0
        %2044 = vmatprep.subr.mxu0 0.0
        %2045 = vmatpush2.msra.mxu0 0.0
        %2046 = vmatprep.subr.mxu0 0.0
        %2047 = vmatpush2.msra.mxu0 0.0
        %2048 = vmatprep.mubr.f32.mxu0 0.0
        %2049 = vmatmul.mubr.f32.gmra.mxu0 %v805
        %v2050 = vpop.f32.mrf.mxu0
        %v2051 = vadd.f32 %v1826, %v2050
        %v2052 = vpop.f32.mrf.mxu0
        %2053 = vmatprep.mubr.f32.mxu0 0.0
        %2054 = vmatmul.mubr.f32.gmra.mxu0 %v806
        %v2055 = vpop.f32.mrf.mxu0
        %v2056 = vadd.f32 %v1831, %v2055
        %v2057 = vpop.f32.mrf.mxu0
        %2058 = vmatprep.mubr.f32.mxu0 0.0
        %2059 = vmatmul.mubr.f32.gmra.mxu0 %v807
        %v2060 = vpop.f32.mrf.mxu0
        %v2061 = vadd.f32 %v1836, %v2060
        %v2062 = vpop.f32.mrf.mxu0
        %2063 = vmatprep.mubr.f32.mxu0 0.0
        %2064 = vmatmul.mubr.f32.gmra.mxu0 %v808
        %v2065 = vpop.f32.mrf.mxu0
        %v2066 = vadd.f32 %v1841, %v2065
        %v2067 = vpop.f32.mrf.mxu0
        %2068 = vmatprep.mubr.f32.mxu0 0.0
        %2069 = vmatmul.mubr.f32.gmra.mxu0 %v809
        %v2070 = vpop.f32.mrf.mxu0
        %v2071 = vadd.f32 %v1846, %v2070
        %v2072 = vpop.f32.mrf.mxu0
        %2073 = vmatprep.mubr.f32.mxu0 0.0
        %2074 = vmatmul.mubr.f32.gmra.mxu0 %v810
        %v2075 = vpop.f32.mrf.mxu0
        %v2076 = vadd.f32 %v1851, %v2075
        %v2077 = vpop.f32.mrf.mxu0
        %2078 = vmatprep.mubr.f32.mxu0 0.0
        %2079 = vmatmul.mubr.f32.gmra.mxu0 %v811
        %v2080 = vpop.f32.mrf.mxu0
        %v2081 = vadd.f32 %v1856, %v2080
        %v2082 = vpop.f32.mrf.mxu0
        %2083 = vmatprep.mubr.f32.mxu0 0.0
        %2084 = vmatmul.mubr.f32.gmra.mxu0 %v812
        %v2085 = vpop.f32.mrf.mxu0
        %v2086 = vadd.f32 %v1861, %v2085
        %v2087 = vpop.f32.mrf.mxu0
        %2088 = vmatprep.mubr.f32.mxu0 0.0
        %2089 = vmatmul.mubr.f32.gmra.mxu0 %v813
        %v2090 = vpop.f32.mrf.mxu0
        %v2091 = vadd.f32 %v1866, %v2090
        %v2092 = vpop.f32.mrf.mxu0
        %2093 = vmatprep.mubr.f32.mxu0 0.0
        %2094 = vmatmul.mubr.f32.gmra.mxu0 %v814
        %v2095 = vpop.f32.mrf.mxu0
        %v2096 = vadd.f32 %v1871, %v2095
        %v2097 = vpop.f32.mrf.mxu0
        %2098 = vmatprep.mubr.f32.mxu0 0.0
        %2099 = vmatmul.mubr.f32.gmra.mxu0 %v815
        %v2100 = vpop.f32.mrf.mxu0
        %v2101 = vadd.f32 %v1876, %v2100
        %v2102 = vpop.f32.mrf.mxu0
        %2103 = vmatprep.mubr.f32.mxu0 0.0
        %2104 = vmatmul.mubr.f32.gmra.mxu0 %v816
        %v2105 = vpop.f32.mrf.mxu0
        %v2106 = vadd.f32 %v1881, %v2105
        %v2107 = vpop.f32.mrf.mxu0
        %2108 = vmatprep.mubr.f32.mxu0 0.0
        %2109 = vmatmul.mubr.f32.gmra.mxu0 %v817
        %v2110 = vpop.f32.mrf.mxu0
        %v2111 = vadd.f32 %v1886, %v2110
        %v2112 = vpop.f32.mrf.mxu0
        %2113 = vmatprep.mubr.f32.mxu0 0.0
        %2114 = vmatmul.mubr.f32.gmra.mxu0 %v818
        %v2115 = vpop.f32.mrf.mxu0
        %v2116 = vadd.f32 %v1891, %v2115
        %v2117 = vpop.f32.mrf.mxu0
        %2118 = vmatprep.mubr.f32.mxu0 0.0
        %2119 = vmatmul.mubr.f32.gmra.mxu0 %v819
        %v2120 = vpop.f32.mrf.mxu0
        %v2121 = vadd.f32 %v1896, %v2120
        %v2122 = vpop.f32.mrf.mxu0
        %2123 = vmatprep.mubr.f32.mxu0 0.0
        %2124 = vmatmul.mubr.f32.gmra.mxu0 %v820
        %v2125 = vpop.f32.mrf.mxu0
        %v2126 = vadd.f32 %v1901, %v2125
        %v2127 = vpop.f32.mrf.mxu0
        %2128 = vmatprep.mubr.f32.mxu0 0.0
        %2129 = vmatmul.mubr.f32.gmra.mxu0 %v821
        %v2130 = vpop.f32.mrf.mxu0
        %v2131 = vadd.f32 %v1906, %v2130
        %v2132 = vpop.f32.mrf.mxu0
        %2133 = vmatprep.mubr.f32.mxu0 0.0
        %2134 = vmatmul.mubr.f32.gmra.mxu0 %v822
        %v2135 = vpop.f32.mrf.mxu0
        %v2136 = vadd.f32 %v1911, %v2135
        %v2137 = vpop.f32.mrf.mxu0
        %2138 = vmatprep.mubr.f32.mxu0 0.0
        %2139 = vmatmul.mubr.f32.gmra.mxu0 %v823
        %v2140 = vpop.f32.mrf.mxu0
        %v2141 = vadd.f32 %v1916, %v2140
        %v2142 = vpop.f32.mrf.mxu0
        %2143 = vmatprep.mubr.f32.mxu0 0.0
        %2144 = vmatmul.mubr.f32.gmra.mxu0 %v824
        %v2145 = vpop.f32.mrf.mxu0
        %v2146 = vadd.f32 %v1921, %v2145
        %v2147 = vpop.f32.mrf.mxu0
        %2148 = vmatprep.mubr.f32.mxu0 0.0
        %2149 = vmatmul.mubr.f32.gmra.mxu0 %v825
        %v2150 = vpop.f32.mrf.mxu0
        %v2151 = vadd.f32 %v1926, %v2150
        %v2152 = vpop.f32.mrf.mxu0
        %2153 = vmatprep.mubr.f32.mxu0 0.0
        %2154 = vmatmul.mubr.f32.gmra.mxu0 %v826
        %v2155 = vpop.f32.mrf.mxu0
        %v2156 = vadd.f32 %v1931, %v2155
        %v2157 = vpop.f32.mrf.mxu0
        %2158 = vmatprep.mubr.f32.mxu0 0.0
        %2159 = vmatmul.mubr.f32.gmra.mxu0 %v827
        %v2160 = vpop.f32.mrf.mxu0
        %v2161 = vadd.f32 %v1936, %v2160
        %v2162 = vpop.f32.mrf.mxu0
        %2163 = vmatprep.mubr.f32.mxu0 0.0
        %2164 = vmatmul.mubr.f32.gmra.mxu0 %v828
        %v2165 = vpop.f32.mrf.mxu0
        %v2166 = vadd.f32 %v1941, %v2165
        %v2167 = vpop.f32.mrf.mxu0
        %2168 = vmatprep.mubr.f32.mxu0 0.0
        %2169 = vmatmul.mubr.f32.gmra.mxu0 %v829
        %v2170 = vpop.f32.mrf.mxu0
        %v2171 = vadd.f32 %v1946, %v2170
        %v2172 = vpop.f32.mrf.mxu0
        %2173 = vmatprep.mubr.f32.mxu0 0.0
        %2174 = vmatmul.mubr.f32.gmra.mxu0 %v830
        %v2175 = vpop.f32.mrf.mxu0
        %v2176 = vadd.f32 %v1951, %v2175
        %v2177 = vpop.f32.mrf.mxu0
        %2178 = vmatprep.mubr.f32.mxu0 0.0
        %2179 = vmatmul.mubr.f32.gmra.mxu0 %v831
        %v2180 = vpop.f32.mrf.mxu0
        %v2181 = vadd.f32 %v1956, %v2180
        %v2182 = vpop.f32.mrf.mxu0
        %2183 = vmatprep.mubr.f32.mxu0 0.0
        %2184 = vmatmul.mubr.f32.gmra.mxu0 %v832
        %v2185 = vpop.f32.mrf.mxu0
        %v2186 = vadd.f32 %v1961, %v2185
        %v2187 = vpop.f32.mrf.mxu0
        %2188 = vmatprep.mubr.f32.mxu0 0.0
        %2189 = vmatmul.mubr.f32.gmra.mxu0 %v833
        %v2190 = vpop.f32.mrf.mxu0
        %v2191 = vadd.f32 %v1966, %v2190
        %v2192 = vpop.f32.mrf.mxu0
        %2193 = vmatprep.mubr.f32.mxu0 0.0
        %2194 = vmatmul.mubr.f32.gmra.mxu0 %v834
        %v2195 = vpop.f32.mrf.mxu0
        %v2196 = vadd.f32 %v1971, %v2195
        %v2197 = vpop.f32.mrf.mxu0
        %2198 = vmatprep.mubr.f32.mxu0 0.0
        %2199 = vmatmul.mubr.f32.gmra.mxu0 %v835
        %v2200 = vpop.f32.mrf.mxu0
        %v2201 = vadd.f32 %v1976, %v2200
        %v2202 = vpop.f32.mrf.mxu0
        %2203 = vmatprep.mubr.f32.mxu0 0.0
        %2204 = vmatmul.mubr.f32.gmra.mxu0 %v836
        %v2205 = vpop.f32.mrf.mxu0
        %v2206 = vadd.f32 %v1981, %v2205
        %v2207 = vpop.f32.mrf.mxu0
        %2208 = vdwg.mxu0
        %2209 = vst [vmem:[%s282 + $0x2] sm:$0xff] %v1711
        %2210 = vst [vmem:[%s282 + $0xa] sm:$0xff] %v1712
        %2211 = vst [vmem:[%s282 + $0x1a] sm:$0xff] %v1713
        %2212 = vst [vmem:[%s282 + $0x22] sm:$0xff] %v1714
        %2213 = vst [vmem:[%s282 + $0x32] sm:$0xff] %v1715
        %2214 = vst [vmem:[%s282 + $0x3a] sm:$0xff] %v1716
        %2215 = vst [vmem:[%s282 + $0x4a] sm:$0xff] %v1717
        %2216 = vst [vmem:[%s282 + $0x52] sm:$0xff] %v1718
        %2217 = vst [vmem:[%s282 + $0x62] sm:$0xff] %v1719
        %2218 = vst [vmem:[%s282 + $0x6a] sm:$0xff] %v1720
        %2219 = vst [vmem:[%s282 + $0x7a] sm:$0xff] %v1721
        %2220 = vst [vmem:[%s282 + $0x82] sm:$0xff] %v1722
        %2221 = vst [vmem:[%s282 + $0x92] sm:$0xff] %v1723
        %2222 = vst [vmem:[%s282 + $0x9a] sm:$0xff] %v1724
        %2223 = vst [vmem:[%s282 + $0xaa] sm:$0xff] %v1725
        %2224 = vst [vmem:[%s282 + $0xb2] sm:$0xff] %v1726
        %2225 = vst [vmem:[%s282 + $0xc2] sm:$0xff] %v1727
        %2226 = vst [vmem:[%s282 + $0xca] sm:$0xff] %v1728
        %2227 = vst [vmem:[%s282 + $0xda] sm:$0xff] %v1729
        %2228 = vst [vmem:[%s282 + $0xe2] sm:$0xff] %v1730
        %2229 = vst [vmem:[%s282 + $0xf2] sm:$0xff] %v1731
        %2230 = vst [vmem:[%s282 + $0xfa] sm:$0xff] %v1732
        %2231 = vst [vmem:[%s282 + $0x10a] sm:$0xff] %v1733
        %2232 = vst [vmem:[%s282 + $0x112] sm:$0xff] %v1734
        %2233 = vst [vmem:[%s282 + $0x122] sm:$0xff] %v1735
        %2234 = vst [vmem:[%s282 + $0x12a] sm:$0xff] %v1736
        %2235 = vst [vmem:[%s282 + $0x13a] sm:$0xff] %v1737
        %2236 = vst [vmem:[%s282 + $0x142] sm:$0xff] %v1738
        %2237 = vst [vmem:[%s282 + $0x152] sm:$0xff] %v1739
        %2238 = vst [vmem:[%s282 + $0x15a] sm:$0xff] %v1740
        %2239 = vst [vmem:[%s282 + $0x16a] sm:$0xff] %v1741
        %2240 = vst [vmem:[%s282 + $0x172] sm:$0xff] %v1742
        %v2241 = vld [vmem:[#allocation3] sm:$0xff]
        %v2242 = vld [vmem:[#allocation3 + $0x8] sm:$0xff]
        %v2243 = vld [vmem:[#allocation3 + $0x10] sm:$0xf]
        %v2244 = vld [vmem:[#allocation3 + $0x18] sm:$0xff]
        %v2245 = vld [vmem:[#allocation3 + $0x20] sm:$0xff]
        %v2246 = vld [vmem:[#allocation3 + $0x28] sm:$0xf]
        %v2247 = vld [vmem:[#allocation3 + $0x30] sm:$0xff]
        %v2248 = vld [vmem:[#allocation3 + $0x38] sm:$0xff]
        %v2249 = vld [vmem:[#allocation3 + $0x40] sm:$0xf]
        %v2250 = vld [vmem:[#allocation3 + $0x48] sm:$0xff]
        %v2251 = vld [vmem:[#allocation3 + $0x50] sm:$0xff]
        %v2252 = vld [vmem:[#allocation3 + $0x58] sm:$0xf]
        %v2253 = vld [vmem:[#allocation3 + $0x60] sm:$0xff]
        %v2254 = vld [vmem:[#allocation3 + $0x68] sm:$0xff]
        %v2255 = vld [vmem:[#allocation3 + $0x70] sm:$0xf]
        %v2256 = vld [vmem:[#allocation3 + $0x78] sm:$0xff]
        %v2257 = vld [vmem:[#allocation3 + $0x80] sm:$0xff]
        %v2258 = vld [vmem:[#allocation3 + $0x88] sm:$0xf]
        %v2259 = vld [vmem:[#allocation3 + $0x90] sm:$0xff]
        %v2260 = vld [vmem:[#allocation3 + $0x98] sm:$0xff]
        %v2261 = vld [vmem:[#allocation3 + $0xa0] sm:$0xf]
        %v2262 = vld [vmem:[#allocation3 + $0xa8] sm:$0xff]
        %v2263 = vld [vmem:[#allocation3 + $0xb0] sm:$0xff]
        %v2264 = vld [vmem:[#allocation3 + $0xb8] sm:$0xf]
        %v2265 = vld [vmem:[#allocation3 + $0xc0] sm:$0xff]
        %v2266 = vld [vmem:[#allocation3 + $0xc8] sm:$0xff]
        %v2267 = vld [vmem:[#allocation3 + $0xd0] sm:$0xf]
        %v2268 = vld [vmem:[#allocation3 + $0xd8] sm:$0xff]
        %v2269 = vld [vmem:[#allocation3 + $0xe0] sm:$0xff]
        %v2270 = vld [vmem:[#allocation3 + $0xe8] sm:$0xf]
        %v2271 = vld [vmem:[#allocation3 + $0xf0] sm:$0xff]
        %v2272 = vld [vmem:[#allocation3 + $0xf8] sm:$0xff]
        %v2273 = vld [vmem:[#allocation3 + $0x100] sm:$0xf]
        %v2274 = vld [vmem:[#allocation3 + $0x108] sm:$0xff]
        %v2275 = vld [vmem:[#allocation3 + $0x110] sm:$0xff]
        %v2276 = vld [vmem:[#allocation3 + $0x118] sm:$0xf]
        %v2277 = vld [vmem:[#allocation3 + $0x120] sm:$0xff]
        %v2278 = vld [vmem:[#allocation3 + $0x128] sm:$0xff]
        %v2279 = vld [vmem:[#allocation3 + $0x130] sm:$0xf]
        %v2280 = vld [vmem:[#allocation3 + $0x138] sm:$0xff]
        %v2281 = vld [vmem:[#allocation3 + $0x140] sm:$0xff]
        %v2282 = vld [vmem:[#allocation3 + $0x148] sm:$0xf]
        %v2283 = vld [vmem:[#allocation3 + $0x150] sm:$0xff]
        %v2284 = vld [vmem:[#allocation3 + $0x158] sm:$0xff]
        %v2285 = vld [vmem:[#allocation3 + $0x160] sm:$0xf]
        %v2286 = vld [vmem:[#allocation3 + $0x168] sm:$0xff]
        %v2287 = vld [vmem:[#allocation3 + $0x170] sm:$0xff]
        %v2288 = vld [vmem:[#allocation3 + $0x178] sm:$0xf]
        %v2289 = vld [vmem:[#allocation3 + $0x180] sm:$0xff]
        %v2290 = vld [vmem:[#allocation3 + $0x188] sm:$0xff]
        %v2291 = vld [vmem:[#allocation3 + $0x190] sm:$0xf]
        %v2292 = vld [vmem:[#allocation3 + $0x198] sm:$0xff]
        %v2293 = vld [vmem:[#allocation3 + $0x1a0] sm:$0xff]
        %v2294 = vld [vmem:[#allocation3 + $0x1a8] sm:$0xf]
        %v2295 = vld [vmem:[#allocation3 + $0x1b0] sm:$0xff]
        %v2296 = vld [vmem:[#allocation3 + $0x1b8] sm:$0xff]
        %v2297 = vld [vmem:[#allocation3 + $0x1c0] sm:$0xf]
        %v2298 = vld [vmem:[#allocation3 + $0x1c8] sm:$0xff]
        %v2299 = vld [vmem:[#allocation3 + $0x1d0] sm:$0xff]
        %v2300 = vld [vmem:[#allocation3 + $0x1d8] sm:$0xf]
        %v2301 = vmax.f32 %v2241, %v2244
        %v2302 = vmax.f32 %v2242, %v2245
        %v2303 = vmax.f32 %v2243, %v2246
        %v2304 = vmax.f32 %v2244, %v2247
        %v2305 = vmax.f32 %v2245, %v2248
        %v2306 = vmax.f32 %v2246, %v2249
        %v2307 = vmax.f32 %v2247, %v2250
        %v2308 = vmax.f32 %v2248, %v2251
        %v2309 = vmax.f32 %v2249, %v2252
        %v2310 = vmax.f32 %v2250, %v2253
        %v2311 = vmax.f32 %v2251, %v2254
        %v2312 = vmax.f32 %v2252, %v2255
        %v2313 = vmax.f32 %v2253, %v2256
        %v2314 = vmax.f32 %v2254, %v2257
        %v2315 = vmax.f32 %v2255, %v2258
        %v2316 = vmax.f32 %v2256, %v2259
        %v2317 = vmax.f32 %v2257, %v2260
        %v2318 = vmax.f32 %v2258, %v2261
        %v2319 = vmax.f32 %v2259, %v2262
        %v2320 = vmax.f32 %v2260, %v2263
        %v2321 = vmax.f32 %v2261, %v2264
        %v2322 = vmax.f32 %v2262, %v2265
        %v2323 = vmax.f32 %v2263, %v2266
        %v2324 = vmax.f32 %v2264, %v2267
        %v2325 = vmax.f32 %v2265, %v2268
        %v2326 = vmax.f32 %v2266, %v2269
        %v2327 = vmax.f32 %v2267, %v2270
        %v2328 = vmax.f32 %v2268, %v2271
        %v2329 = vmax.f32 %v2269, %v2272
        %v2330 = vmax.f32 %v2270, %v2273
        %v2331 = vmax.f32 %v2271, %v2274
        %v2332 = vmax.f32 %v2272, %v2275
        %v2333 = vmax.f32 %v2273, %v2276
        %v2334 = vmax.f32 %v2274, %v2277
        %v2335 = vmax.f32 %v2275, %v2278
        %v2336 = vmax.f32 %v2276, %v2279
        %v2337 = vmax.f32 %v2277, %v2280
        %v2338 = vmax.f32 %v2278, %v2281
        %v2339 = vmax.f32 %v2279, %v2282
        %v2340 = vmax.f32 %v2280, %v2283
        %v2341 = vmax.f32 %v2281, %v2284
        %v2342 = vmax.f32 %v2282, %v2285
        %v2343 = vmax.f32 %v2283, %v2286
        %v2344 = vmax.f32 %v2284, %v2287
        %v2345 = vmax.f32 %v2285, %v2288
        %v2346 = vmax.f32 %v2286, %v2289
        %v2347 = vmax.f32 %v2287, %v2290
        %v2348 = vmax.f32 %v2288, %v2291
        %v2349 = vmax.f32 %v2289, %v2292
        %v2350 = vmax.f32 %v2290, %v2293
        %v2351 = vmax.f32 %v2291, %v2294
        %v2352 = vmax.f32 %v2292, %v2295
        %v2353 = vmax.f32 %v2293, %v2296
        %v2354 = vmax.f32 %v2294, %v2297
        %v2355 = vmax.f32 %v2295, %v2298
        %v2356 = vmax.f32 %v2296, %v2299
        %v2357 = vmax.f32 %v2297, %v2300
        %v2358 = vmax.f32 %v2301, %v2307
        %v2359 = vmax.f32 %v2302, %v2308
        %v2360 = vmax.f32 %v2303, %v2309
        %v2361 = vmax.f32 %v2304, %v2310
        %v2362 = vmax.f32 %v2305, %v2311
        %v2363 = vmax.f32 %v2306, %v2312
        %v2364 = vmax.f32 %v2307, %v2313
        %v2365 = vmax.f32 %v2308, %v2314
        %v2366 = vmax.f32 %v2309, %v2315
        %v2367 = vmax.f32 %v2310, %v2316
        %v2368 = vmax.f32 %v2311, %v2317
        %v2369 = vmax.f32 %v2312, %v2318
        %v2370 = vmax.f32 %v2313, %v2319
        %v2371 = vmax.f32 %v2314, %v2320
        %v2372 = vmax.f32 %v2315, %v2321
        %v2373 = vmax.f32 %v2316, %v2322
        %v2374 = vmax.f32 %v2317, %v2323
        %v2375 = vmax.f32 %v2318, %v2324
        %v2376 = vmax.f32 %v2319, %v2325
        %v2377 = vmax.f32 %v2320, %v2326
        %v2378 = vmax.f32 %v2321, %v2327
        %v2379 = vmax.f32 %v2322, %v2328
        %v2380 = vmax.f32 %v2323, %v2329
        %v2381 = vmax.f32 %v2324, %v2330
        %v2382 = vmax.f32 %v2325, %v2331
        %v2383 = vmax.f32 %v2326, %v2332
        %v2384 = vmax.f32 %v2327, %v2333
        %v2385 = vmax.f32 %v2328, %v2334
        %v2386 = vmax.f32 %v2329, %v2335
        %v2387 = vmax.f32 %v2330, %v2336
        %v2388 = vmax.f32 %v2331, %v2337
        %v2389 = vmax.f32 %v2332, %v2338
        %v2390 = vmax.f32 %v2333, %v2339
        %v2391 = vmax.f32 %v2334, %v2340
        %v2392 = vmax.f32 %v2335, %v2341
        %v2393 = vmax.f32 %v2336, %v2342
        %v2394 = vmax.f32 %v2337, %v2343
        %v2395 = vmax.f32 %v2338, %v2344
        %v2396 = vmax.f32 %v2339, %v2345
        %v2397 = vmax.f32 %v2340, %v2346
        %v2398 = vmax.f32 %v2341, %v2347
        %v2399 = vmax.f32 %v2342, %v2348
        %v2400 = vmax.f32 %v2343, %v2349
        %v2401 = vmax.f32 %v2344, %v2350
        %v2402 = vmax.f32 %v2345, %v2351
        %v2403 = vmax.f32 %v2346, %v2352
        %v2404 = vmax.f32 %v2347, %v2353
        %v2405 = vmax.f32 %v2348, %v2354
        %v2406 = vmax.f32 %v2349, %v2355
        %v2407 = vmax.f32 %v2350, %v2356
        %v2408 = vmax.f32 %v2351, %v2357
        %v2409 = vmax.f32 %v2358, %v2361
        %v2410 = vmax.f32 %v2359, %v2362
        %v2411 = vmax.f32 %v2360, %v2363
        %v2412 = vmax.f32 %v2361, %v2364
        %v2413 = vmax.f32 %v2362, %v2365
        %v2414 = vmax.f32 %v2363, %v2366
        %v2415 = vmax.f32 %v2364, %v2367
        %v2416 = vmax.f32 %v2365, %v2368
        %v2417 = vmax.f32 %v2366, %v2369
        %v2418 = vmax.f32 %v2367, %v2370
        %v2419 = vmax.f32 %v2368, %v2371
        %v2420 = vmax.f32 %v2369, %v2372
        %v2421 = vmax.f32 %v2370, %v2373
        %v2422 = vmax.f32 %v2371, %v2374
        %v2423 = vmax.f32 %v2372, %v2375
        %v2424 = vmax.f32 %v2373, %v2376
        %v2425 = vmax.f32 %v2374, %v2377
        %v2426 = vmax.f32 %v2375, %v2378
        %v2427 = vmax.f32 %v2376, %v2379
        %v2428 = vmax.f32 %v2377, %v2380
        %v2429 = vmax.f32 %v2378, %v2381
        %v2430 = vmax.f32 %v2379, %v2382
        %v2431 = vmax.f32 %v2380, %v2383
        %v2432 = vmax.f32 %v2381, %v2384
        %v2433 = vmax.f32 %v2382, %v2385
        %v2434 = vmax.f32 %v2383, %v2386
        %v2435 = vmax.f32 %v2384, %v2387
        %v2436 = vmax.f32 %v2385, %v2388
        %v2437 = vmax.f32 %v2386, %v2389
        %v2438 = vmax.f32 %v2387, %v2390
        %v2439 = vmax.f32 %v2388, %v2391
        %v2440 = vmax.f32 %v2389, %v2392
        %v2441 = vmax.f32 %v2390, %v2393
        %v2442 = vmax.f32 %v2391, %v2394
        %v2443 = vmax.f32 %v2392, %v2395
        %v2444 = vmax.f32 %v2393, %v2396
        %v2445 = vmax.f32 %v2394, %v2397
        %v2446 = vmax.f32 %v2395, %v2398
        %v2447 = vmax.f32 %v2396, %v2399
        %v2448 = vmax.f32 %v2397, %v2400
        %v2449 = vmax.f32 %v2398, %v2401
        %v2450 = vmax.f32 %v2399, %v2402
        %v2451 = vmax.f32 %v2400, %v2403
        %v2452 = vmax.f32 %v2401, %v2404
        %v2453 = vmax.f32 %v2402, %v2405
        %v2454 = vmax.f32 %v2403, %v2406
        %v2455 = vmax.f32 %v2404, %v2407
        %v2456 = vmax.f32 %v2405, %v2408
        %v2505 = vrot.slane %v2409, 1
        %v2506 = vrot.slane %v2410, 1
        %v2507 = vsel %vm1149, %v2505, %v2506
        %v2508 = vrot.slane %v2411, 1
        %v2509 = vsel %vm1149, %v2506, %v2508
        %v2510 = vrot.slane %v2412, 1
        %v2511 = vrot.slane %v2413, 1
        %v2512 = vsel %vm1149, %v2510, %v2511
        %v2513 = vrot.slane %v2414, 1
        %v2514 = vsel %vm1149, %v2511, %v2513
        %v2515 = vrot.slane %v2415, 1
        %v2516 = vrot.slane %v2416, 1
        %v2517 = vsel %vm1149, %v2515, %v2516
        %v2518 = vrot.slane %v2417, 1
        %v2519 = vsel %vm1149, %v2516, %v2518
        %v2520 = vrot.slane %v2418, 1
        %v2521 = vrot.slane %v2419, 1
        %v2522 = vsel %vm1149, %v2520, %v2521
        %v2523 = vrot.slane %v2420, 1
        %v2524 = vsel %vm1149, %v2521, %v2523
        %v2525 = vrot.slane %v2421, 1
        %v2526 = vrot.slane %v2422, 1
        %v2527 = vsel %vm1149, %v2525, %v2526
        %v2528 = vrot.slane %v2423, 1
        %v2529 = vsel %vm1149, %v2526, %v2528
        %v2530 = vrot.slane %v2424, 1
        %v2531 = vrot.slane %v2425, 1
        %v2532 = vsel %vm1149, %v2530, %v2531
        %v2533 = vrot.slane %v2426, 1
        %v2534 = vsel %vm1149, %v2531, %v2533
        %v2535 = vrot.slane %v2427, 1
        %v2536 = vrot.slane %v2428, 1
        %v2537 = vsel %vm1149, %v2535, %v2536
        %v2538 = vrot.slane %v2429, 1
        %v2539 = vsel %vm1149, %v2536, %v2538
        %v2540 = vrot.slane %v2430, 1
        %v2541 = vrot.slane %v2431, 1
        %v2542 = vsel %vm1149, %v2540, %v2541
        %v2543 = vrot.slane %v2432, 1
        %v2544 = vsel %vm1149, %v2541, %v2543
        %v2545 = vrot.slane %v2433, 1
        %v2546 = vrot.slane %v2434, 1
        %v2547 = vsel %vm1149, %v2545, %v2546
        %v2548 = vrot.slane %v2435, 1
        %v2549 = vsel %vm1149, %v2546, %v2548
        %v2550 = vrot.slane %v2436, 1
        %v2551 = vrot.slane %v2437, 1
        %v2552 = vsel %vm1149, %v2550, %v2551
        %v2553 = vrot.slane %v2438, 1
        %v2554 = vsel %vm1149, %v2551, %v2553
        %v2555 = vrot.slane %v2439, 1
        %v2556 = vrot.slane %v2440, 1
        %v2557 = vsel %vm1149, %v2555, %v2556
        %v2558 = vrot.slane %v2441, 1
        %v2559 = vsel %vm1149, %v2556, %v2558
        %v2560 = vrot.slane %v2442, 1
        %v2561 = vrot.slane %v2443, 1
        %v2562 = vsel %vm1149, %v2560, %v2561
        %v2563 = vrot.slane %v2444, 1
        %v2564 = vsel %vm1149, %v2561, %v2563
        %v2565 = vrot.slane %v2445, 1
        %v2566 = vrot.slane %v2446, 1
        %v2567 = vsel %vm1149, %v2565, %v2566
        %v2568 = vrot.slane %v2447, 1
        %v2569 = vsel %vm1149, %v2566, %v2568
        %v2570 = vrot.slane %v2448, 1
        %v2571 = vrot.slane %v2449, 1
        %v2572 = vsel %vm1149, %v2570, %v2571
        %v2573 = vrot.slane %v2450, 1
        %v2574 = vsel %vm1149, %v2571, %v2573
        %v2575 = vrot.slane %v2451, 1
        %v2576 = vrot.slane %v2452, 1
        %v2577 = vsel %vm1149, %v2575, %v2576
        %v2578 = vrot.slane %v2453, 1
        %v2579 = vsel %vm1149, %v2576, %v2578
        %v2580 = vrot.slane %v2454, 1
        %v2581 = vrot.slane %v2455, 1
        %v2582 = vsel %vm1149, %v2580, %v2581
        %v2583 = vrot.slane %v2456, 1
        %v2584 = vsel %vm1149, %v2581, %v2583
        %v2633 = vmax.f32 %v2409, %v2507
        %v2634 = vmax.f32 %v2410, %v2509
        %v2635 = vmax.f32 %v2411, %v2508
        %v2636 = vmax.f32 %v2412, %v2512
        %v2637 = vmax.f32 %v2413, %v2514
        %v2638 = vmax.f32 %v2414, %v2513
        %v2639 = vmax.f32 %v2415, %v2517
        %v2640 = vmax.f32 %v2416, %v2519
        %v2641 = vmax.f32 %v2417, %v2518
        %v2642 = vmax.f32 %v2418, %v2522
        %v2643 = vmax.f32 %v2419, %v2524
        %v2644 = vmax.f32 %v2420, %v2523
        %v2645 = vmax.f32 %v2421, %v2527
        %v2646 = vmax.f32 %v2422, %v2529
        %v2647 = vmax.f32 %v2423, %v2528
        %v2648 = vmax.f32 %v2424, %v2532
        %v2649 = vmax.f32 %v2425, %v2534
        %v2650 = vmax.f32 %v2426, %v2533
        %v2651 = vmax.f32 %v2427, %v2537
        %v2652 = vmax.f32 %v2428, %v2539
        %v2653 = vmax.f32 %v2429, %v2538
        %v2654 = vmax.f32 %v2430, %v2542
        %v2655 = vmax.f32 %v2431, %v2544
        %v2656 = vmax.f32 %v2432, %v2543
        %v2657 = vmax.f32 %v2433, %v2547
        %v2658 = vmax.f32 %v2434, %v2549
        %v2659 = vmax.f32 %v2435, %v2548
        %v2660 = vmax.f32 %v2436, %v2552
        %v2661 = vmax.f32 %v2437, %v2554
        %v2662 = vmax.f32 %v2438, %v2553
        %v2663 = vmax.f32 %v2439, %v2557
        %v2664 = vmax.f32 %v2440, %v2559
        %v2665 = vmax.f32 %v2441, %v2558
        %v2666 = vmax.f32 %v2442, %v2562
        %v2667 = vmax.f32 %v2443, %v2564
        %v2668 = vmax.f32 %v2444, %v2563
        %v2669 = vmax.f32 %v2445, %v2567
        %v2670 = vmax.f32 %v2446, %v2569
        %v2671 = vmax.f32 %v2447, %v2568
        %v2672 = vmax.f32 %v2448, %v2572
        %v2673 = vmax.f32 %v2449, %v2574
        %v2674 = vmax.f32 %v2450, %v2573
        %v2675 = vmax.f32 %v2451, %v2577
        %v2676 = vmax.f32 %v2452, %v2579
        %v2677 = vmax.f32 %v2453, %v2578
        %v2678 = vmax.f32 %v2454, %v2582
        %v2679 = vmax.f32 %v2455, %v2584
        %v2680 = vmax.f32 %v2456, %v2583
        %v2729 = vrot.slane %v2633, 2
        %v2730 = vrot.slane %v2634, 2
        %v2731 = vsel %vm1374, %v2729, %v2730
        %v2732 = vrot.slane %v2635, 2
        %v2733 = vsel %vm1374, %v2730, %v2732
        %v2734 = vrot.slane %v2636, 2
        %v2735 = vrot.slane %v2637, 2
        %v2736 = vsel %vm1374, %v2734, %v2735
        %v2737 = vrot.slane %v2638, 2
        %v2738 = vsel %vm1374, %v2735, %v2737
        %v2739 = vrot.slane %v2639, 2
        %v2740 = vrot.slane %v2640, 2
        %v2741 = vsel %vm1374, %v2739, %v2740
        %v2742 = vrot.slane %v2641, 2
        %v2743 = vsel %vm1374, %v2740, %v2742
        %v2744 = vrot.slane %v2642, 2
        %v2745 = vrot.slane %v2643, 2
        %v2746 = vsel %vm1374, %v2744, %v2745
        %v2747 = vrot.slane %v2644, 2
        %v2748 = vsel %vm1374, %v2745, %v2747
        %v2749 = vrot.slane %v2645, 2
        %v2750 = vrot.slane %v2646, 2
        %v2751 = vsel %vm1374, %v2749, %v2750
        %v2752 = vrot.slane %v2647, 2
        %v2753 = vsel %vm1374, %v2750, %v2752
        %v2754 = vrot.slane %v2648, 2
        %v2755 = vrot.slane %v2649, 2
        %v2756 = vsel %vm1374, %v2754, %v2755
        %v2757 = vrot.slane %v2650, 2
        %v2758 = vsel %vm1374, %v2755, %v2757
        %v2759 = vrot.slane %v2651, 2
        %v2760 = vrot.slane %v2652, 2
        %v2761 = vsel %vm1374, %v2759, %v2760
        %v2762 = vrot.slane %v2653, 2
        %v2763 = vsel %vm1374, %v2760, %v2762
        %v2764 = vrot.slane %v2654, 2
        %v2765 = vrot.slane %v2655, 2
        %v2766 = vsel %vm1374, %v2764, %v2765
        %v2767 = vrot.slane %v2656, 2
        %v2768 = vsel %vm1374, %v2765, %v2767
        %v2769 = vrot.slane %v2657, 2
        %v2770 = vrot.slane %v2658, 2
        %v2771 = vsel %vm1374, %v2769, %v2770
        %v2772 = vrot.slane %v2659, 2
        %v2773 = vsel %vm1374, %v2770, %v2772
        %v2774 = vrot.slane %v2660, 2
        %v2775 = vrot.slane %v2661, 2
        %v2776 = vsel %vm1374, %v2774, %v2775
        %v2777 = vrot.slane %v2662, 2
        %v2778 = vsel %vm1374, %v2775, %v2777
        %v2779 = vrot.slane %v2663, 2
        %v2780 = vrot.slane %v2664, 2
        %v2781 = vsel %vm1374, %v2779, %v2780
        %v2782 = vrot.slane %v2665, 2
        %v2783 = vsel %vm1374, %v2780, %v2782
        %v2784 = vrot.slane %v2666, 2
        %v2785 = vrot.slane %v2667, 2
        %v2786 = vsel %vm1374, %v2784, %v2785
        %v2787 = vrot.slane %v2668, 2
        %v2788 = vsel %vm1374, %v2785, %v2787
        %v2789 = vrot.slane %v2669, 2
        %v2790 = vrot.slane %v2670, 2
        %v2791 = vsel %vm1374, %v2789, %v2790
        %v2792 = vrot.slane %v2671, 2
        %v2793 = vsel %vm1374, %v2790, %v2792
        %v2794 = vrot.slane %v2672, 2
        %v2795 = vrot.slane %v2673, 2
        %v2796 = vsel %vm1374, %v2794, %v2795
        %v2797 = vrot.slane %v2674, 2
        %v2798 = vsel %vm1374, %v2795, %v2797
        %v2799 = vrot.slane %v2675, 2
        %v2800 = vrot.slane %v2676, 2
        %v2801 = vsel %vm1374, %v2799, %v2800
        %v2802 = vrot.slane %v2677, 2
        %v2803 = vsel %vm1374, %v2800, %v2802
        %v2804 = vrot.slane %v2678, 2
        %v2805 = vrot.slane %v2679, 2
        %v2806 = vsel %vm1374, %v2804, %v2805
        %v2807 = vrot.slane %v2680, 2
        %v2808 = vsel %vm1374, %v2805, %v2807
        %v2857 = vmax.f32 %v2633, %v2731
        %v2858 = vmax.f32 %v2634, %v2733
        %v2859 = vmax.f32 %v2635, %v2732
        %v2860 = vmax.f32 %v2636, %v2736
        %v2861 = vmax.f32 %v2637, %v2738
        %v2862 = vmax.f32 %v2638, %v2737
        %v2863 = vmax.f32 %v2639, %v2741
        %v2864 = vmax.f32 %v2640, %v2743
        %v2865 = vmax.f32 %v2641, %v2742
        %v2866 = vmax.f32 %v2642, %v2746
        %v2867 = vmax.f32 %v2643, %v2748
        %v2868 = vmax.f32 %v2644, %v2747
        %v2869 = vmax.f32 %v2645, %v2751
        %v2870 = vmax.f32 %v2646, %v2753
        %v2871 = vmax.f32 %v2647, %v2752
        %v2872 = vmax.f32 %v2648, %v2756
        %v2873 = vmax.f32 %v2649, %v2758
        %v2874 = vmax.f32 %v2650, %v2757
        %v2875 = vmax.f32 %v2651, %v2761
        %v2876 = vmax.f32 %v2652, %v2763
        %v2877 = vmax.f32 %v2653, %v2762
        %v2878 = vmax.f32 %v2654, %v2766
        %v2879 = vmax.f32 %v2655, %v2768
        %v2880 = vmax.f32 %v2656, %v2767
        %v2881 = vmax.f32 %v2657, %v2771
        %v2882 = vmax.f32 %v2658, %v2773
        %v2883 = vmax.f32 %v2659, %v2772
        %v2884 = vmax.f32 %v2660, %v2776
        %v2885 = vmax.f32 %v2661, %v2778
        %v2886 = vmax.f32 %v2662, %v2777
        %v2887 = vmax.f32 %v2663, %v2781
        %v2888 = vmax.f32 %v2664, %v2783
        %v2889 = vmax.f32 %v2665, %v2782
        %v2890 = vmax.f32 %v2666, %v2786
        %v2891 = vmax.f32 %v2667, %v2788
        %v2892 = vmax.f32 %v2668, %v2787
        %v2893 = vmax.f32 %v2669, %v2791
        %v2894 = vmax.f32 %v2670, %v2793
        %v2895 = vmax.f32 %v2671, %v2792
        %v2896 = vmax.f32 %v2672, %v2796
        %v2897 = vmax.f32 %v2673, %v2798
        %v2898 = vmax.f32 %v2674, %v2797
        %v2899 = vmax.f32 %v2675, %v2801
        %v2900 = vmax.f32 %v2676, %v2803
        %v2901 = vmax.f32 %v2677, %v2802
        %v2902 = vmax.f32 %v2678, %v2806
        %v2903 = vmax.f32 %v2679, %v2808
        %v2904 = vmax.f32 %v2680, %v2807
        %v2953 = vrot.slane %v2857, 1
        %v2954 = vrot.slane %v2858, 1
        %v2955 = vsel %vm1149, %v2953, %v2954
        %v2956 = vrot.slane %v2859, 1
        %v2957 = vsel %vm1149, %v2954, %v2956
        %v2958 = vrot.slane %v2860, 1
        %v2959 = vrot.slane %v2861, 1
        %v2960 = vsel %vm1149, %v2958, %v2959
        %v2961 = vrot.slane %v2862, 1
        %v2962 = vsel %vm1149, %v2959, %v2961
        %v2963 = vrot.slane %v2863, 1
        %v2964 = vrot.slane %v2864, 1
        %v2965 = vsel %vm1149, %v2963, %v2964
        %v2966 = vrot.slane %v2865, 1
        %v2967 = vsel %vm1149, %v2964, %v2966
        %v2968 = vrot.slane %v2866, 1
        %v2969 = vrot.slane %v2867, 1
        %v2970 = vsel %vm1149, %v2968, %v2969
        %v2971 = vrot.slane %v2868, 1
        %v2972 = vsel %vm1149, %v2969, %v2971
        %v2973 = vrot.slane %v2869, 1
        %v2974 = vrot.slane %v2870, 1
        %v2975 = vsel %vm1149, %v2973, %v2974
        %v2976 = vrot.slane %v2871, 1
        %v2977 = vsel %vm1149, %v2974, %v2976
        %v2978 = vrot.slane %v2872, 1
        %v2979 = vrot.slane %v2873, 1
        %v2980 = vsel %vm1149, %v2978, %v2979
        %v2981 = vrot.slane %v2874, 1
        %v2982 = vsel %vm1149, %v2979, %v2981
        %v2983 = vrot.slane %v2875, 1
        %v2984 = vrot.slane %v2876, 1
        %v2985 = vsel %vm1149, %v2983, %v2984
        %v2986 = vrot.slane %v2877, 1
        %v2987 = vsel %vm1149, %v2984, %v2986
        %v2988 = vrot.slane %v2878, 1
        %v2989 = vrot.slane %v2879, 1
        %v2990 = vsel %vm1149, %v2988, %v2989
        %v2991 = vrot.slane %v2880, 1
        %v2992 = vsel %vm1149, %v2989, %v2991
        %v2993 = vrot.slane %v2881, 1
        %v2994 = vrot.slane %v2882, 1
        %v2995 = vsel %vm1149, %v2993, %v2994
        %v2996 = vrot.slane %v2883, 1
        %v2997 = vsel %vm1149, %v2994, %v2996
        %v2998 = vrot.slane %v2884, 1
        %v2999 = vrot.slane %v2885, 1
        %v3000 = vsel %vm1149, %v2998, %v2999
        %v3001 = vrot.slane %v2886, 1
        %v3002 = vsel %vm1149, %v2999, %v3001
        %v3003 = vrot.slane %v2887, 1
        %v3004 = vrot.slane %v2888, 1
        %v3005 = vsel %vm1149, %v3003, %v3004
        %v3006 = vrot.slane %v2889, 1
        %v3007 = vsel %vm1149, %v3004, %v3006
        %v3008 = vrot.slane %v2890, 1
        %v3009 = vrot.slane %v2891, 1
        %v3010 = vsel %vm1149, %v3008, %v3009
        %v3011 = vrot.slane %v2892, 1
        %v3012 = vsel %vm1149, %v3009, %v3011
        %v3013 = vrot.slane %v2893, 1
        %v3014 = vrot.slane %v2894, 1
        %v3015 = vsel %vm1149, %v3013, %v3014
        %v3016 = vrot.slane %v2895, 1
        %v3017 = vsel %vm1149, %v3014, %v3016
        %v3018 = vrot.slane %v2896, 1
        %v3019 = vrot.slane %v2897, 1
        %v3020 = vsel %vm1149, %v3018, %v3019
        %v3021 = vrot.slane %v2898, 1
        %v3022 = vsel %vm1149, %v3019, %v3021
        %v3023 = vrot.slane %v2899, 1
        %v3024 = vrot.slane %v2900, 1
        %v3025 = vsel %vm1149, %v3023, %v3024
        %v3026 = vrot.slane %v2901, 1
        %v3027 = vsel %vm1149, %v3024, %v3026
        %v3028 = vrot.slane %v2902, 1
        %v3029 = vrot.slane %v2903, 1
        %v3030 = vsel %vm1149, %v3028, %v3029
        %v3031 = vrot.slane %v2904, 1
        %v3032 = vsel %vm1149, %v3029, %v3031
        %v3065 = vmax.f32 %v2857, %v2955
        %v3066 = vmax.f32 %v2858, %v2957
        %v3067 = vmax.f32 %v2860, %v2960
        %v3068 = vmax.f32 %v2861, %v2962
        %v3069 = vmax.f32 %v2863, %v2965
        %v3070 = vmax.f32 %v2864, %v2967
        %v3071 = vmax.f32 %v2866, %v2970
        %v3072 = vmax.f32 %v2867, %v2972
        %v3073 = vmax.f32 %v2869, %v2975
        %v3074 = vmax.f32 %v2870, %v2977
        %v3075 = vmax.f32 %v2872, %v2980
        %v3076 = vmax.f32 %v2873, %v2982
        %v3077 = vmax.f32 %v2875, %v2985
        %v3078 = vmax.f32 %v2876, %v2987
        %v3079 = vmax.f32 %v2878, %v2990
        %v3080 = vmax.f32 %v2879, %v2992
        %v3081 = vmax.f32 %v2881, %v2995
        %v3082 = vmax.f32 %v2882, %v2997
        %v3083 = vmax.f32 %v2884, %v3000
        %v3084 = vmax.f32 %v2885, %v3002
        %v3085 = vmax.f32 %v2887, %v3005
        %v3086 = vmax.f32 %v2888, %v3007
        %v3087 = vmax.f32 %v2890, %v3010
        %v3088 = vmax.f32 %v2891, %v3012
        %v3089 = vmax.f32 %v2893, %v3015
        %v3090 = vmax.f32 %v2894, %v3017
        %v3091 = vmax.f32 %v2896, %v3020
        %v3092 = vmax.f32 %v2897, %v3022
        %v3093 = vmax.f32 %v2899, %v3025
        %v3094 = vmax.f32 %v2900, %v3027
        %v3095 = vmax.f32 %v2902, %v3030
        %v3096 = vmax.f32 %v2903, %v3032
        %v3097 = vld [vmem:[%s3 + $0x100] sm:$0xff]
        %v3098 = vld [vmem:[%s3 + $0x108] sm:$0xff]
        %v3099 = vld [vmem:[%s3 + $0x110] sm:$0xff]
        %v3100 = vld [vmem:[%s3 + $0x118] sm:$0xff]
        %v3101 = vld [vmem:[%s3 + $0x120] sm:$0xff]
        %v3102 = vld [vmem:[%s3 + $0x128] sm:$0xff]
        %v3103 = vld [vmem:[%s3 + $0x130] sm:$0xff]
        %v3104 = vld [vmem:[%s3 + $0x138] sm:$0xff]
        %v3105 = vld [vmem:[%s3 + $0x140] sm:$0xff]
        %v3106 = vld [vmem:[%s3 + $0x148] sm:$0xff]
        %v3107 = vld [vmem:[%s3 + $0x150] sm:$0xff]
        %v3108 = vld [vmem:[%s3 + $0x158] sm:$0xff]
        %v3109 = vld [vmem:[%s3 + $0x160] sm:$0xff]
        %v3110 = vld [vmem:[%s3 + $0x168] sm:$0xff]
        %v3111 = vld [vmem:[%s3 + $0x170] sm:$0xff]
        %v3112 = vld [vmem:[%s3 + $0x178] sm:$0xff]
        %3113 = vmatprep.subr.mxu0 0.0
        %3114 = vmatpush1.msra.mxu0 %v3112
        %3115 = vmatprep.subr.mxu0 0.0
        %3116 = vmatpush1.msra.mxu0 %v3111
        %3117 = vmatprep.subr.mxu0 0.0
        %3118 = vmatpush1.msra.mxu0 %v3110
        %3119 = vmatprep.subr.mxu0 0.0
        %3120 = vmatpush1.msra.mxu0 %v3109
        %3121 = vmatprep.subr.mxu0 0.0
        %3122 = vmatpush1.msra.mxu0 %v3108
        %3123 = vmatprep.subr.mxu0 0.0
        %3124 = vmatpush1.msra.mxu0 %v3107
        %3125 = vmatprep.subr.mxu0 0.0
        %3126 = vmatpush1.msra.mxu0 %v3106
        %3127 = vmatprep.subr.mxu0 0.0
        %3128 = vmatpush1.msra.mxu0 %v3105
        %3129 = vmatprep.subr.mxu0 0.0
        %3130 = vmatpush1.msra.mxu0 %v3104
        %3131 = vmatprep.subr.mxu0 0.0
        %3132 = vmatpush1.msra.mxu0 %v3103
        %3133 = vmatprep.subr.mxu0 0.0
        %3134 = vmatpush1.msra.mxu0 %v3102
        %3135 = vmatprep.subr.mxu0 0.0
        %3136 = vmatpush1.msra.mxu0 %v3101
        %3137 = vmatprep.subr.mxu0 0.0
        %3138 = vmatpush1.msra.mxu0 %v3100
        %3139 = vmatprep.subr.mxu0 0.0
        %3140 = vmatpush1.msra.mxu0 %v3099
        %3141 = vmatprep.subr.mxu0 0.0
        %3142 = vmatpush1.msra.mxu0 %v3098
        %3143 = vmatprep.subr.mxu0 0.0
        %3144 = vmatpush1.msra.mxu0 %v3097
        %3145 = vmatprep.subr.mxu0 0.0
        %3146 = vmatpush2.msra.mxu0 0.0
        %3147 = vmatprep.subr.mxu0 0.0
        %3148 = vmatpush2.msra.mxu0 0.0
        %3149 = vmatprep.subr.mxu0 0.0
        %3150 = vmatpush2.msra.mxu0 0.0
        %3151 = vmatprep.subr.mxu0 0.0
        %3152 = vmatpush2.msra.mxu0 0.0
        %3153 = vmatprep.subr.mxu0 0.0
        %3154 = vmatpush2.msra.mxu0 0.0
        %3155 = vmatprep.subr.mxu0 0.0
        %3156 = vmatpush2.msra.mxu0 0.0
        %3157 = vmatprep.subr.mxu0 0.0
        %3158 = vmatpush2.msra.mxu0 0.0
        %3159 = vmatprep.subr.mxu0 0.0
        %3160 = vmatpush2.msra.mxu0 0.0
        %3161 = vmatprep.subr.mxu0 0.0
        %3162 = vmatpush2.msra.mxu0 0.0
        %3163 = vmatprep.subr.mxu0 0.0
        %3164 = vmatpush2.msra.mxu0 0.0
        %3165 = vmatprep.subr.mxu0 0.0
        %3166 = vmatpush2.msra.mxu0 0.0
        %3167 = vmatprep.subr.mxu0 0.0
        %3168 = vmatpush2.msra.mxu0 0.0
        %3169 = vmatprep.subr.mxu0 0.0
        %3170 = vmatpush2.msra.mxu0 0.0
        %3171 = vmatprep.subr.mxu0 0.0
        %3172 = vmatpush2.msra.mxu0 0.0
        %3173 = vmatprep.subr.mxu0 0.0
        %3174 = vmatpush2.msra.mxu0 0.0
        %3175 = vmatprep.subr.mxu0 0.0
        %3176 = vmatpush2.msra.mxu0 0.0
        %3177 = vmatprep.mubr.f32.mxu0 0.0
        %3178 = vmatmul.mubr.f32.gmra.mxu0 %v3065
        %v3179 = vpop.f32.mrf.mxu0
        %v3180 = vadd.f32 0.0, %v3179
        %v3181 = vpop.f32.mrf.mxu0
        %3182 = vmatprep.mubr.f32.mxu0 0.0
        %3183 = vmatmul.mubr.f32.gmra.mxu0 %v3066
        %v3184 = vpop.f32.mrf.mxu0
        %v3185 = vadd.f32 0.0, %v3184
        %v3186 = vpop.f32.mrf.mxu0
        %3187 = vmatprep.mubr.f32.mxu0 0.0
        %3188 = vmatmul.mubr.f32.gmra.mxu0 %v3067
        %v3189 = vpop.f32.mrf.mxu0
        %v3190 = vadd.f32 0.0, %v3189
        %v3191 = vpop.f32.mrf.mxu0
        %3192 = vmatprep.mubr.f32.mxu0 0.0
        %3193 = vmatmul.mubr.f32.gmra.mxu0 %v3068
        %v3194 = vpop.f32.mrf.mxu0
        %v3195 = vadd.f32 0.0, %v3194
        %v3196 = vpop.f32.mrf.mxu0
        %3197 = vmatprep.mubr.f32.mxu0 0.0
        %3198 = vmatmul.mubr.f32.gmra.mxu0 %v3069
        %v3199 = vpop.f32.mrf.mxu0
        %v3200 = vadd.f32 0.0, %v3199
        %v3201 = vpop.f32.mrf.mxu0
        %3202 = vmatprep.mubr.f32.mxu0 0.0
        %3203 = vmatmul.mubr.f32.gmra.mxu0 %v3070
        %v3204 = vpop.f32.mrf.mxu0
        %v3205 = vadd.f32 0.0, %v3204
        %v3206 = vpop.f32.mrf.mxu0
        %3207 = vmatprep.mubr.f32.mxu0 0.0
        %3208 = vmatmul.mubr.f32.gmra.mxu0 %v3071
        %v3209 = vpop.f32.mrf.mxu0
        %v3210 = vadd.f32 0.0, %v3209
        %v3211 = vpop.f32.mrf.mxu0
        %3212 = vmatprep.mubr.f32.mxu0 0.0
        %3213 = vmatmul.mubr.f32.gmra.mxu0 %v3072
        %v3214 = vpop.f32.mrf.mxu0
        %v3215 = vadd.f32 0.0, %v3214
        %v3216 = vpop.f32.mrf.mxu0
        %3217 = vmatprep.mubr.f32.mxu0 0.0
        %3218 = vmatmul.mubr.f32.gmra.mxu0 %v3073
        %v3219 = vpop.f32.mrf.mxu0
        %v3220 = vadd.f32 0.0, %v3219
        %v3221 = vpop.f32.mrf.mxu0
        %3222 = vmatprep.mubr.f32.mxu0 0.0
        %3223 = vmatmul.mubr.f32.gmra.mxu0 %v3074
        %v3224 = vpop.f32.mrf.mxu0
        %v3225 = vadd.f32 0.0, %v3224
        %v3226 = vpop.f32.mrf.mxu0
        %3227 = vmatprep.mubr.f32.mxu0 0.0
        %3228 = vmatmul.mubr.f32.gmra.mxu0 %v3075
        %v3229 = vpop.f32.mrf.mxu0
        %v3230 = vadd.f32 0.0, %v3229
        %v3231 = vpop.f32.mrf.mxu0
        %3232 = vmatprep.mubr.f32.mxu0 0.0
        %3233 = vmatmul.mubr.f32.gmra.mxu0 %v3076
        %v3234 = vpop.f32.mrf.mxu0
        %v3235 = vadd.f32 0.0, %v3234
        %v3236 = vpop.f32.mrf.mxu0
        %3237 = vmatprep.mubr.f32.mxu0 0.0
        %3238 = vmatmul.mubr.f32.gmra.mxu0 %v3077
        %v3239 = vpop.f32.mrf.mxu0
        %v3240 = vadd.f32 0.0, %v3239
        %v3241 = vpop.f32.mrf.mxu0
        %3242 = vmatprep.mubr.f32.mxu0 0.0
        %3243 = vmatmul.mubr.f32.gmra.mxu0 %v3078
        %v3244 = vpop.f32.mrf.mxu0
        %v3245 = vadd.f32 0.0, %v3244
        %v3246 = vpop.f32.mrf.mxu0
        %3247 = vmatprep.mubr.f32.mxu0 0.0
        %3248 = vmatmul.mubr.f32.gmra.mxu0 %v3079
        %v3249 = vpop.f32.mrf.mxu0
        %v3250 = vadd.f32 0.0, %v3249
        %v3251 = vpop.f32.mrf.mxu0
        %3252 = vmatprep.mubr.f32.mxu0 0.0
        %3253 = vmatmul.mubr.f32.gmra.mxu0 %v3080
        %v3254 = vpop.f32.mrf.mxu0
        %v3255 = vadd.f32 0.0, %v3254
        %v3256 = vpop.f32.mrf.mxu0
        %3257 = vmatprep.mubr.f32.mxu0 0.0
        %3258 = vmatmul.mubr.f32.gmra.mxu0 %v3081
        %v3259 = vpop.f32.mrf.mxu0
        %v3260 = vadd.f32 0.0, %v3259
        %v3261 = vpop.f32.mrf.mxu0
        %3262 = vmatprep.mubr.f32.mxu0 0.0
        %3263 = vmatmul.mubr.f32.gmra.mxu0 %v3082
        %v3264 = vpop.f32.mrf.mxu0
        %v3265 = vadd.f32 0.0, %v3264
        %v3266 = vpop.f32.mrf.mxu0
        %3267 = vmatprep.mubr.f32.mxu0 0.0
        %3268 = vmatmul.mubr.f32.gmra.mxu0 %v3083
        %v3269 = vpop.f32.mrf.mxu0
        %v3270 = vadd.f32 0.0, %v3269
        %v3271 = vpop.f32.mrf.mxu0
        %3272 = vmatprep.mubr.f32.mxu0 0.0
        %3273 = vmatmul.mubr.f32.gmra.mxu0 %v3084
        %v3274 = vpop.f32.mrf.mxu0
        %v3275 = vadd.f32 0.0, %v3274
        %v3276 = vpop.f32.mrf.mxu0
        %3277 = vmatprep.mubr.f32.mxu0 0.0
        %3278 = vmatmul.mubr.f32.gmra.mxu0 %v3085
        %v3279 = vpop.f32.mrf.mxu0
        %v3280 = vadd.f32 0.0, %v3279
        %v3281 = vpop.f32.mrf.mxu0
        %3282 = vmatprep.mubr.f32.mxu0 0.0
        %3283 = vmatmul.mubr.f32.gmra.mxu0 %v3086
        %v3284 = vpop.f32.mrf.mxu0
        %v3285 = vadd.f32 0.0, %v3284
        %v3286 = vpop.f32.mrf.mxu0
        %3287 = vmatprep.mubr.f32.mxu0 0.0
        %3288 = vmatmul.mubr.f32.gmra.mxu0 %v3087
        %v3289 = vpop.f32.mrf.mxu0
        %v3290 = vadd.f32 0.0, %v3289
        %v3291 = vpop.f32.mrf.mxu0
        %3292 = vmatprep.mubr.f32.mxu0 0.0
        %3293 = vmatmul.mubr.f32.gmra.mxu0 %v3088
        %v3294 = vpop.f32.mrf.mxu0
        %v3295 = vadd.f32 0.0, %v3294
        %v3296 = vpop.f32.mrf.mxu0
        %3297 = vmatprep.mubr.f32.mxu0 0.0
        %3298 = vmatmul.mubr.f32.gmra.mxu0 %v3089
        %v3299 = vpop.f32.mrf.mxu0
        %v3300 = vadd.f32 0.0, %v3299
        %v3301 = vpop.f32.mrf.mxu0
        %3302 = vmatprep.mubr.f32.mxu0 0.0
        %3303 = vmatmul.mubr.f32.gmra.mxu0 %v3090
        %v3304 = vpop.f32.mrf.mxu0
        %v3305 = vadd.f32 0.0, %v3304
        %v3306 = vpop.f32.mrf.mxu0
        %3307 = vmatprep.mubr.f32.mxu0 0.0
        %3308 = vmatmul.mubr.f32.gmra.mxu0 %v3091
        %v3309 = vpop.f32.mrf.mxu0
        %v3310 = vadd.f32 0.0, %v3309
        %v3311 = vpop.f32.mrf.mxu0
        %3312 = vmatprep.mubr.f32.mxu0 0.0
        %3313 = vmatmul.mubr.f32.gmra.mxu0 %v3092
        %v3314 = vpop.f32.mrf.mxu0
        %v3315 = vadd.f32 0.0, %v3314
        %v3316 = vpop.f32.mrf.mxu0
        %3317 = vmatprep.mubr.f32.mxu0 0.0
        %3318 = vmatmul.mubr.f32.gmra.mxu0 %v3093
        %v3319 = vpop.f32.mrf.mxu0
        %v3320 = vadd.f32 0.0, %v3319
        %v3321 = vpop.f32.mrf.mxu0
        %3322 = vmatprep.mubr.f32.mxu0 0.0
        %3323 = vmatmul.mubr.f32.gmra.mxu0 %v3094
        %v3324 = vpop.f32.mrf.mxu0
        %v3325 = vadd.f32 0.0, %v3324
        %v3326 = vpop.f32.mrf.mxu0
        %3327 = vmatprep.mubr.f32.mxu0 0.0
        %3328 = vmatmul.mubr.f32.gmra.mxu0 %v3095
        %v3329 = vpop.f32.mrf.mxu0
        %v3330 = vadd.f32 0.0, %v3329
        %v3331 = vpop.f32.mrf.mxu0
        %3332 = vmatprep.mubr.f32.mxu0 0.0
        %3333 = vmatmul.mubr.f32.gmra.mxu0 %v3096
        %v3334 = vpop.f32.mrf.mxu0
        %v3335 = vadd.f32 0.0, %v3334
        %v3336 = vpop.f32.mrf.mxu0
        %3337 = vdwg.mxu0
        %v3338 = vadd.f32 %v2051, %v3180
        %v3339 = vadd.f32 %v2056, %v3185
        %v3340 = vadd.f32 %v2061, %v3190
        %v3341 = vadd.f32 %v2066, %v3195
        %v3342 = vadd.f32 %v2071, %v3200
        %v3343 = vadd.f32 %v2076, %v3205
        %v3344 = vadd.f32 %v2081, %v3210
        %v3345 = vadd.f32 %v2086, %v3215
        %v3346 = vadd.f32 %v2091, %v3220
        %v3347 = vadd.f32 %v2096, %v3225
        %v3348 = vadd.f32 %v2101, %v3230
        %v3349 = vadd.f32 %v2106, %v3235
        %v3350 = vadd.f32 %v2111, %v3240
        %v3351 = vadd.f32 %v2116, %v3245
        %v3352 = vadd.f32 %v2121, %v3250
        %v3353 = vadd.f32 %v2126, %v3255
        %v3354 = vadd.f32 %v2131, %v3260
        %v3355 = vadd.f32 %v2136, %v3265
        %v3356 = vadd.f32 %v2141, %v3270
        %v3357 = vadd.f32 %v2146, %v3275
        %v3358 = vadd.f32 %v2151, %v3280
        %v3359 = vadd.f32 %v2156, %v3285
        %v3360 = vadd.f32 %v2161, %v3290
        %v3361 = vadd.f32 %v2166, %v3295
        %v3362 = vadd.f32 %v2171, %v3300
        %v3363 = vadd.f32 %v2176, %v3305
        %v3364 = vadd.f32 %v2181, %v3310
        %v3365 = vadd.f32 %v2186, %v3315
        %v3366 = vadd.f32 %v2191, %v3320
        %v3367 = vadd.f32 %v2196, %v3325
        %v3368 = vadd.f32 %v2201, %v3330
        %v3369 = vadd.f32 %v2206, %v3335
        %3370 = vst [vmem:[%s236 + $0x2] sm:$0xff] %v3065
        %3371 = vst [vmem:[%s236 + $0xa] sm:$0xff] %v3066
        %3372 = vst [vmem:[%s236 + $0x1a] sm:$0xff] %v3067
        %3373 = vst [vmem:[%s236 + $0x22] sm:$0xff] %v3068
        %3374 = vst [vmem:[%s236 + $0x32] sm:$0xff] %v3069
        %3375 = vst [vmem:[%s236 + $0x3a] sm:$0xff] %v3070
        %3376 = vst [vmem:[%s236 + $0x4a] sm:$0xff] %v3071
        %3377 = vst [vmem:[%s236 + $0x52] sm:$0xff] %v3072
        %3378 = vst [vmem:[%s236 + $0x62] sm:$0xff] %v3073
        %3379 = vst [vmem:[%s236 + $0x6a] sm:$0xff] %v3074
        %3380 = vst [vmem:[%s236 + $0x7a] sm:$0xff] %v3075
        %3381 = vst [vmem:[%s236 + $0x82] sm:$0xff] %v3076
        %3382 = vst [vmem:[%s236 + $0x92] sm:$0xff] %v3077
        %3383 = vst [vmem:[%s236 + $0x9a] sm:$0xff] %v3078
        %3384 = vst [vmem:[%s236 + $0xaa] sm:$0xff] %v3079
        %3385 = vst [vmem:[%s236 + $0xb2] sm:$0xff] %v3080
        %3386 = vst [vmem:[%s236 + $0xc2] sm:$0xff] %v3081
        %3387 = vst [vmem:[%s236 + $0xca] sm:$0xff] %v3082
        %3388 = vst [vmem:[%s236 + $0xda] sm:$0xff] %v3083
        %3389 = vst [vmem:[%s236 + $0xe2] sm:$0xff] %v3084
        %3390 = vst [vmem:[%s236 + $0xf2] sm:$0xff] %v3085
        %3391 = vst [vmem:[%s236 + $0xfa] sm:$0xff] %v3086
        %3392 = vst [vmem:[%s236 + $0x10a] sm:$0xff] %v3087
        %3393 = vst [vmem:[%s236 + $0x112] sm:$0xff] %v3088
        %3394 = vst [vmem:[%s236 + $0x122] sm:$0xff] %v3089
        %3395 = vst [vmem:[%s236 + $0x12a] sm:$0xff] %v3090
        %3396 = vst [vmem:[%s236 + $0x13a] sm:$0xff] %v3091
        %3397 = vst [vmem:[%s236 + $0x142] sm:$0xff] %v3092
        %3398 = vst [vmem:[%s236 + $0x152] sm:$0xff] %v3093
        %3399 = vst [vmem:[%s236 + $0x15a] sm:$0xff] %v3094
        %3400 = vst [vmem:[%s236 + $0x16a] sm:$0xff] %v3095
        %3401 = vst [vmem:[%s236 + $0x172] sm:$0xff] %v3096
        %v3402 = vld [vmem:[#allocation2] sm:$0xff]
        %v3403 = vld [vmem:[#allocation2 + $0x8] sm:$0xff]
        %v3404 = vld [vmem:[#allocation2 + $0x10] sm:$0xf]
        %v3405 = vld [vmem:[#allocation2 + $0x18] sm:$0xff]
        %v3406 = vld [vmem:[#allocation2 + $0x20] sm:$0xff]
        %v3407 = vld [vmem:[#allocation2 + $0x28] sm:$0xf]
        %v3408 = vld [vmem:[#allocation2 + $0x30] sm:$0xff]
        %v3409 = vld [vmem:[#allocation2 + $0x38] sm:$0xff]
        %v3410 = vld [vmem:[#allocation2 + $0x40] sm:$0xf]
        %v3411 = vld [vmem:[#allocation2 + $0x48] sm:$0xff]
        %v3412 = vld [vmem:[#allocation2 + $0x50] sm:$0xff]
        %v3413 = vld [vmem:[#allocation2 + $0x58] sm:$0xf]
        %v3414 = vld [vmem:[#allocation2 + $0x60] sm:$0xff]
        %v3415 = vld [vmem:[#allocation2 + $0x68] sm:$0xff]
        %v3416 = vld [vmem:[#allocation2 + $0x70] sm:$0xf]
        %v3417 = vld [vmem:[#allocation2 + $0x78] sm:$0xff]
        %v3418 = vld [vmem:[#allocation2 + $0x80] sm:$0xff]
        %v3419 = vld [vmem:[#allocation2 + $0x88] sm:$0xf]
        %v3420 = vld [vmem:[#allocation2 + $0x90] sm:$0xff]
        %v3421 = vld [vmem:[#allocation2 + $0x98] sm:$0xff]
        %v3422 = vld [vmem:[#allocation2 + $0xa0] sm:$0xf]
        %v3423 = vld [vmem:[#allocation2 + $0xa8] sm:$0xff]
        %v3424 = vld [vmem:[#allocation2 + $0xb0] sm:$0xff]
        %v3425 = vld [vmem:[#allocation2 + $0xb8] sm:$0xf]
        %v3426 = vld [vmem:[#allocation2 + $0xc0] sm:$0xff]
        %v3427 = vld [vmem:[#allocation2 + $0xc8] sm:$0xff]
        %v3428 = vld [vmem:[#allocation2 + $0xd0] sm:$0xf]
        %v3429 = vld [vmem:[#allocation2 + $0xd8] sm:$0xff]
        %v3430 = vld [vmem:[#allocation2 + $0xe0] sm:$0xff]
        %v3431 = vld [vmem:[#allocation2 + $0xe8] sm:$0xf]
        %v3432 = vld [vmem:[#allocation2 + $0xf0] sm:$0xff]
        %v3433 = vld [vmem:[#allocation2 + $0xf8] sm:$0xff]
        %v3434 = vld [vmem:[#allocation2 + $0x100] sm:$0xf]
        %v3435 = vld [vmem:[#allocation2 + $0x108] sm:$0xff]
        %v3436 = vld [vmem:[#allocation2 + $0x110] sm:$0xff]
        %v3437 = vld [vmem:[#allocation2 + $0x118] sm:$0xf]
        %v3438 = vld [vmem:[#allocation2 + $0x120] sm:$0xff]
        %v3439 = vld [vmem:[#allocation2 + $0x128] sm:$0xff]
        %v3440 = vld [vmem:[#allocation2 + $0x130] sm:$0xf]
        %v3441 = vld [vmem:[#allocation2 + $0x138] sm:$0xff]
        %v3442 = vld [vmem:[#allocation2 + $0x140] sm:$0xff]
        %v3443 = vld [vmem:[#allocation2 + $0x148] sm:$0xf]
        %v3444 = vld [vmem:[#allocation2 + $0x150] sm:$0xff]
        %v3445 = vld [vmem:[#allocation2 + $0x158] sm:$0xff]
        %v3446 = vld [vmem:[#allocation2 + $0x160] sm:$0xf]
        %v3447 = vld [vmem:[#allocation2 + $0x168] sm:$0xff]
        %v3448 = vld [vmem:[#allocation2 + $0x170] sm:$0xff]
        %v3449 = vld [vmem:[#allocation2 + $0x178] sm:$0xf]
        %v3450 = vld [vmem:[#allocation2 + $0x180] sm:$0xff]
        %v3451 = vld [vmem:[#allocation2 + $0x188] sm:$0xff]
        %v3452 = vld [vmem:[#allocation2 + $0x190] sm:$0xf]
        %v3453 = vld [vmem:[#allocation2 + $0x198] sm:$0xff]
        %v3454 = vld [vmem:[#allocation2 + $0x1a0] sm:$0xff]
        %v3455 = vld [vmem:[#allocation2 + $0x1a8] sm:$0xf]
        %v3456 = vld [vmem:[#allocation2 + $0x1b0] sm:$0xff]
        %v3457 = vld [vmem:[#allocation2 + $0x1b8] sm:$0xff]
        %v3458 = vld [vmem:[#allocation2 + $0x1c0] sm:$0xf]
        %v3459 = vld [vmem:[#allocation2 + $0x1c8] sm:$0xff]
        %v3460 = vld [vmem:[#allocation2 + $0x1d0] sm:$0xff]
        %v3461 = vld [vmem:[#allocation2 + $0x1d8] sm:$0xf]
        %v3462 = vmax.f32 %v3402, %v3405
        %v3463 = vmax.f32 %v3403, %v3406
        %v3464 = vmax.f32 %v3404, %v3407
        %v3465 = vmax.f32 %v3405, %v3408
        %v3466 = vmax.f32 %v3406, %v3409
        %v3467 = vmax.f32 %v3407, %v3410
        %v3468 = vmax.f32 %v3408, %v3411
        %v3469 = vmax.f32 %v3409, %v3412
        %v3470 = vmax.f32 %v3410, %v3413
        %v3471 = vmax.f32 %v3411, %v3414
        %v3472 = vmax.f32 %v3412, %v3415
        %v3473 = vmax.f32 %v3413, %v3416
        %v3474 = vmax.f32 %v3414, %v3417
        %v3475 = vmax.f32 %v3415, %v3418
        %v3476 = vmax.f32 %v3416, %v3419
        %v3477 = vmax.f32 %v3417, %v3420
        %v3478 = vmax.f32 %v3418, %v3421
        %v3479 = vmax.f32 %v3419, %v3422
        %v3480 = vmax.f32 %v3420, %v3423
        %v3481 = vmax.f32 %v3421, %v3424
        %v3482 = vmax.f32 %v3422, %v3425
        %v3483 = vmax.f32 %v3423, %v3426
        %v3484 = vmax.f32 %v3424, %v3427
        %v3485 = vmax.f32 %v3425, %v3428
        %v3486 = vmax.f32 %v3426, %v3429
        %v3487 = vmax.f32 %v3427, %v3430
        %v3488 = vmax.f32 %v3428, %v3431
        %v3489 = vmax.f32 %v3429, %v3432
        %v3490 = vmax.f32 %v3430, %v3433
        %v3491 = vmax.f32 %v3431, %v3434
        %v3492 = vmax.f32 %v3432, %v3435
        %v3493 = vmax.f32 %v3433, %v3436
        %v3494 = vmax.f32 %v3434, %v3437
        %v3495 = vmax.f32 %v3435, %v3438
        %v3496 = vmax.f32 %v3436, %v3439
        %v3497 = vmax.f32 %v3437, %v3440
        %v3498 = vmax.f32 %v3438, %v3441
        %v3499 = vmax.f32 %v3439, %v3442
        %v3500 = vmax.f32 %v3440, %v3443
        %v3501 = vmax.f32 %v3441, %v3444
        %v3502 = vmax.f32 %v3442, %v3445
        %v3503 = vmax.f32 %v3443, %v3446
        %v3504 = vmax.f32 %v3444, %v3447
        %v3505 = vmax.f32 %v3445, %v3448
        %v3506 = vmax.f32 %v3446, %v3449
        %v3507 = vmax.f32 %v3447, %v3450
        %v3508 = vmax.f32 %v3448, %v3451
        %v3509 = vmax.f32 %v3449, %v3452
        %v3510 = vmax.f32 %v3450, %v3453
        %v3511 = vmax.f32 %v3451, %v3454
        %v3512 = vmax.f32 %v3452, %v3455
        %v3513 = vmax.f32 %v3453, %v3456
        %v3514 = vmax.f32 %v3454, %v3457
        %v3515 = vmax.f32 %v3455, %v3458
        %v3516 = vmax.f32 %v3456, %v3459
        %v3517 = vmax.f32 %v3457, %v3460
        %v3518 = vmax.f32 %v3458, %v3461
        %v3519 = vmax.f32 %v3462, %v3468
        %v3520 = vmax.f32 %v3463, %v3469
        %v3521 = vmax.f32 %v3464, %v3470
        %v3522 = vmax.f32 %v3465, %v3471
        %v3523 = vmax.f32 %v3466, %v3472
        %v3524 = vmax.f32 %v3467, %v3473
        %v3525 = vmax.f32 %v3468, %v3474
        %v3526 = vmax.f32 %v3469, %v3475
        %v3527 = vmax.f32 %v3470, %v3476
        %v3528 = vmax.f32 %v3471, %v3477
        %v3529 = vmax.f32 %v3472, %v3478
        %v3530 = vmax.f32 %v3473, %v3479
        %v3531 = vmax.f32 %v3474, %v3480
        %v3532 = vmax.f32 %v3475, %v3481
        %v3533 = vmax.f32 %v3476, %v3482
        %v3534 = vmax.f32 %v3477, %v3483
        %v3535 = vmax.f32 %v3478, %v3484
        %v3536 = vmax.f32 %v3479, %v3485
        %v3537 = vmax.f32 %v3480, %v3486
        %v3538 = vmax.f32 %v3481, %v3487
        %v3539 = vmax.f32 %v3482, %v3488
        %v3540 = vmax.f32 %v3483, %v3489
        %v3541 = vmax.f32 %v3484, %v3490
        %v3542 = vmax.f32 %v3485, %v3491
        %v3543 = vmax.f32 %v3486, %v3492
        %v3544 = vmax.f32 %v3487, %v3493
        %v3545 = vmax.f32 %v3488, %v3494
        %v3546 = vmax.f32 %v3489, %v3495
        %v3547 = vmax.f32 %v3490, %v3496
        %v3548 = vmax.f32 %v3491, %v3497
        %v3549 = vmax.f32 %v3492, %v3498
        %v3550 = vmax.f32 %v3493, %v3499
        %v3551 = vmax.f32 %v3494, %v3500
        %v3552 = vmax.f32 %v3495, %v3501
        %v3553 = vmax.f32 %v3496, %v3502
        %v3554 = vmax.f32 %v3497, %v3503
        %v3555 = vmax.f32 %v3498, %v3504
        %v3556 = vmax.f32 %v3499, %v3505
        %v3557 = vmax.f32 %v3500, %v3506
        %v3558 = vmax.f32 %v3501, %v3507
        %v3559 = vmax.f32 %v3502, %v3508
        %v3560 = vmax.f32 %v3503, %v3509
        %v3561 = vmax.f32 %v3504, %v3510
        %v3562 = vmax.f32 %v3505, %v3511
        %v3563 = vmax.f32 %v3506, %v3512
        %v3564 = vmax.f32 %v3507, %v3513
        %v3565 = vmax.f32 %v3508, %v3514
        %v3566 = vmax.f32 %v3509, %v3515
        %v3567 = vmax.f32 %v3510, %v3516
        %v3568 = vmax.f32 %v3511, %v3517
        %v3569 = vmax.f32 %v3512, %v3518
        %v3570 = vmax.f32 %v3519, %v3522
        %v3571 = vmax.f32 %v3520, %v3523
        %v3572 = vmax.f32 %v3521, %v3524
        %v3573 = vmax.f32 %v3522, %v3525
        %v3574 = vmax.f32 %v3523, %v3526
        %v3575 = vmax.f32 %v3524, %v3527
        %v3576 = vmax.f32 %v3525, %v3528
        %v3577 = vmax.f32 %v3526, %v3529
        %v3578 = vmax.f32 %v3527, %v3530
        %v3579 = vmax.f32 %v3528, %v3531
        %v3580 = vmax.f32 %v3529, %v3532
        %v3581 = vmax.f32 %v3530, %v3533
        %v3582 = vmax.f32 %v3531, %v3534
        %v3583 = vmax.f32 %v3532, %v3535
        %v3584 = vmax.f32 %v3533, %v3536
        %v3585 = vmax.f32 %v3534, %v3537
        %v3586 = vmax.f32 %v3535, %v3538
        %v3587 = vmax.f32 %v3536, %v3539
        %v3588 = vmax.f32 %v3537, %v3540
        %v3589 = vmax.f32 %v3538, %v3541
        %v3590 = vmax.f32 %v3539, %v3542
        %v3591 = vmax.f32 %v3540, %v3543
        %v3592 = vmax.f32 %v3541, %v3544
        %v3593 = vmax.f32 %v3542, %v3545
        %v3594 = vmax.f32 %v3543, %v3546
        %v3595 = vmax.f32 %v3544, %v3547
        %v3596 = vmax.f32 %v3545, %v3548
        %v3597 = vmax.f32 %v3546, %v3549
        %v3598 = vmax.f32 %v3547, %v3550
        %v3599 = vmax.f32 %v3548, %v3551
        %v3600 = vmax.f32 %v3549, %v3552
        %v3601 = vmax.f32 %v3550, %v3553
        %v3602 = vmax.f32 %v3551, %v3554
        %v3603 = vmax.f32 %v3552, %v3555
        %v3604 = vmax.f32 %v3553, %v3556
        %v3605 = vmax.f32 %v3554, %v3557
        %v3606 = vmax.f32 %v3555, %v3558
        %v3607 = vmax.f32 %v3556, %v3559
        %v3608 = vmax.f32 %v3557, %v3560
        %v3609 = vmax.f32 %v3558, %v3561
        %v3610 = vmax.f32 %v3559, %v3562
        %v3611 = vmax.f32 %v3560, %v3563
        %v3612 = vmax.f32 %v3561, %v3564
        %v3613 = vmax.f32 %v3562, %v3565
        %v3614 = vmax.f32 %v3563, %v3566
        %v3615 = vmax.f32 %v3564, %v3567
        %v3616 = vmax.f32 %v3565, %v3568
        %v3617 = vmax.f32 %v3566, %v3569
        %v3666 = vrot.slane %v3570, 1
        %v3667 = vrot.slane %v3571, 1
        %v3668 = vsel %vm1149, %v3666, %v3667
        %v3669 = vrot.slane %v3572, 1
        %v3670 = vsel %vm1149, %v3667, %v3669
        %v3671 = vrot.slane %v3573, 1
        %v3672 = vrot.slane %v3574, 1
        %v3673 = vsel %vm1149, %v3671, %v3672
        %v3674 = vrot.slane %v3575, 1
        %v3675 = vsel %vm1149, %v3672, %v3674
        %v3676 = vrot.slane %v3576, 1
        %v3677 = vrot.slane %v3577, 1
        %v3678 = vsel %vm1149, %v3676, %v3677
        %v3679 = vrot.slane %v3578, 1
        %v3680 = vsel %vm1149, %v3677, %v3679
        %v3681 = vrot.slane %v3579, 1
        %v3682 = vrot.slane %v3580, 1
        %v3683 = vsel %vm1149, %v3681, %v3682
        %v3684 = vrot.slane %v3581, 1
        %v3685 = vsel %vm1149, %v3682, %v3684
        %v3686 = vrot.slane %v3582, 1
        %v3687 = vrot.slane %v3583, 1
        %v3688 = vsel %vm1149, %v3686, %v3687
        %v3689 = vrot.slane %v3584, 1
        %v3690 = vsel %vm1149, %v3687, %v3689
        %v3691 = vrot.slane %v3585, 1
        %v3692 = vrot.slane %v3586, 1
        %v3693 = vsel %vm1149, %v3691, %v3692
        %v3694 = vrot.slane %v3587, 1
        %v3695 = vsel %vm1149, %v3692, %v3694
        %v3696 = vrot.slane %v3588, 1
        %v3697 = vrot.slane %v3589, 1
        %v3698 = vsel %vm1149, %v3696, %v3697
        %v3699 = vrot.slane %v3590, 1
        %v3700 = vsel %vm1149, %v3697, %v3699
        %v3701 = vrot.slane %v3591, 1
        %v3702 = vrot.slane %v3592, 1
        %v3703 = vsel %vm1149, %v3701, %v3702
        %v3704 = vrot.slane %v3593, 1
        %v3705 = vsel %vm1149, %v3702, %v3704
        %v3706 = vrot.slane %v3594, 1
        %v3707 = vrot.slane %v3595, 1
        %v3708 = vsel %vm1149, %v3706, %v3707
        %v3709 = vrot.slane %v3596, 1
        %v3710 = vsel %vm1149, %v3707, %v3709
        %v3711 = vrot.slane %v3597, 1
        %v3712 = vrot.slane %v3598, 1
        %v3713 = vsel %vm1149, %v3711, %v3712
        %v3714 = vrot.slane %v3599, 1
        %v3715 = vsel %vm1149, %v3712, %v3714
        %v3716 = vrot.slane %v3600, 1
        %v3717 = vrot.slane %v3601, 1
        %v3718 = vsel %vm1149, %v3716, %v3717
        %v3719 = vrot.slane %v3602, 1
        %v3720 = vsel %vm1149, %v3717, %v3719
        %v3721 = vrot.slane %v3603, 1
        %v3722 = vrot.slane %v3604, 1
        %v3723 = vsel %vm1149, %v3721, %v3722
        %v3724 = vrot.slane %v3605, 1
        %v3725 = vsel %vm1149, %v3722, %v3724
        %v3726 = vrot.slane %v3606, 1
        %v3727 = vrot.slane %v3607, 1
        %v3728 = vsel %vm1149, %v3726, %v3727
        %v3729 = vrot.slane %v3608, 1
        %v3730 = vsel %vm1149, %v3727, %v3729
        %v3731 = vrot.slane %v3609, 1
        %v3732 = vrot.slane %v3610, 1
        %v3733 = vsel %vm1149, %v3731, %v3732
        %v3734 = vrot.slane %v3611, 1
        %v3735 = vsel %vm1149, %v3732, %v3734
        %v3736 = vrot.slane %v3612, 1
        %v3737 = vrot.slane %v3613, 1
        %v3738 = vsel %vm1149, %v3736, %v3737
        %v3739 = vrot.slane %v3614, 1
        %v3740 = vsel %vm1149, %v3737, %v3739
        %v3741 = vrot.slane %v3615, 1
        %v3742 = vrot.slane %v3616, 1
        %v3743 = vsel %vm1149, %v3741, %v3742
        %v3744 = vrot.slane %v3617, 1
        %v3745 = vsel %vm1149, %v3742, %v3744
        %v3794 = vmax.f32 %v3570, %v3668
        %v3795 = vmax.f32 %v3571, %v3670
        %v3796 = vmax.f32 %v3572, %v3669
        %v3797 = vmax.f32 %v3573, %v3673
        %v3798 = vmax.f32 %v3574, %v3675
        %v3799 = vmax.f32 %v3575, %v3674
        %v3800 = vmax.f32 %v3576, %v3678
        %v3801 = vmax.f32 %v3577, %v3680
        %v3802 = vmax.f32 %v3578, %v3679
        %v3803 = vmax.f32 %v3579, %v3683
        %v3804 = vmax.f32 %v3580, %v3685
        %v3805 = vmax.f32 %v3581, %v3684
        %v3806 = vmax.f32 %v3582, %v3688
        %v3807 = vmax.f32 %v3583, %v3690
        %v3808 = vmax.f32 %v3584, %v3689
        %v3809 = vmax.f32 %v3585, %v3693
        %v3810 = vmax.f32 %v3586, %v3695
        %v3811 = vmax.f32 %v3587, %v3694
        %v3812 = vmax.f32 %v3588, %v3698
        %v3813 = vmax.f32 %v3589, %v3700
        %v3814 = vmax.f32 %v3590, %v3699
        %v3815 = vmax.f32 %v3591, %v3703
        %v3816 = vmax.f32 %v3592, %v3705
        %v3817 = vmax.f32 %v3593, %v3704
        %v3818 = vmax.f32 %v3594, %v3708
        %v3819 = vmax.f32 %v3595, %v3710
        %v3820 = vmax.f32 %v3596, %v3709
        %v3821 = vmax.f32 %v3597, %v3713
        %v3822 = vmax.f32 %v3598, %v3715
        %v3823 = vmax.f32 %v3599, %v3714
        %v3824 = vmax.f32 %v3600, %v3718
        %v3825 = vmax.f32 %v3601, %v3720
        %v3826 = vmax.f32 %v3602, %v3719
        %v3827 = vmax.f32 %v3603, %v3723
        %v3828 = vmax.f32 %v3604, %v3725
        %v3829 = vmax.f32 %v3605, %v3724
        %v3830 = vmax.f32 %v3606, %v3728
        %v3831 = vmax.f32 %v3607, %v3730
        %v3832 = vmax.f32 %v3608, %v3729
        %v3833 = vmax.f32 %v3609, %v3733
        %v3834 = vmax.f32 %v3610, %v3735
        %v3835 = vmax.f32 %v3611, %v3734
        %v3836 = vmax.f32 %v3612, %v3738
        %v3837 = vmax.f32 %v3613, %v3740
        %v3838 = vmax.f32 %v3614, %v3739
        %v3839 = vmax.f32 %v3615, %v3743
        %v3840 = vmax.f32 %v3616, %v3745
        %v3841 = vmax.f32 %v3617, %v3744
        %v3890 = vrot.slane %v3794, 2
        %v3891 = vrot.slane %v3795, 2
        %v3892 = vsel %vm1374, %v3890, %v3891
        %v3893 = vrot.slane %v3796, 2
        %v3894 = vsel %vm1374, %v3891, %v3893
        %v3895 = vrot.slane %v3797, 2
        %v3896 = vrot.slane %v3798, 2
        %v3897 = vsel %vm1374, %v3895, %v3896
        %v3898 = vrot.slane %v3799, 2
        %v3899 = vsel %vm1374, %v3896, %v3898
        %v3900 = vrot.slane %v3800, 2
        %v3901 = vrot.slane %v3801, 2
        %v3902 = vsel %vm1374, %v3900, %v3901
        %v3903 = vrot.slane %v3802, 2
        %v3904 = vsel %vm1374, %v3901, %v3903
        %v3905 = vrot.slane %v3803, 2
        %v3906 = vrot.slane %v3804, 2
        %v3907 = vsel %vm1374, %v3905, %v3906
        %v3908 = vrot.slane %v3805, 2
        %v3909 = vsel %vm1374, %v3906, %v3908
        %v3910 = vrot.slane %v3806, 2
        %v3911 = vrot.slane %v3807, 2
        %v3912 = vsel %vm1374, %v3910, %v3911
        %v3913 = vrot.slane %v3808, 2
        %v3914 = vsel %vm1374, %v3911, %v3913
        %v3915 = vrot.slane %v3809, 2
        %v3916 = vrot.slane %v3810, 2
        %v3917 = vsel %vm1374, %v3915, %v3916
        %v3918 = vrot.slane %v3811, 2
        %v3919 = vsel %vm1374, %v3916, %v3918
        %v3920 = vrot.slane %v3812, 2
        %v3921 = vrot.slane %v3813, 2
        %v3922 = vsel %vm1374, %v3920, %v3921
        %v3923 = vrot.slane %v3814, 2
        %v3924 = vsel %vm1374, %v3921, %v3923
        %v3925 = vrot.slane %v3815, 2
        %v3926 = vrot.slane %v3816, 2
        %v3927 = vsel %vm1374, %v3925, %v3926
        %v3928 = vrot.slane %v3817, 2
        %v3929 = vsel %vm1374, %v3926, %v3928
        %v3930 = vrot.slane %v3818, 2
        %v3931 = vrot.slane %v3819, 2
        %v3932 = vsel %vm1374, %v3930, %v3931
        %v3933 = vrot.slane %v3820, 2
        %v3934 = vsel %vm1374, %v3931, %v3933
        %v3935 = vrot.slane %v3821, 2
        %v3936 = vrot.slane %v3822, 2
        %v3937 = vsel %vm1374, %v3935, %v3936
        %v3938 = vrot.slane %v3823, 2
        %v3939 = vsel %vm1374, %v3936, %v3938
        %v3940 = vrot.slane %v3824, 2
        %v3941 = vrot.slane %v3825, 2
        %v3942 = vsel %vm1374, %v3940, %v3941
        %v3943 = vrot.slane %v3826, 2
        %v3944 = vsel %vm1374, %v3941, %v3943
        %v3945 = vrot.slane %v3827, 2
        %v3946 = vrot.slane %v3828, 2
        %v3947 = vsel %vm1374, %v3945, %v3946
        %v3948 = vrot.slane %v3829, 2
        %v3949 = vsel %vm1374, %v3946, %v3948
        %v3950 = vrot.slane %v3830, 2
        %v3951 = vrot.slane %v3831, 2
        %v3952 = vsel %vm1374, %v3950, %v3951
        %v3953 = vrot.slane %v3832, 2
        %v3954 = vsel %vm1374, %v3951, %v3953
        %v3955 = vrot.slane %v3833, 2
        %v3956 = vrot.slane %v3834, 2
        %v3957 = vsel %vm1374, %v3955, %v3956
        %v3958 = vrot.slane %v3835, 2
        %v3959 = vsel %vm1374, %v3956, %v3958
        %v3960 = vrot.slane %v3836, 2
        %v3961 = vrot.slane %v3837, 2
        %v3962 = vsel %vm1374, %v3960, %v3961
        %v3963 = vrot.slane %v3838, 2
        %v3964 = vsel %vm1374, %v3961, %v3963
        %v3965 = vrot.slane %v3839, 2
        %v3966 = vrot.slane %v3840, 2
        %v3967 = vsel %vm1374, %v3965, %v3966
        %v3968 = vrot.slane %v3841, 2
        %v3969 = vsel %vm1374, %v3966, %v3968
        %v4018 = vmax.f32 %v3794, %v3892
        %v4019 = vmax.f32 %v3795, %v3894
        %v4020 = vmax.f32 %v3796, %v3893
        %v4021 = vmax.f32 %v3797, %v3897
        %v4022 = vmax.f32 %v3798, %v3899
        %v4023 = vmax.f32 %v3799, %v3898
        %v4024 = vmax.f32 %v3800, %v3902
        %v4025 = vmax.f32 %v3801, %v3904
        %v4026 = vmax.f32 %v3802, %v3903
        %v4027 = vmax.f32 %v3803, %v3907
        %v4028 = vmax.f32 %v3804, %v3909
        %v4029 = vmax.f32 %v3805, %v3908
        %v4030 = vmax.f32 %v3806, %v3912
        %v4031 = vmax.f32 %v3807, %v3914
        %v4032 = vmax.f32 %v3808, %v3913
        %v4033 = vmax.f32 %v3809, %v3917
        %v4034 = vmax.f32 %v3810, %v3919
        %v4035 = vmax.f32 %v3811, %v3918
        %v4036 = vmax.f32 %v3812, %v3922
        %v4037 = vmax.f32 %v3813, %v3924
        %v4038 = vmax.f32 %v3814, %v3923
        %v4039 = vmax.f32 %v3815, %v3927
        %v4040 = vmax.f32 %v3816, %v3929
        %v4041 = vmax.f32 %v3817, %v3928
        %v4042 = vmax.f32 %v3818, %v3932
        %v4043 = vmax.f32 %v3819, %v3934
        %v4044 = vmax.f32 %v3820, %v3933
        %v4045 = vmax.f32 %v3821, %v3937
        %v4046 = vmax.f32 %v3822, %v3939
        %v4047 = vmax.f32 %v3823, %v3938
        %v4048 = vmax.f32 %v3824, %v3942
        %v4049 = vmax.f32 %v3825, %v3944
        %v4050 = vmax.f32 %v3826, %v3943
        %v4051 = vmax.f32 %v3827, %v3947
        %v4052 = vmax.f32 %v3828, %v3949
        %v4053 = vmax.f32 %v3829, %v3948
        %v4054 = vmax.f32 %v3830, %v3952
        %v4055 = vmax.f32 %v3831, %v3954
        %v4056 = vmax.f32 %v3832, %v3953
        %v4057 = vmax.f32 %v3833, %v3957
        %v4058 = vmax.f32 %v3834, %v3959
        %v4059 = vmax.f32 %v3835, %v3958
        %v4060 = vmax.f32 %v3836, %v3962
        %v4061 = vmax.f32 %v3837, %v3964
        %v4062 = vmax.f32 %v3838, %v3963
        %v4063 = vmax.f32 %v3839, %v3967
        %v4064 = vmax.f32 %v3840, %v3969
        %v4065 = vmax.f32 %v3841, %v3968
        %v4114 = vrot.slane %v4018, 1
        %v4115 = vrot.slane %v4019, 1
        %v4116 = vsel %vm1149, %v4114, %v4115
        %v4117 = vrot.slane %v4020, 1
        %v4118 = vsel %vm1149, %v4115, %v4117
        %v4119 = vrot.slane %v4021, 1
        %v4120 = vrot.slane %v4022, 1
        %v4121 = vsel %vm1149, %v4119, %v4120
        %v4122 = vrot.slane %v4023, 1
        %v4123 = vsel %vm1149, %v4120, %v4122
        %v4124 = vrot.slane %v4024, 1
        %v4125 = vrot.slane %v4025, 1
        %v4126 = vsel %vm1149, %v4124, %v4125
        %v4127 = vrot.slane %v4026, 1
        %v4128 = vsel %vm1149, %v4125, %v4127
        %v4129 = vrot.slane %v4027, 1
        %v4130 = vrot.slane %v4028, 1
        %v4131 = vsel %vm1149, %v4129, %v4130
        %v4132 = vrot.slane %v4029, 1
        %v4133 = vsel %vm1149, %v4130, %v4132
        %v4134 = vrot.slane %v4030, 1
        %v4135 = vrot.slane %v4031, 1
        %v4136 = vsel %vm1149, %v4134, %v4135
        %v4137 = vrot.slane %v4032, 1
        %v4138 = vsel %vm1149, %v4135, %v4137
        %v4139 = vrot.slane %v4033, 1
        %v4140 = vrot.slane %v4034, 1
        %v4141 = vsel %vm1149, %v4139, %v4140
        %v4142 = vrot.slane %v4035, 1
        %v4143 = vsel %vm1149, %v4140, %v4142
        %v4144 = vrot.slane %v4036, 1
        %v4145 = vrot.slane %v4037, 1
        %v4146 = vsel %vm1149, %v4144, %v4145
        %v4147 = vrot.slane %v4038, 1
        %v4148 = vsel %vm1149, %v4145, %v4147
        %v4149 = vrot.slane %v4039, 1
        %v4150 = vrot.slane %v4040, 1
        %v4151 = vsel %vm1149, %v4149, %v4150
        %v4152 = vrot.slane %v4041, 1
        %v4153 = vsel %vm1149, %v4150, %v4152
        %v4154 = vrot.slane %v4042, 1
        %v4155 = vrot.slane %v4043, 1
        %v4156 = vsel %vm1149, %v4154, %v4155
        %v4157 = vrot.slane %v4044, 1
        %v4158 = vsel %vm1149, %v4155, %v4157
        %v4159 = vrot.slane %v4045, 1
        %v4160 = vrot.slane %v4046, 1
        %v4161 = vsel %vm1149, %v4159, %v4160
        %v4162 = vrot.slane %v4047, 1
        %v4163 = vsel %vm1149, %v4160, %v4162
        %v4164 = vrot.slane %v4048, 1
        %v4165 = vrot.slane %v4049, 1
        %v4166 = vsel %vm1149, %v4164, %v4165
        %v4167 = vrot.slane %v4050, 1
        %v4168 = vsel %vm1149, %v4165, %v4167
        %v4169 = vrot.slane %v4051, 1
        %v4170 = vrot.slane %v4052, 1
        %v4171 = vsel %vm1149, %v4169, %v4170
        %v4172 = vrot.slane %v4053, 1
        %v4173 = vsel %vm1149, %v4170, %v4172
        %v4174 = vrot.slane %v4054, 1
        %v4175 = vrot.slane %v4055, 1
        %v4176 = vsel %vm1149, %v4174, %v4175
        %v4177 = vrot.slane %v4056, 1
        %v4178 = vsel %vm1149, %v4175, %v4177
        %v4179 = vrot.slane %v4057, 1
        %v4180 = vrot.slane %v4058, 1
        %v4181 = vsel %vm1149, %v4179, %v4180
        %v4182 = vrot.slane %v4059, 1
        %v4183 = vsel %vm1149, %v4180, %v4182
        %v4184 = vrot.slane %v4060, 1
        %v4185 = vrot.slane %v4061, 1
        %v4186 = vsel %vm1149, %v4184, %v4185
        %v4187 = vrot.slane %v4062, 1
        %v4188 = vsel %vm1149, %v4185, %v4187
        %v4189 = vrot.slane %v4063, 1
        %v4190 = vrot.slane %v4064, 1
        %v4191 = vsel %vm1149, %v4189, %v4190
        %v4192 = vrot.slane %v4065, 1
        %v4193 = vsel %vm1149, %v4190, %v4192
        %v4226 = vmax.f32 %v4018, %v4116
        %v4227 = vmax.f32 %v4019, %v4118
        %v4228 = vmax.f32 %v4021, %v4121
        %v4229 = vmax.f32 %v4022, %v4123
        %v4230 = vmax.f32 %v4024, %v4126
        %v4231 = vmax.f32 %v4025, %v4128
        %v4232 = vmax.f32 %v4027, %v4131
        %v4233 = vmax.f32 %v4028, %v4133
        %v4234 = vmax.f32 %v4030, %v4136
        %v4235 = vmax.f32 %v4031, %v4138
        %v4236 = vmax.f32 %v4033, %v4141
        %v4237 = vmax.f32 %v4034, %v4143
        %v4238 = vmax.f32 %v4036, %v4146
        %v4239 = vmax.f32 %v4037, %v4148
        %v4240 = vmax.f32 %v4039, %v4151
        %v4241 = vmax.f32 %v4040, %v4153
        %v4242 = vmax.f32 %v4042, %v4156
        %v4243 = vmax.f32 %v4043, %v4158
        %v4244 = vmax.f32 %v4045, %v4161
        %v4245 = vmax.f32 %v4046, %v4163
        %v4246 = vmax.f32 %v4048, %v4166
        %v4247 = vmax.f32 %v4049, %v4168
        %v4248 = vmax.f32 %v4051, %v4171
        %v4249 = vmax.f32 %v4052, %v4173
        %v4250 = vmax.f32 %v4054, %v4176
        %v4251 = vmax.f32 %v4055, %v4178
        %v4252 = vmax.f32 %v4057, %v4181
        %v4253 = vmax.f32 %v4058, %v4183
        %v4254 = vmax.f32 %v4060, %v4186
        %v4255 = vmax.f32 %v4061, %v4188
        %v4256 = vmax.f32 %v4063, %v4191
        %v4257 = vmax.f32 %v4064, %v4193
        %v4258 = vld [vmem:[%s3 + $0x180] sm:$0xff]
        %v4259 = vld [vmem:[%s3 + $0x188] sm:$0xff]
        %v4260 = vld [vmem:[%s3 + $0x190] sm:$0xff]
        %v4261 = vld [vmem:[%s3 + $0x198] sm:$0xff]
        %v4262 = vld [vmem:[%s3 + $0x1a0] sm:$0xff]
        %v4263 = vld [vmem:[%s3 + $0x1a8] sm:$0xff]
        %v4264 = vld [vmem:[%s3 + $0x1b0] sm:$0xff]
        %v4265 = vld [vmem:[%s3 + $0x1b8] sm:$0xff]
        %v4266 = vld [vmem:[%s3 + $0x1c0] sm:$0xff]
        %v4267 = vld [vmem:[%s3 + $0x1c8] sm:$0xff]
        %v4268 = vld [vmem:[%s3 + $0x1d0] sm:$0xff]
        %v4269 = vld [vmem:[%s3 + $0x1d8] sm:$0xff]
        %v4270 = vld [vmem:[%s3 + $0x1e0] sm:$0xff]
        %v4271 = vld [vmem:[%s3 + $0x1e8] sm:$0xff]
        %v4272 = vld [vmem:[%s3 + $0x1f0] sm:$0xff]
        %v4273 = vld [vmem:[%s3 + $0x1f8] sm:$0xff]
        %4274 = vmatprep.subr.mxu0 0.0
        %4275 = vmatpush1.msra.mxu0 %v4273
        %4276 = vmatprep.subr.mxu0 0.0
        %4277 = vmatpush1.msra.mxu0 %v4272
        %4278 = vmatprep.subr.mxu0 0.0
        %4279 = vmatpush1.msra.mxu0 %v4271
        %4280 = vmatprep.subr.mxu0 0.0
        %4281 = vmatpush1.msra.mxu0 %v4270
        %4282 = vmatprep.subr.mxu0 0.0
        %4283 = vmatpush1.msra.mxu0 %v4269
        %4284 = vmatprep.subr.mxu0 0.0
        %4285 = vmatpush1.msra.mxu0 %v4268
        %4286 = vmatprep.subr.mxu0 0.0
        %4287 = vmatpush1.msra.mxu0 %v4267
        %4288 = vmatprep.subr.mxu0 0.0
        %4289 = vmatpush1.msra.mxu0 %v4266
        %4290 = vmatprep.subr.mxu0 0.0
        %4291 = vmatpush1.msra.mxu0 %v4265
        %4292 = vmatprep.subr.mxu0 0.0
        %4293 = vmatpush1.msra.mxu0 %v4264
        %4294 = vmatprep.subr.mxu0 0.0
        %4295 = vmatpush1.msra.mxu0 %v4263
        %4296 = vmatprep.subr.mxu0 0.0
        %4297 = vmatpush1.msra.mxu0 %v4262
        %4298 = vmatprep.subr.mxu0 0.0
        %4299 = vmatpush1.msra.mxu0 %v4261
        %4300 = vmatprep.subr.mxu0 0.0
        %4301 = vmatpush1.msra.mxu0 %v4260
        %4302 = vmatprep.subr.mxu0 0.0
        %4303 = vmatpush1.msra.mxu0 %v4259
        %4304 = vmatprep.subr.mxu0 0.0
        %4305 = vmatpush1.msra.mxu0 %v4258
        %4306 = vmatprep.subr.mxu0 0.0
        %4307 = vmatpush2.msra.mxu0 0.0
        %4308 = vmatprep.subr.mxu0 0.0
        %4309 = vmatpush2.msra.mxu0 0.0
        %4310 = vmatprep.subr.mxu0 0.0
        %4311 = vmatpush2.msra.mxu0 0.0
        %4312 = vmatprep.subr.mxu0 0.0
        %4313 = vmatpush2.msra.mxu0 0.0
        %4314 = vmatprep.subr.mxu0 0.0
        %4315 = vmatpush2.msra.mxu0 0.0
        %4316 = vmatprep.subr.mxu0 0.0
        %4317 = vmatpush2.msra.mxu0 0.0
        %4318 = vmatprep.subr.mxu0 0.0
        %4319 = vmatpush2.msra.mxu0 0.0
        %4320 = vmatprep.subr.mxu0 0.0
        %4321 = vmatpush2.msra.mxu0 0.0
        %4322 = vmatprep.subr.mxu0 0.0
        %4323 = vmatpush2.msra.mxu0 0.0
        %4324 = vmatprep.subr.mxu0 0.0
        %4325 = vmatpush2.msra.mxu0 0.0
        %4326 = vmatprep.subr.mxu0 0.0
        %4327 = vmatpush2.msra.mxu0 0.0
        %4328 = vmatprep.subr.mxu0 0.0
        %4329 = vmatpush2.msra.mxu0 0.0
        %4330 = vmatprep.subr.mxu0 0.0
        %4331 = vmatpush2.msra.mxu0 0.0
        %4332 = vmatprep.subr.mxu0 0.0
        %4333 = vmatpush2.msra.mxu0 0.0
        %4334 = vmatprep.subr.mxu0 0.0
        %4335 = vmatpush2.msra.mxu0 0.0
        %4336 = vmatprep.subr.mxu0 0.0
        %4337 = vmatpush2.msra.mxu0 0.0
        %4338 = vmatprep.mubr.f32.mxu0 0.0
        %4339 = vmatmul.mubr.f32.gmra.mxu0 %v4226
        %v4340 = vpop.f32.mrf.mxu0
        %v4341 = vadd.f32 0.0, %v4340
        %v4342 = vpop.f32.mrf.mxu0
        %4343 = vmatprep.mubr.f32.mxu0 0.0
        %4344 = vmatmul.mubr.f32.gmra.mxu0 %v4227
        %v4345 = vpop.f32.mrf.mxu0
        %v4346 = vadd.f32 0.0, %v4345
        %v4347 = vpop.f32.mrf.mxu0
        %4348 = vmatprep.mubr.f32.mxu0 0.0
        %4349 = vmatmul.mubr.f32.gmra.mxu0 %v4228
        %v4350 = vpop.f32.mrf.mxu0
        %v4351 = vadd.f32 0.0, %v4350
        %v4352 = vpop.f32.mrf.mxu0
        %4353 = vmatprep.mubr.f32.mxu0 0.0
        %4354 = vmatmul.mubr.f32.gmra.mxu0 %v4229
        %v4355 = vpop.f32.mrf.mxu0
        %v4356 = vadd.f32 0.0, %v4355
        %v4357 = vpop.f32.mrf.mxu0
        %4358 = vmatprep.mubr.f32.mxu0 0.0
        %4359 = vmatmul.mubr.f32.gmra.mxu0 %v4230
        %v4360 = vpop.f32.mrf.mxu0
        %v4361 = vadd.f32 0.0, %v4360
        %v4362 = vpop.f32.mrf.mxu0
        %4363 = vmatprep.mubr.f32.mxu0 0.0
        %4364 = vmatmul.mubr.f32.gmra.mxu0 %v4231
        %v4365 = vpop.f32.mrf.mxu0
        %v4366 = vadd.f32 0.0, %v4365
        %v4367 = vpop.f32.mrf.mxu0
        %4368 = vmatprep.mubr.f32.mxu0 0.0
        %4369 = vmatmul.mubr.f32.gmra.mxu0 %v4232
        %v4370 = vpop.f32.mrf.mxu0
        %v4371 = vadd.f32 0.0, %v4370
        %v4372 = vpop.f32.mrf.mxu0
        %4373 = vmatprep.mubr.f32.mxu0 0.0
        %4374 = vmatmul.mubr.f32.gmra.mxu0 %v4233
        %v4375 = vpop.f32.mrf.mxu0
        %v4376 = vadd.f32 0.0, %v4375
        %v4377 = vpop.f32.mrf.mxu0
        %4378 = vmatprep.mubr.f32.mxu0 0.0
        %4379 = vmatmul.mubr.f32.gmra.mxu0 %v4234
        %v4380 = vpop.f32.mrf.mxu0
        %v4381 = vadd.f32 0.0, %v4380
        %v4382 = vpop.f32.mrf.mxu0
        %4383 = vmatprep.mubr.f32.mxu0 0.0
        %4384 = vmatmul.mubr.f32.gmra.mxu0 %v4235
        %v4385 = vpop.f32.mrf.mxu0
        %v4386 = vadd.f32 0.0, %v4385
        %v4387 = vpop.f32.mrf.mxu0
        %4388 = vmatprep.mubr.f32.mxu0 0.0
        %4389 = vmatmul.mubr.f32.gmra.mxu0 %v4236
        %v4390 = vpop.f32.mrf.mxu0
        %v4391 = vadd.f32 0.0, %v4390
        %v4392 = vpop.f32.mrf.mxu0
        %4393 = vmatprep.mubr.f32.mxu0 0.0
        %4394 = vmatmul.mubr.f32.gmra.mxu0 %v4237
        %v4395 = vpop.f32.mrf.mxu0
        %v4396 = vadd.f32 0.0, %v4395
        %v4397 = vpop.f32.mrf.mxu0
        %4398 = vmatprep.mubr.f32.mxu0 0.0
        %4399 = vmatmul.mubr.f32.gmra.mxu0 %v4238
        %v4400 = vpop.f32.mrf.mxu0
        %v4401 = vadd.f32 0.0, %v4400
        %v4402 = vpop.f32.mrf.mxu0
        %4403 = vmatprep.mubr.f32.mxu0 0.0
        %4404 = vmatmul.mubr.f32.gmra.mxu0 %v4239
        %v4405 = vpop.f32.mrf.mxu0
        %v4406 = vadd.f32 0.0, %v4405
        %v4407 = vpop.f32.mrf.mxu0
        %4408 = vmatprep.mubr.f32.mxu0 0.0
        %4409 = vmatmul.mubr.f32.gmra.mxu0 %v4240
        %v4410 = vpop.f32.mrf.mxu0
        %v4411 = vadd.f32 0.0, %v4410
        %v4412 = vpop.f32.mrf.mxu0
        %4413 = vmatprep.mubr.f32.mxu0 0.0
        %4414 = vmatmul.mubr.f32.gmra.mxu0 %v4241
        %v4415 = vpop.f32.mrf.mxu0
        %v4416 = vadd.f32 0.0, %v4415
        %v4417 = vpop.f32.mrf.mxu0
        %4418 = vmatprep.mubr.f32.mxu0 0.0
        %4419 = vmatmul.mubr.f32.gmra.mxu0 %v4242
        %v4420 = vpop.f32.mrf.mxu0
        %v4421 = vadd.f32 0.0, %v4420
        %v4422 = vpop.f32.mrf.mxu0
        %4423 = vmatprep.mubr.f32.mxu0 0.0
        %4424 = vmatmul.mubr.f32.gmra.mxu0 %v4243
        %v4425 = vpop.f32.mrf.mxu0
        %v4426 = vadd.f32 0.0, %v4425
        %v4427 = vpop.f32.mrf.mxu0
        %4428 = vmatprep.mubr.f32.mxu0 0.0
        %4429 = vmatmul.mubr.f32.gmra.mxu0 %v4244
        %v4430 = vpop.f32.mrf.mxu0
        %v4431 = vadd.f32 0.0, %v4430
        %v4432 = vpop.f32.mrf.mxu0
        %4433 = vmatprep.mubr.f32.mxu0 0.0
        %4434 = vmatmul.mubr.f32.gmra.mxu0 %v4245
        %v4435 = vpop.f32.mrf.mxu0
        %v4436 = vadd.f32 0.0, %v4435
        %v4437 = vpop.f32.mrf.mxu0
        %4438 = vmatprep.mubr.f32.mxu0 0.0
        %4439 = vmatmul.mubr.f32.gmra.mxu0 %v4246
        %v4440 = vpop.f32.mrf.mxu0
        %v4441 = vadd.f32 0.0, %v4440
        %v4442 = vpop.f32.mrf.mxu0
        %4443 = vmatprep.mubr.f32.mxu0 0.0
        %4444 = vmatmul.mubr.f32.gmra.mxu0 %v4247
        %v4445 = vpop.f32.mrf.mxu0
        %v4446 = vadd.f32 0.0, %v4445
        %v4447 = vpop.f32.mrf.mxu0
        %4448 = vmatprep.mubr.f32.mxu0 0.0
        %4449 = vmatmul.mubr.f32.gmra.mxu0 %v4248
        %v4450 = vpop.f32.mrf.mxu0
        %v4451 = vadd.f32 0.0, %v4450
        %v4452 = vpop.f32.mrf.mxu0
        %4453 = vmatprep.mubr.f32.mxu0 0.0
        %4454 = vmatmul.mubr.f32.gmra.mxu0 %v4249
        %v4455 = vpop.f32.mrf.mxu0
        %v4456 = vadd.f32 0.0, %v4455
        %v4457 = vpop.f32.mrf.mxu0
        %4458 = vmatprep.mubr.f32.mxu0 0.0
        %4459 = vmatmul.mubr.f32.gmra.mxu0 %v4250
        %v4460 = vpop.f32.mrf.mxu0
        %v4461 = vadd.f32 0.0, %v4460
        %v4462 = vpop.f32.mrf.mxu0
        %4463 = vmatprep.mubr.f32.mxu0 0.0
        %4464 = vmatmul.mubr.f32.gmra.mxu0 %v4251
        %v4465 = vpop.f32.mrf.mxu0
        %v4466 = vadd.f32 0.0, %v4465
        %v4467 = vpop.f32.mrf.mxu0
        %4468 = vmatprep.mubr.f32.mxu0 0.0
        %4469 = vmatmul.mubr.f32.gmra.mxu0 %v4252
        %v4470 = vpop.f32.mrf.mxu0
        %v4471 = vadd.f32 0.0, %v4470
        %v4472 = vpop.f32.mrf.mxu0
        %4473 = vmatprep.mubr.f32.mxu0 0.0
        %4474 = vmatmul.mubr.f32.gmra.mxu0 %v4253
        %v4475 = vpop.f32.mrf.mxu0
        %v4476 = vadd.f32 0.0, %v4475
        %v4477 = vpop.f32.mrf.mxu0
        %4478 = vmatprep.mubr.f32.mxu0 0.0
        %4479 = vmatmul.mubr.f32.gmra.mxu0 %v4254
        %v4480 = vpop.f32.mrf.mxu0
        %v4481 = vadd.f32 0.0, %v4480
        %v4482 = vpop.f32.mrf.mxu0
        %4483 = vmatprep.mubr.f32.mxu0 0.0
        %4484 = vmatmul.mubr.f32.gmra.mxu0 %v4255
        %v4485 = vpop.f32.mrf.mxu0
        %v4486 = vadd.f32 0.0, %v4485
        %v4487 = vpop.f32.mrf.mxu0
        %4488 = vmatprep.mubr.f32.mxu0 0.0
        %4489 = vmatmul.mubr.f32.gmra.mxu0 %v4256
        %v4490 = vpop.f32.mrf.mxu0
        %v4491 = vadd.f32 0.0, %v4490
        %v4492 = vpop.f32.mrf.mxu0
        %4493 = vmatprep.mubr.f32.mxu0 0.0
        %4494 = vmatmul.mubr.f32.gmra.mxu0 %v4257
        %v4495 = vpop.f32.mrf.mxu0
        %v4496 = vadd.f32 0.0, %v4495
        %v4497 = vpop.f32.mrf.mxu0
        %4498 = vdwg.mxu0
        %v4499 = vadd.f32 %v3338, %v4341
        %v4500 = vadd.f32 %v3339, %v4346
        %v4501 = vadd.f32 %v3340, %v4351
        %v4502 = vadd.f32 %v3341, %v4356
        %v4503 = vadd.f32 %v3342, %v4361
        %v4504 = vadd.f32 %v3343, %v4366
        %v4505 = vadd.f32 %v3344, %v4371
        %v4506 = vadd.f32 %v3345, %v4376
        %v4507 = vadd.f32 %v3346, %v4381
        %v4508 = vadd.f32 %v3347, %v4386
        %v4509 = vadd.f32 %v3348, %v4391
        %v4510 = vadd.f32 %v3349, %v4396
        %v4511 = vadd.f32 %v3350, %v4401
        %v4512 = vadd.f32 %v3351, %v4406
        %v4513 = vadd.f32 %v3352, %v4411
        %v4514 = vadd.f32 %v3353, %v4416
        %v4515 = vadd.f32 %v3354, %v4421
        %v4516 = vadd.f32 %v3355, %v4426
        %v4517 = vadd.f32 %v3356, %v4431
        %v4518 = vadd.f32 %v3357, %v4436
        %v4519 = vadd.f32 %v3358, %v4441
        %v4520 = vadd.f32 %v3359, %v4446
        %v4521 = vadd.f32 %v3360, %v4451
        %v4522 = vadd.f32 %v3361, %v4456
        %v4523 = vadd.f32 %v3362, %v4461
        %v4524 = vadd.f32 %v3363, %v4466
        %v4525 = vadd.f32 %v3364, %v4471
        %v4526 = vadd.f32 %v3365, %v4476
        %v4527 = vadd.f32 %v3366, %v4481
        %v4528 = vadd.f32 %v3367, %v4486
        %v4529 = vadd.f32 %v3368, %v4491
        %v4530 = vadd.f32 %v3369, %v4496
        %v4531 = vld [vmem:[%s4] sm:$0x1]
        %v4533 = vlaneseq
        %v4534 = vshrl.u32 %v4533, 7
        %v4535 = vsub.s32 0, %v4534
        %v4536 = vrot.slane %v4531, %v4535
        %v4538 = vadd.f32 %v4499, %v4536
        %v4539 = vadd.f32 %v4500, %v4536
        %v4540 = vadd.f32 %v4501, %v4536
        %v4541 = vadd.f32 %v4502, %v4536
        %v4542 = vadd.f32 %v4503, %v4536
        %v4543 = vadd.f32 %v4504, %v4536
        %v4544 = vadd.f32 %v4505, %v4536
        %v4545 = vadd.f32 %v4506, %v4536
        %v4546 = vadd.f32 %v4507, %v4536
        %v4547 = vadd.f32 %v4508, %v4536
        %v4548 = vadd.f32 %v4509, %v4536
        %v4549 = vadd.f32 %v4510, %v4536
        %v4550 = vadd.f32 %v4511, %v4536
        %v4551 = vadd.f32 %v4512, %v4536
        %v4552 = vadd.f32 %v4513, %v4536
        %v4553 = vadd.f32 %v4514, %v4536
        %v4554 = vadd.f32 %v4515, %v4536
        %v4555 = vadd.f32 %v4516, %v4536
        %v4556 = vadd.f32 %v4517, %v4536
        %v4557 = vadd.f32 %v4518, %v4536
        %v4558 = vadd.f32 %v4519, %v4536
        %v4559 = vadd.f32 %v4520, %v4536
        %v4560 = vadd.f32 %v4521, %v4536
        %v4561 = vadd.f32 %v4522, %v4536
        %v4562 = vadd.f32 %v4523, %v4536
        %v4563 = vadd.f32 %v4524, %v4536
        %v4564 = vadd.f32 %v4525, %v4536
        %v4565 = vadd.f32 %v4526, %v4536
        %v4566 = vadd.f32 %v4527, %v4536
        %v4567 = vadd.f32 %v4528, %v4536
        %v4568 = vadd.f32 %v4529, %v4536
        %v4569 = vadd.f32 %v4530, %v4536
        %v4570 = vmul.f32 %v4538, 0.5
        %v4571 = vmul.f32 %v4539, 0.5
        %v4572 = vmul.f32 %v4540, 0.5
        %v4573 = vmul.f32 %v4541, 0.5
        %v4574 = vmul.f32 %v4542, 0.5
        %v4575 = vmul.f32 %v4543, 0.5
        %v4576 = vmul.f32 %v4544, 0.5
        %v4577 = vmul.f32 %v4545, 0.5
        %v4578 = vmul.f32 %v4546, 0.5
        %v4579 = vmul.f32 %v4547, 0.5
        %v4580 = vmul.f32 %v4548, 0.5
        %v4581 = vmul.f32 %v4549, 0.5
        %v4582 = vmul.f32 %v4550, 0.5
        %v4583 = vmul.f32 %v4551, 0.5
        %v4584 = vmul.f32 %v4552, 0.5
        %v4585 = vmul.f32 %v4553, 0.5
        %v4586 = vmul.f32 %v4554, 0.5
        %v4587 = vmul.f32 %v4555, 0.5
        %v4588 = vmul.f32 %v4556, 0.5
        %v4589 = vmul.f32 %v4557, 0.5
        %v4590 = vmul.f32 %v4558, 0.5
        %v4591 = vmul.f32 %v4559, 0.5
        %v4592 = vmul.f32 %v4560, 0.5
        %v4593 = vmul.f32 %v4561, 0.5
        %v4594 = vmul.f32 %v4562, 0.5
        %v4595 = vmul.f32 %v4563, 0.5
        %v4596 = vmul.f32 %v4564, 0.5
        %v4597 = vmul.f32 %v4565, 0.5
        %v4598 = vmul.f32 %v4566, 0.5
        %v4599 = vmul.f32 %v4567, 0.5
        %v4600 = vmul.f32 %v4568, 0.5
        %v4601 = vmul.f32 %v4569, 0.5
        %v4602 = vtanh.pop %v4570
        %v4603 = vtanh.pop %v4571
        %v4604 = vtanh.pop %v4572
        %v4605 = vtanh.pop %v4573
        %v4606 = vtanh.pop %v4574
        %v4607 = vtanh.pop %v4575
        %v4608 = vtanh.pop %v4576
        %v4609 = vtanh.pop %v4577
        %v4610 = vtanh.pop %v4578
        %v4611 = vtanh.pop %v4579
        %v4612 = vtanh.pop %v4580
        %v4613 = vtanh.pop %v4581
        %v4614 = vtanh.pop %v4582
        %v4615 = vtanh.pop %v4583
        %v4616 = vtanh.pop %v4584
        %v4617 = vtanh.pop %v4585
        %v4618 = vtanh.pop %v4586
        %v4619 = vtanh.pop %v4587
        %v4620 = vtanh.pop %v4588
        %v4621 = vtanh.pop %v4589
        %v4622 = vtanh.pop %v4590
        %v4623 = vtanh.pop %v4591
        %v4624 = vtanh.pop %v4592
        %v4625 = vtanh.pop %v4593
        %v4626 = vtanh.pop %v4594
        %v4627 = vtanh.pop %v4595
        %v4628 = vtanh.pop %v4596
        %v4629 = vtanh.pop %v4597
        %v4630 = vtanh.pop %v4598
        %v4631 = vtanh.pop %v4599
        %v4632 = vtanh.pop %v4600
        %v4633 = vtanh.pop %v4601
        %v4634 = vmul.f32 %v4602, 0.5
        %v4635 = vmul.f32 %v4603, 0.5
        %v4636 = vmul.f32 %v4604, 0.5
        %v4637 = vmul.f32 %v4605, 0.5
        %v4638 = vmul.f32 %v4606, 0.5
        %v4639 = vmul.f32 %v4607, 0.5
        %v4640 = vmul.f32 %v4608, 0.5
        %v4641 = vmul.f32 %v4609, 0.5
        %v4642 = vmul.f32 %v4610, 0.5
        %v4643 = vmul.f32 %v4611, 0.5
        %v4644 = vmul.f32 %v4612, 0.5
        %v4645 = vmul.f32 %v4613, 0.5
        %v4646 = vmul.f32 %v4614, 0.5
        %v4647 = vmul.f32 %v4615, 0.5
        %v4648 = vmul.f32 %v4616, 0.5
        %v4649 = vmul.f32 %v4617, 0.5
        %v4650 = vmul.f32 %v4618, 0.5
        %v4651 = vmul.f32 %v4619, 0.5
        %v4652 = vmul.f32 %v4620, 0.5
        %v4653 = vmul.f32 %v4621, 0.5
        %v4654 = vmul.f32 %v4622, 0.5
        %v4655 = vmul.f32 %v4623, 0.5
        %v4656 = vmul.f32 %v4624, 0.5
        %v4657 = vmul.f32 %v4625, 0.5
        %v4658 = vmul.f32 %v4626, 0.5
        %v4659 = vmul.f32 %v4627, 0.5
        %v4660 = vmul.f32 %v4628, 0.5
        %v4661 = vmul.f32 %v4629, 0.5
        %v4662 = vmul.f32 %v4630, 0.5
        %v4663 = vmul.f32 %v4631, 0.5
        %v4664 = vmul.f32 %v4632, 0.5
        %v4665 = vmul.f32 %v4633, 0.5
        %v4666 = vadd.f32 %v4634, 0.5
        %v4667 = vadd.f32 %v4635, 0.5
        %v4668 = vadd.f32 %v4636, 0.5
        %v4669 = vadd.f32 %v4637, 0.5
        %v4670 = vadd.f32 %v4638, 0.5
        %v4671 = vadd.f32 %v4639, 0.5
        %v4672 = vadd.f32 %v4640, 0.5
        %v4673 = vadd.f32 %v4641, 0.5
        %v4674 = vadd.f32 %v4642, 0.5
        %v4675 = vadd.f32 %v4643, 0.5
        %v4676 = vadd.f32 %v4644, 0.5
        %v4677 = vadd.f32 %v4645, 0.5
        %v4678 = vadd.f32 %v4646, 0.5
        %v4679 = vadd.f32 %v4647, 0.5
        %v4680 = vadd.f32 %v4648, 0.5
        %v4681 = vadd.f32 %v4649, 0.5
        %v4682 = vadd.f32 %v4650, 0.5
        %v4683 = vadd.f32 %v4651, 0.5
        %v4684 = vadd.f32 %v4652, 0.5
        %v4685 = vadd.f32 %v4653, 0.5
        %v4686 = vadd.f32 %v4654, 0.5
        %v4687 = vadd.f32 %v4655, 0.5
        %v4688 = vadd.f32 %v4656, 0.5
        %v4689 = vadd.f32 %v4657, 0.5
        %v4690 = vadd.f32 %v4658, 0.5
        %v4691 = vadd.f32 %v4659, 0.5
        %v4692 = vadd.f32 %v4660, 0.5
        %v4693 = vadd.f32 %v4661, 0.5
        %v4694 = vadd.f32 %v4662, 0.5
        %v4695 = vadd.f32 %v4663, 0.5
        %v4696 = vadd.f32 %v4664, 0.5
        %v4697 = vadd.f32 %v4665, 0.5
        %v4698 = vmul.f32 %v4538, %v4666
        %v4699 = vmul.f32 %v4539, %v4667
        %v4700 = vmul.f32 %v4540, %v4668
        %v4701 = vmul.f32 %v4541, %v4669
        %v4702 = vmul.f32 %v4542, %v4670
        %v4703 = vmul.f32 %v4543, %v4671
        %v4704 = vmul.f32 %v4544, %v4672
        %v4705 = vmul.f32 %v4545, %v4673
        %v4706 = vmul.f32 %v4546, %v4674
        %v4707 = vmul.f32 %v4547, %v4675
        %v4708 = vmul.f32 %v4548, %v4676
        %v4709 = vmul.f32 %v4549, %v4677
        %v4710 = vmul.f32 %v4550, %v4678
        %v4711 = vmul.f32 %v4551, %v4679
        %v4712 = vmul.f32 %v4552, %v4680
        %v4713 = vmul.f32 %v4553, %v4681
        %v4714 = vmul.f32 %v4554, %v4682
        %v4715 = vmul.f32 %v4555, %v4683
        %v4716 = vmul.f32 %v4556, %v4684
        %v4717 = vmul.f32 %v4557, %v4685
        %v4718 = vmul.f32 %v4558, %v4686
        %v4719 = vmul.f32 %v4559, %v4687
        %v4720 = vmul.f32 %v4560, %v4688
        %v4721 = vmul.f32 %v4561, %v4689
        %v4722 = vmul.f32 %v4562, %v4690
        %v4723 = vmul.f32 %v4563, %v4691
        %v4724 = vmul.f32 %v4564, %v4692
        %v4725 = vmul.f32 %v4565, %v4693
        %v4726 = vmul.f32 %v4566, %v4694
        %v4727 = vmul.f32 %v4567, %v4695
        %v4728 = vmul.f32 %v4568, %v4696
        %v4729 = vmul.f32 %v4569, %v4697
        %4730 = vst [vmem:[%s217] sm:$0xff] %v4698
        %4731 = vst [vmem:[%s217 + $0x8] sm:$0xff] %v4699
        %4732 = vst [vmem:[%s217 + $0x10] sm:$0xff] %v4700
        %4733 = vst [vmem:[%s217 + $0x18] sm:$0xff] %v4701
        %4734 = vst [vmem:[%s217 + $0x20] sm:$0xff] %v4702
        %4735 = vst [vmem:[%s217 + $0x28] sm:$0xff] %v4703
        %4736 = vst [vmem:[%s217 + $0x30] sm:$0xff] %v4704
        %4737 = vst [vmem:[%s217 + $0x38] sm:$0xff] %v4705
        %4738 = vst [vmem:[%s217 + $0x40] sm:$0xff] %v4706
        %4739 = vst [vmem:[%s217 + $0x48] sm:$0xff] %v4707
        %4740 = vst [vmem:[%s217 + $0x50] sm:$0xff] %v4708
        %4741 = vst [vmem:[%s217 + $0x58] sm:$0xff] %v4709
        %4742 = vst [vmem:[%s217 + $0x60] sm:$0xff] %v4710
        %4743 = vst [vmem:[%s217 + $0x68] sm:$0xff] %v4711
        %4744 = vst [vmem:[%s217 + $0x70] sm:$0xff] %v4712
        %4745 = vst [vmem:[%s217 + $0x78] sm:$0xff] %v4713
        %4746 = vst [vmem:[%s217 + $0x80] sm:$0xff] %v4714
        %4747 = vst [vmem:[%s217 + $0x88] sm:$0xff] %v4715
        %4748 = vst [vmem:[%s217 + $0x90] sm:$0xff] %v4716
        %4749 = vst [vmem:[%s217 + $0x98] sm:$0xff] %v4717
        %4750 = vst [vmem:[%s217 + $0xa0] sm:$0xff] %v4718
        %4751 = vst [vmem:[%s217 + $0xa8] sm:$0xff] %v4719
        %4752 = vst [vmem:[%s217 + $0xb0] sm:$0xff] %v4720
        %4753 = vst [vmem:[%s217 + $0xb8] sm:$0xff] %v4721
        %4754 = vst [vmem:[%s217 + $0xc0] sm:$0xff] %v4722
        %4755 = vst [vmem:[%s217 + $0xc8] sm:$0xff] %v4723
        %4756 = vst [vmem:[%s217 + $0xd0] sm:$0xff] %v4724
        %4757 = vst [vmem:[%s217 + $0xd8] sm:$0xff] %v4725
        %4758 = vst [vmem:[%s217 + $0xe0] sm:$0xff] %v4726
        %4759 = vst [vmem:[%s217 + $0xe8] sm:$0xff] %v4727
        %4760 = vst [vmem:[%s217 + $0xf0] sm:$0xff] %v4728
        %4761 = vst [vmem:[%s217 + $0xf8] sm:$0xff] %v4729
        %s4762 = sand.u32 %s137, 1
        %s4763 = scalar_lea.sflag [#allocation5], %s4762
        %s4764 = sand.u32 %s137, 1
        %s4765 = smul.addr %s4764, 256
        %s4766 = scalar_lea.vmem [#allocation4], %s4765
        // Predicated region
        $region41: #{tpu_custom_call.1} parent=39 // pred_check
          %p4767 = pneg %p147
        $region42: #{tpu_custom_call.1} parent=39 // pred_check_branch
          %4769 = sbr.rel (%p4767) target = $region44
        $region43: #{tpu_custom_call.1} parent=39 // pred_region
          %s4771 = ssub.s32 4096, 4096
          %4772 = vsyncadd %s4763, %s4771
          %s4773 = smul.addr %s19, 32
          %s4774 = smul.addr %s4773, 128
          %s4775 = scalar_lea.hbm %s5, %s4774
          %s4776 = sshll.u32 %s4766, 4
          %s4777 = int_to_ptr.vmem [resolvable:$true] %s4776
          %4782 = dma.vmem_to_hbm [thread:$0]  %s4777, 4096, %s4775, %s4763, 128, 128, 8
        $region44: #{tpu_custom_call.1} parent=39 // pred_fallthru
          _
      $region40: #{tpu_custom_call.1} parent=5 // pred_fallthru
        _
      %p4783 = scmp.le.s32.totalorder 2, %s14
      // Predicated region
      $region45: #{tpu_custom_call.1} parent=5 // pred_check
        %p4784 = pneg %p4783
      $region46: #{tpu_custom_call.1} parent=5 // pred_check_branch
        %4786 = sbr.rel (%p4784) target = $region48
      $region47: #{tpu_custom_call.1} parent=5 // pred_region
        %s4787 = ssub.s32 %s14, 2
        // Predicated region
        $region49: #{tpu_custom_call.1} parent=47 // pred_check
          %p4788 = pneg %p153
        $region50: #{tpu_custom_call.1} parent=47 // pred_check_branch
          %4790 = sbr.rel (%p4788) target = $region52
        $region51: #{tpu_custom_call.1} parent=47 // pred_region
          %s4791 = sand.u32 %s138, 1
          %s4792 = scalar_lea.sflag [#allocation5], %s4791
          %s4793 = sand.u32 %s138, 1
          %s4794 = smul.addr %s4793, 256
          %s4795 = scalar_lea.vmem [#allocation4], %s4794
          %4796 = dma.done %s4792, 4096
        $region52: #{tpu_custom_call.1} parent=47 // pred_fallthru
          _
      $region48: #{tpu_custom_call.1} parent=5 // pred_fallthru
        _
    $region6: #{tpu_custom_call.1} parent=1 // loop_footer
      %s18 = sadd.s32 1, %s14
    $region7: #{tpu_custom_call.1} parent=1 // loop_footer_branch
      %13 = sbr.rel target = $region3
    $region8: #{tpu_custom_call.1} parent=1 // loop_exit
      _
    %4797 = vsyncpa [#allocation5], 1
    %s4798 = scalar_lea.sflag [#allocation5], 1
    %4799 = vsyncpa %s4798, 1

// kernel: tpu_custom_call.1
$region0: #{tpu_custom_call.1}
  #allocation0 [shape = 'u32[]', space=smem, size = 0x4, offset = 0x4, fixed_abs, tag = 'smem constant byte address 0x4 - core index']
  #allocation1 [shape = 'u32[144,128]{1,0:T(1,128)}', space=vmem, size = 0x12000, scoped, tag = 'internal scratch']
  #allocation2 [shape = 'f32[1,20,20,128]{3,2,1,0:T(8,128)}', space=vmem, size = 0x3c000, scoped, tag = 'scratch operand']
  #allocation3 [shape = 'f32[1,20,20,128]{3,2,1,0:T(8,128)}', space=vmem, size = 0x3c000, scoped, tag = 'scratch operand']
  %s0 = inlined_call_operand.vmem [shape: f32[2,16,16,8], index: 0, kind: input, shape index: {}]
  %s1 = inlined_call_operand.vmem [shape: f32[8,128], index: 1, kind: input, shape index: {}]
  %s2 = inlined_call_operand.vmem [shape: f32[1,128], index: 2, kind: input, shape index: {}]
  %s3 = inlined_call_operand.vmem [shape: f32[512,128], index: 3, kind: input, shape index: {}]
  %s4 = inlined_call_operand.vmem [shape: f32[1,128], index: 4, kind: input, shape index: {}]
  %s5 = inlined_call_operand.hbm [shape: f32[2,16,16,128], index: 5, kind: output, shape index: {}]
  %s6 = sld [smem:[#allocation0]]
  $region53: #{tpu_custom_call.1} parent=0
    _
  %s8 = ssub.s32 1, %s6
  %s9 = scalar_select 0, %s8, %s6
  $region1: #{tpu_custom_call.1} parent=0
    #allocation4 [shape = 'u8[262144]{0}', space=vmem, size = 0x40000, scoped, tag = 'output window, operand 0']
    #allocation5 [shape = 's32[2]{0}', space=sflag, size = 0x8, scoped, tag = 'scoped memory for tpu_custom_call.1']
    %10 = vsyncpa [#allocation5], 0
    %s11 = scalar_lea.sflag [#allocation5], 1
    %12 = vsyncpa %s11, 0
    loop: start=0, step=1, limit=4
    $region2: #{tpu_custom_call.1} parent=1 // loop_pre_header
      _
    $region3: #{tpu_custom_call.1} parent=1 // loop_header
      %s14 = sphi 0, %s18
      %p15 = scmp.ge.s32.totalorder %s14, 4
      %s24 = sphi 0, %s26
      %s27 = sphi 0, %s24
      %s28 = sphi 0, %s27
      %s44 = sphi 0, %s28
      %s48 = sphi 0, %s48
      %s50 = sphi 0, %s48
      %s51 = sphi 0, %s50
      %s65 = sphi 0, %s51
      %s69 = sphi 0, %s69
      %s71 = sphi 0, %s69
      %s72 = sphi 0, %s71
      %s86 = sphi 0, %s72
      %s90 = sphi 0, %s90
      %s92 = sphi 0, %s90
      %s93 = sphi 0, %s92
      %s107 = sphi 0, %s93
      %s111 = sphi 0, %s111
      %s113 = sphi 0, %s111
      %s114 = sphi 0, %s113
      %s128 = sphi 0, %s114
      %s134 = sphi 0, %s136
      %s137 = sphi 0, %s134
      %s138 = sphi 0, %s137
      %s154 = sphi 0, %s138
    $region4: #{tpu_custom_call.1} parent=1 // loop_header_branch
      %17 = sbr.rel (%p15) target = $region8
    $region5: #{tpu_custom_call.1} parent=1 // loop_body
      %s19 = ssub.s32 %s14, 1
      %s20 = ssub.s32 %s14, 2
      %s21 = sadd.s32 %s14, 1
      %s22 = ssub.s32 %s14, %s21
      %p23 = scmp.eq.s32.totalorder %s22, 0
      %s25 = sadd.s32 %s24, 1
      %s26 = scalar_select %p23, %s24, %s25
      %p29 = pneg %p23
      %p30 = scmp.eq.s32.totalorder %s14, 1
      %p31 = por %p29, %p30
      %p32 = scmp.ne.s32.totalorder %s24, %s27
      %p33 = scmp.eq.s32.totalorder %s14, 0
      %p34 = por %p32, %p33
      %p35 = scmp.ne.s32.totalorder %s24, %s27
      %p36 = scmp.eq.s32.totalorder %s19, 1
      %p37 = por %p35, %p36
      %p38 = scmp.ne.s32.totalorder %s27, %s28
      %p39 = scmp.eq.s32.totalorder %s19, 0
      %p40 = por %p38, %p39
      %p41 = scmp.ne.s32.totalorder %s27, %s28
      %p42 = scmp.eq.s32.totalorder %s20, 1
      %p43 = por %p41, %p42
      %p45 = scmp.ne.s32.totalorder %s28, %s44
      %p46 = scmp.eq.s32.totalorder %s20, 0
      %p47 = por %p45, %p46
      %s49 = sadd.s32 %s48, 1
      %p52 = scmp.eq.s32.totalorder %s14, 1
      %p53 = scmp.ne.s32.totalorder %s48, %s50
      %p54 = scmp.eq.s32.totalorder %s14, 0
      %p55 = por %p53, %p54
      %p56 = scmp.ne.s32.totalorder %s48, %s50
      %p57 = scmp.eq.s32.totalorder %s19, 1
      %p58 = por %p56, %p57
      %p59 = scmp.ne.s32.totalorder %s50, %s51
      %p60 = scmp.eq.s32.totalorder %s19, 0
      %p61 = por %p59, %p60
      %p62 = scmp.ne.s32.totalorder %s50, %s51
      %p63 = scmp.eq.s32.totalorder %s20, 1
      %p64 = por %p62, %p63
      %p66 = scmp.ne.s32.totalorder %s51, %s65
      %p67 = scmp.eq.s32.totalorder %s20, 0
      %p68 = por %p66, %p67
      %s70 = sadd.s32 %s69, 1
      %p73 = scmp.eq.s32.totalorder %s14, 1
      %p74 = scmp.ne.s32.totalorder %s69, %s71
      %p75 = scmp.eq.s32.totalorder %s14, 0
      %p76 = por %p74, %p75
      %p77 = scmp.ne.s32.totalorder %s69, %s71
      %p78 = scmp.eq.s32.totalorder %s19, 1
      %p79 = por %p77, %p78
      %p80 = scmp.ne.s32.totalorder %s71, %s72
      %p81 = scmp.eq.s32.totalorder %s19, 0
      %p82 = por %p80, %p81
      %p83 = scmp.ne.s32.totalorder %s71, %s72
      %p84 = scmp.eq.s32.totalorder %s20, 1
      %p85 = por %p83, %p84
      %p87 = scmp.ne.s32.totalorder %s72, %s86
      %p88 = scmp.eq.s32.totalorder %s20, 0
      %p89 = por %p87, %p88
      %s91 = sadd.s32 %s90, 1
      %p94 = scmp.eq.s32.totalorder %s14, 1
      %p95 = scmp.ne.s32.totalorder %s90, %s92
      %p96 = scmp.eq.s32.totalorder %s14, 0
      %p97 = por %p95, %p96
      %p98 = scmp.ne.s32.totalorder %s90, %s92
      %p99 = scmp.eq.s32.totalorder %s19, 1
      %p100 = por %p98, %p99
      %p101 = scmp.ne.s32.totalorder %s92, %s93
      %p102 = scmp.eq.s32.totalorder %s19, 0
      %p103 = por %p101, %p102
      %p104 = scmp.ne.s32.totalorder %s92, %s93
      %p105 = scmp.eq.s32.totalorder %s20, 1
      %p106 = por %p104, %p105
      %p108 = scmp.ne.s32.totalorder %s93, %s107
      %p109 = scmp.eq.s32.totalorder %s20, 0
      %p110 = por %p108, %p109
      %s112 = sadd.s32 %s111, 1
      %p115 = scmp.eq.s32.totalorder %s14, 1
      %p116 = scmp.ne.s32.totalorder %s111, %s113
      %p117 = scmp.eq.s32.totalorder %s14, 0
      %p118 = por %p116, %p117
      %p119 = scmp.ne.s32.totalorder %s111, %s113
      %p120 = scmp.eq.s32.totalorder %s19, 1
      %p121 = por %p119, %p120
      %p122 = scmp.ne.s32.totalorder %s113, %s114
      %p123 = scmp.eq.s32.totalorder %s19, 0
      %p124 = por %p122, %p123
      %p125 = scmp.ne.s32.totalorder %s113, %s114
      %p126 = scmp.eq.s32.totalorder %s20, 1
      %p127 = por %p125, %p126
      %p129 = scmp.ne.s32.totalorder %s114, %s128
      %p130 = scmp.eq.s32.totalorder %s20, 0
      %p131 = por %p129, %p130
      %s132 = ssub.s32 %s14, %s21
      %p133 = scmp.eq.s32.totalorder %s132, 0
      %s135 = sadd.s32 %s134, 1
      %s136 = scalar_select %p133, %s134, %s135
      %p139 = pneg %p133
      %p140 = scmp.eq.s32.totalorder %s14, 1
      %p141 = por %p139, %p140
      %p142 = scmp.ne.s32.totalorder %s134, %s137
      %p143 = scmp.eq.s32.totalorder %s14, 0
      %p144 = por %p142, %p143
      %p145 = scmp.ne.s32.totalorder %s134, %s137
      %p146 = scmp.eq.s32.totalorder %s19, 1
      %p147 = por %p145, %p146
      %p148 = scmp.ne.s32.totalorder %s137, %s138
      %p149 = scmp.eq.s32.totalorder %s19, 0
      %p150 = por %p148, %p149
      %p151 = scmp.ne.s32.totalorder %s137, %s138
      %p152 = scmp.eq.s32.totalorder %s20, 1
      %p153 = por %p151, %p152
      %p155 = scmp.ne.s32.totalorder %s138, %s154
      %p156 = scmp.eq.s32.totalorder %s20, 0
      %p157 = por %p155, %p156
      %p158 = scmp.le.s32.totalorder 1, %s14
      %p159 = scmp.lt.s32.totalorder %s14, 3
      %p160 = pnand %p158, %p159
      %p161 = pneg %p160
      // Predicated region
      $region9: #{tpu_custom_call.1} parent=5 // pred_check
        _
      $region10: #{tpu_custom_call.1} parent=5 // pred_check_branch
        %163 = sbr.rel (%p160) target = $region12
      $region11: #{tpu_custom_call.1} parent=5 // pred_region
        %s164 = ssub.s32 %s14, 1
        // Predicated region
        $region13: #{tpu_custom_call.1} parent=11 // pred_check
          %p165 = pneg %p61
        $region14: #{tpu_custom_call.1} parent=11 // pred_check_branch
          %167 = sbr.rel (%p165) target = $region16
        $region15: #{tpu_custom_call.1} parent=11 // pred_region
          _
        $region16: #{tpu_custom_call.1} parent=11 // pred_fallthru
          _
        // Predicated region
        $region17: #{tpu_custom_call.1} parent=11 // pred_check
          %p168 = pneg %p82
        $region18: #{tpu_custom_call.1} parent=11 // pred_check_branch
          %170 = sbr.rel (%p168) target = $region20
        $region19: #{tpu_custom_call.1} parent=11 // pred_region
          _
        $region20: #{tpu_custom_call.1} parent=11 // pred_fallthru
          _
        // Predicated region
        $region21: #{tpu_custom_call.1} parent=11 // pred_check
          %p171 = pneg %p103
        $region22: #{tpu_custom_call.1} parent=11 // pred_check_branch
          %173 = sbr.rel (%p171) target = $region24
        $region23: #{tpu_custom_call.1} parent=11 // pred_region
          _
        $region24: #{tpu_custom_call.1} parent=11 // pred_fallthru
          _
        // Predicated region
        $region25: #{tpu_custom_call.1} parent=11 // pred_check
          %p174 = pneg %p124
        $region26: #{tpu_custom_call.1} parent=11 // pred_check_branch
          %176 = sbr.rel (%p174) target = $region28
        $region27: #{tpu_custom_call.1} parent=11 // pred_region
          _
        $region28: #{tpu_custom_call.1} parent=11 // pred_fallthru
          _
      $region12: #{tpu_custom_call.1} parent=5 // pred_fallthru
        _
      %p177 = scmp.lt.s32.totalorder %s14, 2
      // Predicated region
      $region29: #{tpu_custom_call.1} parent=5 // pred_check
        %p178 = pneg %p177
      $region30: #{tpu_custom_call.1} parent=5 // pred_check_branch
        %180 = sbr.rel (%p178) target = $region32
      $region31: #{tpu_custom_call.1} parent=5 // pred_region
        // Predicated region
        $region33: #{tpu_custom_call.1} parent=31 // pred_check
          %p181 = pneg %p34
        $region34: #{tpu_custom_call.1} parent=31 // pred_check_branch
          %183 = sbr.rel (%p181) target = $region36
        $region35: #{tpu_custom_call.1} parent=31 // pred_region
          %p184 = scmp.lt.s32.totalorder %s14, 1
          %s185 = scalar_select %p184, %s14, 1
          %s186 = smul.addr %s185, 32
          %s187 = smul.addr %s186, 8
          %s188 = scalar_lea.vmem %s0, %s187
        $region36: #{tpu_custom_call.1} parent=31 // pred_fallthru
          _
      $region32: #{tpu_custom_call.1} parent=5 // pred_fallthru
        _
      %p189 = scmp.le.s32.totalorder 1, %s14
      %p190 = scmp.lt.s32.totalorder %s14, 3
      %p191 = pnand %p189, %p190
      %p192 = pneg %p191
      // Predicated region
      $region37: #{tpu_custom_call.1} parent=5 // pred_check
        _
      $region38: #{tpu_custom_call.1} parent=5 // pred_check_branch
        %194 = sbr.rel (%p191) target = $region40
      $region39: #{tpu_custom_call.1} parent=5 // pred_region
        %s195 = ssub.s32 %s14, 1
        %p196 = scmp.lt.s32.totalorder %s19, 1
        %s197 = scalar_select %p196, %s19, 1
        %s198 = smul.addr %s197, 32
        %s199 = smul.addr %s198, 8
        %s200 = scalar_lea.vmem %s0, %s199
        %p201 = pneg %p40
        %p202 = pneg %p37
        %p203 = pneg %p61
        %p204 = pneg %p58
        %p205 = pneg %p82
        %p206 = pneg %p79
        %p207 = pneg %p103
        %p208 = pneg %p100
        %p209 = pneg %p124
        %p210 = pneg %p121
        %p211 = pneg %p150
        %p212 = pneg %p147
        %s213 = sand.u32 %s137, 1
        %s214 = scalar_lea.sflag [#allocation5], %s213
        %s215 = sand.u32 %s137, 1
        %s216 = smul.addr %s215, 256
        %s217 = scalar_lea.vmem [#allocation4], %s216
        %p218 = scmp.lt.s32.totalorder %s19, 1
        %s219 = scalar_select %p218, %s19, 1
        %s220 = smul.addr %s219, 32
        %s221 = smul.addr %s220, 8
        %s222 = scalar_lea.vmem %s0, %s221
        %223 = vst [vmem:[#allocation2] sm:$0xff] -inf
        %224 = vst [vmem:[#allocation2 + $0x8] sm:$0xff] -inf
        %225 = vst [vmem:[#allocation2 + $0x10] sm:$0xf] -inf
        %226 = vst [vmem:[#allocation2 + $0x18] sm:$0xff] -inf
        %227 = vst [vmem:[#allocation2 + $0x20] sm:$0xff] -inf
        %228 = vst [vmem:[#allocation2 + $0x28] sm:$0xf] -inf
        %s229 = scalar_lea.vmem [#allocation2], 432
        %230 = vst [vmem:[%s229] sm:$0xff] -inf
        %231 = vst [vmem:[%s229 + $0x8] sm:$0xff] -inf
        %232 = vst [vmem:[%s229 + $0x10] sm:$0xf] -inf
        %233 = vst [vmem:[%s229 + $0x18] sm:$0xff] -inf
        %234 = vst [vmem:[%s229 + $0x20] sm:$0xff] -inf
        %235 = vst [vmem:[%s229 + $0x28] sm:$0xf] -inf
        %s236 = scalar_lea.vmem [#allocation2], 48
        %237 = vst [vmem:[%s236] sm:$0x3] -inf
        %238 = vst [vmem:[%s236 + $0x18] sm:$0x3] -inf
        %239 = vst [vmem:[%s236 + $0x30] sm:$0x3] -inf
        %240 = vst [vmem:[%s236 + $0x48] sm:$0x3] -inf
        %241 = vst [vmem:[%s236 + $0x60] sm:$0x3] -inf
        %242 = vst [vmem:[%s236 + $0x78] sm:$0x3] -inf
        %243 = vst [vmem:[%s236 + $0x90] sm:$0x3] -inf
        %244 = vst [vmem:[%s236 + $0xa8] sm:$0x3] -inf
        %245 = vst [vmem:[%s236 + $0xc0] sm:$0x3] -inf
        %246 = vst [vmem:[%s236 + $0xd8] sm:$0x3] -inf
        %247 = vst [vmem:[%s236 + $0xf0] sm:$0x3] -inf
        %248 = vst [vmem:[%s236 + $0x108] sm:$0x3] -inf
        %249 = vst [vmem:[%s236 + $0x120] sm:$0x3] -inf
        %250 = vst [vmem:[%s236 + $0x138] sm:$0x3] -inf
        %251 = vst [vmem:[%s236 + $0x150] sm:$0x3] -inf
        %252 = vst [vmem:[%s236 + $0x168] sm:$0x3] -inf
        %253 = vst [vmem:[%s236 + $0x12] sm:$0x3] -inf
        %254 = vst [vmem:[%s236 + $0x2a] sm:$0x3] -inf
        %255 = vst [vmem:[%s236 + $0x42] sm:$0x3] -inf
        %256 = vst [vmem:[%s236 + $0x5a] sm:$0x3] -inf
        %257 = vst [vmem:[%s236 + $0x72] sm:$0x3] -inf
        %258 = vst [vmem:[%s236 + $0x8a] sm:$0x3] -inf
        %259 = vst [vmem:[%s236 + $0xa2] sm:$0x3] -inf
        %260 = vst [vmem:[%s236 + $0xba] sm:$0x3] -inf
        %261 = vst [vmem:[%s236 + $0xd2] sm:$0x3] -inf
        %262 = vst [vmem:[%s236 + $0xea] sm:$0x3] -inf
        %263 = vst [vmem:[%s236 + $0x102] sm:$0x3] -inf
        %264 = vst [vmem:[%s236 + $0x11a] sm:$0x3] -inf
        %265 = vst [vmem:[%s236 + $0x132] sm:$0x3] -inf
        %266 = vst [vmem:[%s236 + $0x14a] sm:$0x3] -inf
        %267 = vst [vmem:[%s236 + $0x162] sm:$0x3] -inf
        %268 = vst [vmem:[%s236 + $0x17a] sm:$0x3] -inf
        %269 = vst [vmem:[#allocation3] sm:$0xff] -inf
        %270 = vst [vmem:[#allocation3 + $0x8] sm:$0xff] -inf
        %271 = vst [vmem:[#allocation3 + $0x10] sm:$0xf] -inf
        %272 = vst [vmem:[#allocation3 + $0x18] sm:$0xff] -inf
        %273 = vst [vmem:[#allocation3 + $0x20] sm:$0xff] -inf
        %274 = vst [vmem:[#allocation3 + $0x28] sm:$0xf] -inf
        %s275 = scalar_lea.vmem [#allocation3], 432
        %276 = vst [vmem:[%s275] sm:$0xff] -inf
        %277 = vst [vmem:[%s275 + $0x8] sm:$0xff] -inf
        %278 = vst [vmem:[%s275 + $0x10] sm:$0xf] -inf
        %279 = vst [vmem:[%s275 + $0x18] sm:$0xff] -inf
        %280 = vst [vmem:[%s275 + $0x20] sm:$0xff] -inf
        %281 = vst [vmem:[%s275 + $0x28] sm:$0xf] -inf
        %s282 = scalar_lea.vmem [#allocation3], 48
        %283 = vst [vmem:[%s282] sm:$0x3] -inf
        %284 = vst [vmem:[%s282 + $0x18] sm:$0x3] -inf
        %285 = vst [vmem:[%s282 + $0x30] sm:$0x3] -inf
        %286 = vst [vmem:[%s282 + $0x48] sm:$0x3] -inf
        %287 = vst [vmem:[%s282 + $0x60] sm:$0x3] -inf
        %288 = vst [vmem:[%s282 + $0x78] sm:$0x3] -inf
        %289 = vst [vmem:[%s282 + $0x90] sm:$0x3] -inf
        %290 = vst [vmem:[%s282 + $0xa8] sm:$0x3] -inf
        %291 = vst [vmem:[%s282 + $0xc0] sm:$0x3] -inf
        %292 = vst [vmem:[%s282 + $0xd8] sm:$0x3] -inf
        %293 = vst [vmem:[%s282 + $0xf0] sm:$0x3] -inf
        %294 = vst [vmem:[%s282 + $0x108] sm:$0x3] -inf
        %295 = vst [vmem:[%s282 + $0x120] sm:$0x3] -inf
        %296 = vst [vmem:[%s282 + $0x138] sm:$0x3] -inf
        %297 = vst [vmem:[%s282 + $0x150] sm:$0x3] -inf
        %298 = vst [vmem:[%s282 + $0x168] sm:$0x3] -inf
        %299 = vst [vmem:[%s282 + $0x12] sm:$0x3] -inf
        %300 = vst [vmem:[%s282 + $0x2a] sm:$0x3] -inf
        %301 = vst [vmem:[%s282 + $0x42] sm:$0x3] -inf
        %302 = vst [vmem:[%s282 + $0x5a] sm:$0x3] -inf
        %303 = vst [vmem:[%s282 + $0x72] sm:$0x3] -inf
        %304 = vst [vmem:[%s282 + $0x8a] sm:$0x3] -inf
        %305 = vst [vmem:[%s282 + $0xa2] sm:$0x3] -inf
        %306 = vst [vmem:[%s282 + $0xba] sm:$0x3] -inf
        %307 = vst [vmem:[%s282 + $0xd2] sm:$0x3] -inf
        %308 = vst [vmem:[%s282 + $0xea] sm:$0x3] -inf
        %309 = vst [vmem:[%s282 + $0x102] sm:$0x3] -inf
        %310 = vst [vmem:[%s282 + $0x11a] sm:$0x3] -inf
        %311 = vst [vmem:[%s282 + $0x132] sm:$0x3] -inf
        %312 = vst [vmem:[%s282 + $0x14a] sm:$0x3] -inf
        %313 = vst [vmem:[%s282 + $0x162] sm:$0x3] -inf
        %314 = vst [vmem:[%s282 + $0x17a] sm:$0x3] -inf
        %v315 = vld [vmem:[%s222] sm:$0xff]
        %v316 = vld [vmem:[%s222 + $0x8] sm:$0xff]
        %v317 = vld [vmem:[%s222 + $0x10] sm:$0xff]
        %v318 = vld [vmem:[%s222 + $0x18] sm:$0xff]
        %v319 = vld [vmem:[%s222 + $0x20] sm:$0xff]
        %v320 = vld [vmem:[%s222 + $0x28] sm:$0xff]
        %v321 = vld [vmem:[%s222 + $0x30] sm:$0xff]
        %v322 = vld [vmem:[%s222 + $0x38] sm:$0xff]
        %v323 = vld [vmem:[%s222 + $0x40] sm:$0xff]
        %v324 = vld [vmem:[%s222 + $0x48] sm:$0xff]
        %v325 = vld [vmem:[%s222 + $0x50] sm:$0xff]
        %v326 = vld [vmem:[%s222 + $0x58] sm:$0xff]
        %v327 = vld [vmem:[%s222 + $0x60] sm:$0xff]
        %v328 = vld [vmem:[%s222 + $0x68] sm:$0xff]
        %v329 = vld [vmem:[%s222 + $0x70] sm:$0xff]
        %v330 = vld [vmem:[%s222 + $0x78] sm:$0xff]
        %v331 = vld [vmem:[%s222 + $0x80] sm:$0xff]
        %v332 = vld [vmem:[%s222 + $0x88] sm:$0xff]
        %v333 = vld [vmem:[%s222 + $0x90] sm:$0xff]
        %v334 = vld [vmem:[%s222 + $0x98] sm:$0xff]
        %v335 = vld [vmem:[%s222 + $0xa0] sm:$0xff]
        %v336 = vld [vmem:[%s222 + $0xa8] sm:$0xff]
        %v337 = vld [vmem:[%s222 + $0xb0] sm:$0xff]
        %v338 = vld [vmem:[%s222 + $0xb8] sm:$0xff]
        %v339 = vld [vmem:[%s222 + $0xc0] sm:$0xff]
        %v340 = vld [vmem:[%s222 + $0xc8] sm:$0xff]
        %v341 = vld [vmem:[%s222 + $0xd0] sm:$0xff]
        %v342 = vld [vmem:[%s222 + $0xd8] sm:$0xff]
        %v343 = vld [vmem:[%s222 + $0xe0] sm:$0xff]
        %v344 = vld [vmem:[%s222 + $0xe8] sm:$0xff]
        %v345 = vld [vmem:[%s222 + $0xf0] sm:$0xff]
        %v346 = vld [vmem:[%s222 + $0xf8] sm:$0xff]
        %v347 = vld [vmem:[%s1] sm:$0xff]
        %v348 = vld [vmem:[%s2] sm:$0x1]
        %v350 = vlaneseq
        %v351 = vshrl.u32 %v350, 7
        %v352 = vsub.s32 0, %v351
        %v353 = vrot.slane %v348, %v352
        %vm355 = vcmask 64512
        %v357 = vsel %vm355, %v315, 0
        %v360 = vsel %vm355, %v316, 0
        %v363 = vsel %vm355, %v317, 0
        %v366 = vsel %vm355, %v318, 0
        %v369 = vsel %vm355, %v319, 0
        %v372 = vsel %vm355, %v320, 0
        %v375 = vsel %vm355, %v321, 0
        %v378 = vsel %vm355, %v322, 0
        %v381 = vsel %vm355, %v323, 0
        %v384 = vsel %vm355, %v324, 0
        %v387 = vsel %vm355, %v325, 0
        %v390 = vsel %vm355, %v326, 0
        %v393 = vsel %vm355, %v327, 0
        %v396 = vsel %vm355, %v328, 0
        %v399 = vsel %vm355, %v329, 0
        %v402 = vsel %vm355, %v330, 0
        %v405 = vsel %vm355, %v331, 0
        %v408 = vsel %vm355, %v332, 0
        %v411 = vsel %vm355, %v333, 0
        %v414 = vsel %vm355, %v334, 0
        %v417 = vsel %vm355, %v335, 0
        %v420 = vsel %vm355, %v336, 0
        %v423 = vsel %vm355, %v337, 0
        %v426 = vsel %vm355, %v338, 0
        %v429 = vsel %vm355, %v339, 0
        %v432 = vsel %vm355, %v340, 0
        %v435 = vsel %vm355, %v341, 0
        %v438 = vsel %vm355, %v342, 0
        %v441 = vsel %vm355, %v343, 0
        %v444 = vsel %vm355, %v344, 0
        %v447 = vsel %vm355, %v345, 0
        %v450 = vsel %vm355, %v346, 0
        %452 = vmatprep.subr.mxu0 0.0
        %453 = vmatpush1.msra.mxu0 0.0
        %454 = vmatprep.subr.mxu0 0.0
        %455 = vmatpush1.msra.mxu0 0.0
        %456 = vmatprep.subr.mxu0 0.0
        %457 = vmatpush1.msra.mxu0 0.0
        %458 = vmatprep.subr.mxu0 0.0
        %459 = vmatpush1.msra.mxu0 0.0
        %460 = vmatprep.subr.mxu0 0.0
        %461 = vmatpush1.msra.mxu0 0.0
        %462 = vmatprep.subr.mxu0 0.0
        %463 = vmatpush1.msra.mxu0 0.0
        %464 = vmatprep.subr.mxu0 0.0
        %465 = vmatpush1.msra.mxu0 0.0
        %466 = vmatprep.subr.mxu0 0.0
        %467 = vmatpush1.msra.mxu0 0.0
        %468 = vmatprep.subr.mxu0 0.0
        %469 = vmatpush1.msra.mxu0 0.0
        %470 = vmatprep.subr.mxu0 0.0
        %471 = vmatpush1.msra.mxu0 0.0
        %472 = vmatprep.subr.mxu0 0.0
        %473 = vmatpush1.msra.mxu0 0.0
        %474 = vmatprep.subr.mxu0 0.0
        %475 = vmatpush1.msra.mxu0 0.0
        %476 = vmatprep.subr.mxu0 0.0
        %477 = vmatpush1.msra.mxu0 0.0
        %478 = vmatprep.subr.mxu0 0.0
        %479 = vmatpush1.msra.mxu0 0.0
        %480 = vmatprep.subr.mxu0 0.0
        %481 = vmatpush1.msra.mxu0 0.0
        %482 = vmatprep.subr.mxu0 0.0
        %483 = vmatpush1.msra.mxu0 %v347
        %484 = vmatprep.subr.mxu0 0.0
        %485 = vmatpush2.msra.mxu0 0.0
        %486 = vmatprep.subr.mxu0 0.0
        %487 = vmatpush2.msra.mxu0 0.0
        %488 = vmatprep.subr.mxu0 0.0
        %489 = vmatpush2.msra.mxu0 0.0
        %490 = vmatprep.subr.mxu0 0.0
        %491 = vmatpush2.msra.mxu0 0.0
        %492 = vmatprep.subr.mxu0 0.0
        %493 = vmatpush2.msra.mxu0 0.0
        %494 = vmatprep.subr.mxu0 0.0
        %495 = vmatpush2.msra.mxu0 0.0
        %496 = vmatprep.subr.mxu0 0.0
        %497 = vmatpush2.msra.mxu0 0.0
        %498 = vmatprep.subr.mxu0 0.0
        %499 = vmatpush2.msra.mxu0 0.0
        %500 = vmatprep.subr.mxu0 0.0
        %501 = vmatpush2.msra.mxu0 0.0
        %502 = vmatprep.subr.mxu0 0.0
        %503 = vmatpush2.msra.mxu0 0.0
        %504 = vmatprep.subr.mxu0 0.0
        %505 = vmatpush2.msra.mxu0 0.0
        %506 = vmatprep.subr.mxu0 0.0
        %507 = vmatpush2.msra.mxu0 0.0
        %508 = vmatprep.subr.mxu0 0.0
        %509 = vmatpush2.msra.mxu0 0.0
        %510 = vmatprep.subr.mxu0 0.0
        %511 = vmatpush2.msra.mxu0 0.0
        %512 = vmatprep.subr.mxu0 0.0
        %513 = vmatpush2.msra.mxu0 0.0
        %514 = vmatprep.subr.mxu0 0.0
        %515 = vmatpush2.msra.mxu0 0.0
        %516 = vmatprep.mubr.f32.mxu0 0.0
        %517 = vmatmul.mubr.f32.gmra.mxu0 %v357
        %v518 = vpop.f32.mrf.mxu0
        %v519 = vadd.f32 %v353, %v518
        %v520 = vpop.f32.mrf.mxu0
        %521 = vmatprep.mubr.f32.mxu0 0.0
        %522 = vmatmul.mubr.f32.gmra.mxu0 %v360
        %v523 = vpop.f32.mrf.mxu0
        %v524 = vadd.f32 %v353, %v523
        %v525 = vpop.f32.mrf.mxu0
        %526 = vmatprep.mubr.f32.mxu0 0.0
        %527 = vmatmul.mubr.f32.gmra.mxu0 %v363
        %v528 = vpop.f32.mrf.mxu0
        %v529 = vadd.f32 %v353, %v528
        %v530 = vpop.f32.mrf.mxu0
        %531 = vmatprep.mubr.f32.mxu0 0.0
        %532 = vmatmul.mubr.f32.gmra.mxu0 %v366
        %v533 = vpop.f32.mrf.mxu0
        %v534 = vadd.f32 %v353, %v533
        %v535 = vpop.f32.mrf.mxu0
        %536 = vmatprep.mubr.f32.mxu0 0.0
        %537 = vmatmul.mubr.f32.gmra.mxu0 %v369
        %v538 = vpop.f32.mrf.mxu0
        %v539 = vadd.f32 %v353, %v538
        %v540 = vpop.f32.mrf.mxu0
        %541 = vmatprep.mubr.f32.mxu0 0.0
        %542 = vmatmul.mubr.f32.gmra.mxu0 %v372
        %v543 = vpop.f32.mrf.mxu0
        %v544 = vadd.f32 %v353, %v543
        %v545 = vpop.f32.mrf.mxu0
        %546 = vmatprep.mubr.f32.mxu0 0.0
        %547 = vmatmul.mubr.f32.gmra.mxu0 %v375
        %v548 = vpop.f32.mrf.mxu0
        %v549 = vadd.f32 %v353, %v548
        %v550 = vpop.f32.mrf.mxu0
        %551 = vmatprep.mubr.f32.mxu0 0.0
        %552 = vmatmul.mubr.f32.gmra.mxu0 %v378
        %v553 = vpop.f32.mrf.mxu0
        %v554 = vadd.f32 %v353, %v553
        %v555 = vpop.f32.mrf.mxu0
        %556 = vmatprep.mubr.f32.mxu0 0.0
        %557 = vmatmul.mubr.f32.gmra.mxu0 %v381
        %v558 = vpop.f32.mrf.mxu0
        %v559 = vadd.f32 %v353, %v558
        %v560 = vpop.f32.mrf.mxu0
        %561 = vmatprep.mubr.f32.mxu0 0.0
        %562 = vmatmul.mubr.f32.gmra.mxu0 %v384
        %v563 = vpop.f32.mrf.mxu0
        %v564 = vadd.f32 %v353, %v563
        %v565 = vpop.f32.mrf.mxu0
        %566 = vmatprep.mubr.f32.mxu0 0.0
        %567 = vmatmul.mubr.f32.gmra.mxu0 %v387
        %v568 = vpop.f32.mrf.mxu0
        %v569 = vadd.f32 %v353, %v568
        %v570 = vpop.f32.mrf.mxu0
        %571 = vmatprep.mubr.f32.mxu0 0.0
        %572 = vmatmul.mubr.f32.gmra.mxu0 %v390
        %v573 = vpop.f32.mrf.mxu0
        %v574 = vadd.f32 %v353, %v573
        %v575 = vpop.f32.mrf.mxu0
        %576 = vmatprep.mubr.f32.mxu0 0.0
        %577 = vmatmul.mubr.f32.gmra.mxu0 %v393
        %v578 = vpop.f32.mrf.mxu0
        %v579 = vadd.f32 %v353, %v578
        %v580 = vpop.f32.mrf.mxu0
        %581 = vmatprep.mubr.f32.mxu0 0.0
        %582 = vmatmul.mubr.f32.gmra.mxu0 %v396
        %v583 = vpop.f32.mrf.mxu0
        %v584 = vadd.f32 %v353, %v583
        %v585 = vpop.f32.mrf.mxu0
        %586 = vmatprep.mubr.f32.mxu0 0.0
        %587 = vmatmul.mubr.f32.gmra.mxu0 %v399
        %v588 = vpop.f32.mrf.mxu0
        %v589 = vadd.f32 %v353, %v588
        %v590 = vpop.f32.mrf.mxu0
        %591 = vmatprep.mubr.f32.mxu0 0.0
        %592 = vmatmul.mubr.f32.gmra.mxu0 %v402
        %v593 = vpop.f32.mrf.mxu0
        %v594 = vadd.f32 %v353, %v593
        %v595 = vpop.f32.mrf.mxu0
        %596 = vmatprep.mubr.f32.mxu0 0.0
        %597 = vmatmul.mubr.f32.gmra.mxu0 %v405
        %v598 = vpop.f32.mrf.mxu0
        %v599 = vadd.f32 %v353, %v598
        %v600 = vpop.f32.mrf.mxu0
        %601 = vmatprep.mubr.f32.mxu0 0.0
        %602 = vmatmul.mubr.f32.gmra.mxu0 %v408
        %v603 = vpop.f32.mrf.mxu0
        %v604 = vadd.f32 %v353, %v603
        %v605 = vpop.f32.mrf.mxu0
        %606 = vmatprep.mubr.f32.mxu0 0.0
        %607 = vmatmul.mubr.f32.gmra.mxu0 %v411
        %v608 = vpop.f32.mrf.mxu0
        %v609 = vadd.f32 %v353, %v608
        %v610 = vpop.f32.mrf.mxu0
        %611 = vmatprep.mubr.f32.mxu0 0.0
        %612 = vmatmul.mubr.f32.gmra.mxu0 %v414
        %v613 = vpop.f32.mrf.mxu0
        %v614 = vadd.f32 %v353, %v613
        %v615 = vpop.f32.mrf.mxu0
        %616 = vmatprep.mubr.f32.mxu0 0.0
        %617 = vmatmul.mubr.f32.gmra.mxu0 %v417
        %v618 = vpop.f32.mrf.mxu0
        %v619 = vadd.f32 %v353, %v618
        %v620 = vpop.f32.mrf.mxu0
        %621 = vmatprep.mubr.f32.mxu0 0.0
        %622 = vmatmul.mubr.f32.gmra.mxu0 %v420
        %v623 = vpop.f32.mrf.mxu0
        %v624 = vadd.f32 %v353, %v623
        %v625 = vpop.f32.mrf.mxu0
        %626 = vmatprep.mubr.f32.mxu0 0.0
        %627 = vmatmul.mubr.f32.gmra.mxu0 %v423
        %v628 = vpop.f32.mrf.mxu0
        %v629 = vadd.f32 %v353, %v628
        %v630 = vpop.f32.mrf.mxu0
        %631 = vmatprep.mubr.f32.mxu0 0.0
        %632 = vmatmul.mubr.f32.gmra.mxu0 %v426
        %v633 = vpop.f32.mrf.mxu0
        %v634 = vadd.f32 %v353, %v633
        %v635 = vpop.f32.mrf.mxu0
        %636 = vmatprep.mubr.f32.mxu0 0.0
        %637 = vmatmul.mubr.f32.gmra.mxu0 %v429
        %v638 = vpop.f32.mrf.mxu0
        %v639 = vadd.f32 %v353, %v638
        %v640 = vpop.f32.mrf.mxu0
        %641 = vmatprep.mubr.f32.mxu0 0.0
        %642 = vmatmul.mubr.f32.gmra.mxu0 %v432
        %v643 = vpop.f32.mrf.mxu0
        %v644 = vadd.f32 %v353, %v643
        %v645 = vpop.f32.mrf.mxu0
        %646 = vmatprep.mubr.f32.mxu0 0.0
        %647 = vmatmul.mubr.f32.gmra.mxu0 %v435
        %v648 = vpop.f32.mrf.mxu0
        %v649 = vadd.f32 %v353, %v648
        %v650 = vpop.f32.mrf.mxu0
        %651 = vmatprep.mubr.f32.mxu0 0.0
        %652 = vmatmul.mubr.f32.gmra.mxu0 %v438
        %v653 = vpop.f32.mrf.mxu0
        %v654 = vadd.f32 %v353, %v653
        %v655 = vpop.f32.mrf.mxu0
        %656 = vmatprep.mubr.f32.mxu0 0.0
        %657 = vmatmul.mubr.f32.gmra.mxu0 %v441
        %v658 = vpop.f32.mrf.mxu0
        %v659 = vadd.f32 %v353, %v658
        %v660 = vpop.f32.mrf.mxu0
        %661 = vmatprep.mubr.f32.mxu0 0.0
        %662 = vmatmul.mubr.f32.gmra.mxu0 %v444
        %v663 = vpop.f32.mrf.mxu0
        %v664 = vadd.f32 %v353, %v663
        %v665 = vpop.f32.mrf.mxu0
        %666 = vmatprep.mubr.f32.mxu0 0.0
        %667 = vmatmul.mubr.f32.gmra.mxu0 %v447
        %v668 = vpop.f32.mrf.mxu0
        %v669 = vadd.f32 %v353, %v668
        %v670 = vpop.f32.mrf.mxu0
        %671 = vmatprep.mubr.f32.mxu0 0.0
        %672 = vmatmul.mubr.f32.gmra.mxu0 %v450
        %v673 = vpop.f32.mrf.mxu0
        %v674 = vadd.f32 %v353, %v673
        %v675 = vpop.f32.mrf.mxu0
        %676 = vdwg.mxu0
        %v677 = vmul.f32 %v519, 0.5
        %v678 = vmul.f32 %v524, 0.5
        %v679 = vmul.f32 %v529, 0.5
        %v680 = vmul.f32 %v534, 0.5
        %v681 = vmul.f32 %v539, 0.5
        %v682 = vmul.f32 %v544, 0.5
        %v683 = vmul.f32 %v549, 0.5
        %v684 = vmul.f32 %v554, 0.5
        %v685 = vmul.f32 %v559, 0.5
        %v686 = vmul.f32 %v564, 0.5
        %v687 = vmul.f32 %v569, 0.5
        %v688 = vmul.f32 %v574, 0.5
        %v689 = vmul.f32 %v579, 0.5
        %v690 = vmul.f32 %v584, 0.5
        %v691 = vmul.f32 %v589, 0.5
        %v692 = vmul.f32 %v594, 0.5
        %v693 = vmul.f32 %v599, 0.5
        %v694 = vmul.f32 %v604, 0.5
        %v695 = vmul.f32 %v609, 0.5
        %v696 = vmul.f32 %v614, 0.5
        %v697 = vmul.f32 %v619, 0.5
        %v698 = vmul.f32 %v624, 0.5
        %v699 = vmul.f32 %v629, 0.5
        %v700 = vmul.f32 %v634, 0.5
        %v701 = vmul.f32 %v639, 0.5
        %v702 = vmul.f32 %v644, 0.5
        %v703 = vmul.f32 %v649, 0.5
        %v704 = vmul.f32 %v654, 0.5
        %v705 = vmul.f32 %v659, 0.5
        %v706 = vmul.f32 %v664, 0.5
        %v707 = vmul.f32 %v669, 0.5
        %v708 = vmul.f32 %v674, 0.5
        %v709 = vtanh.pop %v677
        %v710 = vtanh.pop %v678
        %v711 = vtanh.pop %v679
        %v712 = vtanh.pop %v680
        %v713 = vtanh.pop %v681
        %v714 = vtanh.pop %v682
        %v715 = vtanh.pop %v683
        %v716 = vtanh.pop %v684
        %v717 = vtanh.pop %v685
        %v718 = vtanh.pop %v686
        %v719 = vtanh.pop %v687
        %v720 = vtanh.pop %v688
        %v721 = vtanh.pop %v689
        %v722 = vtanh.pop %v690
        %v723 = vtanh.pop %v691
        %v724 = vtanh.pop %v692
        %v725 = vtanh.pop %v693
        %v726 = vtanh.pop %v694
        %v727 = vtanh.pop %v695
        %v728 = vtanh.pop %v696
        %v729 = vtanh.pop %v697
        %v730 = vtanh.pop %v698
        %v731 = vtanh.pop %v699
        %v732 = vtanh.pop %v700
        %v733 = vtanh.pop %v701
        %v734 = vtanh.pop %v702
        %v735 = vtanh.pop %v703
        %v736 = vtanh.pop %v704
        %v737 = vtanh.pop %v705
        %v738 = vtanh.pop %v706
        %v739 = vtanh.pop %v707
        %v740 = vtanh.pop %v708
        %v741 = vmul.f32 %v709, 0.5
        %v742 = vmul.f32 %v710, 0.5
        %v743 = vmul.f32 %v711, 0.5
        %v744 = vmul.f32 %v712, 0.5
        %v745 = vmul.f32 %v713, 0.5
        %v746 = vmul.f32 %v714, 0.5
        %v747 = vmul.f32 %v715, 0.5
        %v748 = vmul.f32 %v716, 0.5
        %v749 = vmul.f32 %v717, 0.5
        %v750 = vmul.f32 %v718, 0.5
        %v751 = vmul.f32 %v719, 0.5
        %v752 = vmul.f32 %v720, 0.5
        %v753 = vmul.f32 %v721, 0.5
        %v754 = vmul.f32 %v722, 0.5
        %v755 = vmul.f32 %v723, 0.5
        %v756 = vmul.f32 %v724, 0.5
        %v757 = vmul.f32 %v725, 0.5
        %v758 = vmul.f32 %v726, 0.5
        %v759 = vmul.f32 %v727, 0.5
        %v760 = vmul.f32 %v728, 0.5
        %v761 = vmul.f32 %v729, 0.5
        %v762 = vmul.f32 %v730, 0.5
        %v763 = vmul.f32 %v731, 0.5
        %v764 = vmul.f32 %v732, 0.5
        %v765 = vmul.f32 %v733, 0.5
        %v766 = vmul.f32 %v734, 0.5
        %v767 = vmul.f32 %v735, 0.5
        %v768 = vmul.f32 %v736, 0.5
        %v769 = vmul.f32 %v737, 0.5
        %v770 = vmul.f32 %v738, 0.5
        %v771 = vmul.f32 %v739, 0.5
        %v772 = vmul.f32 %v740, 0.5
        %v773 = vadd.f32 %v741, 0.5
        %v774 = vadd.f32 %v742, 0.5
        %v775 = vadd.f32 %v743, 0.5
        %v776 = vadd.f32 %v744, 0.5
        %v777 = vadd.f32 %v745, 0.5
        %v778 = vadd.f32 %v746, 0.5
        %v779 = vadd.f32 %v747, 0.5
        %v780 = vadd.f32 %v748, 0.5
        %v781 = vadd.f32 %v749, 0.5
        %v782 = vadd.f32 %v750, 0.5
        %v783 = vadd.f32 %v751, 0.5
        %v784 = vadd.f32 %v752, 0.5
        %v785 = vadd.f32 %v753, 0.5
        %v786 = vadd.f32 %v754, 0.5
        %v787 = vadd.f32 %v755, 0.5
        %v788 = vadd.f32 %v756, 0.5
        %v789 = vadd.f32 %v757, 0.5
        %v790 = vadd.f32 %v758, 0.5
        %v791 = vadd.f32 %v759, 0.5
        %v792 = vadd.f32 %v760, 0.5
        %v793 = vadd.f32 %v761, 0.5
        %v794 = vadd.f32 %v762, 0.5
        %v795 = vadd.f32 %v763, 0.5
        %v796 = vadd.f32 %v764, 0.5
        %v797 = vadd.f32 %v765, 0.5
        %v798 = vadd.f32 %v766, 0.5
        %v799 = vadd.f32 %v767, 0.5
        %v800 = vadd.f32 %v768, 0.5
        %v801 = vadd.f32 %v769, 0.5
        %v802 = vadd.f32 %v770, 0.5
        %v803 = vadd.f32 %v771, 0.5
        %v804 = vadd.f32 %v772, 0.5
        %v805 = vmul.f32 %v519, %v773
        %v806 = vmul.f32 %v524, %v774
        %v807 = vmul.f32 %v529, %v775
        %v808 = vmul.f32 %v534, %v776
        %v809 = vmul.f32 %v539, %v777
        %v810 = vmul.f32 %v544, %v778
        %v811 = vmul.f32 %v549, %v779
        %v812 = vmul.f32 %v554, %v780
        %v813 = vmul.f32 %v559, %v781
        %v814 = vmul.f32 %v564, %v782
        %v815 = vmul.f32 %v569, %v783
        %v816 = vmul.f32 %v574, %v784
        %v817 = vmul.f32 %v579, %v785
        %v818 = vmul.f32 %v584, %v786
        %v819 = vmul.f32 %v589, %v787
        %v820 = vmul.f32 %v594, %v788
        %v821 = vmul.f32 %v599, %v789
        %v822 = vmul.f32 %v604, %v790
        %v823 = vmul.f32 %v609, %v791
        %v824 = vmul.f32 %v614, %v792
        %v825 = vmul.f32 %v619, %v793
        %v826 = vmul.f32 %v624, %v794
        %v827 = vmul.f32 %v629, %v795
        %v828 = vmul.f32 %v634, %v796
        %v829 = vmul.f32 %v639, %v797
        %v830 = vmul.f32 %v644, %v798
        %v831 = vmul.f32 %v649, %v799
        %v832 = vmul.f32 %v654, %v800
        %v833 = vmul.f32 %v659, %v801
        %v834 = vmul.f32 %v664, %v802
        %v835 = vmul.f32 %v669, %v803
        %v836 = vmul.f32 %v674, %v804
        %v837 = vld [vmem:[%s3] sm:$0xff]
        %v838 = vld [vmem:[%s3 + $0x8] sm:$0xff]
        %v839 = vld [vmem:[%s3 + $0x10] sm:$0xff]
        %v840 = vld [vmem:[%s3 + $0x18] sm:$0xff]
        %v841 = vld [vmem:[%s3 + $0x20] sm:$0xff]
        %v842 = vld [vmem:[%s3 + $0x28] sm:$0xff]
        %v843 = vld [vmem:[%s3 + $0x30] sm:$0xff]
        %v844 = vld [vmem:[%s3 + $0x38] sm:$0xff]
        %v845 = vld [vmem:[%s3 + $0x40] sm:$0xff]
        %v846 = vld [vmem:[%s3 + $0x48] sm:$0xff]
        %v847 = vld [vmem:[%s3 + $0x50] sm:$0xff]
        %v848 = vld [vmem:[%s3 + $0x58] sm:$0xff]
        %v849 = vld [vmem:[%s3 + $0x60] sm:$0xff]
        %v850 = vld [vmem:[%s3 + $0x68] sm:$0xff]
        %v851 = vld [vmem:[%s3 + $0x70] sm:$0xff]
        %v852 = vld [vmem:[%s3 + $0x78] sm:$0xff]
        %853 = vst [vmem:[%s236 + $0x2] sm:$0xff] %v805
        %854 = vst [vmem:[%s236 + $0xa] sm:$0xff] %v806
        %855 = vst [vmem:[%s236 + $0x1a] sm:$0xff] %v807
        %856 = vst [vmem:[%s236 + $0x22] sm:$0xff] %v808
        %857 = vst [vmem:[%s236 + $0x32] sm:$0xff] %v809
        %858 = vst [vmem:[%s236 + $0x3a] sm:$0xff] %v810
        %859 = vst [vmem:[%s236 + $0x4a] sm:$0xff] %v811
        %860 = vst [vmem:[%s236 + $0x52] sm:$0xff] %v812
        %861 = vst [vmem:[%s236 + $0x62] sm:$0xff] %v813
        %862 = vst [vmem:[%s236 + $0x6a] sm:$0xff] %v814
        %863 = vst [vmem:[%s236 + $0x7a] sm:$0xff] %v815
        %864 = vst [vmem:[%s236 + $0x82] sm:$0xff] %v816
        %865 = vst [vmem:[%s236 + $0x92] sm:$0xff] %v817
        %866 = vst [vmem:[%s236 + $0x9a] sm:$0xff] %v818
        %867 = vst [vmem:[%s236 + $0xaa] sm:$0xff] %v819
        %868 = vst [vmem:[%s236 + $0xb2] sm:$0xff] %v820
        %869 = vst [vmem:[%s236 + $0xc2] sm:$0xff] %v821
        %870 = vst [vmem:[%s236 + $0xca] sm:$0xff] %v822
        %871 = vst [vmem:[%s236 + $0xda] sm:$0xff] %v823
        %872 = vst [vmem:[%s236 + $0xe2] sm:$0xff] %v824
        %873 = vst [vmem:[%s236 + $0xf2] sm:$0xff] %v825
        %874 = vst [vmem:[%s236 + $0xfa] sm:$0xff] %v826
        %875 = vst [vmem:[%s236 + $0x10a] sm:$0xff] %v827
        %876 = vst [vmem:[%s236 + $0x112] sm:$0xff] %v828
        %877 = vst [vmem:[%s236 + $0x122] sm:$0xff] %v829
        %878 = vst [vmem:[%s236 + $0x12a] sm:$0xff] %v830
        %879 = vst [vmem:[%s236 + $0x13a] sm:$0xff] %v831
        %880 = vst [vmem:[%s236 + $0x142] sm:$0xff] %v832
        %881 = vst [vmem:[%s236 + $0x152] sm:$0xff] %v833
        %882 = vst [vmem:[%s236 + $0x15a] sm:$0xff] %v834
        %883 = vst [vmem:[%s236 + $0x16a] sm:$0xff] %v835
        %884 = vst [vmem:[%s236 + $0x172] sm:$0xff] %v836
        %v885 = vld [vmem:[#allocation2] sm:$0xff]
        %v886 = vld [vmem:[#allocation2 + $0x8] sm:$0xff]
        %v887 = vld [vmem:[#allocation2 + $0x10] sm:$0xf]
        %v888 = vld [vmem:[#allocation2 + $0x18] sm:$0xff]
        %v889 = vld [vmem:[#allocation2 + $0x20] sm:$0xff]
        %v890 = vld [vmem:[#allocation2 + $0x28] sm:$0xf]
        %v891 = vld [vmem:[#allocation2 + $0x30] sm:$0xff]
        %v892 = vld [vmem:[#allocation2 + $0x38] sm:$0xff]
        %v893 = vld [vmem:[#allocation2 + $0x40] sm:$0xf]
        %v894 = vld [vmem:[#allocation2 + $0x48] sm:$0xff]
        %v895 = vld [vmem:[#allocation2 + $0x50] sm:$0xff]
        %v896 = vld [vmem:[#allocation2 + $0x58] sm:$0xf]
        %v897 = vld [vmem:[#allocation2 + $0x60] sm:$0xff]
        %v898 = vld [vmem:[#allocation2 + $0x68] sm:$0xff]
        %v899 = vld [vmem:[#allocation2 + $0x70] sm:$0xf]
        %v900 = vld [vmem:[#allocation2 + $0x78] sm:$0xff]
        %v901 = vld [vmem:[#allocation2 + $0x80] sm:$0xff]
        %v902 = vld [vmem:[#allocation2 + $0x88] sm:$0xf]
        %v903 = vld [vmem:[#allocation2 + $0x90] sm:$0xff]
        %v904 = vld [vmem:[#allocation2 + $0x98] sm:$0xff]
        %v905 = vld [vmem:[#allocation2 + $0xa0] sm:$0xf]
        %v906 = vld [vmem:[#allocation2 + $0xa8] sm:$0xff]
        %v907 = vld [vmem:[#allocation2 + $0xb0] sm:$0xff]
        %v908 = vld [vmem:[#allocation2 + $0xb8] sm:$0xf]
        %v909 = vld [vmem:[#allocation2 + $0xc0] sm:$0xff]
        %v910 = vld [vmem:[#allocation2 + $0xc8] sm:$0xff]
        %v911 = vld [vmem:[#allocation2 + $0xd0] sm:$0xf]
        %v912 = vld [vmem:[#allocation2 + $0xd8] sm:$0xff]
        %v913 = vld [vmem:[#allocation2 + $0xe0] sm:$0xff]
        %v914 = vld [vmem:[#allocation2 + $0xe8] sm:$0xf]
        %v915 = vld [vmem:[#allocation2 + $0xf0] sm:$0xff]
        %v916 = vld [vmem:[#allocation2 + $0xf8] sm:$0xff]
        %v917 = vld [vmem:[#allocation2 + $0x100] sm:$0xf]
        %v918 = vld [vmem:[#allocation2 + $0x108] sm:$0xff]
        %v919 = vld [vmem:[#allocation2 + $0x110] sm:$0xff]
        %v920 = vld [vmem:[#allocation2 + $0x118] sm:$0xf]
        %v921 = vld [vmem:[#allocation2 + $0x120] sm:$0xff]
        %v922 = vld [vmem:[#allocation2 + $0x128] sm:$0xff]
        %v923 = vld [vmem:[#allocation2 + $0x130] sm:$0xf]
        %v924 = vld [vmem:[#allocation2 + $0x138] sm:$0xff]
        %v925 = vld [vmem:[#allocation2 + $0x140] sm:$0xff]
        %v926 = vld [vmem:[#allocation2 + $0x148] sm:$0xf]
        %v927 = vld [vmem:[#allocation2 + $0x150] sm:$0xff]
        %v928 = vld [vmem:[#allocation2 + $0x158] sm:$0xff]
        %v929 = vld [vmem:[#allocation2 + $0x160] sm:$0xf]
        %v930 = vld [vmem:[#allocation2 + $0x168] sm:$0xff]
        %v931 = vld [vmem:[#allocation2 + $0x170] sm:$0xff]
        %v932 = vld [vmem:[#allocation2 + $0x178] sm:$0xf]
        %v933 = vld [vmem:[#allocation2 + $0x180] sm:$0xff]
        %v934 = vld [vmem:[#allocation2 + $0x188] sm:$0xff]
        %v935 = vld [vmem:[#allocation2 + $0x190] sm:$0xf]
        %v936 = vld [vmem:[#allocation2 + $0x198] sm:$0xff]
        %v937 = vld [vmem:[#allocation2 + $0x1a0] sm:$0xff]
        %v938 = vld [vmem:[#allocation2 + $0x1a8] sm:$0xf]
        %v939 = vld [vmem:[#allocation2 + $0x1b0] sm:$0xff]
        %v940 = vld [vmem:[#allocation2 + $0x1b8] sm:$0xff]
        %v941 = vld [vmem:[#allocation2 + $0x1c0] sm:$0xf]
        %v942 = vld [vmem:[#allocation2 + $0x1c8] sm:$0xff]
        %v943 = vld [vmem:[#allocation2 + $0x1d0] sm:$0xff]
        %v944 = vld [vmem:[#allocation2 + $0x1d8] sm:$0xf]
        %v945 = vmax.f32 %v885, %v888
        %v946 = vmax.f32 %v886, %v889
        %v947 = vmax.f32 %v887, %v890
        %v948 = vmax.f32 %v888, %v891
        %v949 = vmax.f32 %v889, %v892
        %v950 = vmax.f32 %v890, %v893
        %v951 = vmax.f32 %v891, %v894
        %v952 = vmax.f32 %v892, %v895
        %v953 = vmax.f32 %v893, %v896
        %v954 = vmax.f32 %v894, %v897
        %v955 = vmax.f32 %v895, %v898
        %v956 = vmax.f32 %v896, %v899
        %v957 = vmax.f32 %v897, %v900
        %v958 = vmax.f32 %v898, %v901
        %v959 = vmax.f32 %v899, %v902
        %v960 = vmax.f32 %v900, %v903
        %v961 = vmax.f32 %v901, %v904
        %v962 = vmax.f32 %v902, %v905
        %v963 = vmax.f32 %v903, %v906
        %v964 = vmax.f32 %v904, %v907
        %v965 = vmax.f32 %v905, %v908
        %v966 = vmax.f32 %v906, %v909
        %v967 = vmax.f32 %v907, %v910
        %v968 = vmax.f32 %v908, %v911
        %v969 = vmax.f32 %v909, %v912
        %v970 = vmax.f32 %v910, %v913
        %v971 = vmax.f32 %v911, %v914
        %v972 = vmax.f32 %v912, %v915
        %v973 = vmax.f32 %v913, %v916
        %v974 = vmax.f32 %v914, %v917
        %v975 = vmax.f32 %v915, %v918
        %v976 = vmax.f32 %v916, %v919
        %v977 = vmax.f32 %v917, %v920
        %v978 = vmax.f32 %v918, %v921
        %v979 = vmax.f32 %v919, %v922
        %v980 = vmax.f32 %v920, %v923
        %v981 = vmax.f32 %v921, %v924
        %v982 = vmax.f32 %v922, %v925
        %v983 = vmax.f32 %v923, %v926
        %v984 = vmax.f32 %v924, %v927
        %v985 = vmax.f32 %v925, %v928
        %v986 = vmax.f32 %v926, %v929
        %v987 = vmax.f32 %v927, %v930
        %v988 = vmax.f32 %v928, %v931
        %v989 = vmax.f32 %v929, %v932
        %v990 = vmax.f32 %v930, %v933
        %v991 = vmax.f32 %v931, %v934
        %v992 = vmax.f32 %v932, %v935
        %v993 = vmax.f32 %v933, %v936
        %v994 = vmax.f32 %v934, %v937
        %v995 = vmax.f32 %v935, %v938
        %v996 = vmax.f32 %v936, %v939
        %v997 = vmax.f32 %v937, %v940
        %v998 = vmax.f32 %v938, %v941
        %v999 = vmax.f32 %v939, %v942
        %v1000 = vmax.f32 %v940, %v943
        %v1001 = vmax.f32 %v941, %v944
        %v1002 = vmax.f32 %v945, %v951
        %v1003 = vmax.f32 %v946, %v952
        %v1004 = vmax.f32 %v947, %v953
        %v1005 = vmax.f32 %v948, %v954
        %v1006 = vmax.f32 %v949, %v955
        %v1007 = vmax.f32 %v950, %v956
        %v1008 = vmax.f32 %v951, %v957
        %v1009 = vmax.f32 %v952, %v958
        %v1010 = vmax.f32 %v953, %v959
        %v1011 = vmax.f32 %v954, %v960
        %v1012 = vmax.f32 %v955, %v961
        %v1013 = vmax.f32 %v956, %v962
        %v1014 = vmax.f32 %v957, %v963
        %v1015 = vmax.f32 %v958, %v964
        %v1016 = vmax.f32 %v959, %v965
        %v1017 = vmax.f32 %v960, %v966
        %v1018 = vmax.f32 %v961, %v967
        %v1019 = vmax.f32 %v962, %v968
        %v1020 = vmax.f32 %v963, %v969
        %v1021 = vmax.f32 %v964, %v970
        %v1022 = vmax.f32 %v965, %v971
        %v1023 = vmax.f32 %v966, %v972
        %v1024 = vmax.f32 %v967, %v973
        %v1025 = vmax.f32 %v968, %v974
        %v1026 = vmax.f32 %v969, %v975
        %v1027 = vmax.f32 %v970, %v976
        %v1028 = vmax.f32 %v971, %v977
        %v1029 = vmax.f32 %v972, %v978
        %v1030 = vmax.f32 %v973, %v979
        %v1031 = vmax.f32 %v974, %v980
        %v1032 = vmax.f32 %v975, %v981
        %v1033 = vmax.f32 %v976, %v982
        %v1034 = vmax.f32 %v977, %v983
        %v1035 = vmax.f32 %v978, %v984
        %v1036 = vmax.f32 %v979, %v985
        %v1037 = vmax.f32 %v980, %v986
        %v1038 = vmax.f32 %v981, %v987
        %v1039 = vmax.f32 %v982, %v988
        %v1040 = vmax.f32 %v983, %v989
        %v1041 = vmax.f32 %v984, %v990
        %v1042 = vmax.f32 %v985, %v991
        %v1043 = vmax.f32 %v986, %v992
        %v1044 = vmax.f32 %v987, %v993
        %v1045 = vmax.f32 %v988, %v994
        %v1046 = vmax.f32 %v989, %v995
        %v1047 = vmax.f32 %v990, %v996
        %v1048 = vmax.f32 %v991, %v997
        %v1049 = vmax.f32 %v992, %v998
        %v1050 = vmax.f32 %v993, %v999
        %v1051 = vmax.f32 %v994, %v1000
        %v1052 = vmax.f32 %v995, %v1001
        %v1053 = vmax.f32 %v1002, %v1005
        %v1054 = vmax.f32 %v1003, %v1006
        %v1055 = vmax.f32 %v1004, %v1007
        %v1056 = vmax.f32 %v1005, %v1008
        %v1057 = vmax.f32 %v1006, %v1009
        %v1058 = vmax.f32 %v1007, %v1010
        %v1059 = vmax.f32 %v1008, %v1011
        %v1060 = vmax.f32 %v1009, %v1012
        %v1061 = vmax.f32 %v1010, %v1013
        %v1062 = vmax.f32 %v1011, %v1014
        %v1063 = vmax.f32 %v1012, %v1015
        %v1064 = vmax.f32 %v1013, %v1016
        %v1065 = vmax.f32 %v1014, %v1017
        %v1066 = vmax.f32 %v1015, %v1018
        %v1067 = vmax.f32 %v1016, %v1019
        %v1068 = vmax.f32 %v1017, %v1020
        %v1069 = vmax.f32 %v1018, %v1021
        %v1070 = vmax.f32 %v1019, %v1022
        %v1071 = vmax.f32 %v1020, %v1023
        %v1072 = vmax.f32 %v1021, %v1024
        %v1073 = vmax.f32 %v1022, %v1025
        %v1074 = vmax.f32 %v1023, %v1026
        %v1075 = vmax.f32 %v1024, %v1027
        %v1076 = vmax.f32 %v1025, %v1028
        %v1077 = vmax.f32 %v1026, %v1029
        %v1078 = vmax.f32 %v1027, %v1030
        %v1079 = vmax.f32 %v1028, %v1031
        %v1080 = vmax.f32 %v1029, %v1032
        %v1081 = vmax.f32 %v1030, %v1033
        %v1082 = vmax.f32 %v1031, %v1034
        %v1083 = vmax.f32 %v1032, %v1035
        %v1084 = vmax.f32 %v1033, %v1036
        %v1085 = vmax.f32 %v1034, %v1037
        %v1086 = vmax.f32 %v1035, %v1038
        %v1087 = vmax.f32 %v1036, %v1039
        %v1088 = vmax.f32 %v1037, %v1040
        %v1089 = vmax.f32 %v1038, %v1041
        %v1090 = vmax.f32 %v1039, %v1042
        %v1091 = vmax.f32 %v1040, %v1043
        %v1092 = vmax.f32 %v1041, %v1044
        %v1093 = vmax.f32 %v1042, %v1045
        %v1094 = vmax.f32 %v1043, %v1046
        %v1095 = vmax.f32 %v1044, %v1047
        %v1096 = vmax.f32 %v1045, %v1048
        %v1097 = vmax.f32 %v1046, %v1049
        %v1098 = vmax.f32 %v1047, %v1050
        %v1099 = vmax.f32 %v1048, %v1051
        %v1100 = vmax.f32 %v1049, %v1052
        %vm1149 = vcmask 1046528
        %v1150 = vrot.slane %v1053, 1
        %v1151 = vrot.slane %v1054, 1
        %v1152 = vsel %vm1149, %v1150, %v1151
        %v1153 = vrot.slane %v1055, 1
        %v1154 = vsel %vm1149, %v1151, %v1153
        %v1155 = vrot.slane %v1056, 1
        %v1156 = vrot.slane %v1057, 1
        %v1157 = vsel %vm1149, %v1155, %v1156
        %v1158 = vrot.slane %v1058, 1
        %v1159 = vsel %vm1149, %v1156, %v1158
        %v1160 = vrot.slane %v1059, 1
        %v1161 = vrot.slane %v1060, 1
        %v1162 = vsel %vm1149, %v1160, %v1161
        %v1163 = vrot.slane %v1061, 1
        %v1164 = vsel %vm1149, %v1161, %v1163
        %v1165 = vrot.slane %v1062, 1
        %v1166 = vrot.slane %v1063, 1
        %v1167 = vsel %vm1149, %v1165, %v1166
        %v1168 = vrot.slane %v1064, 1
        %v1169 = vsel %vm1149, %v1166, %v1168
        %v1170 = vrot.slane %v1065, 1
        %v1171 = vrot.slane %v1066, 1
        %v1172 = vsel %vm1149, %v1170, %v1171
        %v1173 = vrot.slane %v1067, 1
        %v1174 = vsel %vm1149, %v1171, %v1173
        %v1175 = vrot.slane %v1068, 1
        %v1176 = vrot.slane %v1069, 1
        %v1177 = vsel %vm1149, %v1175, %v1176
        %v1178 = vrot.slane %v1070, 1
        %v1179 = vsel %vm1149, %v1176, %v1178
        %v1180 = vrot.slane %v1071, 1
        %v1181 = vrot.slane %v1072, 1
        %v1182 = vsel %vm1149, %v1180, %v1181
        %v1183 = vrot.slane %v1073, 1
        %v1184 = vsel %vm1149, %v1181, %v1183
        %v1185 = vrot.slane %v1074, 1
        %v1186 = vrot.slane %v1075, 1
        %v1187 = vsel %vm1149, %v1185, %v1186
        %v1188 = vrot.slane %v1076, 1
        %v1189 = vsel %vm1149, %v1186, %v1188
        %v1190 = vrot.slane %v1077, 1
        %v1191 = vrot.slane %v1078, 1
        %v1192 = vsel %vm1149, %v1190, %v1191
        %v1193 = vrot.slane %v1079, 1
        %v1194 = vsel %vm1149, %v1191, %v1193
        %v1195 = vrot.slane %v1080, 1
        %v1196 = vrot.slane %v1081, 1
        %v1197 = vsel %vm1149, %v1195, %v1196
        %v1198 = vrot.slane %v1082, 1
        %v1199 = vsel %vm1149, %v1196, %v1198
        %v1200 = vrot.slane %v1083, 1
        %v1201 = vrot.slane %v1084, 1
        %v1202 = vsel %vm1149, %v1200, %v1201
        %v1203 = vrot.slane %v1085, 1
        %v1204 = vsel %vm1149, %v1201, %v1203
        %v1205 = vrot.slane %v1086, 1
        %v1206 = vrot.slane %v1087, 1
        %v1207 = vsel %vm1149, %v1205, %v1206
        %v1208 = vrot.slane %v1088, 1
        %v1209 = vsel %vm1149, %v1206, %v1208
        %v1210 = vrot.slane %v1089, 1
        %v1211 = vrot.slane %v1090, 1
        %v1212 = vsel %vm1149, %v1210, %v1211
        %v1213 = vrot.slane %v1091, 1
        %v1214 = vsel %vm1149, %v1211, %v1213
        %v1215 = vrot.slane %v1092, 1
        %v1216 = vrot.slane %v1093, 1
        %v1217 = vsel %vm1149, %v1215, %v1216
        %v1218 = vrot.slane %v1094, 1
        %v1219 = vsel %vm1149, %v1216, %v1218
        %v1220 = vrot.slane %v1095, 1
        %v1221 = vrot.slane %v1096, 1
        %v1222 = vsel %vm1149, %v1220, %v1221
        %v1223 = vrot.slane %v1097, 1
        %v1224 = vsel %vm1149, %v1221, %v1223
        %v1225 = vrot.slane %v1098, 1
        %v1226 = vrot.slane %v1099, 1
        %v1227 = vsel %vm1149, %v1225, %v1226
        %v1228 = vrot.slane %v1100, 1
        %v1229 = vsel %vm1149, %v1226, %v1228
        %v1278 = vmax.f32 %v1053, %v1152
        %v1279 = vmax.f32 %v1054, %v1154
        %v1280 = vmax.f32 %v1055, %v1153
        %v1281 = vmax.f32 %v1056, %v1157
        %v1282 = vmax.f32 %v1057, %v1159
        %v1283 = vmax.f32 %v1058, %v1158
        %v1284 = vmax.f32 %v1059, %v1162
        %v1285 = vmax.f32 %v1060, %v1164
        %v1286 = vmax.f32 %v1061, %v1163
        %v1287 = vmax.f32 %v1062, %v1167
        %v1288 = vmax.f32 %v1063, %v1169
        %v1289 = vmax.f32 %v1064, %v1168
        %v1290 = vmax.f32 %v1065, %v1172
        %v1291 = vmax.f32 %v1066, %v1174
        %v1292 = vmax.f32 %v1067, %v1173
        %v1293 = vmax.f32 %v1068, %v1177
        %v1294 = vmax.f32 %v1069, %v1179
        %v1295 = vmax.f32 %v1070, %v1178
        %v1296 = vmax.f32 %v1071, %v1182
        %v1297 = vmax.f32 %v1072, %v1184
        %v1298 = vmax.f32 %v1073, %v1183
        %v1299 = vmax.f32 %v1074, %v1187
        %v1300 = vmax.f32 %v1075, %v1189
        %v1301 = vmax.f32 %v1076, %v1188
        %v1302 = vmax.f32 %v1077, %v1192
        %v1303 = vmax.f32 %v1078, %v1194
        %v1304 = vmax.f32 %v1079, %v1193
        %v1305 = vmax.f32 %v1080, %v1197
        %v1306 = vmax.f32 %v1081, %v1199
        %v1307 = vmax.f32 %v1082, %v1198
        %v1308 = vmax.f32 %v1083, %v1202
        %v1309 = vmax.f32 %v1084, %v1204
        %v1310 = vmax.f32 %v1085, %v1203
        %v1311 = vmax.f32 %v1086, %v1207
        %v1312 = vmax.f32 %v1087, %v1209
        %v1313 = vmax.f32 %v1088, %v1208
        %v1314 = vmax.f32 %v1089, %v1212
        %v1315 = vmax.f32 %v1090, %v1214
        %v1316 = vmax.f32 %v1091, %v1213
        %v1317 = vmax.f32 %v1092, %v1217
        %v1318 = vmax.f32 %v1093, %v1219
        %v1319 = vmax.f32 %v1094, %v1218
        %v1320 = vmax.f32 %v1095, %v1222
        %v1321 = vmax.f32 %v1096, %v1224
        %v1322 = vmax.f32 %v1097, %v1223
        %v1323 = vmax.f32 %v1098, %v1227
        %v1324 = vmax.f32 %v1099, %v1229
        %v1325 = vmax.f32 %v1100, %v1228
        %vm1374 = vcmask 1045504
        %v1375 = vrot.slane %v1278, 2
        %v1376 = vrot.slane %v1279, 2
        %v1377 = vsel %vm1374, %v1375, %v1376
        %v1378 = vrot.slane %v1280, 2
        %v1379 = vsel %vm1374, %v1376, %v1378
        %v1380 = vrot.slane %v1281, 2
        %v1381 = vrot.slane %v1282, 2
        %v1382 = vsel %vm1374, %v1380, %v1381
        %v1383 = vrot.slane %v1283, 2
        %v1384 = vsel %vm1374, %v1381, %v1383
        %v1385 = vrot.slane %v1284, 2
        %v1386 = vrot.slane %v1285, 2
        %v1387 = vsel %vm1374, %v1385, %v1386
        %v1388 = vrot.slane %v1286, 2
        %v1389 = vsel %vm1374, %v1386, %v1388
        %v1390 = vrot.slane %v1287, 2
        %v1391 = vrot.slane %v1288, 2
        %v1392 = vsel %vm1374, %v1390, %v1391
        %v1393 = vrot.slane %v1289, 2
        %v1394 = vsel %vm1374, %v1391, %v1393
        %v1395 = vrot.slane %v1290, 2
        %v1396 = vrot.slane %v1291, 2
        %v1397 = vsel %vm1374, %v1395, %v1396
        %v1398 = vrot.slane %v1292, 2
        %v1399 = vsel %vm1374, %v1396, %v1398
        %v1400 = vrot.slane %v1293, 2
        %v1401 = vrot.slane %v1294, 2
        %v1402 = vsel %vm1374, %v1400, %v1401
        %v1403 = vrot.slane %v1295, 2
        %v1404 = vsel %vm1374, %v1401, %v1403
        %v1405 = vrot.slane %v1296, 2
        %v1406 = vrot.slane %v1297, 2
        %v1407 = vsel %vm1374, %v1405, %v1406
        %v1408 = vrot.slane %v1298, 2
        %v1409 = vsel %vm1374, %v1406, %v1408
        %v1410 = vrot.slane %v1299, 2
        %v1411 = vrot.slane %v1300, 2
        %v1412 = vsel %vm1374, %v1410, %v1411
        %v1413 = vrot.slane %v1301, 2
        %v1414 = vsel %vm1374, %v1411, %v1413
        %v1415 = vrot.slane %v1302, 2
        %v1416 = vrot.slane %v1303, 2
        %v1417 = vsel %vm1374, %v1415, %v1416
        %v1418 = vrot.slane %v1304, 2
        %v1419 = vsel %vm1374, %v1416, %v1418
        %v1420 = vrot.slane %v1305, 2
        %v1421 = vrot.slane %v1306, 2
        %v1422 = vsel %vm1374, %v1420, %v1421
        %v1423 = vrot.slane %v1307, 2
        %v1424 = vsel %vm1374, %v1421, %v1423
        %v1425 = vrot.slane %v1308, 2
        %v1426 = vrot.slane %v1309, 2
        %v1427 = vsel %vm1374, %v1425, %v1426
        %v1428 = vrot.slane %v1310, 2
        %v1429 = vsel %vm1374, %v1426, %v1428
        %v1430 = vrot.slane %v1311, 2
        %v1431 = vrot.slane %v1312, 2
        %v1432 = vsel %vm1374, %v1430, %v1431
        %v1433 = vrot.slane %v1313, 2
        %v1434 = vsel %vm1374, %v1431, %v1433
        %v1435 = vrot.slane %v1314, 2
        %v1436 = vrot.slane %v1315, 2
        %v1437 = vsel %vm1374, %v1435, %v1436
        %v1438 = vrot.slane %v1316, 2
        %v1439 = vsel %vm1374, %v1436, %v1438
        %v1440 = vrot.slane %v1317, 2
        %v1441 = vrot.slane %v1318, 2
        %v1442 = vsel %vm1374, %v1440, %v1441
        %v1443 = vrot.slane %v1319, 2
        %v1444 = vsel %vm1374, %v1441, %v1443
        %v1445 = vrot.slane %v1320, 2
        %v1446 = vrot.slane %v1321, 2
        %v1447 = vsel %vm1374, %v1445, %v1446
        %v1448 = vrot.slane %v1322, 2
        %v1449 = vsel %vm1374, %v1446, %v1448
        %v1450 = vrot.slane %v1323, 2
        %v1451 = vrot.slane %v1324, 2
        %v1452 = vsel %vm1374, %v1450, %v1451
        %v1453 = vrot.slane %v1325, 2
        %v1454 = vsel %vm1374, %v1451, %v1453
        %v1503 = vmax.f32 %v1278, %v1377
        %v1504 = vmax.f32 %v1279, %v1379
        %v1505 = vmax.f32 %v1280, %v1378
        %v1506 = vmax.f32 %v1281, %v1382
        %v1507 = vmax.f32 %v1282, %v1384
        %v1508 = vmax.f32 %v1283, %v1383
        %v1509 = vmax.f32 %v1284, %v1387
        %v1510 = vmax.f32 %v1285, %v1389
        %v1511 = vmax.f32 %v1286, %v1388
        %v1512 = vmax.f32 %v1287, %v1392
        %v1513 = vmax.f32 %v1288, %v1394
        %v1514 = vmax.f32 %v1289, %v1393
        %v1515 = vmax.f32 %v1290, %v1397
        %v1516 = vmax.f32 %v1291, %v1399
        %v1517 = vmax.f32 %v1292, %v1398
        %v1518 = vmax.f32 %v1293, %v1402
        %v1519 = vmax.f32 %v1294, %v1404
        %v1520 = vmax.f32 %v1295, %v1403
        %v1521 = vmax.f32 %v1296, %v1407
        %v1522 = vmax.f32 %v1297, %v1409
        %v1523 = vmax.f32 %v1298, %v1408
        %v1524 = vmax.f32 %v1299, %v1412
        %v1525 = vmax.f32 %v1300, %v1414
        %v1526 = vmax.f32 %v1301, %v1413
        %v1527 = vmax.f32 %v1302, %v1417
        %v1528 = vmax.f32 %v1303, %v1419
        %v1529 = vmax.f32 %v1304, %v1418
        %v1530 = vmax.f32 %v1305, %v1422
        %v1531 = vmax.f32 %v1306, %v1424
        %v1532 = vmax.f32 %v1307, %v1423
        %v1533 = vmax.f32 %v1308, %v1427
        %v1534 = vmax.f32 %v1309, %v1429
        %v1535 = vmax.f32 %v1310, %v1428
        %v1536 = vmax.f32 %v1311, %v1432
        %v1537 = vmax.f32 %v1312, %v1434
        %v1538 = vmax.f32 %v1313, %v1433
        %v1539 = vmax.f32 %v1314, %v1437
        %v1540 = vmax.f32 %v1315, %v1439
        %v1541 = vmax.f32 %v1316, %v1438
        %v1542 = vmax.f32 %v1317, %v1442
        %v1543 = vmax.f32 %v1318, %v1444
        %v1544 = vmax.f32 %v1319, %v1443
        %v1545 = vmax.f32 %v1320, %v1447
        %v1546 = vmax.f32 %v1321, %v1449
        %v1547 = vmax.f32 %v1322, %v1448
        %v1548 = vmax.f32 %v1323, %v1452
        %v1549 = vmax.f32 %v1324, %v1454
        %v1550 = vmax.f32 %v1325, %v1453
        %v1599 = vrot.slane %v1503, 1
        %v1600 = vrot.slane %v1504, 1
        %v1601 = vsel %vm1149, %v1599, %v1600
        %v1602 = vrot.slane %v1505, 1
        %v1603 = vsel %vm1149, %v1600, %v1602
        %v1604 = vrot.slane %v1506, 1
        %v1605 = vrot.slane %v1507, 1
        %v1606 = vsel %vm1149, %v1604, %v1605
        %v1607 = vrot.slane %v1508, 1
        %v1608 = vsel %vm1149, %v1605, %v1607
        %v1609 = vrot.slane %v1509, 1
        %v1610 = vrot.slane %v1510, 1
        %v1611 = vsel %vm1149, %v1609, %v1610
        %v1612 = vrot.slane %v1511, 1
        %v1613 = vsel %vm1149, %v1610, %v1612
        %v1614 = vrot.slane %v1512, 1
        %v1615 = vrot.slane %v1513, 1
        %v1616 = vsel %vm1149, %v1614, %v1615
        %v1617 = vrot.slane %v1514, 1
        %v1618 = vsel %vm1149, %v1615, %v1617
        %v1619 = vrot.slane %v1515, 1
        %v1620 = vrot.slane %v1516, 1
        %v1621 = vsel %vm1149, %v1619, %v1620
        %v1622 = vrot.slane %v1517, 1
        %v1623 = vsel %vm1149, %v1620, %v1622
        %v1624 = vrot.slane %v1518, 1
        %v1625 = vrot.slane %v1519, 1
        %v1626 = vsel %vm1149, %v1624, %v1625
        %v1627 = vrot.slane %v1520, 1
        %v1628 = vsel %vm1149, %v1625, %v1627
        %v1629 = vrot.slane %v1521, 1
        %v1630 = vrot.slane %v1522, 1
        %v1631 = vsel %vm1149, %v1629, %v1630
        %v1632 = vrot.slane %v1523, 1
        %v1633 = vsel %vm1149, %v1630, %v1632
        %v1634 = vrot.slane %v1524, 1
        %v1635 = vrot.slane %v1525, 1
        %v1636 = vsel %vm1149, %v1634, %v1635
        %v1637 = vrot.slane %v1526, 1
        %v1638 = vsel %vm1149, %v1635, %v1637
        %v1639 = vrot.slane %v1527, 1
        %v1640 = vrot.slane %v1528, 1
        %v1641 = vsel %vm1149, %v1639, %v1640
        %v1642 = vrot.slane %v1529, 1
        %v1643 = vsel %vm1149, %v1640, %v1642
        %v1644 = vrot.slane %v1530, 1
        %v1645 = vrot.slane %v1531, 1
        %v1646 = vsel %vm1149, %v1644, %v1645
        %v1647 = vrot.slane %v1532, 1
        %v1648 = vsel %vm1149, %v1645, %v1647
        %v1649 = vrot.slane %v1533, 1
        %v1650 = vrot.slane %v1534, 1
        %v1651 = vsel %vm1149, %v1649, %v1650
        %v1652 = vrot.slane %v1535, 1
        %v1653 = vsel %vm1149, %v1650, %v1652
        %v1654 = vrot.slane %v1536, 1
        %v1655 = vrot.slane %v1537, 1
        %v1656 = vsel %vm1149, %v1654, %v1655
        %v1657 = vrot.slane %v1538, 1
        %v1658 = vsel %vm1149, %v1655, %v1657
        %v1659 = vrot.slane %v1539, 1
        %v1660 = vrot.slane %v1540, 1
        %v1661 = vsel %vm1149, %v1659, %v1660
        %v1662 = vrot.slane %v1541, 1
        %v1663 = vsel %vm1149, %v1660, %v1662
        %v1664 = vrot.slane %v1542, 1
        %v1665 = vrot.slane %v1543, 1
        %v1666 = vsel %vm1149, %v1664, %v1665
        %v1667 = vrot.slane %v1544, 1
        %v1668 = vsel %vm1149, %v1665, %v1667
        %v1669 = vrot.slane %v1545, 1
        %v1670 = vrot.slane %v1546, 1
        %v1671 = vsel %vm1149, %v1669, %v1670
        %v1672 = vrot.slane %v1547, 1
        %v1673 = vsel %vm1149, %v1670, %v1672
        %v1674 = vrot.slane %v1548, 1
        %v1675 = vrot.slane %v1549, 1
        %v1676 = vsel %vm1149, %v1674, %v1675
        %v1677 = vrot.slane %v1550, 1
        %v1678 = vsel %vm1149, %v1675, %v1677
        %v1711 = vmax.f32 %v1503, %v1601
        %v1712 = vmax.f32 %v1504, %v1603
        %v1713 = vmax.f32 %v1506, %v1606
        %v1714 = vmax.f32 %v1507, %v1608
        %v1715 = vmax.f32 %v1509, %v1611
        %v1716 = vmax.f32 %v1510, %v1613
        %v1717 = vmax.f32 %v1512, %v1616
        %v1718 = vmax.f32 %v1513, %v1618
        %v1719 = vmax.f32 %v1515, %v1621
        %v1720 = vmax.f32 %v1516, %v1623
        %v1721 = vmax.f32 %v1518, %v1626
        %v1722 = vmax.f32 %v1519, %v1628
        %v1723 = vmax.f32 %v1521, %v1631
        %v1724 = vmax.f32 %v1522, %v1633
        %v1725 = vmax.f32 %v1524, %v1636
        %v1726 = vmax.f32 %v1525, %v1638
        %v1727 = vmax.f32 %v1527, %v1641
        %v1728 = vmax.f32 %v1528, %v1643
        %v1729 = vmax.f32 %v1530, %v1646
        %v1730 = vmax.f32 %v1531, %v1648
        %v1731 = vmax.f32 %v1533, %v1651
        %v1732 = vmax.f32 %v1534, %v1653
        %v1733 = vmax.f32 %v1536, %v1656
        %v1734 = vmax.f32 %v1537, %v1658
        %v1735 = vmax.f32 %v1539, %v1661
        %v1736 = vmax.f32 %v1540, %v1663
        %v1737 = vmax.f32 %v1542, %v1666
        %v1738 = vmax.f32 %v1543, %v1668
        %v1739 = vmax.f32 %v1545, %v1671
        %v1740 = vmax.f32 %v1546, %v1673
        %v1741 = vmax.f32 %v1548, %v1676
        %v1742 = vmax.f32 %v1549, %v1678
        %v1743 = vld [vmem:[%s3 + $0x80] sm:$0xff]
        %v1744 = vld [vmem:[%s3 + $0x88] sm:$0xff]
        %v1745 = vld [vmem:[%s3 + $0x90] sm:$0xff]
        %v1746 = vld [vmem:[%s3 + $0x98] sm:$0xff]
        %v1747 = vld [vmem:[%s3 + $0xa0] sm:$0xff]
        %v1748 = vld [vmem:[%s3 + $0xa8] sm:$0xff]
        %v1749 = vld [vmem:[%s3 + $0xb0] sm:$0xff]
        %v1750 = vld [vmem:[%s3 + $0xb8] sm:$0xff]
        %v1751 = vld [vmem:[%s3 + $0xc0] sm:$0xff]
        %v1752 = vld [vmem:[%s3 + $0xc8] sm:$0xff]
        %v1753 = vld [vmem:[%s3 + $0xd0] sm:$0xff]
        %v1754 = vld [vmem:[%s3 + $0xd8] sm:$0xff]
        %v1755 = vld [vmem:[%s3 + $0xe0] sm:$0xff]
        %v1756 = vld [vmem:[%s3 + $0xe8] sm:$0xff]
        %v1757 = vld [vmem:[%s3 + $0xf0] sm:$0xff]
        %v1758 = vld [vmem:[%s3 + $0xf8] sm:$0xff]
        %1759 = vmatprep.subr.mxu0 0.0
        %1760 = vmatpush1.msra.mxu0 %v1758
        %1761 = vmatprep.subr.mxu0 0.0
        %1762 = vmatpush1.msra.mxu0 %v1757
        %1763 = vmatprep.subr.mxu0 0.0
        %1764 = vmatpush1.msra.mxu0 %v1756
        %1765 = vmatprep.subr.mxu0 0.0
        %1766 = vmatpush1.msra.mxu0 %v1755
        %1767 = vmatprep.subr.mxu0 0.0
        %1768 = vmatpush1.msra.mxu0 %v1754
        %1769 = vmatprep.subr.mxu0 0.0
        %1770 = vmatpush1.msra.mxu0 %v1753
        %1771 = vmatprep.subr.mxu0 0.0
        %1772 = vmatpush1.msra.mxu0 %v1752
        %1773 = vmatprep.subr.mxu0 0.0
        %1774 = vmatpush1.msra.mxu0 %v1751
        %1775 = vmatprep.subr.mxu0 0.0
        %1776 = vmatpush1.msra.mxu0 %v1750
        %1777 = vmatprep.subr.mxu0 0.0
        %1778 = vmatpush1.msra.mxu0 %v1749
        %1779 = vmatprep.subr.mxu0 0.0
        %1780 = vmatpush1.msra.mxu0 %v1748
        %1781 = vmatprep.subr.mxu0 0.0
        %1782 = vmatpush1.msra.mxu0 %v1747
        %1783 = vmatprep.subr.mxu0 0.0
        %1784 = vmatpush1.msra.mxu0 %v1746
        %1785 = vmatprep.subr.mxu0 0.0
        %1786 = vmatpush1.msra.mxu0 %v1745
        %1787 = vmatprep.subr.mxu0 0.0
        %1788 = vmatpush1.msra.mxu0 %v1744
        %1789 = vmatprep.subr.mxu0 0.0
        %1790 = vmatpush1.msra.mxu0 %v1743
        %1791 = vmatprep.subr.mxu0 0.0
        %1792 = vmatpush2.msra.mxu0 0.0
        %1793 = vmatprep.subr.mxu0 0.0
        %1794 = vmatpush2.msra.mxu0 0.0
        %1795 = vmatprep.subr.mxu0 0.0
        %1796 = vmatpush2.msra.mxu0 0.0
        %1797 = vmatprep.subr.mxu0 0.0
        %1798 = vmatpush2.msra.mxu0 0.0
        %1799 = vmatprep.subr.mxu0 0.0
        %1800 = vmatpush2.msra.mxu0 0.0
        %1801 = vmatprep.subr.mxu0 0.0
        %1802 = vmatpush2.msra.mxu0 0.0
        %1803 = vmatprep.subr.mxu0 0.0
        %1804 = vmatpush2.msra.mxu0 0.0
        %1805 = vmatprep.subr.mxu0 0.0
        %1806 = vmatpush2.msra.mxu0 0.0
        %1807 = vmatprep.subr.mxu0 0.0
        %1808 = vmatpush2.msra.mxu0 0.0
        %1809 = vmatprep.subr.mxu0 0.0
        %1810 = vmatpush2.msra.mxu0 0.0
        %1811 = vmatprep.subr.mxu0 0.0
        %1812 = vmatpush2.msra.mxu0 0.0
        %1813 = vmatprep.subr.mxu0 0.0
        %1814 = vmatpush2.msra.mxu0 0.0
        %1815 = vmatprep.subr.mxu0 0.0
        %1816 = vmatpush2.msra.mxu0 0.0
        %1817 = vmatprep.subr.mxu0 0.0
        %1818 = vmatpush2.msra.mxu0 0.0
        %1819 = vmatprep.subr.mxu0 0.0
        %1820 = vmatpush2.msra.mxu0 0.0
        %1821 = vmatprep.subr.mxu0 0.0
        %1822 = vmatpush2.msra.mxu0 0.0
        %1823 = vmatprep.mubr.f32.mxu0 0.0
        %1824 = vmatmul.mubr.f32.gmra.mxu0 %v1711
        %v1825 = vpop.f32.mrf.mxu0
        %v1826 = vadd.f32 0.0, %v1825
        %v1827 = vpop.f32.mrf.mxu0
        %1828 = vmatprep.mubr.f32.mxu0 0.0
        %1829 = vmatmul.mubr.f32.gmra.mxu0 %v1712
        %v1830 = vpop.f32.mrf.mxu0
        %v1831 = vadd.f32 0.0, %v1830
        %v1832 = vpop.f32.mrf.mxu0
        %1833 = vmatprep.mubr.f32.mxu0 0.0
        %1834 = vmatmul.mubr.f32.gmra.mxu0 %v1713
        %v1835 = vpop.f32.mrf.mxu0
        %v1836 = vadd.f32 0.0, %v1835
        %v1837 = vpop.f32.mrf.mxu0
        %1838 = vmatprep.mubr.f32.mxu0 0.0
        %1839 = vmatmul.mubr.f32.gmra.mxu0 %v1714
        %v1840 = vpop.f32.mrf.mxu0
        %v1841 = vadd.f32 0.0, %v1840
        %v1842 = vpop.f32.mrf.mxu0
        %1843 = vmatprep.mubr.f32.mxu0 0.0
        %1844 = vmatmul.mubr.f32.gmra.mxu0 %v1715
        %v1845 = vpop.f32.mrf.mxu0
        %v1846 = vadd.f32 0.0, %v1845
        %v1847 = vpop.f32.mrf.mxu0
        %1848 = vmatprep.mubr.f32.mxu0 0.0
        %1849 = vmatmul.mubr.f32.gmra.mxu0 %v1716
        %v1850 = vpop.f32.mrf.mxu0
        %v1851 = vadd.f32 0.0, %v1850
        %v1852 = vpop.f32.mrf.mxu0
        %1853 = vmatprep.mubr.f32.mxu0 0.0
        %1854 = vmatmul.mubr.f32.gmra.mxu0 %v1717
        %v1855 = vpop.f32.mrf.mxu0
        %v1856 = vadd.f32 0.0, %v1855
        %v1857 = vpop.f32.mrf.mxu0
        %1858 = vmatprep.mubr.f32.mxu0 0.0
        %1859 = vmatmul.mubr.f32.gmra.mxu0 %v1718
        %v1860 = vpop.f32.mrf.mxu0
        %v1861 = vadd.f32 0.0, %v1860
        %v1862 = vpop.f32.mrf.mxu0
        %1863 = vmatprep.mubr.f32.mxu0 0.0
        %1864 = vmatmul.mubr.f32.gmra.mxu0 %v1719
        %v1865 = vpop.f32.mrf.mxu0
        %v1866 = vadd.f32 0.0, %v1865
        %v1867 = vpop.f32.mrf.mxu0
        %1868 = vmatprep.mubr.f32.mxu0 0.0
        %1869 = vmatmul.mubr.f32.gmra.mxu0 %v1720
        %v1870 = vpop.f32.mrf.mxu0
        %v1871 = vadd.f32 0.0, %v1870
        %v1872 = vpop.f32.mrf.mxu0
        %1873 = vmatprep.mubr.f32.mxu0 0.0
        %1874 = vmatmul.mubr.f32.gmra.mxu0 %v1721
        %v1875 = vpop.f32.mrf.mxu0
        %v1876 = vadd.f32 0.0, %v1875
        %v1877 = vpop.f32.mrf.mxu0
        %1878 = vmatprep.mubr.f32.mxu0 0.0
        %1879 = vmatmul.mubr.f32.gmra.mxu0 %v1722
        %v1880 = vpop.f32.mrf.mxu0
        %v1881 = vadd.f32 0.0, %v1880
        %v1882 = vpop.f32.mrf.mxu0
        %1883 = vmatprep.mubr.f32.mxu0 0.0
        %1884 = vmatmul.mubr.f32.gmra.mxu0 %v1723
        %v1885 = vpop.f32.mrf.mxu0
        %v1886 = vadd.f32 0.0, %v1885
        %v1887 = vpop.f32.mrf.mxu0
        %1888 = vmatprep.mubr.f32.mxu0 0.0
        %1889 = vmatmul.mubr.f32.gmra.mxu0 %v1724
        %v1890 = vpop.f32.mrf.mxu0
        %v1891 = vadd.f32 0.0, %v1890
        %v1892 = vpop.f32.mrf.mxu0
        %1893 = vmatprep.mubr.f32.mxu0 0.0
        %1894 = vmatmul.mubr.f32.gmra.mxu0 %v1725
        %v1895 = vpop.f32.mrf.mxu0
        %v1896 = vadd.f32 0.0, %v1895
        %v1897 = vpop.f32.mrf.mxu0
        %1898 = vmatprep.mubr.f32.mxu0 0.0
        %1899 = vmatmul.mubr.f32.gmra.mxu0 %v1726
        %v1900 = vpop.f32.mrf.mxu0
        %v1901 = vadd.f32 0.0, %v1900
        %v1902 = vpop.f32.mrf.mxu0
        %1903 = vmatprep.mubr.f32.mxu0 0.0
        %1904 = vmatmul.mubr.f32.gmra.mxu0 %v1727
        %v1905 = vpop.f32.mrf.mxu0
        %v1906 = vadd.f32 0.0, %v1905
        %v1907 = vpop.f32.mrf.mxu0
        %1908 = vmatprep.mubr.f32.mxu0 0.0
        %1909 = vmatmul.mubr.f32.gmra.mxu0 %v1728
        %v1910 = vpop.f32.mrf.mxu0
        %v1911 = vadd.f32 0.0, %v1910
        %v1912 = vpop.f32.mrf.mxu0
        %1913 = vmatprep.mubr.f32.mxu0 0.0
        %1914 = vmatmul.mubr.f32.gmra.mxu0 %v1729
        %v1915 = vpop.f32.mrf.mxu0
        %v1916 = vadd.f32 0.0, %v1915
        %v1917 = vpop.f32.mrf.mxu0
        %1918 = vmatprep.mubr.f32.mxu0 0.0
        %1919 = vmatmul.mubr.f32.gmra.mxu0 %v1730
        %v1920 = vpop.f32.mrf.mxu0
        %v1921 = vadd.f32 0.0, %v1920
        %v1922 = vpop.f32.mrf.mxu0
        %1923 = vmatprep.mubr.f32.mxu0 0.0
        %1924 = vmatmul.mubr.f32.gmra.mxu0 %v1731
        %v1925 = vpop.f32.mrf.mxu0
        %v1926 = vadd.f32 0.0, %v1925
        %v1927 = vpop.f32.mrf.mxu0
        %1928 = vmatprep.mubr.f32.mxu0 0.0
        %1929 = vmatmul.mubr.f32.gmra.mxu0 %v1732
        %v1930 = vpop.f32.mrf.mxu0
        %v1931 = vadd.f32 0.0, %v1930
        %v1932 = vpop.f32.mrf.mxu0
        %1933 = vmatprep.mubr.f32.mxu0 0.0
        %1934 = vmatmul.mubr.f32.gmra.mxu0 %v1733
        %v1935 = vpop.f32.mrf.mxu0
        %v1936 = vadd.f32 0.0, %v1935
        %v1937 = vpop.f32.mrf.mxu0
        %1938 = vmatprep.mubr.f32.mxu0 0.0
        %1939 = vmatmul.mubr.f32.gmra.mxu0 %v1734
        %v1940 = vpop.f32.mrf.mxu0
        %v1941 = vadd.f32 0.0, %v1940
        %v1942 = vpop.f32.mrf.mxu0
        %1943 = vmatprep.mubr.f32.mxu0 0.0
        %1944 = vmatmul.mubr.f32.gmra.mxu0 %v1735
        %v1945 = vpop.f32.mrf.mxu0
        %v1946 = vadd.f32 0.0, %v1945
        %v1947 = vpop.f32.mrf.mxu0
        %1948 = vmatprep.mubr.f32.mxu0 0.0
        %1949 = vmatmul.mubr.f32.gmra.mxu0 %v1736
        %v1950 = vpop.f32.mrf.mxu0
        %v1951 = vadd.f32 0.0, %v1950
        %v1952 = vpop.f32.mrf.mxu0
        %1953 = vmatprep.mubr.f32.mxu0 0.0
        %1954 = vmatmul.mubr.f32.gmra.mxu0 %v1737
        %v1955 = vpop.f32.mrf.mxu0
        %v1956 = vadd.f32 0.0, %v1955
        %v1957 = vpop.f32.mrf.mxu0
        %1958 = vmatprep.mubr.f32.mxu0 0.0
        %1959 = vmatmul.mubr.f32.gmra.mxu0 %v1738
        %v1960 = vpop.f32.mrf.mxu0
        %v1961 = vadd.f32 0.0, %v1960
        %v1962 = vpop.f32.mrf.mxu0
        %1963 = vmatprep.mubr.f32.mxu0 0.0
        %1964 = vmatmul.mubr.f32.gmra.mxu0 %v1739
        %v1965 = vpop.f32.mrf.mxu0
        %v1966 = vadd.f32 0.0, %v1965
        %v1967 = vpop.f32.mrf.mxu0
        %1968 = vmatprep.mubr.f32.mxu0 0.0
        %1969 = vmatmul.mubr.f32.gmra.mxu0 %v1740
        %v1970 = vpop.f32.mrf.mxu0
        %v1971 = vadd.f32 0.0, %v1970
        %v1972 = vpop.f32.mrf.mxu0
        %1973 = vmatprep.mubr.f32.mxu0 0.0
        %1974 = vmatmul.mubr.f32.gmra.mxu0 %v1741
        %v1975 = vpop.f32.mrf.mxu0
        %v1976 = vadd.f32 0.0, %v1975
        %v1977 = vpop.f32.mrf.mxu0
        %1978 = vmatprep.mubr.f32.mxu0 0.0
        %1979 = vmatmul.mubr.f32.gmra.mxu0 %v1742
        %v1980 = vpop.f32.mrf.mxu0
        %v1981 = vadd.f32 0.0, %v1980
        %v1982 = vpop.f32.mrf.mxu0
        %1983 = vdwg.mxu0
        %1984 = vmatprep.subr.mxu0 0.0
        %1985 = vmatpush1.msra.mxu0 %v852
        %1986 = vmatprep.subr.mxu0 0.0
        %1987 = vmatpush1.msra.mxu0 %v851
        %1988 = vmatprep.subr.mxu0 0.0
        %1989 = vmatpush1.msra.mxu0 %v850
        %1990 = vmatprep.subr.mxu0 0.0
        %1991 = vmatpush1.msra.mxu0 %v849
        %1992 = vmatprep.subr.mxu0 0.0
        %1993 = vmatpush1.msra.mxu0 %v848
        %1994 = vmatprep.subr.mxu0 0.0
        %1995 = vmatpush1.msra.mxu0 %v847
        %1996 = vmatprep.subr.mxu0 0.0
        %1997 = vmatpush1.msra.mxu0 %v846
        %1998 = vmatprep.subr.mxu0 0.0
        %1999 = vmatpush1.msra.mxu0 %v845
        %2000 = vmatprep.subr.mxu0 0.0
        %2001 = vmatpush1.msra.mxu0 %v844
        %2002 = vmatprep.subr.mxu0 0.0
        %2003 = vmatpush1.msra.mxu0 %v843
        %2004 = vmatprep.subr.mxu0 0.0
        %2005 = vmatpush1.msra.mxu0 %v842
        %2006 = vmatprep.subr.mxu0 0.0
        %2007 = vmatpush1.msra.mxu0 %v841
        %2008 = vmatprep.subr.mxu0 0.0
        %2009 = vmatpush1.msra.mxu0 %v840
        %2010 = vmatprep.subr.mxu0 0.0
        %2011 = vmatpush1.msra.mxu0 %v839
        %2012 = vmatprep.subr.mxu0 0.0
        %2013 = vmatpush1.msra.mxu0 %v838
        %2014 = vmatprep.subr.mxu0 0.0
        %2015 = vmatpush1.msra.mxu0 %v837
        %2016 = vmatprep.subr.mxu0 0.0
        %2017 = vmatpush2.msra.mxu0 0.0
        %2018 = vmatprep.subr.mxu0 0.0
        %2019 = vmatpush2.msra.mxu0 0.0
        %2020 = vmatprep.subr.mxu0 0.0
        %2021 = vmatpush2.msra.mxu0 0.0
        %2022 = vmatprep.subr.mxu0 0.0
        %2023 = vmatpush2.msra.mxu0 0.0
        %2024 = vmatprep.subr.mxu0 0.0
        %2025 = vmatpush2.msra.mxu0 0.0
        %2026 = vmatprep.subr.mxu0 0.0
        %2027 = vmatpush2.msra.mxu0 0.0
        %2028 = vmatprep.subr.mxu0 0.0
        %2029 = vmatpush2.msra.mxu0 0.0
        %2030 = vmatprep.subr.mxu0 0.0
        %2031 = vmatpush2.msra.mxu0 0.0
        %2032 = vmatprep.subr.mxu0 0.0
        %2033 = vmatpush2.msra.mxu0 0.0
        %2034 = vmatprep.subr.mxu0 0.0
        %2035 = vmatpush2.msra.mxu0 0.0
        %2036 = vmatprep.subr.mxu0 0.0
        %2037 = vmatpush2.msra.mxu0 0.0
        %2038 = vmatprep.subr.mxu0 0.0
        %2039 = vmatpush2.msra.mxu0 0.0
        %2040 = vmatprep.subr.mxu0 0.0
        %2041 = vmatpush2.msra.mxu0 0.0
        %2042 = vmatprep.subr.mxu0 0.0
        %2043 = vmatpush2.msra.mxu0 0.0
        %2044 = vmatprep.subr.mxu0 0.0
        %2045 = vmatpush2.msra.mxu0 0.0
        %2046 = vmatprep.subr.mxu0 0.0
        %2047 = vmatpush2.msra.mxu0 0.0
        %2048 = vmatprep.mubr.f32.mxu0 0.0
        %2049 = vmatmul.mubr.f32.gmra.mxu0 %v805
        %v2050 = vpop.f32.mrf.mxu0
        %v2051 = vadd.f32 %v1826, %v2050
        %v2052 = vpop.f32.mrf.mxu0
        %2053 = vmatprep.mubr.f32.mxu0 0.0
        %2054 = vmatmul.mubr.f32.gmra.mxu0 %v806
        %v2055 = vpop.f32.mrf.mxu0
        %v2056 = vadd.f32 %v1831, %v2055
        %v2057 = vpop.f32.mrf.mxu0
        %2058 = vmatprep.mubr.f32.mxu0 0.0
        %2059 = vmatmul.mubr.f32.gmra.mxu0 %v807
        %v2060 = vpop.f32.mrf.mxu0
        %v2061 = vadd.f32 %v1836, %v2060
        %v2062 = vpop.f32.mrf.mxu0
        %2063 = vmatprep.mubr.f32.mxu0 0.0
        %2064 = vmatmul.mubr.f32.gmra.mxu0 %v808
        %v2065 = vpop.f32.mrf.mxu0
        %v2066 = vadd.f32 %v1841, %v2065
        %v2067 = vpop.f32.mrf.mxu0
        %2068 = vmatprep.mubr.f32.mxu0 0.0
        %2069 = vmatmul.mubr.f32.gmra.mxu0 %v809
        %v2070 = vpop.f32.mrf.mxu0
        %v2071 = vadd.f32 %v1846, %v2070
        %v2072 = vpop.f32.mrf.mxu0
        %2073 = vmatprep.mubr.f32.mxu0 0.0
        %2074 = vmatmul.mubr.f32.gmra.mxu0 %v810
        %v2075 = vpop.f32.mrf.mxu0
        %v2076 = vadd.f32 %v1851, %v2075
        %v2077 = vpop.f32.mrf.mxu0
        %2078 = vmatprep.mubr.f32.mxu0 0.0
        %2079 = vmatmul.mubr.f32.gmra.mxu0 %v811
        %v2080 = vpop.f32.mrf.mxu0
        %v2081 = vadd.f32 %v1856, %v2080
        %v2082 = vpop.f32.mrf.mxu0
        %2083 = vmatprep.mubr.f32.mxu0 0.0
        %2084 = vmatmul.mubr.f32.gmra.mxu0 %v812
        %v2085 = vpop.f32.mrf.mxu0
        %v2086 = vadd.f32 %v1861, %v2085
        %v2087 = vpop.f32.mrf.mxu0
        %2088 = vmatprep.mubr.f32.mxu0 0.0
        %2089 = vmatmul.mubr.f32.gmra.mxu0 %v813
        %v2090 = vpop.f32.mrf.mxu0
        %v2091 = vadd.f32 %v1866, %v2090
        %v2092 = vpop.f32.mrf.mxu0
        %2093 = vmatprep.mubr.f32.mxu0 0.0
        %2094 = vmatmul.mubr.f32.gmra.mxu0 %v814
        %v2095 = vpop.f32.mrf.mxu0
        %v2096 = vadd.f32 %v1871, %v2095
        %v2097 = vpop.f32.mrf.mxu0
        %2098 = vmatprep.mubr.f32.mxu0 0.0
        %2099 = vmatmul.mubr.f32.gmra.mxu0 %v815
        %v2100 = vpop.f32.mrf.mxu0
        %v2101 = vadd.f32 %v1876, %v2100
        %v2102 = vpop.f32.mrf.mxu0
        %2103 = vmatprep.mubr.f32.mxu0 0.0
        %2104 = vmatmul.mubr.f32.gmra.mxu0 %v816
        %v2105 = vpop.f32.mrf.mxu0
        %v2106 = vadd.f32 %v1881, %v2105
        %v2107 = vpop.f32.mrf.mxu0
        %2108 = vmatprep.mubr.f32.mxu0 0.0
        %2109 = vmatmul.mubr.f32.gmra.mxu0 %v817
        %v2110 = vpop.f32.mrf.mxu0
        %v2111 = vadd.f32 %v1886, %v2110
        %v2112 = vpop.f32.mrf.mxu0
        %2113 = vmatprep.mubr.f32.mxu0 0.0
        %2114 = vmatmul.mubr.f32.gmra.mxu0 %v818
        %v2115 = vpop.f32.mrf.mxu0
        %v2116 = vadd.f32 %v1891, %v2115
        %v2117 = vpop.f32.mrf.mxu0
        %2118 = vmatprep.mubr.f32.mxu0 0.0
        %2119 = vmatmul.mubr.f32.gmra.mxu0 %v819
        %v2120 = vpop.f32.mrf.mxu0
        %v2121 = vadd.f32 %v1896, %v2120
        %v2122 = vpop.f32.mrf.mxu0
        %2123 = vmatprep.mubr.f32.mxu0 0.0
        %2124 = vmatmul.mubr.f32.gmra.mxu0 %v820
        %v2125 = vpop.f32.mrf.mxu0
        %v2126 = vadd.f32 %v1901, %v2125
        %v2127 = vpop.f32.mrf.mxu0
        %2128 = vmatprep.mubr.f32.mxu0 0.0
        %2129 = vmatmul.mubr.f32.gmra.mxu0 %v821
        %v2130 = vpop.f32.mrf.mxu0
        %v2131 = vadd.f32 %v1906, %v2130
        %v2132 = vpop.f32.mrf.mxu0
        %2133 = vmatprep.mubr.f32.mxu0 0.0
        %2134 = vmatmul.mubr.f32.gmra.mxu0 %v822
        %v2135 = vpop.f32.mrf.mxu0
        %v2136 = vadd.f32 %v1911, %v2135
        %v2137 = vpop.f32.mrf.mxu0
        %2138 = vmatprep.mubr.f32.mxu0 0.0
        %2139 = vmatmul.mubr.f32.gmra.mxu0 %v823
        %v2140 = vpop.f32.mrf.mxu0
        %v2141 = vadd.f32 %v1916, %v2140
        %v2142 = vpop.f32.mrf.mxu0
        %2143 = vmatprep.mubr.f32.mxu0 0.0
        %2144 = vmatmul.mubr.f32.gmra.mxu0 %v824
        %v2145 = vpop.f32.mrf.mxu0
        %v2146 = vadd.f32 %v1921, %v2145
        %v2147 = vpop.f32.mrf.mxu0
        %2148 = vmatprep.mubr.f32.mxu0 0.0
        %2149 = vmatmul.mubr.f32.gmra.mxu0 %v825
        %v2150 = vpop.f32.mrf.mxu0
        %v2151 = vadd.f32 %v1926, %v2150
        %v2152 = vpop.f32.mrf.mxu0
        %2153 = vmatprep.mubr.f32.mxu0 0.0
        %2154 = vmatmul.mubr.f32.gmra.mxu0 %v826
        %v2155 = vpop.f32.mrf.mxu0
        %v2156 = vadd.f32 %v1931, %v2155
        %v2157 = vpop.f32.mrf.mxu0
        %2158 = vmatprep.mubr.f32.mxu0 0.0
        %2159 = vmatmul.mubr.f32.gmra.mxu0 %v827
        %v2160 = vpop.f32.mrf.mxu0
        %v2161 = vadd.f32 %v1936, %v2160
        %v2162 = vpop.f32.mrf.mxu0
        %2163 = vmatprep.mubr.f32.mxu0 0.0
        %2164 = vmatmul.mubr.f32.gmra.mxu0 %v828
        %v2165 = vpop.f32.mrf.mxu0
        %v2166 = vadd.f32 %v1941, %v2165
        %v2167 = vpop.f32.mrf.mxu0
        %2168 = vmatprep.mubr.f32.mxu0 0.0
        %2169 = vmatmul.mubr.f32.gmra.mxu0 %v829
        %v2170 = vpop.f32.mrf.mxu0
        %v2171 = vadd.f32 %v1946, %v2170
        %v2172 = vpop.f32.mrf.mxu0
        %2173 = vmatprep.mubr.f32.mxu0 0.0
        %2174 = vmatmul.mubr.f32.gmra.mxu0 %v830
        %v2175 = vpop.f32.mrf.mxu0
        %v2176 = vadd.f32 %v1951, %v2175
        %v2177 = vpop.f32.mrf.mxu0
        %2178 = vmatprep.mubr.f32.mxu0 0.0
        %2179 = vmatmul.mubr.f32.gmra.mxu0 %v831
        %v2180 = vpop.f32.mrf.mxu0
        %v2181 = vadd.f32 %v1956, %v2180
        %v2182 = vpop.f32.mrf.mxu0
        %2183 = vmatprep.mubr.f32.mxu0 0.0
        %2184 = vmatmul.mubr.f32.gmra.mxu0 %v832
        %v2185 = vpop.f32.mrf.mxu0
        %v2186 = vadd.f32 %v1961, %v2185
        %v2187 = vpop.f32.mrf.mxu0
        %2188 = vmatprep.mubr.f32.mxu0 0.0
        %2189 = vmatmul.mubr.f32.gmra.mxu0 %v833
        %v2190 = vpop.f32.mrf.mxu0
        %v2191 = vadd.f32 %v1966, %v2190
        %v2192 = vpop.f32.mrf.mxu0
        %2193 = vmatprep.mubr.f32.mxu0 0.0
        %2194 = vmatmul.mubr.f32.gmra.mxu0 %v834
        %v2195 = vpop.f32.mrf.mxu0
        %v2196 = vadd.f32 %v1971, %v2195
        %v2197 = vpop.f32.mrf.mxu0
        %2198 = vmatprep.mubr.f32.mxu0 0.0
        %2199 = vmatmul.mubr.f32.gmra.mxu0 %v835
        %v2200 = vpop.f32.mrf.mxu0
        %v2201 = vadd.f32 %v1976, %v2200
        %v2202 = vpop.f32.mrf.mxu0
        %2203 = vmatprep.mubr.f32.mxu0 0.0
        %2204 = vmatmul.mubr.f32.gmra.mxu0 %v836
        %v2205 = vpop.f32.mrf.mxu0
        %v2206 = vadd.f32 %v1981, %v2205
        %v2207 = vpop.f32.mrf.mxu0
        %2208 = vdwg.mxu0
        %2209 = vst [vmem:[%s282 + $0x2] sm:$0xff] %v1711
        %2210 = vst [vmem:[%s282 + $0xa] sm:$0xff] %v1712
        %2211 = vst [vmem:[%s282 + $0x1a] sm:$0xff] %v1713
        %2212 = vst [vmem:[%s282 + $0x22] sm:$0xff] %v1714
        %2213 = vst [vmem:[%s282 + $0x32] sm:$0xff] %v1715
        %2214 = vst [vmem:[%s282 + $0x3a] sm:$0xff] %v1716
        %2215 = vst [vmem:[%s282 + $0x4a] sm:$0xff] %v1717
        %2216 = vst [vmem:[%s282 + $0x52] sm:$0xff] %v1718
        %2217 = vst [vmem:[%s282 + $0x62] sm:$0xff] %v1719
        %2218 = vst [vmem:[%s282 + $0x6a] sm:$0xff] %v1720
        %2219 = vst [vmem:[%s282 + $0x7a] sm:$0xff] %v1721
        %2220 = vst [vmem:[%s282 + $0x82] sm:$0xff] %v1722
        %2221 = vst [vmem:[%s282 + $0x92] sm:$0xff] %v1723
        %2222 = vst [vmem:[%s282 + $0x9a] sm:$0xff] %v1724
        %2223 = vst [vmem:[%s282 + $0xaa] sm:$0xff] %v1725
        %2224 = vst [vmem:[%s282 + $0xb2] sm:$0xff] %v1726
        %2225 = vst [vmem:[%s282 + $0xc2] sm:$0xff] %v1727
        %2226 = vst [vmem:[%s282 + $0xca] sm:$0xff] %v1728
        %2227 = vst [vmem:[%s282 + $0xda] sm:$0xff] %v1729
        %2228 = vst [vmem:[%s282 + $0xe2] sm:$0xff] %v1730
        %2229 = vst [vmem:[%s282 + $0xf2] sm:$0xff] %v1731
        %2230 = vst [vmem:[%s282 + $0xfa] sm:$0xff] %v1732
        %2231 = vst [vmem:[%s282 + $0x10a] sm:$0xff] %v1733
        %2232 = vst [vmem:[%s282 + $0x112] sm:$0xff] %v1734
        %2233 = vst [vmem:[%s282 + $0x122] sm:$0xff] %v1735
        %2234 = vst [vmem:[%s282 + $0x12a] sm:$0xff] %v1736
        %2235 = vst [vmem:[%s282 + $0x13a] sm:$0xff] %v1737
        %2236 = vst [vmem:[%s282 + $0x142] sm:$0xff] %v1738
        %2237 = vst [vmem:[%s282 + $0x152] sm:$0xff] %v1739
        %2238 = vst [vmem:[%s282 + $0x15a] sm:$0xff] %v1740
        %2239 = vst [vmem:[%s282 + $0x16a] sm:$0xff] %v1741
        %2240 = vst [vmem:[%s282 + $0x172] sm:$0xff] %v1742
        %v2241 = vld [vmem:[#allocation3] sm:$0xff]
        %v2242 = vld [vmem:[#allocation3 + $0x8] sm:$0xff]
        %v2243 = vld [vmem:[#allocation3 + $0x10] sm:$0xf]
        %v2244 = vld [vmem:[#allocation3 + $0x18] sm:$0xff]
        %v2245 = vld [vmem:[#allocation3 + $0x20] sm:$0xff]
        %v2246 = vld [vmem:[#allocation3 + $0x28] sm:$0xf]
        %v2247 = vld [vmem:[#allocation3 + $0x30] sm:$0xff]
        %v2248 = vld [vmem:[#allocation3 + $0x38] sm:$0xff]
        %v2249 = vld [vmem:[#allocation3 + $0x40] sm:$0xf]
        %v2250 = vld [vmem:[#allocation3 + $0x48] sm:$0xff]
        %v2251 = vld [vmem:[#allocation3 + $0x50] sm:$0xff]
        %v2252 = vld [vmem:[#allocation3 + $0x58] sm:$0xf]
        %v2253 = vld [vmem:[#allocation3 + $0x60] sm:$0xff]
        %v2254 = vld [vmem:[#allocation3 + $0x68] sm:$0xff]
        %v2255 = vld [vmem:[#allocation3 + $0x70] sm:$0xf]
        %v2256 = vld [vmem:[#allocation3 + $0x78] sm:$0xff]
        %v2257 = vld [vmem:[#allocation3 + $0x80] sm:$0xff]
        %v2258 = vld [vmem:[#allocation3 + $0x88] sm:$0xf]
        %v2259 = vld [vmem:[#allocation3 + $0x90] sm:$0xff]
        %v2260 = vld [vmem:[#allocation3 + $0x98] sm:$0xff]
        %v2261 = vld [vmem:[#allocation3 + $0xa0] sm:$0xf]
        %v2262 = vld [vmem:[#allocation3 + $0xa8] sm:$0xff]
        %v2263 = vld [vmem:[#allocation3 + $0xb0] sm:$0xff]
        %v2264 = vld [vmem:[#allocation3 + $0xb8] sm:$0xf]
        %v2265 = vld [vmem:[#allocation3 + $0xc0] sm:$0xff]
        %v2266 = vld [vmem:[#allocation3 + $0xc8] sm:$0xff]
        %v2267 = vld [vmem:[#allocation3 + $0xd0] sm:$0xf]
        %v2268 = vld [vmem:[#allocation3 + $0xd8] sm:$0xff]
        %v2269 = vld [vmem:[#allocation3 + $0xe0] sm:$0xff]
        %v2270 = vld [vmem:[#allocation3 + $0xe8] sm:$0xf]
        %v2271 = vld [vmem:[#allocation3 + $0xf0] sm:$0xff]
        %v2272 = vld [vmem:[#allocation3 + $0xf8] sm:$0xff]
        %v2273 = vld [vmem:[#allocation3 + $0x100] sm:$0xf]
        %v2274 = vld [vmem:[#allocation3 + $0x108] sm:$0xff]
        %v2275 = vld [vmem:[#allocation3 + $0x110] sm:$0xff]
        %v2276 = vld [vmem:[#allocation3 + $0x118] sm:$0xf]
        %v2277 = vld [vmem:[#allocation3 + $0x120] sm:$0xff]
        %v2278 = vld [vmem:[#allocation3 + $0x128] sm:$0xff]
        %v2279 = vld [vmem:[#allocation3 + $0x130] sm:$0xf]
        %v2280 = vld [vmem:[#allocation3 + $0x138] sm:$0xff]
        %v2281 = vld [vmem:[#allocation3 + $0x140] sm:$0xff]
        %v2282 = vld [vmem:[#allocation3 + $0x148] sm:$0xf]
        %v2283 = vld [vmem:[#allocation3 + $0x150] sm:$0xff]
        %v2284 = vld [vmem:[#allocation3 + $0x158] sm:$0xff]
        %v2285 = vld [vmem:[#allocation3 + $0x160] sm:$0xf]
        %v2286 = vld [vmem:[#allocation3 + $0x168] sm:$0xff]
        %v2287 = vld [vmem:[#allocation3 + $0x170] sm:$0xff]
        %v2288 = vld [vmem:[#allocation3 + $0x178] sm:$0xf]
        %v2289 = vld [vmem:[#allocation3 + $0x180] sm:$0xff]
        %v2290 = vld [vmem:[#allocation3 + $0x188] sm:$0xff]
        %v2291 = vld [vmem:[#allocation3 + $0x190] sm:$0xf]
        %v2292 = vld [vmem:[#allocation3 + $0x198] sm:$0xff]
        %v2293 = vld [vmem:[#allocation3 + $0x1a0] sm:$0xff]
        %v2294 = vld [vmem:[#allocation3 + $0x1a8] sm:$0xf]
        %v2295 = vld [vmem:[#allocation3 + $0x1b0] sm:$0xff]
        %v2296 = vld [vmem:[#allocation3 + $0x1b8] sm:$0xff]
        %v2297 = vld [vmem:[#allocation3 + $0x1c0] sm:$0xf]
        %v2298 = vld [vmem:[#allocation3 + $0x1c8] sm:$0xff]
        %v2299 = vld [vmem:[#allocation3 + $0x1d0] sm:$0xff]
        %v2300 = vld [vmem:[#allocation3 + $0x1d8] sm:$0xf]
        %v2301 = vmax.f32 %v2241, %v2244
        %v2302 = vmax.f32 %v2242, %v2245
        %v2303 = vmax.f32 %v2243, %v2246
        %v2304 = vmax.f32 %v2244, %v2247
        %v2305 = vmax.f32 %v2245, %v2248
        %v2306 = vmax.f32 %v2246, %v2249
        %v2307 = vmax.f32 %v2247, %v2250
        %v2308 = vmax.f32 %v2248, %v2251
        %v2309 = vmax.f32 %v2249, %v2252
        %v2310 = vmax.f32 %v2250, %v2253
        %v2311 = vmax.f32 %v2251, %v2254
        %v2312 = vmax.f32 %v2252, %v2255
        %v2313 = vmax.f32 %v2253, %v2256
        %v2314 = vmax.f32 %v2254, %v2257
        %v2315 = vmax.f32 %v2255, %v2258
        %v2316 = vmax.f32 %v2256, %v2259
        %v2317 = vmax.f32 %v2257, %v2260
        %v2318 = vmax.f32 %v2258, %v2261
        %v2319 = vmax.f32 %v2259, %v2262
        %v2320 = vmax.f32 %v2260, %v2263
        %v2321 = vmax.f32 %v2261, %v2264
        %v2322 = vmax.f32 %v2262, %v2265
        %v2323 = vmax.f32 %v2263, %v2266
        %v2324 = vmax.f32 %v2264, %v2267
        %v2325 = vmax.f32 %v2265, %v2268
        %v2326 = vmax.f32 %v2266, %v2269
        %v2327 = vmax.f32 %v2267, %v2270
        %v2328 = vmax.f32 %v2268, %v2271
        %v2329 = vmax.f32 %v2269, %v2272
        %v2330 = vmax.f32 %v2270, %v2273
        %v2331 = vmax.f32 %v2271, %v2274
        %v2332 = vmax.f32 %v2272, %v2275
        %v2333 = vmax.f32 %v2273, %v2276
        %v2334 = vmax.f32 %v2274, %v2277
        %v2335 = vmax.f32 %v2275, %v2278
        %v2336 = vmax.f32 %v2276, %v2279
        %v2337 = vmax.f32 %v2277, %v2280
        %v2338 = vmax.f32 %v2278, %v2281
        %v2339 = vmax.f32 %v2279, %v2282
        %v2340 = vmax.f32 %v2280, %v2283
        %v2341 = vmax.f32 %v2281, %v2284
        %v2342 = vmax.f32 %v2282, %v2285
        %v2343 = vmax.f32 %v2283, %v2286
        %v2344 = vmax.f32 %v2284, %v2287
        %v2345 = vmax.f32 %v2285, %v2288
        %v2346 = vmax.f32 %v2286, %v2289
        %v2347 = vmax.f32 %v2287, %v2290
        %v2348 = vmax.f32 %v2288, %v2291
        %v2349 = vmax.f32 %v2289, %v2292
        %v2350 = vmax.f32 %v2290, %v2293
        %v2351 = vmax.f32 %v2291, %v2294
        %v2352 = vmax.f32 %v2292, %v2295
        %v2353 = vmax.f32 %v2293, %v2296
        %v2354 = vmax.f32 %v2294, %v2297
        %v2355 = vmax.f32 %v2295, %v2298
        %v2356 = vmax.f32 %v2296, %v2299
        %v2357 = vmax.f32 %v2297, %v2300
        %v2358 = vmax.f32 %v2301, %v2307
        %v2359 = vmax.f32 %v2302, %v2308
        %v2360 = vmax.f32 %v2303, %v2309
        %v2361 = vmax.f32 %v2304, %v2310
        %v2362 = vmax.f32 %v2305, %v2311
        %v2363 = vmax.f32 %v2306, %v2312
        %v2364 = vmax.f32 %v2307, %v2313
        %v2365 = vmax.f32 %v2308, %v2314
        %v2366 = vmax.f32 %v2309, %v2315
        %v2367 = vmax.f32 %v2310, %v2316
        %v2368 = vmax.f32 %v2311, %v2317
        %v2369 = vmax.f32 %v2312, %v2318
        %v2370 = vmax.f32 %v2313, %v2319
        %v2371 = vmax.f32 %v2314, %v2320
        %v2372 = vmax.f32 %v2315, %v2321
        %v2373 = vmax.f32 %v2316, %v2322
        %v2374 = vmax.f32 %v2317, %v2323
        %v2375 = vmax.f32 %v2318, %v2324
        %v2376 = vmax.f32 %v2319, %v2325
        %v2377 = vmax.f32 %v2320, %v2326
        %v2378 = vmax.f32 %v2321, %v2327
        %v2379 = vmax.f32 %v2322, %v2328
        %v2380 = vmax.f32 %v2323, %v2329
        %v2381 = vmax.f32 %v2324, %v2330
        %v2382 = vmax.f32 %v2325, %v2331
        %v2383 = vmax.f32 %v2326, %v2332
        %v2384 = vmax.f32 %v2327, %v2333
        %v2385 = vmax.f32 %v2328, %v2334
        %v2386 = vmax.f32 %v2329, %v2335
        %v2387 = vmax.f32 %v2330, %v2336
        %v2388 = vmax.f32 %v2331, %v2337
        %v2389 = vmax.f32 %v2332, %v2338
        %v2390 = vmax.f32 %v2333, %v2339
        %v2391 = vmax.f32 %v2334, %v2340
        %v2392 = vmax.f32 %v2335, %v2341
        %v2393 = vmax.f32 %v2336, %v2342
        %v2394 = vmax.f32 %v2337, %v2343
        %v2395 = vmax.f32 %v2338, %v2344
        %v2396 = vmax.f32 %v2339, %v2345
        %v2397 = vmax.f32 %v2340, %v2346
        %v2398 = vmax.f32 %v2341, %v2347
        %v2399 = vmax.f32 %v2342, %v2348
        %v2400 = vmax.f32 %v2343, %v2349
        %v2401 = vmax.f32 %v2344, %v2350
        %v2402 = vmax.f32 %v2345, %v2351
        %v2403 = vmax.f32 %v2346, %v2352
        %v2404 = vmax.f32 %v2347, %v2353
        %v2405 = vmax.f32 %v2348, %v2354
        %v2406 = vmax.f32 %v2349, %v2355
        %v2407 = vmax.f32 %v2350, %v2356
        %v2408 = vmax.f32 %v2351, %v2357
        %v2409 = vmax.f32 %v2358, %v2361
        %v2410 = vmax.f32 %v2359, %v2362
        %v2411 = vmax.f32 %v2360, %v2363
        %v2412 = vmax.f32 %v2361, %v2364
        %v2413 = vmax.f32 %v2362, %v2365
        %v2414 = vmax.f32 %v2363, %v2366
        %v2415 = vmax.f32 %v2364, %v2367
        %v2416 = vmax.f32 %v2365, %v2368
        %v2417 = vmax.f32 %v2366, %v2369
        %v2418 = vmax.f32 %v2367, %v2370
        %v2419 = vmax.f32 %v2368, %v2371
        %v2420 = vmax.f32 %v2369, %v2372
        %v2421 = vmax.f32 %v2370, %v2373
        %v2422 = vmax.f32 %v2371, %v2374
        %v2423 = vmax.f32 %v2372, %v2375
        %v2424 = vmax.f32 %v2373, %v2376
        %v2425 = vmax.f32 %v2374, %v2377
        %v2426 = vmax.f32 %v2375, %v2378
        %v2427 = vmax.f32 %v2376, %v2379
        %v2428 = vmax.f32 %v2377, %v2380
        %v2429 = vmax.f32 %v2378, %v2381
        %v2430 = vmax.f32 %v2379, %v2382
        %v2431 = vmax.f32 %v2380, %v2383
        %v2432 = vmax.f32 %v2381, %v2384
        %v2433 = vmax.f32 %v2382, %v2385
        %v2434 = vmax.f32 %v2383, %v2386
        %v2435 = vmax.f32 %v2384, %v2387
        %v2436 = vmax.f32 %v2385, %v2388
        %v2437 = vmax.f32 %v2386, %v2389
        %v2438 = vmax.f32 %v2387, %v2390
        %v2439 = vmax.f32 %v2388, %v2391
        %v2440 = vmax.f32 %v2389, %v2392
        %v2441 = vmax.f32 %v2390, %v2393
        %v2442 = vmax.f32 %v2391, %v2394
        %v2443 = vmax.f32 %v2392, %v2395
        %v2444 = vmax.f32 %v2393, %v2396
        %v2445 = vmax.f32 %v2394, %v2397
        %v2446 = vmax.f32 %v2395, %v2398
        %v2447 = vmax.f32 %v2396, %v2399
        %v2448 = vmax.f32 %v2397, %v2400
        %v2449 = vmax.f32 %v2398, %v2401
        %v2450 = vmax.f32 %v2399, %v2402
        %v2451 = vmax.f32 %v2400, %v2403
        %v2452 = vmax.f32 %v2401, %v2404
        %v2453 = vmax.f32 %v2402, %v2405
        %v2454 = vmax.f32 %v2403, %v2406
        %v2455 = vmax.f32 %v2404, %v2407
        %v2456 = vmax.f32 %v2405, %v2408
        %v2505 = vrot.slane %v2409, 1
        %v2506 = vrot.slane %v2410, 1
        %v2507 = vsel %vm1149, %v2505, %v2506
        %v2508 = vrot.slane %v2411, 1
        %v2509 = vsel %vm1149, %v2506, %v2508
        %v2510 = vrot.slane %v2412, 1
        %v2511 = vrot.slane %v2413, 1
        %v2512 = vsel %vm1149, %v2510, %v2511
        %v2513 = vrot.slane %v2414, 1
        %v2514 = vsel %vm1149, %v2511, %v2513
        %v2515 = vrot.slane %v2415, 1
        %v2516 = vrot.slane %v2416, 1
        %v2517 = vsel %vm1149, %v2515, %v2516
        %v2518 = vrot.slane %v2417, 1
        %v2519 = vsel %vm1149, %v2516, %v2518
        %v2520 = vrot.slane %v2418, 1
        %v2521 = vrot.slane %v2419, 1
        %v2522 = vsel %vm1149, %v2520, %v2521
        %v2523 = vrot.slane %v2420, 1
        %v2524 = vsel %vm1149, %v2521, %v2523
        %v2525 = vrot.slane %v2421, 1
        %v2526 = vrot.slane %v2422, 1
        %v2527 = vsel %vm1149, %v2525, %v2526
        %v2528 = vrot.slane %v2423, 1
        %v2529 = vsel %vm1149, %v2526, %v2528
        %v2530 = vrot.slane %v2424, 1
        %v2531 = vrot.slane %v2425, 1
        %v2532 = vsel %vm1149, %v2530, %v2531
        %v2533 = vrot.slane %v2426, 1
        %v2534 = vsel %vm1149, %v2531, %v2533
        %v2535 = vrot.slane %v2427, 1
        %v2536 = vrot.slane %v2428, 1
        %v2537 = vsel %vm1149, %v2535, %v2536
        %v2538 = vrot.slane %v2429, 1
        %v2539 = vsel %vm1149, %v2536, %v2538
        %v2540 = vrot.slane %v2430, 1
        %v2541 = vrot.slane %v2431, 1
        %v2542 = vsel %vm1149, %v2540, %v2541
        %v2543 = vrot.slane %v2432, 1
        %v2544 = vsel %vm1149, %v2541, %v2543
        %v2545 = vrot.slane %v2433, 1
        %v2546 = vrot.slane %v2434, 1
        %v2547 = vsel %vm1149, %v2545, %v2546
        %v2548 = vrot.slane %v2435, 1
        %v2549 = vsel %vm1149, %v2546, %v2548
        %v2550 = vrot.slane %v2436, 1
        %v2551 = vrot.slane %v2437, 1
        %v2552 = vsel %vm1149, %v2550, %v2551
        %v2553 = vrot.slane %v2438, 1
        %v2554 = vsel %vm1149, %v2551, %v2553
        %v2555 = vrot.slane %v2439, 1
        %v2556 = vrot.slane %v2440, 1
        %v2557 = vsel %vm1149, %v2555, %v2556
        %v2558 = vrot.slane %v2441, 1
        %v2559 = vsel %vm1149, %v2556, %v2558
        %v2560 = vrot.slane %v2442, 1
        %v2561 = vrot.slane %v2443, 1
        %v2562 = vsel %vm1149, %v2560, %v2561
        %v2563 = vrot.slane %v2444, 1
        %v2564 = vsel %vm1149, %v2561, %v2563
        %v2565 = vrot.slane %v2445, 1
        %v2566 = vrot.slane %v2446, 1
        %v2567 = vsel %vm1149, %v2565, %v2566
        %v2568 = vrot.slane %v2447, 1
        %v2569 = vsel %vm1149, %v2566, %v2568
        %v2570 = vrot.slane %v2448, 1
        %v2571 = vrot.slane %v2449, 1
        %v2572 = vsel %vm1149, %v2570, %v2571
        %v2573 = vrot.slane %v2450, 1
        %v2574 = vsel %vm1149, %v2571, %v2573
        %v2575 = vrot.slane %v2451, 1
        %v2576 = vrot.slane %v2452, 1
        %v2577 = vsel %vm1149, %v2575, %v2576
        %v2578 = vrot.slane %v2453, 1
        %v2579 = vsel %vm1149, %v2576, %v2578
        %v2580 = vrot.slane %v2454, 1
        %v2581 = vrot.slane %v2455, 1
        %v2582 = vsel %vm1149, %v2580, %v2581
        %v2583 = vrot.slane %v2456, 1
        %v2584 = vsel %vm1149, %v2581, %v2583
        %v2633 = vmax.f32 %v2409, %v2507
        %v2634 = vmax.f32 %v2410, %v2509
        %v2635 = vmax.f32 %v2411, %v2508
        %v2636 = vmax.f32 %v2412, %v2512
        %v2637 = vmax.f32 %v2413, %v2514
        %v2638 = vmax.f32 %v2414, %v2513
        %v2639 = vmax.f32 %v2415, %v2517
        %v2640 = vmax.f32 %v2416, %v2519
        %v2641 = vmax.f32 %v2417, %v2518
        %v2642 = vmax.f32 %v2418, %v2522
        %v2643 = vmax.f32 %v2419, %v2524
        %v2644 = vmax.f32 %v2420, %v2523
        %v2645 = vmax.f32 %v2421, %v2527
        %v2646 = vmax.f32 %v2422, %v2529
        %v2647 = vmax.f32 %v2423, %v2528
        %v2648 = vmax.f32 %v2424, %v2532
        %v2649 = vmax.f32 %v2425, %v2534
        %v2650 = vmax.f32 %v2426, %v2533
        %v2651 = vmax.f32 %v2427, %v2537
        %v2652 = vmax.f32 %v2428, %v2539
        %v2653 = vmax.f32 %v2429, %v2538
        %v2654 = vmax.f32 %v2430, %v2542
        %v2655 = vmax.f32 %v2431, %v2544
        %v2656 = vmax.f32 %v2432, %v2543
        %v2657 = vmax.f32 %v2433, %v2547
        %v2658 = vmax.f32 %v2434, %v2549
        %v2659 = vmax.f32 %v2435, %v2548
        %v2660 = vmax.f32 %v2436, %v2552
        %v2661 = vmax.f32 %v2437, %v2554
        %v2662 = vmax.f32 %v2438, %v2553
        %v2663 = vmax.f32 %v2439, %v2557
        %v2664 = vmax.f32 %v2440, %v2559
        %v2665 = vmax.f32 %v2441, %v2558
        %v2666 = vmax.f32 %v2442, %v2562
        %v2667 = vmax.f32 %v2443, %v2564
        %v2668 = vmax.f32 %v2444, %v2563
        %v2669 = vmax.f32 %v2445, %v2567
        %v2670 = vmax.f32 %v2446, %v2569
        %v2671 = vmax.f32 %v2447, %v2568
        %v2672 = vmax.f32 %v2448, %v2572
        %v2673 = vmax.f32 %v2449, %v2574
        %v2674 = vmax.f32 %v2450, %v2573
        %v2675 = vmax.f32 %v2451, %v2577
        %v2676 = vmax.f32 %v2452, %v2579
        %v2677 = vmax.f32 %v2453, %v2578
        %v2678 = vmax.f32 %v2454, %v2582
        %v2679 = vmax.f32 %v2455, %v2584
        %v2680 = vmax.f32 %v2456, %v2583
        %v2729 = vrot.slane %v2633, 2
        %v2730 = vrot.slane %v2634, 2
        %v2731 = vsel %vm1374, %v2729, %v2730
        %v2732 = vrot.slane %v2635, 2
        %v2733 = vsel %vm1374, %v2730, %v2732
        %v2734 = vrot.slane %v2636, 2
        %v2735 = vrot.slane %v2637, 2
        %v2736 = vsel %vm1374, %v2734, %v2735
        %v2737 = vrot.slane %v2638, 2
        %v2738 = vsel %vm1374, %v2735, %v2737
        %v2739 = vrot.slane %v2639, 2
        %v2740 = vrot.slane %v2640, 2
        %v2741 = vsel %vm1374, %v2739, %v2740
        %v2742 = vrot.slane %v2641, 2
        %v2743 = vsel %vm1374, %v2740, %v2742
        %v2744 = vrot.slane %v2642, 2
        %v2745 = vrot.slane %v2643, 2
        %v2746 = vsel %vm1374, %v2744, %v2745
        %v2747 = vrot.slane %v2644, 2
        %v2748 = vsel %vm1374, %v2745, %v2747
        %v2749 = vrot.slane %v2645, 2
        %v2750 = vrot.slane %v2646, 2
        %v2751 = vsel %vm1374, %v2749, %v2750
        %v2752 = vrot.slane %v2647, 2
        %v2753 = vsel %vm1374, %v2750, %v2752
        %v2754 = vrot.slane %v2648, 2
        %v2755 = vrot.slane %v2649, 2
        %v2756 = vsel %vm1374, %v2754, %v2755
        %v2757 = vrot.slane %v2650, 2
        %v2758 = vsel %vm1374, %v2755, %v2757
        %v2759 = vrot.slane %v2651, 2
        %v2760 = vrot.slane %v2652, 2
        %v2761 = vsel %vm1374, %v2759, %v2760
        %v2762 = vrot.slane %v2653, 2
        %v2763 = vsel %vm1374, %v2760, %v2762
        %v2764 = vrot.slane %v2654, 2
        %v2765 = vrot.slane %v2655, 2
        %v2766 = vsel %vm1374, %v2764, %v2765
        %v2767 = vrot.slane %v2656, 2
        %v2768 = vsel %vm1374, %v2765, %v2767
        %v2769 = vrot.slane %v2657, 2
        %v2770 = vrot.slane %v2658, 2
        %v2771 = vsel %vm1374, %v2769, %v2770
        %v2772 = vrot.slane %v2659, 2
        %v2773 = vsel %vm1374, %v2770, %v2772
        %v2774 = vrot.slane %v2660, 2
        %v2775 = vrot.slane %v2661, 2
        %v2776 = vsel %vm1374, %v2774, %v2775
        %v2777 = vrot.slane %v2662, 2
        %v2778 = vsel %vm1374, %v2775, %v2777
        %v2779 = vrot.slane %v2663, 2
        %v2780 = vrot.slane %v2664, 2
        %v2781 = vsel %vm1374, %v2779, %v2780
        %v2782 = vrot.slane %v2665, 2
        %v2783 = vsel %vm1374, %v2780, %v2782
        %v2784 = vrot.slane %v2666, 2
        %v2785 = vrot.slane %v2667, 2
        %v2786 = vsel %vm1374, %v2784, %v2785
        %v2787 = vrot.slane %v2668, 2
        %v2788 = vsel %vm1374, %v2785, %v2787
        %v2789 = vrot.slane %v2669, 2
        %v2790 = vrot.slane %v2670, 2
        %v2791 = vsel %vm1374, %v2789, %v2790
        %v2792 = vrot.slane %v2671, 2
        %v2793 = vsel %vm1374, %v2790, %v2792
        %v2794 = vrot.slane %v2672, 2
        %v2795 = vrot.slane %v2673, 2
        %v2796 = vsel %vm1374, %v2794, %v2795
        %v2797 = vrot.slane %v2674, 2
        %v2798 = vsel %vm1374, %v2795, %v2797
        %v2799 = vrot.slane %v2675, 2
        %v2800 = vrot.slane %v2676, 2
        %v2801 = vsel %vm1374, %v2799, %v2800
        %v2802 = vrot.slane %v2677, 2
        %v2803 = vsel %vm1374, %v2800, %v2802
        %v2804 = vrot.slane %v2678, 2
        %v2805 = vrot.slane %v2679, 2
        %v2806 = vsel %vm1374, %v2804, %v2805
        %v2807 = vrot.slane %v2680, 2
        %v2808 = vsel %vm1374, %v2805, %v2807
        %v2857 = vmax.f32 %v2633, %v2731
        %v2858 = vmax.f32 %v2634, %v2733
        %v2859 = vmax.f32 %v2635, %v2732
        %v2860 = vmax.f32 %v2636, %v2736
        %v2861 = vmax.f32 %v2637, %v2738
        %v2862 = vmax.f32 %v2638, %v2737
        %v2863 = vmax.f32 %v2639, %v2741
        %v2864 = vmax.f32 %v2640, %v2743
        %v2865 = vmax.f32 %v2641, %v2742
        %v2866 = vmax.f32 %v2642, %v2746
        %v2867 = vmax.f32 %v2643, %v2748
        %v2868 = vmax.f32 %v2644, %v2747
        %v2869 = vmax.f32 %v2645, %v2751
        %v2870 = vmax.f32 %v2646, %v2753
        %v2871 = vmax.f32 %v2647, %v2752
        %v2872 = vmax.f32 %v2648, %v2756
        %v2873 = vmax.f32 %v2649, %v2758
        %v2874 = vmax.f32 %v2650, %v2757
        %v2875 = vmax.f32 %v2651, %v2761
        %v2876 = vmax.f32 %v2652, %v2763
        %v2877 = vmax.f32 %v2653, %v2762
        %v2878 = vmax.f32 %v2654, %v2766
        %v2879 = vmax.f32 %v2655, %v2768
        %v2880 = vmax.f32 %v2656, %v2767
        %v2881 = vmax.f32 %v2657, %v2771
        %v2882 = vmax.f32 %v2658, %v2773
        %v2883 = vmax.f32 %v2659, %v2772
        %v2884 = vmax.f32 %v2660, %v2776
        %v2885 = vmax.f32 %v2661, %v2778
        %v2886 = vmax.f32 %v2662, %v2777
        %v2887 = vmax.f32 %v2663, %v2781
        %v2888 = vmax.f32 %v2664, %v2783
        %v2889 = vmax.f32 %v2665, %v2782
        %v2890 = vmax.f32 %v2666, %v2786
        %v2891 = vmax.f32 %v2667, %v2788
        %v2892 = vmax.f32 %v2668, %v2787
        %v2893 = vmax.f32 %v2669, %v2791
        %v2894 = vmax.f32 %v2670, %v2793
        %v2895 = vmax.f32 %v2671, %v2792
        %v2896 = vmax.f32 %v2672, %v2796
        %v2897 = vmax.f32 %v2673, %v2798
        %v2898 = vmax.f32 %v2674, %v2797
        %v2899 = vmax.f32 %v2675, %v2801
        %v2900 = vmax.f32 %v2676, %v2803
        %v2901 = vmax.f32 %v2677, %v2802
        %v2902 = vmax.f32 %v2678, %v2806
        %v2903 = vmax.f32 %v2679, %v2808
        %v2904 = vmax.f32 %v2680, %v2807
        %v2953 = vrot.slane %v2857, 1
        %v2954 = vrot.slane %v2858, 1
        %v2955 = vsel %vm1149, %v2953, %v2954
        %v2956 = vrot.slane %v2859, 1
        %v2957 = vsel %vm1149, %v2954, %v2956
        %v2958 = vrot.slane %v2860, 1
        %v2959 = vrot.slane %v2861, 1
        %v2960 = vsel %vm1149, %v2958, %v2959
        %v2961 = vrot.slane %v2862, 1
        %v2962 = vsel %vm1149, %v2959, %v2961
        %v2963 = vrot.slane %v2863, 1
        %v2964 = vrot.slane %v2864, 1
        %v2965 = vsel %vm1149, %v2963, %v2964
        %v2966 = vrot.slane %v2865, 1
        %v2967 = vsel %vm1149, %v2964, %v2966
        %v2968 = vrot.slane %v2866, 1
        %v2969 = vrot.slane %v2867, 1
        %v2970 = vsel %vm1149, %v2968, %v2969
        %v2971 = vrot.slane %v2868, 1
        %v2972 = vsel %vm1149, %v2969, %v2971
        %v2973 = vrot.slane %v2869, 1
        %v2974 = vrot.slane %v2870, 1
        %v2975 = vsel %vm1149, %v2973, %v2974
        %v2976 = vrot.slane %v2871, 1
        %v2977 = vsel %vm1149, %v2974, %v2976
        %v2978 = vrot.slane %v2872, 1
        %v2979 = vrot.slane %v2873, 1
        %v2980 = vsel %vm1149, %v2978, %v2979
        %v2981 = vrot.slane %v2874, 1
        %v2982 = vsel %vm1149, %v2979, %v2981
        %v2983 = vrot.slane %v2875, 1
        %v2984 = vrot.slane %v2876, 1
        %v2985 = vsel %vm1149, %v2983, %v2984
        %v2986 = vrot.slane %v2877, 1
        %v2987 = vsel %vm1149, %v2984, %v2986
        %v2988 = vrot.slane %v2878, 1
        %v2989 = vrot.slane %v2879, 1
        %v2990 = vsel %vm1149, %v2988, %v2989
        %v2991 = vrot.slane %v2880, 1
        %v2992 = vsel %vm1149, %v2989, %v2991
        %v2993 = vrot.slane %v2881, 1
        %v2994 = vrot.slane %v2882, 1
        %v2995 = vsel %vm1149, %v2993, %v2994
        %v2996 = vrot.slane %v2883, 1
        %v2997 = vsel %vm1149, %v2994, %v2996
        %v2998 = vrot.slane %v2884, 1
        %v2999 = vrot.slane %v2885, 1
        %v3000 = vsel %vm1149, %v2998, %v2999
        %v3001 = vrot.slane %v2886, 1
        %v3002 = vsel %vm1149, %v2999, %v3001
        %v3003 = vrot.slane %v2887, 1
        %v3004 = vrot.slane %v2888, 1
        %v3005 = vsel %vm1149, %v3003, %v3004
        %v3006 = vrot.slane %v2889, 1
        %v3007 = vsel %vm1149, %v3004, %v3006
        %v3008 = vrot.slane %v2890, 1
        %v3009 = vrot.slane %v2891, 1
        %v3010 = vsel %vm1149, %v3008, %v3009
        %v3011 = vrot.slane %v2892, 1
        %v3012 = vsel %vm1149, %v3009, %v3011
        %v3013 = vrot.slane %v2893, 1
        %v3014 = vrot.slane %v2894, 1
        %v3015 = vsel %vm1149, %v3013, %v3014
        %v3016 = vrot.slane %v2895, 1
        %v3017 = vsel %vm1149, %v3014, %v3016
        %v3018 = vrot.slane %v2896, 1
        %v3019 = vrot.slane %v2897, 1
        %v3020 = vsel %vm1149, %v3018, %v3019
        %v3021 = vrot.slane %v2898, 1
        %v3022 = vsel %vm1149, %v3019, %v3021
        %v3023 = vrot.slane %v2899, 1
        %v3024 = vrot.slane %v2900, 1
        %v3025 = vsel %vm1149, %v3023, %v3024
        %v3026 = vrot.slane %v2901, 1
        %v3027 = vsel %vm1149, %v3024, %v3026
        %v3028 = vrot.slane %v2902, 1
        %v3029 = vrot.slane %v2903, 1
        %v3030 = vsel %vm1149, %v3028, %v3029
        %v3031 = vrot.slane %v2904, 1
        %v3032 = vsel %vm1149, %v3029, %v3031
        %v3065 = vmax.f32 %v2857, %v2955
        %v3066 = vmax.f32 %v2858, %v2957
        %v3067 = vmax.f32 %v2860, %v2960
        %v3068 = vmax.f32 %v2861, %v2962
        %v3069 = vmax.f32 %v2863, %v2965
        %v3070 = vmax.f32 %v2864, %v2967
        %v3071 = vmax.f32 %v2866, %v2970
        %v3072 = vmax.f32 %v2867, %v2972
        %v3073 = vmax.f32 %v2869, %v2975
        %v3074 = vmax.f32 %v2870, %v2977
        %v3075 = vmax.f32 %v2872, %v2980
        %v3076 = vmax.f32 %v2873, %v2982
        %v3077 = vmax.f32 %v2875, %v2985
        %v3078 = vmax.f32 %v2876, %v2987
        %v3079 = vmax.f32 %v2878, %v2990
        %v3080 = vmax.f32 %v2879, %v2992
        %v3081 = vmax.f32 %v2881, %v2995
        %v3082 = vmax.f32 %v2882, %v2997
        %v3083 = vmax.f32 %v2884, %v3000
        %v3084 = vmax.f32 %v2885, %v3002
        %v3085 = vmax.f32 %v2887, %v3005
        %v3086 = vmax.f32 %v2888, %v3007
        %v3087 = vmax.f32 %v2890, %v3010
        %v3088 = vmax.f32 %v2891, %v3012
        %v3089 = vmax.f32 %v2893, %v3015
        %v3090 = vmax.f32 %v2894, %v3017
        %v3091 = vmax.f32 %v2896, %v3020
        %v3092 = vmax.f32 %v2897, %v3022
        %v3093 = vmax.f32 %v2899, %v3025
        %v3094 = vmax.f32 %v2900, %v3027
        %v3095 = vmax.f32 %v2902, %v3030
        %v3096 = vmax.f32 %v2903, %v3032
        %v3097 = vld [vmem:[%s3 + $0x100] sm:$0xff]
        %v3098 = vld [vmem:[%s3 + $0x108] sm:$0xff]
        %v3099 = vld [vmem:[%s3 + $0x110] sm:$0xff]
        %v3100 = vld [vmem:[%s3 + $0x118] sm:$0xff]
        %v3101 = vld [vmem:[%s3 + $0x120] sm:$0xff]
        %v3102 = vld [vmem:[%s3 + $0x128] sm:$0xff]
        %v3103 = vld [vmem:[%s3 + $0x130] sm:$0xff]
        %v3104 = vld [vmem:[%s3 + $0x138] sm:$0xff]
        %v3105 = vld [vmem:[%s3 + $0x140] sm:$0xff]
        %v3106 = vld [vmem:[%s3 + $0x148] sm:$0xff]
        %v3107 = vld [vmem:[%s3 + $0x150] sm:$0xff]
        %v3108 = vld [vmem:[%s3 + $0x158] sm:$0xff]
        %v3109 = vld [vmem:[%s3 + $0x160] sm:$0xff]
        %v3110 = vld [vmem:[%s3 + $0x168] sm:$0xff]
        %v3111 = vld [vmem:[%s3 + $0x170] sm:$0xff]
        %v3112 = vld [vmem:[%s3 + $0x178] sm:$0xff]
        %3113 = vmatprep.subr.mxu0 0.0
        %3114 = vmatpush1.msra.mxu0 %v3112
        %3115 = vmatprep.subr.mxu0 0.0
        %3116 = vmatpush1.msra.mxu0 %v3111
        %3117 = vmatprep.subr.mxu0 0.0
        %3118 = vmatpush1.msra.mxu0 %v3110
        %3119 = vmatprep.subr.mxu0 0.0
        %3120 = vmatpush1.msra.mxu0 %v3109
        %3121 = vmatprep.subr.mxu0 0.0
        %3122 = vmatpush1.msra.mxu0 %v3108
        %3123 = vmatprep.subr.mxu0 0.0
        %3124 = vmatpush1.msra.mxu0 %v3107
        %3125 = vmatprep.subr.mxu0 0.0
        %3126 = vmatpush1.msra.mxu0 %v3106
        %3127 = vmatprep.subr.mxu0 0.0
        %3128 = vmatpush1.msra.mxu0 %v3105
        %3129 = vmatprep.subr.mxu0 0.0
        %3130 = vmatpush1.msra.mxu0 %v3104
        %3131 = vmatprep.subr.mxu0 0.0
        %3132 = vmatpush1.msra.mxu0 %v3103
        %3133 = vmatprep.subr.mxu0 0.0
        %3134 = vmatpush1.msra.mxu0 %v3102
        %3135 = vmatprep.subr.mxu0 0.0
        %3136 = vmatpush1.msra.mxu0 %v3101
        %3137 = vmatprep.subr.mxu0 0.0
        %3138 = vmatpush1.msra.mxu0 %v3100
        %3139 = vmatprep.subr.mxu0 0.0
        %3140 = vmatpush1.msra.mxu0 %v3099
        %3141 = vmatprep.subr.mxu0 0.0
        %3142 = vmatpush1.msra.mxu0 %v3098
        %3143 = vmatprep.subr.mxu0 0.0
        %3144 = vmatpush1.msra.mxu0 %v3097
        %3145 = vmatprep.subr.mxu0 0.0
        %3146 = vmatpush2.msra.mxu0 0.0
        %3147 = vmatprep.subr.mxu0 0.0
        %3148 = vmatpush2.msra.mxu0 0.0
        %3149 = vmatprep.subr.mxu0 0.0
        %3150 = vmatpush2.msra.mxu0 0.0
        %3151 = vmatprep.subr.mxu0 0.0
        %3152 = vmatpush2.msra.mxu0 0.0
        %3153 = vmatprep.subr.mxu0 0.0
        %3154 = vmatpush2.msra.mxu0 0.0
        %3155 = vmatprep.subr.mxu0 0.0
        %3156 = vmatpush2.msra.mxu0 0.0
        %3157 = vmatprep.subr.mxu0 0.0
        %3158 = vmatpush2.msra.mxu0 0.0
        %3159 = vmatprep.subr.mxu0 0.0
        %3160 = vmatpush2.msra.mxu0 0.0
        %3161 = vmatprep.subr.mxu0 0.0
        %3162 = vmatpush2.msra.mxu0 0.0
        %3163 = vmatprep.subr.mxu0 0.0
        %3164 = vmatpush2.msra.mxu0 0.0
        %3165 = vmatprep.subr.mxu0 0.0
        %3166 = vmatpush2.msra.mxu0 0.0
        %3167 = vmatprep.subr.mxu0 0.0
        %3168 = vmatpush2.msra.mxu0 0.0
        %3169 = vmatprep.subr.mxu0 0.0
        %3170 = vmatpush2.msra.mxu0 0.0
        %3171 = vmatprep.subr.mxu0 0.0
        %3172 = vmatpush2.msra.mxu0 0.0
        %3173 = vmatprep.subr.mxu0 0.0
        %3174 = vmatpush2.msra.mxu0 0.0
        %3175 = vmatprep.subr.mxu0 0.0
        %3176 = vmatpush2.msra.mxu0 0.0
        %3177 = vmatprep.mubr.f32.mxu0 0.0
        %3178 = vmatmul.mubr.f32.gmra.mxu0 %v3065
        %v3179 = vpop.f32.mrf.mxu0
        %v3180 = vadd.f32 0.0, %v3179
        %v3181 = vpop.f32.mrf.mxu0
        %3182 = vmatprep.mubr.f32.mxu0 0.0
        %3183 = vmatmul.mubr.f32.gmra.mxu0 %v3066
        %v3184 = vpop.f32.mrf.mxu0
        %v3185 = vadd.f32 0.0, %v3184
        %v3186 = vpop.f32.mrf.mxu0
        %3187 = vmatprep.mubr.f32.mxu0 0.0
        %3188 = vmatmul.mubr.f32.gmra.mxu0 %v3067
        %v3189 = vpop.f32.mrf.mxu0
        %v3190 = vadd.f32 0.0, %v3189
        %v3191 = vpop.f32.mrf.mxu0
        %3192 = vmatprep.mubr.f32.mxu0 0.0
        %3193 = vmatmul.mubr.f32.gmra.mxu0 %v3068
        %v3194 = vpop.f32.mrf.mxu0
        %v3195 = vadd.f32 0.0, %v3194
        %v3196 = vpop.f32.mrf.mxu0
        %3197 = vmatprep.mubr.f32.mxu0 0.0
        %3198 = vmatmul.mubr.f32.gmra.mxu0 %v3069
        %v3199 = vpop.f32.mrf.mxu0
        %v3200 = vadd.f32 0.0, %v3199
        %v3201 = vpop.f32.mrf.mxu0
        %3202 = vmatprep.mubr.f32.mxu0 0.0
        %3203 = vmatmul.mubr.f32.gmra.mxu0 %v3070
        %v3204 = vpop.f32.mrf.mxu0
        %v3205 = vadd.f32 0.0, %v3204
        %v3206 = vpop.f32.mrf.mxu0
        %3207 = vmatprep.mubr.f32.mxu0 0.0
        %3208 = vmatmul.mubr.f32.gmra.mxu0 %v3071
        %v3209 = vpop.f32.mrf.mxu0
        %v3210 = vadd.f32 0.0, %v3209
        %v3211 = vpop.f32.mrf.mxu0
        %3212 = vmatprep.mubr.f32.mxu0 0.0
        %3213 = vmatmul.mubr.f32.gmra.mxu0 %v3072
        %v3214 = vpop.f32.mrf.mxu0
        %v3215 = vadd.f32 0.0, %v3214
        %v3216 = vpop.f32.mrf.mxu0
        %3217 = vmatprep.mubr.f32.mxu0 0.0
        %3218 = vmatmul.mubr.f32.gmra.mxu0 %v3073
        %v3219 = vpop.f32.mrf.mxu0
        %v3220 = vadd.f32 0.0, %v3219
        %v3221 = vpop.f32.mrf.mxu0
        %3222 = vmatprep.mubr.f32.mxu0 0.0
        %3223 = vmatmul.mubr.f32.gmra.mxu0 %v3074
        %v3224 = vpop.f32.mrf.mxu0
        %v3225 = vadd.f32 0.0, %v3224
        %v3226 = vpop.f32.mrf.mxu0
        %3227 = vmatprep.mubr.f32.mxu0 0.0
        %3228 = vmatmul.mubr.f32.gmra.mxu0 %v3075
        %v3229 = vpop.f32.mrf.mxu0
        %v3230 = vadd.f32 0.0, %v3229
        %v3231 = vpop.f32.mrf.mxu0
        %3232 = vmatprep.mubr.f32.mxu0 0.0
        %3233 = vmatmul.mubr.f32.gmra.mxu0 %v3076
        %v3234 = vpop.f32.mrf.mxu0
        %v3235 = vadd.f32 0.0, %v3234
        %v3236 = vpop.f32.mrf.mxu0
        %3237 = vmatprep.mubr.f32.mxu0 0.0
        %3238 = vmatmul.mubr.f32.gmra.mxu0 %v3077
        %v3239 = vpop.f32.mrf.mxu0
        %v3240 = vadd.f32 0.0, %v3239
        %v3241 = vpop.f32.mrf.mxu0
        %3242 = vmatprep.mubr.f32.mxu0 0.0
        %3243 = vmatmul.mubr.f32.gmra.mxu0 %v3078
        %v3244 = vpop.f32.mrf.mxu0
        %v3245 = vadd.f32 0.0, %v3244
        %v3246 = vpop.f32.mrf.mxu0
        %3247 = vmatprep.mubr.f32.mxu0 0.0
        %3248 = vmatmul.mubr.f32.gmra.mxu0 %v3079
        %v3249 = vpop.f32.mrf.mxu0
        %v3250 = vadd.f32 0.0, %v3249
        %v3251 = vpop.f32.mrf.mxu0
        %3252 = vmatprep.mubr.f32.mxu0 0.0
        %3253 = vmatmul.mubr.f32.gmra.mxu0 %v3080
        %v3254 = vpop.f32.mrf.mxu0
        %v3255 = vadd.f32 0.0, %v3254
        %v3256 = vpop.f32.mrf.mxu0
        %3257 = vmatprep.mubr.f32.mxu0 0.0
        %3258 = vmatmul.mubr.f32.gmra.mxu0 %v3081
        %v3259 = vpop.f32.mrf.mxu0
        %v3260 = vadd.f32 0.0, %v3259
        %v3261 = vpop.f32.mrf.mxu0
        %3262 = vmatprep.mubr.f32.mxu0 0.0
        %3263 = vmatmul.mubr.f32.gmra.mxu0 %v3082
        %v3264 = vpop.f32.mrf.mxu0
        %v3265 = vadd.f32 0.0, %v3264
        %v3266 = vpop.f32.mrf.mxu0
        %3267 = vmatprep.mubr.f32.mxu0 0.0
        %3268 = vmatmul.mubr.f32.gmra.mxu0 %v3083
        %v3269 = vpop.f32.mrf.mxu0
        %v3270 = vadd.f32 0.0, %v3269
        %v3271 = vpop.f32.mrf.mxu0
        %3272 = vmatprep.mubr.f32.mxu0 0.0
        %3273 = vmatmul.mubr.f32.gmra.mxu0 %v3084
        %v3274 = vpop.f32.mrf.mxu0
        %v3275 = vadd.f32 0.0, %v3274
        %v3276 = vpop.f32.mrf.mxu0
        %3277 = vmatprep.mubr.f32.mxu0 0.0
        %3278 = vmatmul.mubr.f32.gmra.mxu0 %v3085
        %v3279 = vpop.f32.mrf.mxu0
        %v3280 = vadd.f32 0.0, %v3279
        %v3281 = vpop.f32.mrf.mxu0
        %3282 = vmatprep.mubr.f32.mxu0 0.0
        %3283 = vmatmul.mubr.f32.gmra.mxu0 %v3086
        %v3284 = vpop.f32.mrf.mxu0
        %v3285 = vadd.f32 0.0, %v3284
        %v3286 = vpop.f32.mrf.mxu0
        %3287 = vmatprep.mubr.f32.mxu0 0.0
        %3288 = vmatmul.mubr.f32.gmra.mxu0 %v3087
        %v3289 = vpop.f32.mrf.mxu0
        %v3290 = vadd.f32 0.0, %v3289
        %v3291 = vpop.f32.mrf.mxu0
        %3292 = vmatprep.mubr.f32.mxu0 0.0
        %3293 = vmatmul.mubr.f32.gmra.mxu0 %v3088
        %v3294 = vpop.f32.mrf.mxu0
        %v3295 = vadd.f32 0.0, %v3294
        %v3296 = vpop.f32.mrf.mxu0
        %3297 = vmatprep.mubr.f32.mxu0 0.0
        %3298 = vmatmul.mubr.f32.gmra.mxu0 %v3089
        %v3299 = vpop.f32.mrf.mxu0
        %v3300 = vadd.f32 0.0, %v3299
        %v3301 = vpop.f32.mrf.mxu0
        %3302 = vmatprep.mubr.f32.mxu0 0.0
        %3303 = vmatmul.mubr.f32.gmra.mxu0 %v3090
        %v3304 = vpop.f32.mrf.mxu0
        %v3305 = vadd.f32 0.0, %v3304
        %v3306 = vpop.f32.mrf.mxu0
        %3307 = vmatprep.mubr.f32.mxu0 0.0
        %3308 = vmatmul.mubr.f32.gmra.mxu0 %v3091
        %v3309 = vpop.f32.mrf.mxu0
        %v3310 = vadd.f32 0.0, %v3309
        %v3311 = vpop.f32.mrf.mxu0
        %3312 = vmatprep.mubr.f32.mxu0 0.0
        %3313 = vmatmul.mubr.f32.gmra.mxu0 %v3092
        %v3314 = vpop.f32.mrf.mxu0
        %v3315 = vadd.f32 0.0, %v3314
        %v3316 = vpop.f32.mrf.mxu0
        %3317 = vmatprep.mubr.f32.mxu0 0.0
        %3318 = vmatmul.mubr.f32.gmra.mxu0 %v3093
        %v3319 = vpop.f32.mrf.mxu0
        %v3320 = vadd.f32 0.0, %v3319
        %v3321 = vpop.f32.mrf.mxu0
        %3322 = vmatprep.mubr.f32.mxu0 0.0
        %3323 = vmatmul.mubr.f32.gmra.mxu0 %v3094
        %v3324 = vpop.f32.mrf.mxu0
        %v3325 = vadd.f32 0.0, %v3324
        %v3326 = vpop.f32.mrf.mxu0
        %3327 = vmatprep.mubr.f32.mxu0 0.0
        %3328 = vmatmul.mubr.f32.gmra.mxu0 %v3095
        %v3329 = vpop.f32.mrf.mxu0
        %v3330 = vadd.f32 0.0, %v3329
        %v3331 = vpop.f32.mrf.mxu0
        %3332 = vmatprep.mubr.f32.mxu0 0.0
        %3333 = vmatmul.mubr.f32.gmra.mxu0 %v3096
        %v3334 = vpop.f32.mrf.mxu0
        %v3335 = vadd.f32 0.0, %v3334
        %v3336 = vpop.f32.mrf.mxu0
        %3337 = vdwg.mxu0
        %v3338 = vadd.f32 %v2051, %v3180
        %v3339 = vadd.f32 %v2056, %v3185
        %v3340 = vadd.f32 %v2061, %v3190
        %v3341 = vadd.f32 %v2066, %v3195
        %v3342 = vadd.f32 %v2071, %v3200
        %v3343 = vadd.f32 %v2076, %v3205
        %v3344 = vadd.f32 %v2081, %v3210
        %v3345 = vadd.f32 %v2086, %v3215
        %v3346 = vadd.f32 %v2091, %v3220
        %v3347 = vadd.f32 %v2096, %v3225
        %v3348 = vadd.f32 %v2101, %v3230
        %v3349 = vadd.f32 %v2106, %v3235
        %v3350 = vadd.f32 %v2111, %v3240
        %v3351 = vadd.f32 %v2116, %v3245
        %v3352 = vadd.f32 %v2121, %v3250
        %v3353 = vadd.f32 %v2126, %v3255
        %v3354 = vadd.f32 %v2131, %v3260
        %v3355 = vadd.f32 %v2136, %v3265
        %v3356 = vadd.f32 %v2141, %v3270
        %v3357 = vadd.f32 %v2146, %v3275
        %v3358 = vadd.f32 %v2151, %v3280
        %v3359 = vadd.f32 %v2156, %v3285
        %v3360 = vadd.f32 %v2161, %v3290
        %v3361 = vadd.f32 %v2166, %v3295
        %v3362 = vadd.f32 %v2171, %v3300
        %v3363 = vadd.f32 %v2176, %v3305
        %v3364 = vadd.f32 %v2181, %v3310
        %v3365 = vadd.f32 %v2186, %v3315
        %v3366 = vadd.f32 %v2191, %v3320
        %v3367 = vadd.f32 %v2196, %v3325
        %v3368 = vadd.f32 %v2201, %v3330
        %v3369 = vadd.f32 %v2206, %v3335
        %3370 = vst [vmem:[%s236 + $0x2] sm:$0xff] %v3065
        %3371 = vst [vmem:[%s236 + $0xa] sm:$0xff] %v3066
        %3372 = vst [vmem:[%s236 + $0x1a] sm:$0xff] %v3067
        %3373 = vst [vmem:[%s236 + $0x22] sm:$0xff] %v3068
        %3374 = vst [vmem:[%s236 + $0x32] sm:$0xff] %v3069
        %3375 = vst [vmem:[%s236 + $0x3a] sm:$0xff] %v3070
        %3376 = vst [vmem:[%s236 + $0x4a] sm:$0xff] %v3071
        %3377 = vst [vmem:[%s236 + $0x52] sm:$0xff] %v3072
        %3378 = vst [vmem:[%s236 + $0x62] sm:$0xff] %v3073
        %3379 = vst [vmem:[%s236 + $0x6a] sm:$0xff] %v3074
        %3380 = vst [vmem:[%s236 + $0x7a] sm:$0xff] %v3075
        %3381 = vst [vmem:[%s236 + $0x82] sm:$0xff] %v3076
        %3382 = vst [vmem:[%s236 + $0x92] sm:$0xff] %v3077
        %3383 = vst [vmem:[%s236 + $0x9a] sm:$0xff] %v3078
        %3384 = vst [vmem:[%s236 + $0xaa] sm:$0xff] %v3079
        %3385 = vst [vmem:[%s236 + $0xb2] sm:$0xff] %v3080
        %3386 = vst [vmem:[%s236 + $0xc2] sm:$0xff] %v3081
        %3387 = vst [vmem:[%s236 + $0xca] sm:$0xff] %v3082
        %3388 = vst [vmem:[%s236 + $0xda] sm:$0xff] %v3083
        %3389 = vst [vmem:[%s236 + $0xe2] sm:$0xff] %v3084
        %3390 = vst [vmem:[%s236 + $0xf2] sm:$0xff] %v3085
        %3391 = vst [vmem:[%s236 + $0xfa] sm:$0xff] %v3086
        %3392 = vst [vmem:[%s236 + $0x10a] sm:$0xff] %v3087
        %3393 = vst [vmem:[%s236 + $0x112] sm:$0xff] %v3088
        %3394 = vst [vmem:[%s236 + $0x122] sm:$0xff] %v3089
        %3395 = vst [vmem:[%s236 + $0x12a] sm:$0xff] %v3090
        %3396 = vst [vmem:[%s236 + $0x13a] sm:$0xff] %v3091
        %3397 = vst [vmem:[%s236 + $0x142] sm:$0xff] %v3092
        %3398 = vst [vmem:[%s236 + $0x152] sm:$0xff] %v3093
        %3399 = vst [vmem:[%s236 + $0x15a] sm:$0xff] %v3094
        %3400 = vst [vmem:[%s236 + $0x16a] sm:$0xff] %v3095
        %3401 = vst [vmem:[%s236 + $0x172] sm:$0xff] %v3096
        %v3402 = vld [vmem:[#allocation2] sm:$0xff]
        %v3403 = vld [vmem:[#allocation2 + $0x8] sm:$0xff]
        %v3404 = vld [vmem:[#allocation2 + $0x10] sm:$0xf]
        %v3405 = vld [vmem:[#allocation2 + $0x18] sm:$0xff]
        %v3406 = vld [vmem:[#allocation2 + $0x20] sm:$0xff]
        %v3407 = vld [vmem:[#allocation2 + $0x28] sm:$0xf]
        %v3408 = vld [vmem:[#allocation2 + $0x30] sm:$0xff]
        %v3409 = vld [vmem:[#allocation2 + $0x38] sm:$0xff]
        %v3410 = vld [vmem:[#allocation2 + $0x40] sm:$0xf]
        %v3411 = vld [vmem:[#allocation2 + $0x48] sm:$0xff]
        %v3412 = vld [vmem:[#allocation2 + $0x50] sm:$0xff]
        %v3413 = vld [vmem:[#allocation2 + $0x58] sm:$0xf]
        %v3414 = vld [vmem:[#allocation2 + $0x60] sm:$0xff]
        %v3415 = vld [vmem:[#allocation2 + $0x68] sm:$0xff]
        %v3416 = vld [vmem:[#allocation2 + $0x70] sm:$0xf]
        %v3417 = vld [vmem:[#allocation2 + $0x78] sm:$0xff]
        %v3418 = vld [vmem:[#allocation2 + $0x80] sm:$0xff]
        %v3419 = vld [vmem:[#allocation2 + $0x88] sm:$0xf]
        %v3420 = vld [vmem:[#allocation2 + $0x90] sm:$0xff]
        %v3421 = vld [vmem:[#allocation2 + $0x98] sm:$0xff]
        %v3422 = vld [vmem:[#allocation2 + $0xa0] sm:$0xf]
        %v3423 = vld [vmem:[#allocation2 + $0xa8] sm:$0xff]
        %v3424 = vld [vmem:[#allocation2 + $0xb0] sm:$0xff]
        %v3425 = vld [vmem:[#allocation2 + $0xb8] sm:$0xf]
        %v3426 = vld [vmem:[#allocation2 + $0xc0] sm:$0xff]
        %v3427 = vld [vmem:[#allocation2 + $0xc8] sm:$0xff]
        %v3428 = vld [vmem:[#allocation2 + $0xd0] sm:$0xf]
        %v3429 = vld [vmem:[#allocation2 + $0xd8] sm:$0xff]
        %v3430 = vld [vmem:[#allocation2 + $0xe0] sm:$0xff]
        %v3431 = vld [vmem:[#allocation2 + $0xe8] sm:$0xf]
        %v3432 = vld [vmem:[#allocation2 + $0xf0] sm:$0xff]
        %v3433 = vld [vmem:[#allocation2 + $0xf8] sm:$0xff]
        %v3434 = vld [vmem:[#allocation2 + $0x100] sm:$0xf]
        %v3435 = vld [vmem:[#allocation2 + $0x108] sm:$0xff]
        %v3436 = vld [vmem:[#allocation2 + $0x110] sm:$0xff]
        %v3437 = vld [vmem:[#allocation2 + $0x118] sm:$0xf]
        %v3438 = vld [vmem:[#allocation2 + $0x120] sm:$0xff]
        %v3439 = vld [vmem:[#allocation2 + $0x128] sm:$0xff]
        %v3440 = vld [vmem:[#allocation2 + $0x130] sm:$0xf]
        %v3441 = vld [vmem:[#allocation2 + $0x138] sm:$0xff]
        %v3442 = vld [vmem:[#allocation2 + $0x140] sm:$0xff]
        %v3443 = vld [vmem:[#allocation2 + $0x148] sm:$0xf]
        %v3444 = vld [vmem:[#allocation2 + $0x150] sm:$0xff]
        %v3445 = vld [vmem:[#allocation2 + $0x158] sm:$0xff]
        %v3446 = vld [vmem:[#allocation2 + $0x160] sm:$0xf]
        %v3447 = vld [vmem:[#allocation2 + $0x168] sm:$0xff]
        %v3448 = vld [vmem:[#allocation2 + $0x170] sm:$0xff]
        %v3449 = vld [vmem:[#allocation2 + $0x178] sm:$0xf]
        %v3450 = vld [vmem:[#allocation2 + $0x180] sm:$0xff]
        %v3451 = vld [vmem:[#allocation2 + $0x188] sm:$0xff]
        %v3452 = vld [vmem:[#allocation2 + $0x190] sm:$0xf]
        %v3453 = vld [vmem:[#allocation2 + $0x198] sm:$0xff]
        %v3454 = vld [vmem:[#allocation2 + $0x1a0] sm:$0xff]
        %v3455 = vld [vmem:[#allocation2 + $0x1a8] sm:$0xf]
        %v3456 = vld [vmem:[#allocation2 + $0x1b0] sm:$0xff]
        %v3457 = vld [vmem:[#allocation2 + $0x1b8] sm:$0xff]
        %v3458 = vld [vmem:[#allocation2 + $0x1c0] sm:$0xf]
        %v3459 = vld [vmem:[#allocation2 + $0x1c8] sm:$0xff]
        %v3460 = vld [vmem:[#allocation2 + $0x1d0] sm:$0xff]
        %v3461 = vld [vmem:[#allocation2 + $0x1d8] sm:$0xf]
        %v3462 = vmax.f32 %v3402, %v3405
        %v3463 = vmax.f32 %v3403, %v3406
        %v3464 = vmax.f32 %v3404, %v3407
        %v3465 = vmax.f32 %v3405, %v3408
        %v3466 = vmax.f32 %v3406, %v3409
        %v3467 = vmax.f32 %v3407, %v3410
        %v3468 = vmax.f32 %v3408, %v3411
        %v3469 = vmax.f32 %v3409, %v3412
        %v3470 = vmax.f32 %v3410, %v3413
        %v3471 = vmax.f32 %v3411, %v3414
        %v3472 = vmax.f32 %v3412, %v3415
        %v3473 = vmax.f32 %v3413, %v3416
        %v3474 = vmax.f32 %v3414, %v3417
        %v3475 = vmax.f32 %v3415, %v3418
        %v3476 = vmax.f32 %v3416, %v3419
        %v3477 = vmax.f32 %v3417, %v3420
        %v3478 = vmax.f32 %v3418, %v3421
        %v3479 = vmax.f32 %v3419, %v3422
        %v3480 = vmax.f32 %v3420, %v3423
        %v3481 = vmax.f32 %v3421, %v3424
        %v3482 = vmax.f32 %v3422, %v3425
        %v3483 = vmax.f32 %v3423, %v3426
        %v3484 = vmax.f32 %v3424, %v3427
        %v3485 = vmax.f32 %v3425, %v3428
        %v3486 = vmax.f32 %v3426, %v3429
        %v3487 = vmax.f32 %v3427, %v3430
        %v3488 = vmax.f32 %v3428, %v3431
        %v3489 = vmax.f32 %v3429, %v3432
        %v3490 = vmax.f32 %v3430, %v3433
        %v3491 = vmax.f32 %v3431, %v3434
        %v3492 = vmax.f32 %v3432, %v3435
        %v3493 = vmax.f32 %v3433, %v3436
        %v3494 = vmax.f32 %v3434, %v3437
        %v3495 = vmax.f32 %v3435, %v3438
        %v3496 = vmax.f32 %v3436, %v3439
        %v3497 = vmax.f32 %v3437, %v3440
        %v3498 = vmax.f32 %v3438, %v3441
        %v3499 = vmax.f32 %v3439, %v3442
        %v3500 = vmax.f32 %v3440, %v3443
        %v3501 = vmax.f32 %v3441, %v3444
        %v3502 = vmax.f32 %v3442, %v3445
        %v3503 = vmax.f32 %v3443, %v3446
        %v3504 = vmax.f32 %v3444, %v3447
        %v3505 = vmax.f32 %v3445, %v3448
        %v3506 = vmax.f32 %v3446, %v3449
        %v3507 = vmax.f32 %v3447, %v3450
        %v3508 = vmax.f32 %v3448, %v3451
        %v3509 = vmax.f32 %v3449, %v3452
        %v3510 = vmax.f32 %v3450, %v3453
        %v3511 = vmax.f32 %v3451, %v3454
        %v3512 = vmax.f32 %v3452, %v3455
        %v3513 = vmax.f32 %v3453, %v3456
        %v3514 = vmax.f32 %v3454, %v3457
        %v3515 = vmax.f32 %v3455, %v3458
        %v3516 = vmax.f32 %v3456, %v3459
        %v3517 = vmax.f32 %v3457, %v3460
        %v3518 = vmax.f32 %v3458, %v3461
        %v3519 = vmax.f32 %v3462, %v3468
        %v3520 = vmax.f32 %v3463, %v3469
        %v3521 = vmax.f32 %v3464, %v3470
        %v3522 = vmax.f32 %v3465, %v3471
        %v3523 = vmax.f32 %v3466, %v3472
        %v3524 = vmax.f32 %v3467, %v3473
        %v3525 = vmax.f32 %v3468, %v3474
        %v3526 = vmax.f32 %v3469, %v3475
        %v3527 = vmax.f32 %v3470, %v3476
        %v3528 = vmax.f32 %v3471, %v3477
        %v3529 = vmax.f32 %v3472, %v3478
        %v3530 = vmax.f32 %v3473, %v3479
        %v3531 = vmax.f32 %v3474, %v3480
        %v3532 = vmax.f32 %v3475, %v3481
        %v3533 = vmax.f32 %v3476, %v3482
        %v3534 = vmax.f32 %v3477, %v3483
        %v3535 = vmax.f32 %v3478, %v3484
        %v3536 = vmax.f32 %v3479, %v3485
        %v3537 = vmax.f32 %v3480, %v3486
        %v3538 = vmax.f32 %v3481, %v3487
        %v3539 = vmax.f32 %v3482, %v3488
        %v3540 = vmax.f32 %v3483, %v3489
        %v3541 = vmax.f32 %v3484, %v3490
        %v3542 = vmax.f32 %v3485, %v3491
        %v3543 = vmax.f32 %v3486, %v3492
        %v3544 = vmax.f32 %v3487, %v3493
        %v3545 = vmax.f32 %v3488, %v3494
        %v3546 = vmax.f32 %v3489, %v3495
        %v3547 = vmax.f32 %v3490, %v3496
        %v3548 = vmax.f32 %v3491, %v3497
        %v3549 = vmax.f32 %v3492, %v3498
        %v3550 = vmax.f32 %v3493, %v3499
        %v3551 = vmax.f32 %v3494, %v3500
        %v3552 = vmax.f32 %v3495, %v3501
        %v3553 = vmax.f32 %v3496, %v3502
        %v3554 = vmax.f32 %v3497, %v3503
        %v3555 = vmax.f32 %v3498, %v3504
        %v3556 = vmax.f32 %v3499, %v3505
        %v3557 = vmax.f32 %v3500, %v3506
        %v3558 = vmax.f32 %v3501, %v3507
        %v3559 = vmax.f32 %v3502, %v3508
        %v3560 = vmax.f32 %v3503, %v3509
        %v3561 = vmax.f32 %v3504, %v3510
        %v3562 = vmax.f32 %v3505, %v3511
        %v3563 = vmax.f32 %v3506, %v3512
        %v3564 = vmax.f32 %v3507, %v3513
        %v3565 = vmax.f32 %v3508, %v3514
        %v3566 = vmax.f32 %v3509, %v3515
        %v3567 = vmax.f32 %v3510, %v3516
        %v3568 = vmax.f32 %v3511, %v3517
        %v3569 = vmax.f32 %v3512, %v3518
        %v3570 = vmax.f32 %v3519, %v3522
        %v3571 = vmax.f32 %v3520, %v3523
        %v3572 = vmax.f32 %v3521, %v3524
        %v3573 = vmax.f32 %v3522, %v3525
        %v3574 = vmax.f32 %v3523, %v3526
        %v3575 = vmax.f32 %v3524, %v3527
        %v3576 = vmax.f32 %v3525, %v3528
        %v3577 = vmax.f32 %v3526, %v3529
        %v3578 = vmax.f32 %v3527, %v3530
        %v3579 = vmax.f32 %v3528, %v3531
        %v3580 = vmax.f32 %v3529, %v3532
        %v3581 = vmax.f32 %v3530, %v3533
        %v3582 = vmax.f32 %v3531, %v3534
        %v3583 = vmax.f32 %v3532, %v3535
        %v3584 = vmax.f32 %v3533, %v3536
        %v3585 = vmax.f32 %v3534, %v3537
        %v3586 = vmax.f32 %v3535, %v3538
        %v3587 = vmax.f32 %v3536, %v3539
        %v3588 = vmax.f32 %v3537, %v3540
        %v3589 = vmax.f32 %v3538, %v3541
        %v3590 = vmax.f32 %v3539, %v3542
        %v3591 = vmax.f32 %v3540, %v3543
        %v3592 = vmax.f32 %v3541, %v3544
        %v3593 = vmax.f32 %v3542, %v3545
        %v3594 = vmax.f32 %v3543, %v3546
        %v3595 = vmax.f32 %v3544, %v3547
        %v3596 = vmax.f32 %v3545, %v3548
        %v3597 = vmax.f32 %v3546, %v3549
        %v3598 = vmax.f32 %v3547, %v3550
        %v3599 = vmax.f32 %v3548, %v3551
        %v3600 = vmax.f32 %v3549, %v3552
        %v3601 = vmax.f32 %v3550, %v3553
        %v3602 = vmax.f32 %v3551, %v3554
        %v3603 = vmax.f32 %v3552, %v3555
        %v3604 = vmax.f32 %v3553, %v3556
        %v3605 = vmax.f32 %v3554, %v3557
        %v3606 = vmax.f32 %v3555, %v3558
        %v3607 = vmax.f32 %v3556, %v3559
        %v3608 = vmax.f32 %v3557, %v3560
        %v3609 = vmax.f32 %v3558, %v3561
        %v3610 = vmax.f32 %v3559, %v3562
        %v3611 = vmax.f32 %v3560, %v3563
        %v3612 = vmax.f32 %v3561, %v3564
        %v3613 = vmax.f32 %v3562, %v3565
        %v3614 = vmax.f32 %v3563, %v3566
        %v3615 = vmax.f32 %v3564, %v3567
        %v3616 = vmax.f32 %v3565, %v3568
        %v3617 = vmax.f32 %v3566, %v3569
        %v3666 = vrot.slane %v3570, 1
        %v3667 = vrot.slane %v3571, 1
        %v3668 = vsel %vm1149, %v3666, %v3667
        %v3669 = vrot.slane %v3572, 1
        %v3670 = vsel %vm1149, %v3667, %v3669
        %v3671 = vrot.slane %v3573, 1
        %v3672 = vrot.slane %v3574, 1
        %v3673 = vsel %vm1149, %v3671, %v3672
        %v3674 = vrot.slane %v3575, 1
        %v3675 = vsel %vm1149, %v3672, %v3674
        %v3676 = vrot.slane %v3576, 1
        %v3677 = vrot.slane %v3577, 1
        %v3678 = vsel %vm1149, %v3676, %v3677
        %v3679 = vrot.slane %v3578, 1
        %v3680 = vsel %vm1149, %v3677, %v3679
        %v3681 = vrot.slane %v3579, 1
        %v3682 = vrot.slane %v3580, 1
        %v3683 = vsel %vm1149, %v3681, %v3682
        %v3684 = vrot.slane %v3581, 1
        %v3685 = vsel %vm1149, %v3682, %v3684
        %v3686 = vrot.slane %v3582, 1
        %v3687 = vrot.slane %v3583, 1
        %v3688 = vsel %vm1149, %v3686, %v3687
        %v3689 = vrot.slane %v3584, 1
        %v3690 = vsel %vm1149, %v3687, %v3689
        %v3691 = vrot.slane %v3585, 1
        %v3692 = vrot.slane %v3586, 1
        %v3693 = vsel %vm1149, %v3691, %v3692
        %v3694 = vrot.slane %v3587, 1
        %v3695 = vsel %vm1149, %v3692, %v3694
        %v3696 = vrot.slane %v3588, 1
        %v3697 = vrot.slane %v3589, 1
        %v3698 = vsel %vm1149, %v3696, %v3697
        %v3699 = vrot.slane %v3590, 1
        %v3700 = vsel %vm1149, %v3697, %v3699
        %v3701 = vrot.slane %v3591, 1
        %v3702 = vrot.slane %v3592, 1
        %v3703 = vsel %vm1149, %v3701, %v3702
        %v3704 = vrot.slane %v3593, 1
        %v3705 = vsel %vm1149, %v3702, %v3704
        %v3706 = vrot.slane %v3594, 1
        %v3707 = vrot.slane %v3595, 1
        %v3708 = vsel %vm1149, %v3706, %v3707
        %v3709 = vrot.slane %v3596, 1
        %v3710 = vsel %vm1149, %v3707, %v3709
        %v3711 = vrot.slane %v3597, 1
        %v3712 = vrot.slane %v3598, 1
        %v3713 = vsel %vm1149, %v3711, %v3712
        %v3714 = vrot.slane %v3599, 1
        %v3715 = vsel %vm1149, %v3712, %v3714
        %v3716 = vrot.slane %v3600, 1
        %v3717 = vrot.slane %v3601, 1
        %v3718 = vsel %vm1149, %v3716, %v3717
        %v3719 = vrot.slane %v3602, 1
        %v3720 = vsel %vm1149, %v3717, %v3719
        %v3721 = vrot.slane %v3603, 1
        %v3722 = vrot.slane %v3604, 1
        %v3723 = vsel %vm1149, %v3721, %v3722
        %v3724 = vrot.slane %v3605, 1
        %v3725 = vsel %vm1149, %v3722, %v3724
        %v3726 = vrot.slane %v3606, 1
        %v3727 = vrot.slane %v3607, 1
        %v3728 = vsel %vm1149, %v3726, %v3727
        %v3729 = vrot.slane %v3608, 1
        %v3730 = vsel %vm1149, %v3727, %v3729
        %v3731 = vrot.slane %v3609, 1
        %v3732 = vrot.slane %v3610, 1
        %v3733 = vsel %vm1149, %v3731, %v3732
        %v3734 = vrot.slane %v3611, 1
        %v3735 = vsel %vm1149, %v3732, %v3734
        %v3736 = vrot.slane %v3612, 1
        %v3737 = vrot.slane %v3613, 1
        %v3738 = vsel %vm1149, %v3736, %v3737
        %v3739 = vrot.slane %v3614, 1
        %v3740 = vsel %vm1149, %v3737, %v3739
        %v3741 = vrot.slane %v3615, 1
        %v3742 = vrot.slane %v3616, 1
        %v3743 = vsel %vm1149, %v3741, %v3742
        %v3744 = vrot.slane %v3617, 1
        %v3745 = vsel %vm1149, %v3742, %v3744
        %v3794 = vmax.f32 %v3570, %v3668
        %v3795 = vmax.f32 %v3571, %v3670
        %v3796 = vmax.f32 %v3572, %v3669
        %v3797 = vmax.f32 %v3573, %v3673
        %v3798 = vmax.f32 %v3574, %v3675
        %v3799 = vmax.f32 %v3575, %v3674
        %v3800 = vmax.f32 %v3576, %v3678
        %v3801 = vmax.f32 %v3577, %v3680
        %v3802 = vmax.f32 %v3578, %v3679
        %v3803 = vmax.f32 %v3579, %v3683
        %v3804 = vmax.f32 %v3580, %v3685
        %v3805 = vmax.f32 %v3581, %v3684
        %v3806 = vmax.f32 %v3582, %v3688
        %v3807 = vmax.f32 %v3583, %v3690
        %v3808 = vmax.f32 %v3584, %v3689
        %v3809 = vmax.f32 %v3585, %v3693
        %v3810 = vmax.f32 %v3586, %v3695
        %v3811 = vmax.f32 %v3587, %v3694
        %v3812 = vmax.f32 %v3588, %v3698
        %v3813 = vmax.f32 %v3589, %v3700
        %v3814 = vmax.f32 %v3590, %v3699
        %v3815 = vmax.f32 %v3591, %v3703
        %v3816 = vmax.f32 %v3592, %v3705
        %v3817 = vmax.f32 %v3593, %v3704
        %v3818 = vmax.f32 %v3594, %v3708
        %v3819 = vmax.f32 %v3595, %v3710
        %v3820 = vmax.f32 %v3596, %v3709
        %v3821 = vmax.f32 %v3597, %v3713
        %v3822 = vmax.f32 %v3598, %v3715
        %v3823 = vmax.f32 %v3599, %v3714
        %v3824 = vmax.f32 %v3600, %v3718
        %v3825 = vmax.f32 %v3601, %v3720
        %v3826 = vmax.f32 %v3602, %v3719
        %v3827 = vmax.f32 %v3603, %v3723
        %v3828 = vmax.f32 %v3604, %v3725
        %v3829 = vmax.f32 %v3605, %v3724
        %v3830 = vmax.f32 %v3606, %v3728
        %v3831 = vmax.f32 %v3607, %v3730
        %v3832 = vmax.f32 %v3608, %v3729
        %v3833 = vmax.f32 %v3609, %v3733
        %v3834 = vmax.f32 %v3610, %v3735
        %v3835 = vmax.f32 %v3611, %v3734
        %v3836 = vmax.f32 %v3612, %v3738
        %v3837 = vmax.f32 %v3613, %v3740
        %v3838 = vmax.f32 %v3614, %v3739
        %v3839 = vmax.f32 %v3615, %v3743
        %v3840 = vmax.f32 %v3616, %v3745
        %v3841 = vmax.f32 %v3617, %v3744
        %v3890 = vrot.slane %v3794, 2
        %v3891 = vrot.slane %v3795, 2
        %v3892 = vsel %vm1374, %v3890, %v3891
        %v3893 = vrot.slane %v3796, 2
        %v3894 = vsel %vm1374, %v3891, %v3893
        %v3895 = vrot.slane %v3797, 2
        %v3896 = vrot.slane %v3798, 2
        %v3897 = vsel %vm1374, %v3895, %v3896
        %v3898 = vrot.slane %v3799, 2
        %v3899 = vsel %vm1374, %v3896, %v3898
        %v3900 = vrot.slane %v3800, 2
        %v3901 = vrot.slane %v3801, 2
        %v3902 = vsel %vm1374, %v3900, %v3901
        %v3903 = vrot.slane %v3802, 2
        %v3904 = vsel %vm1374, %v3901, %v3903
        %v3905 = vrot.slane %v3803, 2
        %v3906 = vrot.slane %v3804, 2
        %v3907 = vsel %vm1374, %v3905, %v3906
        %v3908 = vrot.slane %v3805, 2
        %v3909 = vsel %vm1374, %v3906, %v3908
        %v3910 = vrot.slane %v3806, 2
        %v3911 = vrot.slane %v3807, 2
        %v3912 = vsel %vm1374, %v3910, %v3911
        %v3913 = vrot.slane %v3808, 2
        %v3914 = vsel %vm1374, %v3911, %v3913
        %v3915 = vrot.slane %v3809, 2
        %v3916 = vrot.slane %v3810, 2
        %v3917 = vsel %vm1374, %v3915, %v3916
        %v3918 = vrot.slane %v3811, 2
        %v3919 = vsel %vm1374, %v3916, %v3918
        %v3920 = vrot.slane %v3812, 2
        %v3921 = vrot.slane %v3813, 2
        %v3922 = vsel %vm1374, %v3920, %v3921
        %v3923 = vrot.slane %v3814, 2
        %v3924 = vsel %vm1374, %v3921, %v3923
        %v3925 = vrot.slane %v3815, 2
        %v3926 = vrot.slane %v3816, 2
        %v3927 = vsel %vm1374, %v3925, %v3926
        %v3928 = vrot.slane %v3817, 2
        %v3929 = vsel %vm1374, %v3926, %v3928
        %v3930 = vrot.slane %v3818, 2
        %v3931 = vrot.slane %v3819, 2
        %v3932 = vsel %vm1374, %v3930, %v3931
        %v3933 = vrot.slane %v3820, 2
        %v3934 = vsel %vm1374, %v3931, %v3933
        %v3935 = vrot.slane %v3821, 2
        %v3936 = vrot.slane %v3822, 2
        %v3937 = vsel %vm1374, %v3935, %v3936
        %v3938 = vrot.slane %v3823, 2
        %v3939 = vsel %vm1374, %v3936, %v3938
        %v3940 = vrot.slane %v3824, 2
        %v3941 = vrot.slane %v3825, 2
        %v3942 = vsel %vm1374, %v3940, %v3941
        %v3943 = vrot.slane %v3826, 2
        %v3944 = vsel %vm1374, %v3941, %v3943
        %v3945 = vrot.slane %v3827, 2
        %v3946 = vrot.slane %v3828, 2
        %v3947 = vsel %vm1374, %v3945, %v3946
        %v3948 = vrot.slane %v3829, 2
        %v3949 = vsel %vm1374, %v3946, %v3948
        %v3950 = vrot.slane %v3830, 2
        %v3951 = vrot.slane %v3831, 2
        %v3952 = vsel %vm1374, %v3950, %v3951
        %v3953 = vrot.slane %v3832, 2
        %v3954 = vsel %vm1374, %v3951, %v3953
        %v3955 = vrot.slane %v3833, 2
        %v3956 = vrot.slane %v3834, 2
        %v3957 = vsel %vm1374, %v3955, %v3956
        %v3958 = vrot.slane %v3835, 2
        %v3959 = vsel %vm1374, %v3956, %v3958
        %v3960 = vrot.slane %v3836, 2
        %v3961 = vrot.slane %v3837, 2
        %v3962 = vsel %vm1374, %v3960, %v3961
        %v3963 = vrot.slane %v3838, 2
        %v3964 = vsel %vm1374, %v3961, %v3963
        %v3965 = vrot.slane %v3839, 2
        %v3966 = vrot.slane %v3840, 2
        %v3967 = vsel %vm1374, %v3965, %v3966
        %v3968 = vrot.slane %v3841, 2
        %v3969 = vsel %vm1374, %v3966, %v3968
        %v4018 = vmax.f32 %v3794, %v3892
        %v4019 = vmax.f32 %v3795, %v3894
        %v4020 = vmax.f32 %v3796, %v3893
        %v4021 = vmax.f32 %v3797, %v3897
        %v4022 = vmax.f32 %v3798, %v3899
        %v4023 = vmax.f32 %v3799, %v3898
        %v4024 = vmax.f32 %v3800, %v3902
        %v4025 = vmax.f32 %v3801, %v3904
        %v4026 = vmax.f32 %v3802, %v3903
        %v4027 = vmax.f32 %v3803, %v3907
        %v4028 = vmax.f32 %v3804, %v3909
        %v4029 = vmax.f32 %v3805, %v3908
        %v4030 = vmax.f32 %v3806, %v3912
        %v4031 = vmax.f32 %v3807, %v3914
        %v4032 = vmax.f32 %v3808, %v3913
        %v4033 = vmax.f32 %v3809, %v3917
        %v4034 = vmax.f32 %v3810, %v3919
        %v4035 = vmax.f32 %v3811, %v3918
        %v4036 = vmax.f32 %v3812, %v3922
        %v4037 = vmax.f32 %v3813, %v3924
        %v4038 = vmax.f32 %v3814, %v3923
        %v4039 = vmax.f32 %v3815, %v3927
        %v4040 = vmax.f32 %v3816, %v3929
        %v4041 = vmax.f32 %v3817, %v3928
        %v4042 = vmax.f32 %v3818, %v3932
        %v4043 = vmax.f32 %v3819, %v3934
        %v4044 = vmax.f32 %v3820, %v3933
        %v4045 = vmax.f32 %v3821, %v3937
        %v4046 = vmax.f32 %v3822, %v3939
        %v4047 = vmax.f32 %v3823, %v3938
        %v4048 = vmax.f32 %v3824, %v3942
        %v4049 = vmax.f32 %v3825, %v3944
        %v4050 = vmax.f32 %v3826, %v3943
        %v4051 = vmax.f32 %v3827, %v3947
        %v4052 = vmax.f32 %v3828, %v3949
        %v4053 = vmax.f32 %v3829, %v3948
        %v4054 = vmax.f32 %v3830, %v3952
        %v4055 = vmax.f32 %v3831, %v3954
        %v4056 = vmax.f32 %v3832, %v3953
        %v4057 = vmax.f32 %v3833, %v3957
        %v4058 = vmax.f32 %v3834, %v3959
        %v4059 = vmax.f32 %v3835, %v3958
        %v4060 = vmax.f32 %v3836, %v3962
        %v4061 = vmax.f32 %v3837, %v3964
        %v4062 = vmax.f32 %v3838, %v3963
        %v4063 = vmax.f32 %v3839, %v3967
        %v4064 = vmax.f32 %v3840, %v3969
        %v4065 = vmax.f32 %v3841, %v3968
        %v4114 = vrot.slane %v4018, 1
        %v4115 = vrot.slane %v4019, 1
        %v4116 = vsel %vm1149, %v4114, %v4115
        %v4117 = vrot.slane %v4020, 1
        %v4118 = vsel %vm1149, %v4115, %v4117
        %v4119 = vrot.slane %v4021, 1
        %v4120 = vrot.slane %v4022, 1
        %v4121 = vsel %vm1149, %v4119, %v4120
        %v4122 = vrot.slane %v4023, 1
        %v4123 = vsel %vm1149, %v4120, %v4122
        %v4124 = vrot.slane %v4024, 1
        %v4125 = vrot.slane %v4025, 1
        %v4126 = vsel %vm1149, %v4124, %v4125
        %v4127 = vrot.slane %v4026, 1
        %v4128 = vsel %vm1149, %v4125, %v4127
        %v4129 = vrot.slane %v4027, 1
        %v4130 = vrot.slane %v4028, 1
        %v4131 = vsel %vm1149, %v4129, %v4130
        %v4132 = vrot.slane %v4029, 1
        %v4133 = vsel %vm1149, %v4130, %v4132
        %v4134 = vrot.slane %v4030, 1
        %v4135 = vrot.slane %v4031, 1
        %v4136 = vsel %vm1149, %v4134, %v4135
        %v4137 = vrot.slane %v4032, 1
        %v4138 = vsel %vm1149, %v4135, %v4137
        %v4139 = vrot.slane %v4033, 1
        %v4140 = vrot.slane %v4034, 1
        %v4141 = vsel %vm1149, %v4139, %v4140
        %v4142 = vrot.slane %v4035, 1
        %v4143 = vsel %vm1149, %v4140, %v4142
        %v4144 = vrot.slane %v4036, 1
        %v4145 = vrot.slane %v4037, 1
        %v4146 = vsel %vm1149, %v4144, %v4145
        %v4147 = vrot.slane %v4038, 1
        %v4148 = vsel %vm1149, %v4145, %v4147
        %v4149 = vrot.slane %v4039, 1
        %v4150 = vrot.slane %v4040, 1
        %v4151 = vsel %vm1149, %v4149, %v4150
        %v4152 = vrot.slane %v4041, 1
        %v4153 = vsel %vm1149, %v4150, %v4152
        %v4154 = vrot.slane %v4042, 1
        %v4155 = vrot.slane %v4043, 1
        %v4156 = vsel %vm1149, %v4154, %v4155
        %v4157 = vrot.slane %v4044, 1
        %v4158 = vsel %vm1149, %v4155, %v4157
        %v4159 = vrot.slane %v4045, 1
        %v4160 = vrot.slane %v4046, 1
        %v4161 = vsel %vm1149, %v4159, %v4160
        %v4162 = vrot.slane %v4047, 1
        %v4163 = vsel %vm1149, %v4160, %v4162
        %v4164 = vrot.slane %v4048, 1
        %v4165 = vrot.slane %v4049, 1
        %v4166 = vsel %vm1149, %v4164, %v4165
        %v4167 = vrot.slane %v4050, 1
        %v4168 = vsel %vm1149, %v4165, %v4167
        %v4169 = vrot.slane %v4051, 1
        %v4170 = vrot.slane %v4052, 1
        %v4171 = vsel %vm1149, %v4169, %v4170
        %v4172 = vrot.slane %v4053, 1
        %v4173 = vsel %vm1149, %v4170, %v4172
        %v4174 = vrot.slane %v4054, 1
        %v4175 = vrot.slane %v4055, 1
        %v4176 = vsel %vm1149, %v4174, %v4175
        %v4177 = vrot.slane %v4056, 1
        %v4178 = vsel %vm1149, %v4175, %v4177
        %v4179 = vrot.slane %v4057, 1
        %v4180 = vrot.slane %v4058, 1
        %v4181 = vsel %vm1149, %v4179, %v4180
        %v4182 = vrot.slane %v4059, 1
        %v4183 = vsel %vm1149, %v4180, %v4182
        %v4184 = vrot.slane %v4060, 1
        %v4185 = vrot.slane %v4061, 1
        %v4186 = vsel %vm1149, %v4184, %v4185
        %v4187 = vrot.slane %v4062, 1
        %v4188 = vsel %vm1149, %v4185, %v4187
        %v4189 = vrot.slane %v4063, 1
        %v4190 = vrot.slane %v4064, 1
        %v4191 = vsel %vm1149, %v4189, %v4190
        %v4192 = vrot.slane %v4065, 1
        %v4193 = vsel %vm1149, %v4190, %v4192
        %v4226 = vmax.f32 %v4018, %v4116
        %v4227 = vmax.f32 %v4019, %v4118
        %v4228 = vmax.f32 %v4021, %v4121
        %v4229 = vmax.f32 %v4022, %v4123
        %v4230 = vmax.f32 %v4024, %v4126
        %v4231 = vmax.f32 %v4025, %v4128
        %v4232 = vmax.f32 %v4027, %v4131
        %v4233 = vmax.f32 %v4028, %v4133
        %v4234 = vmax.f32 %v4030, %v4136
        %v4235 = vmax.f32 %v4031, %v4138
        %v4236 = vmax.f32 %v4033, %v4141
        %v4237 = vmax.f32 %v4034, %v4143
        %v4238 = vmax.f32 %v4036, %v4146
        %v4239 = vmax.f32 %v4037, %v4148
        %v4240 = vmax.f32 %v4039, %v4151
        %v4241 = vmax.f32 %v4040, %v4153
        %v4242 = vmax.f32 %v4042, %v4156
        %v4243 = vmax.f32 %v4043, %v4158
        %v4244 = vmax.f32 %v4045, %v4161
        %v4245 = vmax.f32 %v4046, %v4163
        %v4246 = vmax.f32 %v4048, %v4166
        %v4247 = vmax.f32 %v4049, %v4168
        %v4248 = vmax.f32 %v4051, %v4171
        %v4249 = vmax.f32 %v4052, %v4173
        %v4250 = vmax.f32 %v4054, %v4176
        %v4251 = vmax.f32 %v4055, %v4178
        %v4252 = vmax.f32 %v4057, %v4181
        %v4253 = vmax.f32 %v4058, %v4183
        %v4254 = vmax.f32 %v4060, %v4186
        %v4255 = vmax.f32 %v4061, %v4188
        %v4256 = vmax.f32 %v4063, %v4191
        %v4257 = vmax.f32 %v4064, %v4193
        %v4258 = vld [vmem:[%s3 + $0x180] sm:$0xff]
        %v4259 = vld [vmem:[%s3 + $0x188] sm:$0xff]
        %v4260 = vld [vmem:[%s3 + $0x190] sm:$0xff]
        %v4261 = vld [vmem:[%s3 + $0x198] sm:$0xff]
        %v4262 = vld [vmem:[%s3 + $0x1a0] sm:$0xff]
        %v4263 = vld [vmem:[%s3 + $0x1a8] sm:$0xff]
        %v4264 = vld [vmem:[%s3 + $0x1b0] sm:$0xff]
        %v4265 = vld [vmem:[%s3 + $0x1b8] sm:$0xff]
        %v4266 = vld [vmem:[%s3 + $0x1c0] sm:$0xff]
        %v4267 = vld [vmem:[%s3 + $0x1c8] sm:$0xff]
        %v4268 = vld [vmem:[%s3 + $0x1d0] sm:$0xff]
        %v4269 = vld [vmem:[%s3 + $0x1d8] sm:$0xff]
        %v4270 = vld [vmem:[%s3 + $0x1e0] sm:$0xff]
        %v4271 = vld [vmem:[%s3 + $0x1e8] sm:$0xff]
        %v4272 = vld [vmem:[%s3 + $0x1f0] sm:$0xff]
        %v4273 = vld [vmem:[%s3 + $0x1f8] sm:$0xff]
        %4274 = vmatprep.subr.mxu0 0.0
        %4275 = vmatpush1.msra.mxu0 %v4273
        %4276 = vmatprep.subr.mxu0 0.0
        %4277 = vmatpush1.msra.mxu0 %v4272
        %4278 = vmatprep.subr.mxu0 0.0
        %4279 = vmatpush1.msra.mxu0 %v4271
        %4280 = vmatprep.subr.mxu0 0.0
        %4281 = vmatpush1.msra.mxu0 %v4270
        %4282 = vmatprep.subr.mxu0 0.0
        %4283 = vmatpush1.msra.mxu0 %v4269
        %4284 = vmatprep.subr.mxu0 0.0
        %4285 = vmatpush1.msra.mxu0 %v4268
        %4286 = vmatprep.subr.mxu0 0.0
        %4287 = vmatpush1.msra.mxu0 %v4267
        %4288 = vmatprep.subr.mxu0 0.0
        %4289 = vmatpush1.msra.mxu0 %v4266
        %4290 = vmatprep.subr.mxu0 0.0
        %4291 = vmatpush1.msra.mxu0 %v4265
        %4292 = vmatprep.subr.mxu0 0.0
        %4293 = vmatpush1.msra.mxu0 %v4264
        %4294 = vmatprep.subr.mxu0 0.0
        %4295 = vmatpush1.msra.mxu0 %v4263
        %4296 = vmatprep.subr.mxu0 0.0
        %4297 = vmatpush1.msra.mxu0 %v4262
        %4298 = vmatprep.subr.mxu0 0.0
        %4299 = vmatpush1.msra.mxu0 %v4261
        %4300 = vmatprep.subr.mxu0 0.0
        %4301 = vmatpush1.msra.mxu0 %v4260
        %4302 = vmatprep.subr.mxu0 0.0
        %4303 = vmatpush1.msra.mxu0 %v4259
        %4304 = vmatprep.subr.mxu0 0.0
        %4305 = vmatpush1.msra.mxu0 %v4258
        %4306 = vmatprep.subr.mxu0 0.0
        %4307 = vmatpush2.msra.mxu0 0.0
        %4308 = vmatprep.subr.mxu0 0.0
        %4309 = vmatpush2.msra.mxu0 0.0
        %4310 = vmatprep.subr.mxu0 0.0
        %4311 = vmatpush2.msra.mxu0 0.0
        %4312 = vmatprep.subr.mxu0 0.0
        %4313 = vmatpush2.msra.mxu0 0.0
        %4314 = vmatprep.subr.mxu0 0.0
        %4315 = vmatpush2.msra.mxu0 0.0
        %4316 = vmatprep.subr.mxu0 0.0
        %4317 = vmatpush2.msra.mxu0 0.0
        %4318 = vmatprep.subr.mxu0 0.0
        %4319 = vmatpush2.msra.mxu0 0.0
        %4320 = vmatprep.subr.mxu0 0.0
        %4321 = vmatpush2.msra.mxu0 0.0
        %4322 = vmatprep.subr.mxu0 0.0
        %4323 = vmatpush2.msra.mxu0 0.0
        %4324 = vmatprep.subr.mxu0 0.0
        %4325 = vmatpush2.msra.mxu0 0.0
        %4326 = vmatprep.subr.mxu0 0.0
        %4327 = vmatpush2.msra.mxu0 0.0
        %4328 = vmatprep.subr.mxu0 0.0
        %4329 = vmatpush2.msra.mxu0 0.0
        %4330 = vmatprep.subr.mxu0 0.0
        %4331 = vmatpush2.msra.mxu0 0.0
        %4332 = vmatprep.subr.mxu0 0.0
        %4333 = vmatpush2.msra.mxu0 0.0
        %4334 = vmatprep.subr.mxu0 0.0
        %4335 = vmatpush2.msra.mxu0 0.0
        %4336 = vmatprep.subr.mxu0 0.0
        %4337 = vmatpush2.msra.mxu0 0.0
        %4338 = vmatprep.mubr.f32.mxu0 0.0
        %4339 = vmatmul.mubr.f32.gmra.mxu0 %v4226
        %v4340 = vpop.f32.mrf.mxu0
        %v4341 = vadd.f32 0.0, %v4340
        %v4342 = vpop.f32.mrf.mxu0
        %4343 = vmatprep.mubr.f32.mxu0 0.0
        %4344 = vmatmul.mubr.f32.gmra.mxu0 %v4227
        %v4345 = vpop.f32.mrf.mxu0
        %v4346 = vadd.f32 0.0, %v4345
        %v4347 = vpop.f32.mrf.mxu0
        %4348 = vmatprep.mubr.f32.mxu0 0.0
        %4349 = vmatmul.mubr.f32.gmra.mxu0 %v4228
        %v4350 = vpop.f32.mrf.mxu0
        %v4351 = vadd.f32 0.0, %v4350
        %v4352 = vpop.f32.mrf.mxu0
        %4353 = vmatprep.mubr.f32.mxu0 0.0
        %4354 = vmatmul.mubr.f32.gmra.mxu0 %v4229
        %v4355 = vpop.f32.mrf.mxu0
        %v4356 = vadd.f32 0.0, %v4355
        %v4357 = vpop.f32.mrf.mxu0
        %4358 = vmatprep.mubr.f32.mxu0 0.0
        %4359 = vmatmul.mubr.f32.gmra.mxu0 %v4230
        %v4360 = vpop.f32.mrf.mxu0
        %v4361 = vadd.f32 0.0, %v4360
        %v4362 = vpop.f32.mrf.mxu0
        %4363 = vmatprep.mubr.f32.mxu0 0.0
        %4364 = vmatmul.mubr.f32.gmra.mxu0 %v4231
        %v4365 = vpop.f32.mrf.mxu0
        %v4366 = vadd.f32 0.0, %v4365
        %v4367 = vpop.f32.mrf.mxu0
        %4368 = vmatprep.mubr.f32.mxu0 0.0
        %4369 = vmatmul.mubr.f32.gmra.mxu0 %v4232
        %v4370 = vpop.f32.mrf.mxu0
        %v4371 = vadd.f32 0.0, %v4370
        %v4372 = vpop.f32.mrf.mxu0
        %4373 = vmatprep.mubr.f32.mxu0 0.0
        %4374 = vmatmul.mubr.f32.gmra.mxu0 %v4233
        %v4375 = vpop.f32.mrf.mxu0
        %v4376 = vadd.f32 0.0, %v4375
        %v4377 = vpop.f32.mrf.mxu0
        %4378 = vmatprep.mubr.f32.mxu0 0.0
        %4379 = vmatmul.mubr.f32.gmra.mxu0 %v4234
        %v4380 = vpop.f32.mrf.mxu0
        %v4381 = vadd.f32 0.0, %v4380
        %v4382 = vpop.f32.mrf.mxu0
        %4383 = vmatprep.mubr.f32.mxu0 0.0
        %4384 = vmatmul.mubr.f32.gmra.mxu0 %v4235
        %v4385 = vpop.f32.mrf.mxu0
        %v4386 = vadd.f32 0.0, %v4385
        %v4387 = vpop.f32.mrf.mxu0
        %4388 = vmatprep.mubr.f32.mxu0 0.0
        %4389 = vmatmul.mubr.f32.gmra.mxu0 %v4236
        %v4390 = vpop.f32.mrf.mxu0
        %v4391 = vadd.f32 0.0, %v4390
        %v4392 = vpop.f32.mrf.mxu0
        %4393 = vmatprep.mubr.f32.mxu0 0.0
        %4394 = vmatmul.mubr.f32.gmra.mxu0 %v4237
        %v4395 = vpop.f32.mrf.mxu0
        %v4396 = vadd.f32 0.0, %v4395
        %v4397 = vpop.f32.mrf.mxu0
        %4398 = vmatprep.mubr.f32.mxu0 0.0
        %4399 = vmatmul.mubr.f32.gmra.mxu0 %v4238
        %v4400 = vpop.f32.mrf.mxu0
        %v4401 = vadd.f32 0.0, %v4400
        %v4402 = vpop.f32.mrf.mxu0
        %4403 = vmatprep.mubr.f32.mxu0 0.0
        %4404 = vmatmul.mubr.f32.gmra.mxu0 %v4239
        %v4405 = vpop.f32.mrf.mxu0
        %v4406 = vadd.f32 0.0, %v4405
        %v4407 = vpop.f32.mrf.mxu0
        %4408 = vmatprep.mubr.f32.mxu0 0.0
        %4409 = vmatmul.mubr.f32.gmra.mxu0 %v4240
        %v4410 = vpop.f32.mrf.mxu0
        %v4411 = vadd.f32 0.0, %v4410
        %v4412 = vpop.f32.mrf.mxu0
        %4413 = vmatprep.mubr.f32.mxu0 0.0
        %4414 = vmatmul.mubr.f32.gmra.mxu0 %v4241
        %v4415 = vpop.f32.mrf.mxu0
        %v4416 = vadd.f32 0.0, %v4415
        %v4417 = vpop.f32.mrf.mxu0
        %4418 = vmatprep.mubr.f32.mxu0 0.0
        %4419 = vmatmul.mubr.f32.gmra.mxu0 %v4242
        %v4420 = vpop.f32.mrf.mxu0
        %v4421 = vadd.f32 0.0, %v4420
        %v4422 = vpop.f32.mrf.mxu0
        %4423 = vmatprep.mubr.f32.mxu0 0.0
        %4424 = vmatmul.mubr.f32.gmra.mxu0 %v4243
        %v4425 = vpop.f32.mrf.mxu0
        %v4426 = vadd.f32 0.0, %v4425
        %v4427 = vpop.f32.mrf.mxu0
        %4428 = vmatprep.mubr.f32.mxu0 0.0
        %4429 = vmatmul.mubr.f32.gmra.mxu0 %v4244
        %v4430 = vpop.f32.mrf.mxu0
        %v4431 = vadd.f32 0.0, %v4430
        %v4432 = vpop.f32.mrf.mxu0
        %4433 = vmatprep.mubr.f32.mxu0 0.0
        %4434 = vmatmul.mubr.f32.gmra.mxu0 %v4245
        %v4435 = vpop.f32.mrf.mxu0
        %v4436 = vadd.f32 0.0, %v4435
        %v4437 = vpop.f32.mrf.mxu0
        %4438 = vmatprep.mubr.f32.mxu0 0.0
        %4439 = vmatmul.mubr.f32.gmra.mxu0 %v4246
        %v4440 = vpop.f32.mrf.mxu0
        %v4441 = vadd.f32 0.0, %v4440
        %v4442 = vpop.f32.mrf.mxu0
        %4443 = vmatprep.mubr.f32.mxu0 0.0
        %4444 = vmatmul.mubr.f32.gmra.mxu0 %v4247
        %v4445 = vpop.f32.mrf.mxu0
        %v4446 = vadd.f32 0.0, %v4445
        %v4447 = vpop.f32.mrf.mxu0
        %4448 = vmatprep.mubr.f32.mxu0 0.0
        %4449 = vmatmul.mubr.f32.gmra.mxu0 %v4248
        %v4450 = vpop.f32.mrf.mxu0
        %v4451 = vadd.f32 0.0, %v4450
        %v4452 = vpop.f32.mrf.mxu0
        %4453 = vmatprep.mubr.f32.mxu0 0.0
        %4454 = vmatmul.mubr.f32.gmra.mxu0 %v4249
        %v4455 = vpop.f32.mrf.mxu0
        %v4456 = vadd.f32 0.0, %v4455
        %v4457 = vpop.f32.mrf.mxu0
        %4458 = vmatprep.mubr.f32.mxu0 0.0
        %4459 = vmatmul.mubr.f32.gmra.mxu0 %v4250
        %v4460 = vpop.f32.mrf.mxu0
        %v4461 = vadd.f32 0.0, %v4460
        %v4462 = vpop.f32.mrf.mxu0
        %4463 = vmatprep.mubr.f32.mxu0 0.0
        %4464 = vmatmul.mubr.f32.gmra.mxu0 %v4251
        %v4465 = vpop.f32.mrf.mxu0
        %v4466 = vadd.f32 0.0, %v4465
        %v4467 = vpop.f32.mrf.mxu0
        %4468 = vmatprep.mubr.f32.mxu0 0.0
        %4469 = vmatmul.mubr.f32.gmra.mxu0 %v4252
        %v4470 = vpop.f32.mrf.mxu0
        %v4471 = vadd.f32 0.0, %v4470
        %v4472 = vpop.f32.mrf.mxu0
        %4473 = vmatprep.mubr.f32.mxu0 0.0
        %4474 = vmatmul.mubr.f32.gmra.mxu0 %v4253
        %v4475 = vpop.f32.mrf.mxu0
        %v4476 = vadd.f32 0.0, %v4475
        %v4477 = vpop.f32.mrf.mxu0
        %4478 = vmatprep.mubr.f32.mxu0 0.0
        %4479 = vmatmul.mubr.f32.gmra.mxu0 %v4254
        %v4480 = vpop.f32.mrf.mxu0
        %v4481 = vadd.f32 0.0, %v4480
        %v4482 = vpop.f32.mrf.mxu0
        %4483 = vmatprep.mubr.f32.mxu0 0.0
        %4484 = vmatmul.mubr.f32.gmra.mxu0 %v4255
        %v4485 = vpop.f32.mrf.mxu0
        %v4486 = vadd.f32 0.0, %v4485
        %v4487 = vpop.f32.mrf.mxu0
        %4488 = vmatprep.mubr.f32.mxu0 0.0
        %4489 = vmatmul.mubr.f32.gmra.mxu0 %v4256
        %v4490 = vpop.f32.mrf.mxu0
        %v4491 = vadd.f32 0.0, %v4490
        %v4492 = vpop.f32.mrf.mxu0
        %4493 = vmatprep.mubr.f32.mxu0 0.0
        %4494 = vmatmul.mubr.f32.gmra.mxu0 %v4257
        %v4495 = vpop.f32.mrf.mxu0
        %v4496 = vadd.f32 0.0, %v4495
        %v4497 = vpop.f32.mrf.mxu0
        %4498 = vdwg.mxu0
        %v4499 = vadd.f32 %v3338, %v4341
        %v4500 = vadd.f32 %v3339, %v4346
        %v4501 = vadd.f32 %v3340, %v4351
        %v4502 = vadd.f32 %v3341, %v4356
        %v4503 = vadd.f32 %v3342, %v4361
        %v4504 = vadd.f32 %v3343, %v4366
        %v4505 = vadd.f32 %v3344, %v4371
        %v4506 = vadd.f32 %v3345, %v4376
        %v4507 = vadd.f32 %v3346, %v4381
        %v4508 = vadd.f32 %v3347, %v4386
        %v4509 = vadd.f32 %v3348, %v4391
        %v4510 = vadd.f32 %v3349, %v4396
        %v4511 = vadd.f32 %v3350, %v4401
        %v4512 = vadd.f32 %v3351, %v4406
        %v4513 = vadd.f32 %v3352, %v4411
        %v4514 = vadd.f32 %v3353, %v4416
        %v4515 = vadd.f32 %v3354, %v4421
        %v4516 = vadd.f32 %v3355, %v4426
        %v4517 = vadd.f32 %v3356, %v4431
        %v4518 = vadd.f32 %v3357, %v4436
        %v4519 = vadd.f32 %v3358, %v4441
        %v4520 = vadd.f32 %v3359, %v4446
        %v4521 = vadd.f32 %v3360, %v4451
        %v4522 = vadd.f32 %v3361, %v4456
        %v4523 = vadd.f32 %v3362, %v4461
        %v4524 = vadd.f32 %v3363, %v4466
        %v4525 = vadd.f32 %v3364, %v4471
        %v4526 = vadd.f32 %v3365, %v4476
        %v4527 = vadd.f32 %v3366, %v4481
        %v4528 = vadd.f32 %v3367, %v4486
        %v4529 = vadd.f32 %v3368, %v4491
        %v4530 = vadd.f32 %v3369, %v4496
        %v4531 = vld [vmem:[%s4] sm:$0x1]
        %v4533 = vlaneseq
        %v4534 = vshrl.u32 %v4533, 7
        %v4535 = vsub.s32 0, %v4534
        %v4536 = vrot.slane %v4531, %v4535
        %v4538 = vadd.f32 %v4499, %v4536
        %v4539 = vadd.f32 %v4500, %v4536
        %v4540 = vadd.f32 %v4501, %v4536
        %v4541 = vadd.f32 %v4502, %v4536
        %v4542 = vadd.f32 %v4503, %v4536
        %v4543 = vadd.f32 %v4504, %v4536
        %v4544 = vadd.f32 %v4505, %v4536
        %v4545 = vadd.f32 %v4506, %v4536
        %v4546 = vadd.f32 %v4507, %v4536
        %v4547 = vadd.f32 %v4508, %v4536
        %v4548 = vadd.f32 %v4509, %v4536
        %v4549 = vadd.f32 %v4510, %v4536
        %v4550 = vadd.f32 %v4511, %v4536
        %v4551 = vadd.f32 %v4512, %v4536
        %v4552 = vadd.f32 %v4513, %v4536
        %v4553 = vadd.f32 %v4514, %v4536
        %v4554 = vadd.f32 %v4515, %v4536
        %v4555 = vadd.f32 %v4516, %v4536
        %v4556 = vadd.f32 %v4517, %v4536
        %v4557 = vadd.f32 %v4518, %v4536
        %v4558 = vadd.f32 %v4519, %v4536
        %v4559 = vadd.f32 %v4520, %v4536
        %v4560 = vadd.f32 %v4521, %v4536
        %v4561 = vadd.f32 %v4522, %v4536
        %v4562 = vadd.f32 %v4523, %v4536
        %v4563 = vadd.f32 %v4524, %v4536
        %v4564 = vadd.f32 %v4525, %v4536
        %v4565 = vadd.f32 %v4526, %v4536
        %v4566 = vadd.f32 %v4527, %v4536
        %v4567 = vadd.f32 %v4528, %v4536
        %v4568 = vadd.f32 %v4529, %v4536
        %v4569 = vadd.f32 %v4530, %v4536
        %v4570 = vmul.f32 %v4538, 0.5
        %v4571 = vmul.f32 %v4539, 0.5
        %v4572 = vmul.f32 %v4540, 0.5
        %v4573 = vmul.f32 %v4541, 0.5
        %v4574 = vmul.f32 %v4542, 0.5
        %v4575 = vmul.f32 %v4543, 0.5
        %v4576 = vmul.f32 %v4544, 0.5
        %v4577 = vmul.f32 %v4545, 0.5
        %v4578 = vmul.f32 %v4546, 0.5
        %v4579 = vmul.f32 %v4547, 0.5
        %v4580 = vmul.f32 %v4548, 0.5
        %v4581 = vmul.f32 %v4549, 0.5
        %v4582 = vmul.f32 %v4550, 0.5
        %v4583 = vmul.f32 %v4551, 0.5
        %v4584 = vmul.f32 %v4552, 0.5
        %v4585 = vmul.f32 %v4553, 0.5
        %v4586 = vmul.f32 %v4554, 0.5
        %v4587 = vmul.f32 %v4555, 0.5
        %v4588 = vmul.f32 %v4556, 0.5
        %v4589 = vmul.f32 %v4557, 0.5
        %v4590 = vmul.f32 %v4558, 0.5
        %v4591 = vmul.f32 %v4559, 0.5
        %v4592 = vmul.f32 %v4560, 0.5
        %v4593 = vmul.f32 %v4561, 0.5
        %v4594 = vmul.f32 %v4562, 0.5
        %v4595 = vmul.f32 %v4563, 0.5
        %v4596 = vmul.f32 %v4564, 0.5
        %v4597 = vmul.f32 %v4565, 0.5
        %v4598 = vmul.f32 %v4566, 0.5
        %v4599 = vmul.f32 %v4567, 0.5
        %v4600 = vmul.f32 %v4568, 0.5
        %v4601 = vmul.f32 %v4569, 0.5
        %v4602 = vtanh.pop %v4570
        %v4603 = vtanh.pop %v4571
        %v4604 = vtanh.pop %v4572
        %v4605 = vtanh.pop %v4573
        %v4606 = vtanh.pop %v4574
        %v4607 = vtanh.pop %v4575
        %v4608 = vtanh.pop %v4576
        %v4609 = vtanh.pop %v4577
        %v4610 = vtanh.pop %v4578
        %v4611 = vtanh.pop %v4579
        %v4612 = vtanh.pop %v4580
        %v4613 = vtanh.pop %v4581
        %v4614 = vtanh.pop %v4582
        %v4615 = vtanh.pop %v4583
        %v4616 = vtanh.pop %v4584
        %v4617 = vtanh.pop %v4585
        %v4618 = vtanh.pop %v4586
        %v4619 = vtanh.pop %v4587
        %v4620 = vtanh.pop %v4588
        %v4621 = vtanh.pop %v4589
        %v4622 = vtanh.pop %v4590
        %v4623 = vtanh.pop %v4591
        %v4624 = vtanh.pop %v4592
        %v4625 = vtanh.pop %v4593
        %v4626 = vtanh.pop %v4594
        %v4627 = vtanh.pop %v4595
        %v4628 = vtanh.pop %v4596
        %v4629 = vtanh.pop %v4597
        %v4630 = vtanh.pop %v4598
        %v4631 = vtanh.pop %v4599
        %v4632 = vtanh.pop %v4600
        %v4633 = vtanh.pop %v4601
        %v4634 = vmul.f32 %v4602, 0.5
        %v4635 = vmul.f32 %v4603, 0.5
        %v4636 = vmul.f32 %v4604, 0.5
        %v4637 = vmul.f32 %v4605, 0.5
        %v4638 = vmul.f32 %v4606, 0.5
        %v4639 = vmul.f32 %v4607, 0.5
        %v4640 = vmul.f32 %v4608, 0.5
        %v4641 = vmul.f32 %v4609, 0.5
        %v4642 = vmul.f32 %v4610, 0.5
        %v4643 = vmul.f32 %v4611, 0.5
        %v4644 = vmul.f32 %v4612, 0.5
        %v4645 = vmul.f32 %v4613, 0.5
        %v4646 = vmul.f32 %v4614, 0.5
        %v4647 = vmul.f32 %v4615, 0.5
        %v4648 = vmul.f32 %v4616, 0.5
        %v4649 = vmul.f32 %v4617, 0.5
        %v4650 = vmul.f32 %v4618, 0.5
        %v4651 = vmul.f32 %v4619, 0.5
        %v4652 = vmul.f32 %v4620, 0.5
        %v4653 = vmul.f32 %v4621, 0.5
        %v4654 = vmul.f32 %v4622, 0.5
        %v4655 = vmul.f32 %v4623, 0.5
        %v4656 = vmul.f32 %v4624, 0.5
        %v4657 = vmul.f32 %v4625, 0.5
        %v4658 = vmul.f32 %v4626, 0.5
        %v4659 = vmul.f32 %v4627, 0.5
        %v4660 = vmul.f32 %v4628, 0.5
        %v4661 = vmul.f32 %v4629, 0.5
        %v4662 = vmul.f32 %v4630, 0.5
        %v4663 = vmul.f32 %v4631, 0.5
        %v4664 = vmul.f32 %v4632, 0.5
        %v4665 = vmul.f32 %v4633, 0.5
        %v4666 = vadd.f32 %v4634, 0.5
        %v4667 = vadd.f32 %v4635, 0.5
        %v4668 = vadd.f32 %v4636, 0.5
        %v4669 = vadd.f32 %v4637, 0.5
        %v4670 = vadd.f32 %v4638, 0.5
        %v4671 = vadd.f32 %v4639, 0.5
        %v4672 = vadd.f32 %v4640, 0.5
        %v4673 = vadd.f32 %v4641, 0.5
        %v4674 = vadd.f32 %v4642, 0.5
        %v4675 = vadd.f32 %v4643, 0.5
        %v4676 = vadd.f32 %v4644, 0.5
        %v4677 = vadd.f32 %v4645, 0.5
        %v4678 = vadd.f32 %v4646, 0.5
        %v4679 = vadd.f32 %v4647, 0.5
        %v4680 = vadd.f32 %v4648, 0.5
        %v4681 = vadd.f32 %v4649, 0.5
        %v4682 = vadd.f32 %v4650, 0.5
        %v4683 = vadd.f32 %v4651, 0.5
        %v4684 = vadd.f32 %v4652, 0.5
        %v4685 = vadd.f32 %v4653, 0.5
        %v4686 = vadd.f32 %v4654, 0.5
        %v4687 = vadd.f32 %v4655, 0.5
        %v4688 = vadd.f32 %v4656, 0.5
        %v4689 = vadd.f32 %v4657, 0.5
        %v4690 = vadd.f32 %v4658, 0.5
        %v4691 = vadd.f32 %v4659, 0.5
        %v4692 = vadd.f32 %v4660, 0.5
        %v4693 = vadd.f32 %v4661, 0.5
        %v4694 = vadd.f32 %v4662, 0.5
        %v4695 = vadd.f32 %v4663, 0.5
        %v4696 = vadd.f32 %v4664, 0.5
        %v4697 = vadd.f32 %v4665, 0.5
        %v4698 = vmul.f32 %v4538, %v4666
        %v4699 = vmul.f32 %v4539, %v4667
        %v4700 = vmul.f32 %v4540, %v4668
        %v4701 = vmul.f32 %v4541, %v4669
        %v4702 = vmul.f32 %v4542, %v4670
        %v4703 = vmul.f32 %v4543, %v4671
        %v4704 = vmul.f32 %v4544, %v4672
        %v4705 = vmul.f32 %v4545, %v4673
        %v4706 = vmul.f32 %v4546, %v4674
        %v4707 = vmul.f32 %v4547, %v4675
        %v4708 = vmul.f32 %v4548, %v4676
        %v4709 = vmul.f32 %v4549, %v4677
        %v4710 = vmul.f32 %v4550, %v4678
        %v4711 = vmul.f32 %v4551, %v4679
        %v4712 = vmul.f32 %v4552, %v4680
        %v4713 = vmul.f32 %v4553, %v4681
        %v4714 = vmul.f32 %v4554, %v4682
        %v4715 = vmul.f32 %v4555, %v4683
        %v4716 = vmul.f32 %v4556, %v4684
        %v4717 = vmul.f32 %v4557, %v4685
        %v4718 = vmul.f32 %v4558, %v4686
        %v4719 = vmul.f32 %v4559, %v4687
        %v4720 = vmul.f32 %v4560, %v4688
        %v4721 = vmul.f32 %v4561, %v4689
        %v4722 = vmul.f32 %v4562, %v4690
        %v4723 = vmul.f32 %v4563, %v4691
        %v4724 = vmul.f32 %v4564, %v4692
        %v4725 = vmul.f32 %v4565, %v4693
        %v4726 = vmul.f32 %v4566, %v4694
        %v4727 = vmul.f32 %v4567, %v4695
        %v4728 = vmul.f32 %v4568, %v4696
        %v4729 = vmul.f32 %v4569, %v4697
        %4730 = vst [vmem:[%s217] sm:$0xff] %v4698
        %4731 = vst [vmem:[%s217 + $0x8] sm:$0xff] %v4699
        %4732 = vst [vmem:[%s217 + $0x10] sm:$0xff] %v4700
        %4733 = vst [vmem:[%s217 + $0x18] sm:$0xff] %v4701
        %4734 = vst [vmem:[%s217 + $0x20] sm:$0xff] %v4702
        %4735 = vst [vmem:[%s217 + $0x28] sm:$0xff] %v4703
        %4736 = vst [vmem:[%s217 + $0x30] sm:$0xff] %v4704
        %4737 = vst [vmem:[%s217 + $0x38] sm:$0xff] %v4705
        %4738 = vst [vmem:[%s217 + $0x40] sm:$0xff] %v4706
        %4739 = vst [vmem:[%s217 + $0x48] sm:$0xff] %v4707
        %4740 = vst [vmem:[%s217 + $0x50] sm:$0xff] %v4708
        %4741 = vst [vmem:[%s217 + $0x58] sm:$0xff] %v4709
        %4742 = vst [vmem:[%s217 + $0x60] sm:$0xff] %v4710
        %4743 = vst [vmem:[%s217 + $0x68] sm:$0xff] %v4711
        %4744 = vst [vmem:[%s217 + $0x70] sm:$0xff] %v4712
        %4745 = vst [vmem:[%s217 + $0x78] sm:$0xff] %v4713
        %4746 = vst [vmem:[%s217 + $0x80] sm:$0xff] %v4714
        %4747 = vst [vmem:[%s217 + $0x88] sm:$0xff] %v4715
        %4748 = vst [vmem:[%s217 + $0x90] sm:$0xff] %v4716
        %4749 = vst [vmem:[%s217 + $0x98] sm:$0xff] %v4717
        %4750 = vst [vmem:[%s217 + $0xa0] sm:$0xff] %v4718
        %4751 = vst [vmem:[%s217 + $0xa8] sm:$0xff] %v4719
        %4752 = vst [vmem:[%s217 + $0xb0] sm:$0xff] %v4720
        %4753 = vst [vmem:[%s217 + $0xb8] sm:$0xff] %v4721
        %4754 = vst [vmem:[%s217 + $0xc0] sm:$0xff] %v4722
        %4755 = vst [vmem:[%s217 + $0xc8] sm:$0xff] %v4723
        %4756 = vst [vmem:[%s217 + $0xd0] sm:$0xff] %v4724
        %4757 = vst [vmem:[%s217 + $0xd8] sm:$0xff] %v4725
        %4758 = vst [vmem:[%s217 + $0xe0] sm:$0xff] %v4726
        %4759 = vst [vmem:[%s217 + $0xe8] sm:$0xff] %v4727
        %4760 = vst [vmem:[%s217 + $0xf0] sm:$0xff] %v4728
        %4761 = vst [vmem:[%s217 + $0xf8] sm:$0xff] %v4729
        %s4762 = sand.u32 %s137, 1
        %s4763 = scalar_lea.sflag [#allocation5], %s4762
        %s4764 = sand.u32 %s137, 1
        %s4765 = smul.addr %s4764, 256
        %s4766 = scalar_lea.vmem [#allocation4], %s4765
        // Predicated region
        $region41: #{tpu_custom_call.1} parent=39 // pred_check
          %p4767 = pneg %p147
        $region42: #{tpu_custom_call.1} parent=39 // pred_check_branch
          %4769 = sbr.rel (%p4767) target = $region44
        $region43: #{tpu_custom_call.1} parent=39 // pred_region
          %s4771 = ssub.s32 4096, 4096
          %4772 = vsyncadd %s4763, %s4771
          %s4773 = smul.addr %s19, 32
          %s4774 = smul.addr %s4773, 128
          %s4775 = scalar_lea.hbm %s5, %s4774
          %s4776 = sshll.u32 %s4766, 4
          %s4777 = int_to_ptr.vmem [resolvable:$true] %s4776
          %4782 = dma.vmem_to_hbm [thread:$0]  %s4777, 4096, %s4775, %s4763, 128, 128, 8
        $region44: #{tpu_custom_call.1} parent=39 // pred_fallthru
          _
      $region40: #{tpu_custom_call.1} parent=5 // pred_fallthru
        _
      %p4783 = scmp.le.s32.totalorder 2, %s14
      // Predicated region
      $region45: #{tpu_custom_call.1} parent=5 // pred_check
        %p4784 = pneg %p4783
      $region46: #{tpu_custom_call.1} parent=5 // pred_check_branch
        %4786 = sbr.rel (%p4784) target = $region48
      $region47: #{tpu_custom_call.1} parent=5 // pred_region
        %s4787 = ssub.s32 %s14, 2
        // Predicated region
        $region49: #{tpu_custom_call.1} parent=47 // pred_check
          %p4788 = pneg %p153
        $region50: #{tpu_custom_call.1} parent=47 // pred_check_branch
          %4790 = sbr.rel (%p4788) target = $region52
        $region51: #{tpu_custom_call.1} parent=47 // pred_region
          %s4791 = sand.u32 %s138, 1
          %s4792 = scalar_lea.sflag [#allocation5], %s4791
          %s4793 = sand.u32 %s138, 1
          %s4794 = smul.addr %s4793, 256
          %s4795 = scalar_lea.vmem [#allocation4], %s4794
          %4796 = dma.done %s4792, 4096
        $region52: #{tpu_custom_call.1} parent=47 // pred_fallthru
          _
      $region48: #{tpu_custom_call.1} parent=5 // pred_fallthru
        _
    $region6: #{tpu_custom_call.1} parent=1 // loop_footer
      %s18 = sadd.s32 1, %s14
    $region7: #{tpu_custom_call.1} parent=1 // loop_footer_branch
      %13 = sbr.rel target = $region3
    $region8: #{tpu_custom_call.1} parent=1 // loop_exit
      _
    %4797 = vsyncpa [#allocation5], 1
    %s4798 = scalar_lea.sflag [#allocation5], 1
    %4799 = vsyncpa %s4798, 1

</llo_original>
